<compile_context>
chip_gen: v5e
topology: v5e:2x2
jax: 0.10.0
libtpu: 0.0.40
codegen_flags: <defaults>
</compile_context>

<pallas_src>
import functools

import numpy as np
import jax
import jax.numpy as jnp
from jax.experimental import pallas as pl
from jax.experimental.pallas import tpu as pltpu

VMEM_SPEC = pl.BlockSpec(memory_space=pltpu.MemorySpace.VMEM)


# --------------------------------------------------------------------------------------
# Single fused kernel: embed -> depth x (PreNorm+Attn+Res, PreNorm+FFN+Res) -> NCE + proj
# --------------------------------------------------------------------------------------
def _tc_fused_kernel(fs_ref, encbd_ref, wemb_ref, wall_ref, bias_ref, headw_ref, out_ref,
                     *, depth, heads, timestep):
    f32 = jnp.float32

    # ---- patch_to_embedding (c_token in row 0 / Linear bias in row 1 of wemb, folded on host) ----
    x = jnp.einsum('bne,eh->bnh', fs_ref[...], wemb_ref[...], preferred_element_type=f32)
    B, N, H = x.shape
    dh = H // heads
    mlp = wall_ref.shape[1] - 3 * H
    TE = encbd_ref.shape[1]                       # timestep * emb
    P1 = headw_ref.shape[1] - TE                  # emb // 2

    # per-head lane-selection masks (loop-invariant constants)
    lane = jax.lax.broadcasted_iota(jnp.int32, (1, H), 1)
    hmasks = [((lane >= h * dh) & (lane < (h + 1) * dh)).astype(f32) for h in range(heads)]

    def brow(slot, r, w):                          # one packed bias row -> (1, w)
        return bias_ref[slot, r:r + 1, :w]

    def layer_norm(v, g, b):
        # single-pass form: the two cross-lane reductions are independent (dual-issue on XLU)
        mu = jnp.mean(v, axis=-1, keepdims=True)
        ms = jnp.mean(v * v, axis=-1, keepdims=True)
        return (v - mu) * jax.lax.rsqrt(ms - mu * mu + 1e-5) * g + b

    # ---- transformer blocks (unrolled; all weights live in one row-stacked tensor) ----
    for l in range(depth):
        # PreNorm -> Attention -> Residual
        xn = layer_norm(x, brow(l, 0, H), brow(l, 1, H))
        # fused QKV projection (attention scale dim**-0.5 pre-folded into the q columns on host)
        qkv = jnp.einsum('bnd,de->bne', xn, wall_ref[l, 0:H, 0:3 * H],
                         preferred_element_type=f32)
        q = qkv[:, :, 0:H]
        k = qkv[:, :, H:2 * H]
        v = qkv[:, :, 2 * H:3 * H]
        o = jnp.zeros_like(x)
        for h in range(heads):
            # masked-q trick: (q*mask_h)·k == q_h·k_h; heads stay lane-concatenated, so there is
            # no broadcast_to of k/v and no (B*heads) relayout; iterations are independent.
            d_h = jnp.einsum('bid,bjd->bij', q * hmasks[h], k, preferred_element_type=f32)
            d_h = d_h - jnp.max(d_h, axis=-1, keepdims=True)
            p = jnp.exp(d_h)
            a = p * pl.reciprocal(jnp.sum(p, axis=-1, keepdims=True), approx=True)
            o = o + jnp.einsum('bij,bjd->bid', a, v, preferred_element_type=f32) * hmasks[h]
        x = jnp.einsum('bnd,de->bne', o, wall_ref[l, H:2 * H, 0:H],
                       preferred_element_type=f32) + brow(l, 4, H) + x
        # PreNorm -> FeedForward -> Residual
        xn2 = layer_norm(x, brow(l, 2, H), brow(l, 3, H))
        h1 = jnp.maximum(jnp.einsum('bnd,dm->bnm', xn2, wall_ref[l, 2 * H:3 * H, 0:mlp],
                                    preferred_element_type=f32) + brow(l, 6, mlp), 0.0)
        x = jnp.einsum('bnm,md->bnd', h1, wall_ref[l, 3 * H:3 * H + mlp, 0:H],
                       preferred_element_type=f32) + brow(l, 5, H) + x

    c_t = x[:, 0, :]                               # (B, H)

    # ---- all CPC prediction heads + projection-head layer 1 fused into ONE matmul ----
    head_out = jnp.dot(c_t, headw_ref[...], preferred_element_type=f32) + brow(depth, 0, TE + P1)
    pred_flat = head_out[:, 0:TE]                  # (B, timestep*emb): pred[t][d, e] at lane t*E+e
    h1p = jnp.maximum(head_out[:, TE:], 0.0)       # (B, emb//2): BatchNorm folded, then ReLU

    # ---- InfoNCE: one block-diagonal matmul + one batched log-softmax pass ----
    total = jnp.einsum('xe,de->xd', encbd_ref[...], pred_flat,
                       preferred_element_type=f32)  # (timestep*B, B); row t*B+b = enc[t,b]·pred[t]
    m = jnp.max(total, axis=-1, keepdims=True)
    lse = jnp.log(jnp.sum(jnp.exp(total - m), axis=-1, keepdims=True)) + m
    row = jax.lax.broadcasted_iota(jnp.int32, total.shape, 0)
    col = jax.lax.broadcasted_iota(jnp.int32, total.shape, 1)
    diag = row == col
    for t in range(1, timestep):
        diag = diag | (row == col + t * B)         # picks element [t*B+b, b] for every t
    nce = jnp.sum(jnp.where(diag, total - lse, 0.0)) * (-1.0 / (B * timestep))

    # ---- projection head layer 2 (weights pre-padded to 128 lanes -> one dense (B,128) store) ----
    proj = jnp.dot(h1p, bias_ref[depth + 1, 0:P1, :], preferred_element_type=f32) \
        + bias_ref[depth, 1:2, :]
    orow = jax.lax.broadcasted_iota(jnp.int32, proj.shape, 0)
    ocol = jax.lax.broadcasted_iota(jnp.int32, proj.shape, 1)
    out_ref[...] = jnp.where((orow == 0) & (ocol == proj.shape[1] - 1), nce, proj)


# --------------------------------------------------------------------------------------
# Parameter init (deterministic, in-script); natural per-module layout.
# --------------------------------------------------------------------------------------
def init_params(key, *, emb, hidden, depth, heads, mlp, timestep):
    assert hidden % heads == 0
    kit = iter(jax.random.split(key, 24))

    def nrm(shape, scale=0.05):
        return (scale * jax.random.normal(next(kit), shape)).astype(jnp.float32)

    return {
        'emb_w': nrm((emb, hidden)),
        'emb_b': nrm((1, hidden)),
        'c_token': nrm((1, hidden)),
        'ln1_g': jnp.ones((depth, 1, hidden), jnp.float32),
        'ln1_b': jnp.zeros((depth, 1, hidden), jnp.float32),
        'wq': nrm((depth, hidden, hidden)),
        'wk': nrm((depth, hidden, hidden)),
        'wv': nrm((depth, hidden, hidden)),
        'wo': nrm((depth, hidden, hidden)),
        'bo': nrm((depth, 1, hidden)),
        'ln2_g': jnp.ones((depth, 1, hidden), jnp.float32),
        'ln2_b': jnp.zeros((depth, 1, hidden), jnp.float32),
        'w1': nrm((depth, hidden, mlp)),
        'b1': nrm((depth, 1, mlp)),
        'w2': nrm((depth, mlp, hidden)),
        'b2': nrm((depth, 1, hidden)),
        # Wk prediction heads: Linear(hidden -> emb), stored (in, out)
        'cpc_w': nrm((timestep, hidden, emb)),
        'cpc_b': nrm((timestep, 1, emb)),
        # projection head
        'proj_w1': nrm((hidden, emb // 2)),
        'proj_b1': nrm((1, emb // 2)),
        'bn_g': jnp.ones((1, emb // 2), jnp.float32),
        'bn_b': jnp.zeros((1, emb // 2), jnp.float32),
        'proj_w2': nrm((emb // 2, emb // 4)),
        'proj_b2': nrm((1, emb // 4)),
    }


# --------------------------------------------------------------------------------------
# Host-side packing / folding (done once): 4 weight tensors for the kernel.
# --------------------------------------------------------------------------------------
def pack_params(params, *, timestep):
    f32 = jnp.float32
    E, H = params['emb_w'].shape
    depth = params['wq'].shape[0]
    mlp = params['w1'].shape[2]
    P1 = params['proj_w1'].shape[1]
    P2 = params['proj_w2'].shape[1]
    assert H % 8 == 0 and mlp % 8 == 0 and P2 <= 128 and timestep * E + P1 <= 128

    # 1) embedding weight with c_token (row 0) and Linear bias (row 1) folded in
    w_emb_ext = jnp.concatenate([params['c_token'], params['emb_b'], params['emb_w']],
                                axis=0).astype(f32)                           # (E+2, H)

    # 2) all transformer weights, row-stacked per layer (row offsets multiples of 8, prefix lanes);
    #    attention scale dim**-0.5 folded into the q columns of the fused qkv weight.
    scale = float(H) ** -0.5
    WL = max(3 * H, mlp)

    def lane_pad(w):
        return jnp.pad(w, ((0, 0), (0, 0), (0, WL - w.shape[-1])))

    wqkv = jnp.concatenate([params['wq'] * scale, params['wk'], params['wv']], axis=2)
    w_all = jnp.concatenate([lane_pad(wqkv), lane_pad(params['wo']),
                             lane_pad(params['w1']), lane_pad(params['w2'])],
                            axis=1).astype(f32)                               # (depth, 3H+mlp, WL)

    # 3) eval-mode BatchNorm1d (running_mean=0, running_var=1, eps=1e-5) folded into proj layer 1
    bn_scale = params['bn_g'] * (1.0 / np.sqrt(1.0 + 1e-5))
    pw1 = params['proj_w1'] * bn_scale
    pb1 = params['proj_b1'] * bn_scale + params['bn_b']

    # 4) all CPC prediction heads + projection layer 1 fused into one (H, T*E + E//2) weight
    cpc_w_flat = jnp.transpose(params['cpc_w'], (1, 0, 2)).reshape(H, timestep * E)
    head_w = jnp.concatenate([cpc_w_flat, pw1], axis=1).astype(f32)
    head_b = jnp.concatenate([params['cpc_b'].reshape(1, timestep * E), pb1], axis=1)

    # 5) LN params / biases / tiny projection weight in one lane-dense (depth+2, RB, 128) tensor
    RB = max(8, P1)

    def row128(v):
        v = jnp.reshape(v, (1, -1)).astype(f32)
        return jnp.pad(v, ((0, 0), (0, 128 - v.shape[1])))

    zero_row = jnp.zeros((1, 128), f32)
    slots = []
    for l in range(depth):
        rows = [row128(params['ln1_g'][l]), row128(params['ln1_b'][l]),
                row128(params['ln2_g'][l]), row128(params['ln2_b'][l]),
                row128(params['bo'][l]), row128(params['b2'][l]), row128(params['b1'][l])]
        rows += [zero_row] * (RB - len(rows))
        slots.append(jnp.concatenate(rows, axis=0)[None])
    head_rows = [row128(head_b), row128(params['proj_b2'])] + [zero_row] * (RB - 2)
    slots.append(jnp.concatenate(head_rows, axis=0)[None])
    pw2_pad = jnp.pad(params['proj_w2'].astype(f32), ((0, RB - P1), (0, 128 - P2)))[None]
    slots.append(pw2_pad)
    bias_pack = jnp.concatenate(slots, axis=0)                                # (depth+2, RB, 128)

    return dict(w_emb_ext=w_emb_ext, w_all=w_all, bias_pack=bias_pack, head_w=head_w)


# --------------------------------------------------------------------------------------
# TC.forward
# --------------------------------------------------------------------------------------
@functools.partial(jax.jit, static_argnames=('t_samples', 'timestep', 'heads', 'depth'))
def tc_forward(packed, features_aug1, features_aug2, *, t_samples, timestep, heads, depth):
    f32 = jnp.float32
    # z_augX = features_augX.transpose(1, 2): (B, emb, T) -> (B, T, emb)
    z1 = jnp.transpose(features_aug1, (0, 2, 1)).astype(f32)
    z2 = jnp.transpose(features_aug2, (0, 2, 1)).astype(f32)
    B, _, E = z1.shape
    n = t_samples + 1

    # encode_samples[t] = z_aug2[:, t_samples+1+t, :], laid out block-diagonally so the whole
    # InfoNCE "total" tensor is ONE in-kernel matmul of shape (timestep*B, B).
    enc = z2[:, t_samples + 1:t_samples + 1 + timestep, :]                    # (B, timestep, E)
    enc_bd = jnp.zeros((timestep * B, timestep * E), f32)
    for t in range(timestep):
        enc_bd = enc_bd.at[t * B:(t + 1) * B, t * E:(t + 1) * E].set(enc[:, t, :])

    # forward_seq with c_token / embedding bias folded in as one-hot input columns:
    #   row 0: [1, 0, 0...]   -> c_token
    #   row i: [0, 1, z1[i-1]] -> z1 @ emb_w + emb_b
    fs_ext = jnp.zeros((B, n + 1, E + 2), f32)
    fs_ext = fs_ext.at[:, 0, 0].set(1.0)
    fs_ext = fs_ext.at[:, 1:, 1].set(1.0)
    fs_ext = fs_ext.at[:, 1:, 2:].set(z1[:, :n, :])

    kernel = functools.partial(_tc_fused_kernel, depth=depth, heads=heads, timestep=timestep)
    out = pl.pallas_call(
        kernel,
        out_shape=jax.ShapeDtypeStruct((B, 128), f32),
        in_specs=[VMEM_SPEC] * 6,
        out_specs=VMEM_SPEC,
    )(fs_ext, enc_bd, packed['w_emb_ext'], packed['w_all'], packed['bias_pack'],
      packed['head_w'])

    nce = out[0, 127]
    proj = out[:, :E // 4]
    return nce, proj


if __name__ == "__main__":
    bs, emb_size, hidden_dim, ts_length = 2, 16, 32, 16
    timestep, depth, heads, mlp_dim = 3, 4, 4, 64

    key = jax.random.PRNGKey(0)
    k1, k2, kp = jax.random.split(key, 3)

    # layout: (batch, emb_size, ts_length); transposed to (batch, ts_length, emb_size) inside
    features_aug1 = jax.random.normal(k1, (bs, emb_size, ts_length), jnp.float32)
    features_aug2 = jax.random.normal(k2, (bs, emb_size, ts_length), jnp.float32)

    params = init_params(kp, emb=emb_size, hidden=hidden_dim, depth=depth,
                         heads=heads, mlp=mlp_dim, timestep=timestep)
    packed = pack_params(params, timestep=timestep)

    # TODO(synk): torch.randint made deterministic/static (a dynamic sequence length is not
    # representable as a static Pallas kernel shape).
    t_samples = int(np.random.RandomState(0).randint(ts_length - timestep))

    nce, proj = tc_forward(packed, features_aug1, features_aug2,
                           t_samples=t_samples, timestep=timestep,
                           heads=heads, depth=depth)
    jax.block_until_ready((nce, proj))
    assert proj.shape == (bs, emb_size // 4)
    assert nce.shape == ()
    print("KERNEL_OK")
</pallas_src>

<mosaic_0001>
module attributes {stable_mosaic.version = 11 : i64} {
  func.func @_tc_fused_kernel(%arg0: memref<2x14x18xf32, #tpu.memory_space<vmem>>, %arg1: memref<6x48xf32, #tpu.memory_space<vmem>>, %arg2: memref<18x32xf32, #tpu.memory_space<vmem>>, %arg3: memref<4x160x96xf32, #tpu.memory_space<vmem>>, %arg4: memref<6x8x128xf32, #tpu.memory_space<vmem>>, %arg5: memref<32x56xf32, #tpu.memory_space<vmem>>, %arg6: memref<2x128xf32, #tpu.memory_space<vmem>>) attributes {dimension_semantics = [], scalar_prefetch = 0 : i64, scratch_operands = 0 : i64, tpu.core_type = #tpu.core_type<tc>} {
    %c0 = arith.constant 0 : index
    %c0_0 = arith.constant 0 : index
    %c0_1 = arith.constant 0 : index
    %0 = vector.load %arg0[%c0, %c0_0, %c0_1] : memref<2x14x18xf32, #tpu.memory_space<vmem>>, vector<2x14x18xf32>
    %c0_2 = arith.constant 0 : index
    %c0_3 = arith.constant 0 : index
    %1 = vector.load %arg2[%c0_2, %c0_3] : memref<18x32xf32, #tpu.memory_space<vmem>>, vector<18x32xf32>
    "tpu.trace_start"() <{level = 10 : i32, message = "bne,eh->bnh"}> : () -> ()
    %cst = arith.constant dense<0.000000e+00> : vector<2x14x32xf32>
    %2 = tpu.matmul %0, %1, %cst {dimension_numbers = #tpu.dot_dimension_numbers<[2], [0], [0, 1], [1], [0, 0, 0, 1, 1, 1], [], []>} : vector<2x14x18xf32>, vector<18x32xf32>, vector<2x14x32xf32> -> vector<2x14x32xf32>
    "tpu.trace_stop"() : () -> ()
    %3 = tpu.iota {dimensions = array<i32: 1>} : vector<1x32xi32>
    %c0_i32 = arith.constant 0 : i32
    %4 = vector.broadcast %c0_i32 : i32 to vector<1x32xi32>
    %5 = arith.cmpi sge, %3, %4 : vector<1x32xi32>
    %c8_i32 = arith.constant 8 : i32
    %6 = vector.broadcast %c8_i32 : i32 to vector<1x32xi32>
    %7 = arith.cmpi slt, %3, %6 : vector<1x32xi32>
    %8 = arith.andi %5, %7 : vector<1x32xi1>
    %9 = arith.extui %8 : vector<1x32xi1> to vector<1x32xi32>
    %10 = arith.sitofp %9 : vector<1x32xi32> to vector<1x32xf32>
    %c8_i32_4 = arith.constant 8 : i32
    %11 = vector.broadcast %c8_i32_4 : i32 to vector<1x32xi32>
    %12 = arith.cmpi sge, %3, %11 : vector<1x32xi32>
    %c16_i32 = arith.constant 16 : i32
    %13 = vector.broadcast %c16_i32 : i32 to vector<1x32xi32>
    %14 = arith.cmpi slt, %3, %13 : vector<1x32xi32>
    %15 = arith.andi %12, %14 : vector<1x32xi1>
    %16 = arith.extui %15 : vector<1x32xi1> to vector<1x32xi32>
    %17 = arith.sitofp %16 : vector<1x32xi32> to vector<1x32xf32>
    %c16_i32_5 = arith.constant 16 : i32
    %18 = vector.broadcast %c16_i32_5 : i32 to vector<1x32xi32>
    %19 = arith.cmpi sge, %3, %18 : vector<1x32xi32>
    %c24_i32 = arith.constant 24 : i32
    %20 = vector.broadcast %c24_i32 : i32 to vector<1x32xi32>
    %21 = arith.cmpi slt, %3, %20 : vector<1x32xi32>
    %22 = arith.andi %19, %21 : vector<1x32xi1>
    %23 = arith.extui %22 : vector<1x32xi1> to vector<1x32xi32>
    %24 = arith.sitofp %23 : vector<1x32xi32> to vector<1x32xf32>
    %c24_i32_6 = arith.constant 24 : i32
    %25 = vector.broadcast %c24_i32_6 : i32 to vector<1x32xi32>
    %26 = arith.cmpi sge, %3, %25 : vector<1x32xi32>
    %c32_i32 = arith.constant 32 : i32
    %27 = vector.broadcast %c32_i32 : i32 to vector<1x32xi32>
    %28 = arith.cmpi slt, %3, %27 : vector<1x32xi32>
    %29 = arith.andi %26, %28 : vector<1x32xi1>
    %30 = arith.extui %29 : vector<1x32xi1> to vector<1x32xi32>
    %31 = arith.sitofp %30 : vector<1x32xi32> to vector<1x32xf32>
    %c0_7 = arith.constant 0 : index
    %c0_8 = arith.constant 0 : index
    %c0_9 = arith.constant 0 : index
    %32 = vector.load %arg4[%c0_7, %c0_8, %c0_9] : memref<6x8x128xf32, #tpu.memory_space<vmem>>, vector<1x1x32xf32>
    %33 = vector.shape_cast %32 : vector<1x1x32xf32> to vector<1x32xf32>
    %c0_10 = arith.constant 0 : index
    %c1 = arith.constant 1 : index
    %c0_11 = arith.constant 0 : index
    %34 = vector.load %arg4[%c0_10, %c1, %c0_11] : memref<6x8x128xf32, #tpu.memory_space<vmem>>, vector<1x1x32xf32>
    %35 = vector.shape_cast %34 : vector<1x1x32xf32> to vector<1x32xf32>
    %cst_12 = arith.constant dense<0.000000e+00> : vector<2x14xf32>
    %36 = vector.multi_reduction <add>, %2, %cst_12 [2] : vector<2x14x32xf32> to vector<2x14xf32>
    %37 = vector.shape_cast %36 : vector<2x14xf32> to vector<2x14x1xf32>
    %cst_13 = arith.constant 3.200000e+01 : f32
    %38 = vector.broadcast %cst_13 : f32 to vector<2x14x1xf32>
    %39 = arith.divf %37, %38 : vector<2x14x1xf32>
    %40 = arith.mulf %2, %2 : vector<2x14x32xf32>
    %cst_14 = arith.constant dense<0.000000e+00> : vector<2x14xf32>
    %41 = vector.multi_reduction <add>, %40, %cst_14 [2] : vector<2x14x32xf32> to vector<2x14xf32>
    %42 = vector.shape_cast %41 : vector<2x14xf32> to vector<2x14x1xf32>
    %cst_15 = arith.constant 3.200000e+01 : f32
    %43 = vector.broadcast %cst_15 : f32 to vector<2x14x1xf32>
    %44 = arith.divf %42, %43 : vector<2x14x1xf32>
    %45 = vector.broadcast %39 : vector<2x14x1xf32> to vector<2x14x32xf32>
    %46 = arith.subf %2, %45 : vector<2x14x32xf32>
    %47 = arith.mulf %39, %39 : vector<2x14x1xf32>
    %48 = arith.subf %44, %47 : vector<2x14x1xf32>
    %cst_16 = arith.constant 9.99999974E-6 : f32
    %49 = vector.broadcast %cst_16 : f32 to vector<2x14x1xf32>
    %50 = arith.addf %48, %49 : vector<2x14x1xf32>
    %51 = math.rsqrt %50 : vector<2x14x1xf32>
    %52 = vector.broadcast %51 : vector<2x14x1xf32> to vector<2x14x32xf32>
    %53 = arith.mulf %46, %52 : vector<2x14x32xf32>
    %54 = vector.shape_cast %33 : vector<1x32xf32> to vector<1x1x32xf32>
    %55 = vector.broadcast %54 : vector<1x1x32xf32> to vector<2x14x32xf32>
    %56 = arith.mulf %53, %55 : vector<2x14x32xf32>
    %57 = vector.shape_cast %35 : vector<1x32xf32> to vector<1x1x32xf32>
    %58 = vector.broadcast %57 : vector<1x1x32xf32> to vector<2x14x32xf32>
    %59 = arith.addf %56, %58 : vector<2x14x32xf32>
    %c0_17 = arith.constant 0 : index
    %c0_18 = arith.constant 0 : index
    %c0_19 = arith.constant 0 : index
    %60 = vector.load %arg3[%c0_17, %c0_18, %c0_19] : memref<4x160x96xf32, #tpu.memory_space<vmem>>, vector<1x32x96xf32>
    %61 = vector.shape_cast %60 : vector<1x32x96xf32> to vector<32x96xf32>
    "tpu.trace_start"() <{level = 10 : i32, message = "bnd,de->bne"}> : () -> ()
    %cst_20 = arith.constant dense<0.000000e+00> : vector<2x14x96xf32>
    %62 = tpu.matmul %59, %61, %cst_20 {dimension_numbers = #tpu.dot_dimension_numbers<[2], [0], [0, 1], [1], [0, 0, 0, 1, 1, 1], [], []>} : vector<2x14x32xf32>, vector<32x96xf32>, vector<2x14x96xf32> -> vector<2x14x96xf32>
    "tpu.trace_stop"() : () -> ()
    %63 = vector.extract_strided_slice %62 {offsets = [0, 0, 0], sizes = [2, 14, 32], strides = [1, 1, 1]} : vector<2x14x96xf32> to vector<2x14x32xf32>
    %64 = vector.extract_strided_slice %62 {offsets = [0, 0, 32], sizes = [2, 14, 32], strides = [1, 1, 1]} : vector<2x14x96xf32> to vector<2x14x32xf32>
    %65 = vector.extract_strided_slice %62 {offsets = [0, 0, 64], sizes = [2, 14, 32], strides = [1, 1, 1]} : vector<2x14x96xf32> to vector<2x14x32xf32>
    %cst_21 = arith.constant 0.000000e+00 : f32
    %66 = vector.broadcast %cst_21 : f32 to vector<2x14x32xf32>
    %67 = vector.shape_cast %10 : vector<1x32xf32> to vector<1x1x32xf32>
    %68 = vector.broadcast %67 : vector<1x1x32xf32> to vector<2x14x32xf32>
    %69 = arith.mulf %63, %68 : vector<2x14x32xf32>
    "tpu.trace_start"() <{level = 10 : i32, message = "bid,bjd->bij"}> : () -> ()
    %cst_22 = arith.constant dense<0.000000e+00> : vector<2x14x14xf32>
    %70 = tpu.matmul %69, %64, %cst_22 {dimension_numbers = #tpu.dot_dimension_numbers<[2], [2], [1], [1], [0, 0, 0, 1, 1, 1], [0], [0]>} : vector<2x14x32xf32>, vector<2x14x32xf32>, vector<2x14x14xf32> -> vector<2x14x14xf32>
    "tpu.trace_stop"() : () -> ()
    %cst_23 = arith.constant dense<0xFF800000> : vector<2x14xf32>
    %71 = vector.multi_reduction <maximumf>, %70, %cst_23 [2] : vector<2x14x14xf32> to vector<2x14xf32>
    %72 = vector.shape_cast %71 : vector<2x14xf32> to vector<2x14x1xf32>
    %73 = vector.broadcast %72 : vector<2x14x1xf32> to vector<2x14x14xf32>
    %74 = arith.subf %70, %73 : vector<2x14x14xf32>
    %75 = math.exp %74 : vector<2x14x14xf32>
    %cst_24 = arith.constant dense<0.000000e+00> : vector<2x14xf32>
    %76 = vector.multi_reduction <add>, %75, %cst_24 [2] : vector<2x14x14xf32> to vector<2x14xf32>
    %77 = vector.shape_cast %76 : vector<2x14xf32> to vector<2x14x1xf32>
    %78 = tpu.reciprocal %77 {approx = true} : vector<2x14x1xf32> -> vector<2x14x1xf32>
    %79 = vector.broadcast %78 : vector<2x14x1xf32> to vector<2x14x14xf32>
    %80 = arith.mulf %75, %79 : vector<2x14x14xf32>
    "tpu.trace_start"() <{level = 10 : i32, message = "bij,bjd->bid"}> : () -> ()
    %cst_25 = arith.constant dense<0.000000e+00> : vector<2x14x32xf32>
    %81 = tpu.matmul %80, %65, %cst_25 {dimension_numbers = #tpu.dot_dimension_numbers<[2], [1], [1], [2], [0, 0, 0, 1, 1, 2], [0], [0]>} : vector<2x14x14xf32>, vector<2x14x32xf32>, vector<2x14x32xf32> -> vector<2x14x32xf32>
    "tpu.trace_stop"() : () -> ()
    %82 = vector.shape_cast %10 : vector<1x32xf32> to vector<1x1x32xf32>
    %83 = vector.broadcast %82 : vector<1x1x32xf32> to vector<2x14x32xf32>
    %84 = arith.mulf %81, %83 : vector<2x14x32xf32>
    %85 = arith.addf %66, %84 : vector<2x14x32xf32>
    %86 = vector.shape_cast %17 : vector<1x32xf32> to vector<1x1x32xf32>
    %87 = vector.broadcast %86 : vector<1x1x32xf32> to vector<2x14x32xf32>
    %88 = arith.mulf %63, %87 : vector<2x14x32xf32>
    "tpu.trace_start"() <{level = 10 : i32, message = "bid,bjd->bij"}> : () -> ()
    %cst_26 = arith.constant dense<0.000000e+00> : vector<2x14x14xf32>
    %89 = tpu.matmul %88, %64, %cst_26 {dimension_numbers = #tpu.dot_dimension_numbers<[2], [2], [1], [1], [0, 0, 0, 1, 1, 1], [0], [0]>} : vector<2x14x32xf32>, vector<2x14x32xf32>, vector<2x14x14xf32> -> vector<2x14x14xf32>
    "tpu.trace_stop"() : () -> ()
    %cst_27 = arith.constant dense<0xFF800000> : vector<2x14xf32>
    %90 = vector.multi_reduction <maximumf>, %89, %cst_27 [2] : vector<2x14x14xf32> to vector<2x14xf32>
    %91 = vector.shape_cast %90 : vector<2x14xf32> to vector<2x14x1xf32>
    %92 = vector.broadcast %91 : vector<2x14x1xf32> to vector<2x14x14xf32>
    %93 = arith.subf %89, %92 : vector<2x14x14xf32>
    %94 = math.exp %93 : vector<2x14x14xf32>
    %cst_28 = arith.constant dense<0.000000e+00> : vector<2x14xf32>
    %95 = vector.multi_reduction <add>, %94, %cst_28 [2] : vector<2x14x14xf32> to vector<2x14xf32>
    %96 = vector.shape_cast %95 : vector<2x14xf32> to vector<2x14x1xf32>
    %97 = tpu.reciprocal %96 {approx = true} : vector<2x14x1xf32> -> vector<2x14x1xf32>
    %98 = vector.broadcast %97 : vector<2x14x1xf32> to vector<2x14x14xf32>
    %99 = arith.mulf %94, %98 : vector<2x14x14xf32>
    "tpu.trace_start"() <{level = 10 : i32, message = "bij,bjd->bid"}> : () -> ()
    %cst_29 = arith.constant dense<0.000000e+00> : vector<2x14x32xf32>
    %100 = tpu.matmul %99, %65, %cst_29 {dimension_numbers = #tpu.dot_dimension_numbers<[2], [1], [1], [2], [0, 0, 0, 1, 1, 2], [0], [0]>} : vector<2x14x14xf32>, vector<2x14x32xf32>, vector<2x14x32xf32> -> vector<2x14x32xf32>
    "tpu.trace_stop"() : () -> ()
    %101 = vector.shape_cast %17 : vector<1x32xf32> to vector<1x1x32xf32>
    %102 = vector.broadcast %101 : vector<1x1x32xf32> to vector<2x14x32xf32>
    %103 = arith.mulf %100, %102 : vector<2x14x32xf32>
    %104 = arith.addf %85, %103 : vector<2x14x32xf32>
    %105 = vector.shape_cast %24 : vector<1x32xf32> to vector<1x1x32xf32>
    %106 = vector.broadcast %105 : vector<1x1x32xf32> to vector<2x14x32xf32>
    %107 = arith.mulf %63, %106 : vector<2x14x32xf32>
    "tpu.trace_start"() <{level = 10 : i32, message = "bid,bjd->bij"}> : () -> ()
    %cst_30 = arith.constant dense<0.000000e+00> : vector<2x14x14xf32>
    %108 = tpu.matmul %107, %64, %cst_30 {dimension_numbers = #tpu.dot_dimension_numbers<[2], [2], [1], [1], [0, 0, 0, 1, 1, 1], [0], [0]>} : vector<2x14x32xf32>, vector<2x14x32xf32>, vector<2x14x14xf32> -> vector<2x14x14xf32>
    "tpu.trace_stop"() : () -> ()
    %cst_31 = arith.constant dense<0xFF800000> : vector<2x14xf32>
    %109 = vector.multi_reduction <maximumf>, %108, %cst_31 [2] : vector<2x14x14xf32> to vector<2x14xf32>
    %110 = vector.shape_cast %109 : vector<2x14xf32> to vector<2x14x1xf32>
    %111 = vector.broadcast %110 : vector<2x14x1xf32> to vector<2x14x14xf32>
    %112 = arith.subf %108, %111 : vector<2x14x14xf32>
    %113 = math.exp %112 : vector<2x14x14xf32>
    %cst_32 = arith.constant dense<0.000000e+00> : vector<2x14xf32>
    %114 = vector.multi_reduction <add>, %113, %cst_32 [2] : vector<2x14x14xf32> to vector<2x14xf32>
    %115 = vector.shape_cast %114 : vector<2x14xf32> to vector<2x14x1xf32>
    %116 = tpu.reciprocal %115 {approx = true} : vector<2x14x1xf32> -> vector<2x14x1xf32>
    %117 = vector.broadcast %116 : vector<2x14x1xf32> to vector<2x14x14xf32>
    %118 = arith.mulf %113, %117 : vector<2x14x14xf32>
    "tpu.trace_start"() <{level = 10 : i32, message = "bij,bjd->bid"}> : () -> ()
    %cst_33 = arith.constant dense<0.000000e+00> : vector<2x14x32xf32>
    %119 = tpu.matmul %118, %65, %cst_33 {dimension_numbers = #tpu.dot_dimension_numbers<[2], [1], [1], [2], [0, 0, 0, 1, 1, 2], [0], [0]>} : vector<2x14x14xf32>, vector<2x14x32xf32>, vector<2x14x32xf32> -> vector<2x14x32xf32>
    "tpu.trace_stop"() : () -> ()
    %120 = vector.shape_cast %24 : vector<1x32xf32> to vector<1x1x32xf32>
    %121 = vector.broadcast %120 : vector<1x1x32xf32> to vector<2x14x32xf32>
    %122 = arith.mulf %119, %121 : vector<2x14x32xf32>
    %123 = arith.addf %104, %122 : vector<2x14x32xf32>
    %124 = vector.shape_cast %31 : vector<1x32xf32> to vector<1x1x32xf32>
    %125 = vector.broadcast %124 : vector<1x1x32xf32> to vector<2x14x32xf32>
    %126 = arith.mulf %63, %125 : vector<2x14x32xf32>
    "tpu.trace_start"() <{level = 10 : i32, message = "bid,bjd->bij"}> : () -> ()
    %cst_34 = arith.constant dense<0.000000e+00> : vector<2x14x14xf32>
    %127 = tpu.matmul %126, %64, %cst_34 {dimension_numbers = #tpu.dot_dimension_numbers<[2], [2], [1], [1], [0, 0, 0, 1, 1, 1], [0], [0]>} : vector<2x14x32xf32>, vector<2x14x32xf32>, vector<2x14x14xf32> -> vector<2x14x14xf32>
    "tpu.trace_stop"() : () -> ()
    %cst_35 = arith.constant dense<0xFF800000> : vector<2x14xf32>
    %128 = vector.multi_reduction <maximumf>, %127, %cst_35 [2] : vector<2x14x14xf32> to vector<2x14xf32>
    %129 = vector.shape_cast %128 : vector<2x14xf32> to vector<2x14x1xf32>
    %130 = vector.broadcast %129 : vector<2x14x1xf32> to vector<2x14x14xf32>
    %131 = arith.subf %127, %130 : vector<2x14x14xf32>
    %132 = math.exp %131 : vector<2x14x14xf32>
    %cst_36 = arith.constant dense<0.000000e+00> : vector<2x14xf32>
    %133 = vector.multi_reduction <add>, %132, %cst_36 [2] : vector<2x14x14xf32> to vector<2x14xf32>
    %134 = vector.shape_cast %133 : vector<2x14xf32> to vector<2x14x1xf32>
    %135 = tpu.reciprocal %134 {approx = true} : vector<2x14x1xf32> -> vector<2x14x1xf32>
    %136 = vector.broadcast %135 : vector<2x14x1xf32> to vector<2x14x14xf32>
    %137 = arith.mulf %132, %136 : vector<2x14x14xf32>
    "tpu.trace_start"() <{level = 10 : i32, message = "bij,bjd->bid"}> : () -> ()
    %cst_37 = arith.constant dense<0.000000e+00> : vector<2x14x32xf32>
    %138 = tpu.matmul %137, %65, %cst_37 {dimension_numbers = #tpu.dot_dimension_numbers<[2], [1], [1], [2], [0, 0, 0, 1, 1, 2], [0], [0]>} : vector<2x14x14xf32>, vector<2x14x32xf32>, vector<2x14x32xf32> -> vector<2x14x32xf32>
    "tpu.trace_stop"() : () -> ()
    %139 = vector.shape_cast %31 : vector<1x32xf32> to vector<1x1x32xf32>
    %140 = vector.broadcast %139 : vector<1x1x32xf32> to vector<2x14x32xf32>
    %141 = arith.mulf %138, %140 : vector<2x14x32xf32>
    %142 = arith.addf %123, %141 : vector<2x14x32xf32>
    %c0_38 = arith.constant 0 : index
    %c32 = arith.constant 32 : index
    %c0_39 = arith.constant 0 : index
    %143 = vector.load %arg3[%c0_38, %c32, %c0_39] : memref<4x160x96xf32, #tpu.memory_space<vmem>>, vector<1x32x32xf32>
    %144 = vector.shape_cast %143 : vector<1x32x32xf32> to vector<32x32xf32>
    "tpu.trace_start"() <{level = 10 : i32, message = "bnd,de->bne"}> : () -> ()
    %cst_40 = arith.constant dense<0.000000e+00> : vector<2x14x32xf32>
    %145 = tpu.matmul %142, %144, %cst_40 {dimension_numbers = #tpu.dot_dimension_numbers<[2], [0], [0, 1], [1], [0, 0, 0, 1, 1, 1], [], []>} : vector<2x14x32xf32>, vector<32x32xf32>, vector<2x14x32xf32> -> vector<2x14x32xf32>
    "tpu.trace_stop"() : () -> ()
    %c0_41 = arith.constant 0 : index
    %c4 = arith.constant 4 : index
    %c0_42 = arith.constant 0 : index
    %146 = vector.load %arg4[%c0_41, %c4, %c0_42] : memref<6x8x128xf32, #tpu.memory_space<vmem>>, vector<1x1x32xf32>
    %147 = vector.shape_cast %146 : vector<1x1x32xf32> to vector<1x32xf32>
    %148 = vector.shape_cast %147 : vector<1x32xf32> to vector<1x1x32xf32>
    %149 = vector.broadcast %148 : vector<1x1x32xf32> to vector<2x14x32xf32>
    %150 = arith.addf %145, %149 : vector<2x14x32xf32>
    %151 = arith.addf %150, %2 : vector<2x14x32xf32>
    %c0_43 = arith.constant 0 : index
    %c2 = arith.constant 2 : index
    %c0_44 = arith.constant 0 : index
    %152 = vector.load %arg4[%c0_43, %c2, %c0_44] : memref<6x8x128xf32, #tpu.memory_space<vmem>>, vector<1x1x32xf32>
    %153 = vector.shape_cast %152 : vector<1x1x32xf32> to vector<1x32xf32>
    %c0_45 = arith.constant 0 : index
    %c3 = arith.constant 3 : index
    %c0_46 = arith.constant 0 : index
    %154 = vector.load %arg4[%c0_45, %c3, %c0_46] : memref<6x8x128xf32, #tpu.memory_space<vmem>>, vector<1x1x32xf32>
    %155 = vector.shape_cast %154 : vector<1x1x32xf32> to vector<1x32xf32>
    %cst_47 = arith.constant dense<0.000000e+00> : vector<2x14xf32>
    %156 = vector.multi_reduction <add>, %151, %cst_47 [2] : vector<2x14x32xf32> to vector<2x14xf32>
    %157 = vector.shape_cast %156 : vector<2x14xf32> to vector<2x14x1xf32>
    %cst_48 = arith.constant 3.200000e+01 : f32
    %158 = vector.broadcast %cst_48 : f32 to vector<2x14x1xf32>
    %159 = arith.divf %157, %158 : vector<2x14x1xf32>
    %160 = arith.mulf %151, %151 : vector<2x14x32xf32>
    %cst_49 = arith.constant dense<0.000000e+00> : vector<2x14xf32>
    %161 = vector.multi_reduction <add>, %160, %cst_49 [2] : vector<2x14x32xf32> to vector<2x14xf32>
    %162 = vector.shape_cast %161 : vector<2x14xf32> to vector<2x14x1xf32>
    %cst_50 = arith.constant 3.200000e+01 : f32
    %163 = vector.broadcast %cst_50 : f32 to vector<2x14x1xf32>
    %164 = arith.divf %162, %163 : vector<2x14x1xf32>
    %165 = vector.broadcast %159 : vector<2x14x1xf32> to vector<2x14x32xf32>
    %166 = arith.subf %151, %165 : vector<2x14x32xf32>
    %167 = arith.mulf %159, %159 : vector<2x14x1xf32>
    %168 = arith.subf %164, %167 : vector<2x14x1xf32>
    %cst_51 = arith.constant 9.99999974E-6 : f32
    %169 = vector.broadcast %cst_51 : f32 to vector<2x14x1xf32>
    %170 = arith.addf %168, %169 : vector<2x14x1xf32>
    %171 = math.rsqrt %170 : vector<2x14x1xf32>
    %172 = vector.broadcast %171 : vector<2x14x1xf32> to vector<2x14x32xf32>
    %173 = arith.mulf %166, %172 : vector<2x14x32xf32>
    %174 = vector.shape_cast %153 : vector<1x32xf32> to vector<1x1x32xf32>
    %175 = vector.broadcast %174 : vector<1x1x32xf32> to vector<2x14x32xf32>
    %176 = arith.mulf %173, %175 : vector<2x14x32xf32>
    %177 = vector.shape_cast %155 : vector<1x32xf32> to vector<1x1x32xf32>
    %178 = vector.broadcast %177 : vector<1x1x32xf32> to vector<2x14x32xf32>
    %179 = arith.addf %176, %178 : vector<2x14x32xf32>
    %c0_52 = arith.constant 0 : index
    %c64 = arith.constant 64 : index
    %c0_53 = arith.constant 0 : index
    %180 = vector.load %arg3[%c0_52, %c64, %c0_53] : memref<4x160x96xf32, #tpu.memory_space<vmem>>, vector<1x32x64xf32>
    %181 = vector.shape_cast %180 : vector<1x32x64xf32> to vector<32x64xf32>
    "tpu.trace_start"() <{level = 10 : i32, message = "bnd,dm->bnm"}> : () -> ()
    %cst_54 = arith.constant dense<0.000000e+00> : vector<2x14x64xf32>
    %182 = tpu.matmul %179, %181, %cst_54 {dimension_numbers = #tpu.dot_dimension_numbers<[2], [0], [0, 1], [1], [0, 0, 0, 1, 1, 1], [], []>} : vector<2x14x32xf32>, vector<32x64xf32>, vector<2x14x64xf32> -> vector<2x14x64xf32>
    "tpu.trace_stop"() : () -> ()
    %c0_55 = arith.constant 0 : index
    %c6 = arith.constant 6 : index
    %c0_56 = arith.constant 0 : index
    %183 = vector.load %arg4[%c0_55, %c6, %c0_56] : memref<6x8x128xf32, #tpu.memory_space<vmem>>, vector<1x1x64xf32>
    %184 = vector.shape_cast %183 : vector<1x1x64xf32> to vector<1x64xf32>
    %185 = vector.shape_cast %184 : vector<1x64xf32> to vector<1x1x64xf32>
    %186 = vector.broadcast %185 : vector<1x1x64xf32> to vector<2x14x64xf32>
    %187 = arith.addf %182, %186 : vector<2x14x64xf32>
    %cst_57 = arith.constant 0.000000e+00 : f32
    %188 = vector.broadcast %cst_57 : f32 to vector<2x14x64xf32>
    %189 = arith.maximumf %187, %188 : vector<2x14x64xf32>
    %c0_58 = arith.constant 0 : index
    %c96 = arith.constant 96 : index
    %c0_59 = arith.constant 0 : index
    %190 = vector.load %arg3[%c0_58, %c96, %c0_59] : memref<4x160x96xf32, #tpu.memory_space<vmem>>, vector<1x64x32xf32>
    %191 = vector.shape_cast %190 : vector<1x64x32xf32> to vector<64x32xf32>
    "tpu.trace_start"() <{level = 10 : i32, message = "bnm,md->bnd"}> : () -> ()
    %cst_60 = arith.constant dense<0.000000e+00> : vector<2x14x32xf32>
    %192 = tpu.matmul %189, %191, %cst_60 {dimension_numbers = #tpu.dot_dimension_numbers<[2], [0], [0, 1], [1], [0, 0, 0, 1, 1, 1], [], []>} : vector<2x14x64xf32>, vector<64x32xf32>, vector<2x14x32xf32> -> vector<2x14x32xf32>
    "tpu.trace_stop"() : () -> ()
    %c0_61 = arith.constant 0 : index
    %c5 = arith.constant 5 : index
    %c0_62 = arith.constant 0 : index
    %193 = vector.load %arg4[%c0_61, %c5, %c0_62] : memref<6x8x128xf32, #tpu.memory_space<vmem>>, vector<1x1x32xf32>
    %194 = vector.shape_cast %193 : vector<1x1x32xf32> to vector<1x32xf32>
    %195 = vector.shape_cast %194 : vector<1x32xf32> to vector<1x1x32xf32>
    %196 = vector.broadcast %195 : vector<1x1x32xf32> to vector<2x14x32xf32>
    %197 = arith.addf %192, %196 : vector<2x14x32xf32>
    %198 = arith.addf %197, %151 : vector<2x14x32xf32>
    %c1_63 = arith.constant 1 : index
    %c0_64 = arith.constant 0 : index
    %c0_65 = arith.constant 0 : index
    %199 = vector.load %arg4[%c1_63, %c0_64, %c0_65] : memref<6x8x128xf32, #tpu.memory_space<vmem>>, vector<1x1x32xf32>
    %200 = vector.shape_cast %199 : vector<1x1x32xf32> to vector<1x32xf32>
    %c1_66 = arith.constant 1 : index
    %c1_67 = arith.constant 1 : index
    %c0_68 = arith.constant 0 : index
    %201 = vector.load %arg4[%c1_66, %c1_67, %c0_68] : memref<6x8x128xf32, #tpu.memory_space<vmem>>, vector<1x1x32xf32>
    %202 = vector.shape_cast %201 : vector<1x1x32xf32> to vector<1x32xf32>
    %cst_69 = arith.constant dense<0.000000e+00> : vector<2x14xf32>
    %203 = vector.multi_reduction <add>, %198, %cst_69 [2] : vector<2x14x32xf32> to vector<2x14xf32>
    %204 = vector.shape_cast %203 : vector<2x14xf32> to vector<2x14x1xf32>
    %cst_70 = arith.constant 3.200000e+01 : f32
    %205 = vector.broadcast %cst_70 : f32 to vector<2x14x1xf32>
    %206 = arith.divf %204, %205 : vector<2x14x1xf32>
    %207 = arith.mulf %198, %198 : vector<2x14x32xf32>
    %cst_71 = arith.constant dense<0.000000e+00> : vector<2x14xf32>
    %208 = vector.multi_reduction <add>, %207, %cst_71 [2] : vector<2x14x32xf32> to vector<2x14xf32>
    %209 = vector.shape_cast %208 : vector<2x14xf32> to vector<2x14x1xf32>
    %cst_72 = arith.constant 3.200000e+01 : f32
    %210 = vector.broadcast %cst_72 : f32 to vector<2x14x1xf32>
    %211 = arith.divf %209, %210 : vector<2x14x1xf32>
    %212 = vector.broadcast %206 : vector<2x14x1xf32> to vector<2x14x32xf32>
    %213 = arith.subf %198, %212 : vector<2x14x32xf32>
    %214 = arith.mulf %206, %206 : vector<2x14x1xf32>
    %215 = arith.subf %211, %214 : vector<2x14x1xf32>
    %cst_73 = arith.constant 9.99999974E-6 : f32
    %216 = vector.broadcast %cst_73 : f32 to vector<2x14x1xf32>
    %217 = arith.addf %215, %216 : vector<2x14x1xf32>
    %218 = math.rsqrt %217 : vector<2x14x1xf32>
    %219 = vector.broadcast %218 : vector<2x14x1xf32> to vector<2x14x32xf32>
    %220 = arith.mulf %213, %219 : vector<2x14x32xf32>
    %221 = vector.shape_cast %200 : vector<1x32xf32> to vector<1x1x32xf32>
    %222 = vector.broadcast %221 : vector<1x1x32xf32> to vector<2x14x32xf32>
    %223 = arith.mulf %220, %222 : vector<2x14x32xf32>
    %224 = vector.shape_cast %202 : vector<1x32xf32> to vector<1x1x32xf32>
    %225 = vector.broadcast %224 : vector<1x1x32xf32> to vector<2x14x32xf32>
    %226 = arith.addf %223, %225 : vector<2x14x32xf32>
    %c1_74 = arith.constant 1 : index
    %c0_75 = arith.constant 0 : index
    %c0_76 = arith.constant 0 : index
    %227 = vector.load %arg3[%c1_74, %c0_75, %c0_76] : memref<4x160x96xf32, #tpu.memory_space<vmem>>, vector<1x32x96xf32>
    %228 = vector.shape_cast %227 : vector<1x32x96xf32> to vector<32x96xf32>
    "tpu.trace_start"() <{level = 10 : i32, message = "bnd,de->bne"}> : () -> ()
    %cst_77 = arith.constant dense<0.000000e+00> : vector<2x14x96xf32>
    %229 = tpu.matmul %226, %228, %cst_77 {dimension_numbers = #tpu.dot_dimension_numbers<[2], [0], [0, 1], [1], [0, 0, 0, 1, 1, 1], [], []>} : vector<2x14x32xf32>, vector<32x96xf32>, vector<2x14x96xf32> -> vector<2x14x96xf32>
    "tpu.trace_stop"() : () -> ()
    %230 = vector.extract_strided_slice %229 {offsets = [0, 0, 0], sizes = [2, 14, 32], strides = [1, 1, 1]} : vector<2x14x96xf32> to vector<2x14x32xf32>
    %231 = vector.extract_strided_slice %229 {offsets = [0, 0, 32], sizes = [2, 14, 32], strides = [1, 1, 1]} : vector<2x14x96xf32> to vector<2x14x32xf32>
    %232 = vector.extract_strided_slice %229 {offsets = [0, 0, 64], sizes = [2, 14, 32], strides = [1, 1, 1]} : vector<2x14x96xf32> to vector<2x14x32xf32>
    %cst_78 = arith.constant 0.000000e+00 : f32
    %233 = vector.broadcast %cst_78 : f32 to vector<2x14x32xf32>
    %234 = vector.shape_cast %10 : vector<1x32xf32> to vector<1x1x32xf32>
    %235 = vector.broadcast %234 : vector<1x1x32xf32> to vector<2x14x32xf32>
    %236 = arith.mulf %230, %235 : vector<2x14x32xf32>
    "tpu.trace_start"() <{level = 10 : i32, message = "bid,bjd->bij"}> : () -> ()
    %cst_79 = arith.constant dense<0.000000e+00> : vector<2x14x14xf32>
    %237 = tpu.matmul %236, %231, %cst_79 {dimension_numbers = #tpu.dot_dimension_numbers<[2], [2], [1], [1], [0, 0, 0, 1, 1, 1], [0], [0]>} : vector<2x14x32xf32>, vector<2x14x32xf32>, vector<2x14x14xf32> -> vector<2x14x14xf32>
    "tpu.trace_stop"() : () -> ()
    %cst_80 = arith.constant dense<0xFF800000> : vector<2x14xf32>
    %238 = vector.multi_reduction <maximumf>, %237, %cst_80 [2] : vector<2x14x14xf32> to vector<2x14xf32>
    %239 = vector.shape_cast %238 : vector<2x14xf32> to vector<2x14x1xf32>
    %240 = vector.broadcast %239 : vector<2x14x1xf32> to vector<2x14x14xf32>
    %241 = arith.subf %237, %240 : vector<2x14x14xf32>
    %242 = math.exp %241 : vector<2x14x14xf32>
    %cst_81 = arith.constant dense<0.000000e+00> : vector<2x14xf32>
    %243 = vector.multi_reduction <add>, %242, %cst_81 [2] : vector<2x14x14xf32> to vector<2x14xf32>
    %244 = vector.shape_cast %243 : vector<2x14xf32> to vector<2x14x1xf32>
    %245 = tpu.reciprocal %244 {approx = true} : vector<2x14x1xf32> -> vector<2x14x1xf32>
    %246 = vector.broadcast %245 : vector<2x14x1xf32> to vector<2x14x14xf32>
    %247 = arith.mulf %242, %246 : vector<2x14x14xf32>
    "tpu.trace_start"() <{level = 10 : i32, message = "bij,bjd->bid"}> : () -> ()
    %cst_82 = arith.constant dense<0.000000e+00> : vector<2x14x32xf32>
    %248 = tpu.matmul %247, %232, %cst_82 {dimension_numbers = #tpu.dot_dimension_numbers<[2], [1], [1], [2], [0, 0, 0, 1, 1, 2], [0], [0]>} : vector<2x14x14xf32>, vector<2x14x32xf32>, vector<2x14x32xf32> -> vector<2x14x32xf32>
    "tpu.trace_stop"() : () -> ()
    %249 = vector.shape_cast %10 : vector<1x32xf32> to vector<1x1x32xf32>
    %250 = vector.broadcast %249 : vector<1x1x32xf32> to vector<2x14x32xf32>
    %251 = arith.mulf %248, %250 : vector<2x14x32xf32>
    %252 = arith.addf %233, %251 : vector<2x14x32xf32>
    %253 = vector.shape_cast %17 : vector<1x32xf32> to vector<1x1x32xf32>
    %254 = vector.broadcast %253 : vector<1x1x32xf32> to vector<2x14x32xf32>
    %255 = arith.mulf %230, %254 : vector<2x14x32xf32>
    "tpu.trace_start"() <{level = 10 : i32, message = "bid,bjd->bij"}> : () -> ()
    %cst_83 = arith.constant dense<0.000000e+00> : vector<2x14x14xf32>
    %256 = tpu.matmul %255, %231, %cst_83 {dimension_numbers = #tpu.dot_dimension_numbers<[2], [2], [1], [1], [0, 0, 0, 1, 1, 1], [0], [0]>} : vector<2x14x32xf32>, vector<2x14x32xf32>, vector<2x14x14xf32> -> vector<2x14x14xf32>
    "tpu.trace_stop"() : () -> ()
    %cst_84 = arith.constant dense<0xFF800000> : vector<2x14xf32>
    %257 = vector.multi_reduction <maximumf>, %256, %cst_84 [2] : vector<2x14x14xf32> to vector<2x14xf32>
    %258 = vector.shape_cast %257 : vector<2x14xf32> to vector<2x14x1xf32>
    %259 = vector.broadcast %258 : vector<2x14x1xf32> to vector<2x14x14xf32>
    %260 = arith.subf %256, %259 : vector<2x14x14xf32>
    %261 = math.exp %260 : vector<2x14x14xf32>
    %cst_85 = arith.constant dense<0.000000e+00> : vector<2x14xf32>
    %262 = vector.multi_reduction <add>, %261, %cst_85 [2] : vector<2x14x14xf32> to vector<2x14xf32>
    %263 = vector.shape_cast %262 : vector<2x14xf32> to vector<2x14x1xf32>
    %264 = tpu.reciprocal %263 {approx = true} : vector<2x14x1xf32> -> vector<2x14x1xf32>
    %265 = vector.broadcast %264 : vector<2x14x1xf32> to vector<2x14x14xf32>
    %266 = arith.mulf %261, %265 : vector<2x14x14xf32>
    "tpu.trace_start"() <{level = 10 : i32, message = "bij,bjd->bid"}> : () -> ()
    %cst_86 = arith.constant dense<0.000000e+00> : vector<2x14x32xf32>
    %267 = tpu.matmul %266, %232, %cst_86 {dimension_numbers = #tpu.dot_dimension_numbers<[2], [1], [1], [2], [0, 0, 0, 1, 1, 2], [0], [0]>} : vector<2x14x14xf32>, vector<2x14x32xf32>, vector<2x14x32xf32> -> vector<2x14x32xf32>
    "tpu.trace_stop"() : () -> ()
    %268 = vector.shape_cast %17 : vector<1x32xf32> to vector<1x1x32xf32>
    %269 = vector.broadcast %268 : vector<1x1x32xf32> to vector<2x14x32xf32>
    %270 = arith.mulf %267, %269 : vector<2x14x32xf32>
    %271 = arith.addf %252, %270 : vector<2x14x32xf32>
    %272 = vector.shape_cast %24 : vector<1x32xf32> to vector<1x1x32xf32>
    %273 = vector.broadcast %272 : vector<1x1x32xf32> to vector<2x14x32xf32>
    %274 = arith.mulf %230, %273 : vector<2x14x32xf32>
    "tpu.trace_start"() <{level = 10 : i32, message = "bid,bjd->bij"}> : () -> ()
    %cst_87 = arith.constant dense<0.000000e+00> : vector<2x14x14xf32>
    %275 = tpu.matmul %274, %231, %cst_87 {dimension_numbers = #tpu.dot_dimension_numbers<[2], [2], [1], [1], [0, 0, 0, 1, 1, 1], [0], [0]>} : vector<2x14x32xf32>, vector<2x14x32xf32>, vector<2x14x14xf32> -> vector<2x14x14xf32>
    "tpu.trace_stop"() : () -> ()
    %cst_88 = arith.constant dense<0xFF800000> : vector<2x14xf32>
    %276 = vector.multi_reduction <maximumf>, %275, %cst_88 [2] : vector<2x14x14xf32> to vector<2x14xf32>
    %277 = vector.shape_cast %276 : vector<2x14xf32> to vector<2x14x1xf32>
    %278 = vector.broadcast %277 : vector<2x14x1xf32> to vector<2x14x14xf32>
    %279 = arith.subf %275, %278 : vector<2x14x14xf32>
    %280 = math.exp %279 : vector<2x14x14xf32>
    %cst_89 = arith.constant dense<0.000000e+00> : vector<2x14xf32>
    %281 = vector.multi_reduction <add>, %280, %cst_89 [2] : vector<2x14x14xf32> to vector<2x14xf32>
    %282 = vector.shape_cast %281 : vector<2x14xf32> to vector<2x14x1xf32>
    %283 = tpu.reciprocal %282 {approx = true} : vector<2x14x1xf32> -> vector<2x14x1xf32>
    %284 = vector.broadcast %283 : vector<2x14x1xf32> to vector<2x14x14xf32>
    %285 = arith.mulf %280, %284 : vector<2x14x14xf32>
    "tpu.trace_start"() <{level = 10 : i32, message = "bij,bjd->bid"}> : () -> ()
    %cst_90 = arith.constant dense<0.000000e+00> : vector<2x14x32xf32>
    %286 = tpu.matmul %285, %232, %cst_90 {dimension_numbers = #tpu.dot_dimension_numbers<[2], [1], [1], [2], [0, 0, 0, 1, 1, 2], [0], [0]>} : vector<2x14x14xf32>, vector<2x14x32xf32>, vector<2x14x32xf32> -> vector<2x14x32xf32>
    "tpu.trace_stop"() : () -> ()
    %287 = vector.shape_cast %24 : vector<1x32xf32> to vector<1x1x32xf32>
    %288 = vector.broadcast %287 : vector<1x1x32xf32> to vector<2x14x32xf32>
    %289 = arith.mulf %286, %288 : vector<2x14x32xf32>
    %290 = arith.addf %271, %289 : vector<2x14x32xf32>
    %291 = vector.shape_cast %31 : vector<1x32xf32> to vector<1x1x32xf32>
    %292 = vector.broadcast %291 : vector<1x1x32xf32> to vector<2x14x32xf32>
    %293 = arith.mulf %230, %292 : vector<2x14x32xf32>
    "tpu.trace_start"() <{level = 10 : i32, message = "bid,bjd->bij"}> : () -> ()
    %cst_91 = arith.constant dense<0.000000e+00> : vector<2x14x14xf32>
    %294 = tpu.matmul %293, %231, %cst_91 {dimension_numbers = #tpu.dot_dimension_numbers<[2], [2], [1], [1], [0, 0, 0, 1, 1, 1], [0], [0]>} : vector<2x14x32xf32>, vector<2x14x32xf32>, vector<2x14x14xf32> -> vector<2x14x14xf32>
    "tpu.trace_stop"() : () -> ()
    %cst_92 = arith.constant dense<0xFF800000> : vector<2x14xf32>
    %295 = vector.multi_reduction <maximumf>, %294, %cst_92 [2] : vector<2x14x14xf32> to vector<2x14xf32>
    %296 = vector.shape_cast %295 : vector<2x14xf32> to vector<2x14x1xf32>
    %297 = vector.broadcast %296 : vector<2x14x1xf32> to vector<2x14x14xf32>
    %298 = arith.subf %294, %297 : vector<2x14x14xf32>
    %299 = math.exp %298 : vector<2x14x14xf32>
    %cst_93 = arith.constant dense<0.000000e+00> : vector<2x14xf32>
    %300 = vector.multi_reduction <add>, %299, %cst_93 [2] : vector<2x14x14xf32> to vector<2x14xf32>
    %301 = vector.shape_cast %300 : vector<2x14xf32> to vector<2x14x1xf32>
    %302 = tpu.reciprocal %301 {approx = true} : vector<2x14x1xf32> -> vector<2x14x1xf32>
    %303 = vector.broadcast %302 : vector<2x14x1xf32> to vector<2x14x14xf32>
    %304 = arith.mulf %299, %303 : vector<2x14x14xf32>
    "tpu.trace_start"() <{level = 10 : i32, message = "bij,bjd->bid"}> : () -> ()
    %cst_94 = arith.constant dense<0.000000e+00> : vector<2x14x32xf32>
    %305 = tpu.matmul %304, %232, %cst_94 {dimension_numbers = #tpu.dot_dimension_numbers<[2], [1], [1], [2], [0, 0, 0, 1, 1, 2], [0], [0]>} : vector<2x14x14xf32>, vector<2x14x32xf32>, vector<2x14x32xf32> -> vector<2x14x32xf32>
    "tpu.trace_stop"() : () -> ()
    %306 = vector.shape_cast %31 : vector<1x32xf32> to vector<1x1x32xf32>
    %307 = vector.broadcast %306 : vector<1x1x32xf32> to vector<2x14x32xf32>
    %308 = arith.mulf %305, %307 : vector<2x14x32xf32>
    %309 = arith.addf %290, %308 : vector<2x14x32xf32>
    %c1_95 = arith.constant 1 : index
    %c32_96 = arith.constant 32 : index
    %c0_97 = arith.constant 0 : index
    %310 = vector.load %arg3[%c1_95, %c32_96, %c0_97] : memref<4x160x96xf32, #tpu.memory_space<vmem>>, vector<1x32x32xf32>
    %311 = vector.shape_cast %310 : vector<1x32x32xf32> to vector<32x32xf32>
    "tpu.trace_start"() <{level = 10 : i32, message = "bnd,de->bne"}> : () -> ()
    %cst_98 = arith.constant dense<0.000000e+00> : vector<2x14x32xf32>
    %312 = tpu.matmul %309, %311, %cst_98 {dimension_numbers = #tpu.dot_dimension_numbers<[2], [0], [0, 1], [1], [0, 0, 0, 1, 1, 1], [], []>} : vector<2x14x32xf32>, vector<32x32xf32>, vector<2x14x32xf32> -> vector<2x14x32xf32>
    "tpu.trace_stop"() : () -> ()
    %c1_99 = arith.constant 1 : index
    %c4_100 = arith.constant 4 : index
    %c0_101 = arith.constant 0 : index
    %313 = vector.load %arg4[%c1_99, %c4_100, %c0_101] : memref<6x8x128xf32, #tpu.memory_space<vmem>>, vector<1x1x32xf32>
    %314 = vector.shape_cast %313 : vector<1x1x32xf32> to vector<1x32xf32>
    %315 = vector.shape_cast %314 : vector<1x32xf32> to vector<1x1x32xf32>
    %316 = vector.broadcast %315 : vector<1x1x32xf32> to vector<2x14x32xf32>
    %317 = arith.addf %312, %316 : vector<2x14x32xf32>
    %318 = arith.addf %317, %198 : vector<2x14x32xf32>
    %c1_102 = arith.constant 1 : index
    %c2_103 = arith.constant 2 : index
    %c0_104 = arith.constant 0 : index
    %319 = vector.load %arg4[%c1_102, %c2_103, %c0_104] : memref<6x8x128xf32, #tpu.memory_space<vmem>>, vector<1x1x32xf32>
    %320 = vector.shape_cast %319 : vector<1x1x32xf32> to vector<1x32xf32>
    %c1_105 = arith.constant 1 : index
    %c3_106 = arith.constant 3 : index
    %c0_107 = arith.constant 0 : index
    %321 = vector.load %arg4[%c1_105, %c3_106, %c0_107] : memref<6x8x128xf32, #tpu.memory_space<vmem>>, vector<1x1x32xf32>
    %322 = vector.shape_cast %321 : vector<1x1x32xf32> to vector<1x32xf32>
    %cst_108 = arith.constant dense<0.000000e+00> : vector<2x14xf32>
    %323 = vector.multi_reduction <add>, %318, %cst_108 [2] : vector<2x14x32xf32> to vector<2x14xf32>
    %324 = vector.shape_cast %323 : vector<2x14xf32> to vector<2x14x1xf32>
    %cst_109 = arith.constant 3.200000e+01 : f32
    %325 = vector.broadcast %cst_109 : f32 to vector<2x14x1xf32>
    %326 = arith.divf %324, %325 : vector<2x14x1xf32>
    %327 = arith.mulf %318, %318 : vector<2x14x32xf32>
    %cst_110 = arith.constant dense<0.000000e+00> : vector<2x14xf32>
    %328 = vector.multi_reduction <add>, %327, %cst_110 [2] : vector<2x14x32xf32> to vector<2x14xf32>
    %329 = vector.shape_cast %328 : vector<2x14xf32> to vector<2x14x1xf32>
    %cst_111 = arith.constant 3.200000e+01 : f32
    %330 = vector.broadcast %cst_111 : f32 to vector<2x14x1xf32>
    %331 = arith.divf %329, %330 : vector<2x14x1xf32>
    %332 = vector.broadcast %326 : vector<2x14x1xf32> to vector<2x14x32xf32>
    %333 = arith.subf %318, %332 : vector<2x14x32xf32>
    %334 = arith.mulf %326, %326 : vector<2x14x1xf32>
    %335 = arith.subf %331, %334 : vector<2x14x1xf32>
    %cst_112 = arith.constant 9.99999974E-6 : f32
    %336 = vector.broadcast %cst_112 : f32 to vector<2x14x1xf32>
    %337 = arith.addf %335, %336 : vector<2x14x1xf32>
    %338 = math.rsqrt %337 : vector<2x14x1xf32>
    %339 = vector.broadcast %338 : vector<2x14x1xf32> to vector<2x14x32xf32>
    %340 = arith.mulf %333, %339 : vector<2x14x32xf32>
    %341 = vector.shape_cast %320 : vector<1x32xf32> to vector<1x1x32xf32>
    %342 = vector.broadcast %341 : vector<1x1x32xf32> to vector<2x14x32xf32>
    %343 = arith.mulf %340, %342 : vector<2x14x32xf32>
    %344 = vector.shape_cast %322 : vector<1x32xf32> to vector<1x1x32xf32>
    %345 = vector.broadcast %344 : vector<1x1x32xf32> to vector<2x14x32xf32>
    %346 = arith.addf %343, %345 : vector<2x14x32xf32>
    %c1_113 = arith.constant 1 : index
    %c64_114 = arith.constant 64 : index
    %c0_115 = arith.constant 0 : index
    %347 = vector.load %arg3[%c1_113, %c64_114, %c0_115] : memref<4x160x96xf32, #tpu.memory_space<vmem>>, vector<1x32x64xf32>
    %348 = vector.shape_cast %347 : vector<1x32x64xf32> to vector<32x64xf32>
    "tpu.trace_start"() <{level = 10 : i32, message = "bnd,dm->bnm"}> : () -> ()
    %cst_116 = arith.constant dense<0.000000e+00> : vector<2x14x64xf32>
    %349 = tpu.matmul %346, %348, %cst_116 {dimension_numbers = #tpu.dot_dimension_numbers<[2], [0], [0, 1], [1], [0, 0, 0, 1, 1, 1], [], []>} : vector<2x14x32xf32>, vector<32x64xf32>, vector<2x14x64xf32> -> vector<2x14x64xf32>
    "tpu.trace_stop"() : () -> ()
    %c1_117 = arith.constant 1 : index
    %c6_118 = arith.constant 6 : index
    %c0_119 = arith.constant 0 : index
    %350 = vector.load %arg4[%c1_117, %c6_118, %c0_119] : memref<6x8x128xf32, #tpu.memory_space<vmem>>, vector<1x1x64xf32>
    %351 = vector.shape_cast %350 : vector<1x1x64xf32> to vector<1x64xf32>
    %352 = vector.shape_cast %351 : vector<1x64xf32> to vector<1x1x64xf32>
    %353 = vector.broadcast %352 : vector<1x1x64xf32> to vector<2x14x64xf32>
    %354 = arith.addf %349, %353 : vector<2x14x64xf32>
    %cst_120 = arith.constant 0.000000e+00 : f32
    %355 = vector.broadcast %cst_120 : f32 to vector<2x14x64xf32>
    %356 = arith.maximumf %354, %355 : vector<2x14x64xf32>
    %c1_121 = arith.constant 1 : index
    %c96_122 = arith.constant 96 : index
    %c0_123 = arith.constant 0 : index
    %357 = vector.load %arg3[%c1_121, %c96_122, %c0_123] : memref<4x160x96xf32, #tpu.memory_space<vmem>>, vector<1x64x32xf32>
    %358 = vector.shape_cast %357 : vector<1x64x32xf32> to vector<64x32xf32>
    "tpu.trace_start"() <{level = 10 : i32, message = "bnm,md->bnd"}> : () -> ()
    %cst_124 = arith.constant dense<0.000000e+00> : vector<2x14x32xf32>
    %359 = tpu.matmul %356, %358, %cst_124 {dimension_numbers = #tpu.dot_dimension_numbers<[2], [0], [0, 1], [1], [0, 0, 0, 1, 1, 1], [], []>} : vector<2x14x64xf32>, vector<64x32xf32>, vector<2x14x32xf32> -> vector<2x14x32xf32>
    "tpu.trace_stop"() : () -> ()
    %c1_125 = arith.constant 1 : index
    %c5_126 = arith.constant 5 : index
    %c0_127 = arith.constant 0 : index
    %360 = vector.load %arg4[%c1_125, %c5_126, %c0_127] : memref<6x8x128xf32, #tpu.memory_space<vmem>>, vector<1x1x32xf32>
    %361 = vector.shape_cast %360 : vector<1x1x32xf32> to vector<1x32xf32>
    %362 = vector.shape_cast %361 : vector<1x32xf32> to vector<1x1x32xf32>
    %363 = vector.broadcast %362 : vector<1x1x32xf32> to vector<2x14x32xf32>
    %364 = arith.addf %359, %363 : vector<2x14x32xf32>
    %365 = arith.addf %364, %318 : vector<2x14x32xf32>
    %c2_128 = arith.constant 2 : index
    %c0_129 = arith.constant 0 : index
    %c0_130 = arith.constant 0 : index
    %366 = vector.load %arg4[%c2_128, %c0_129, %c0_130] : memref<6x8x128xf32, #tpu.memory_space<vmem>>, vector<1x1x32xf32>
    %367 = vector.shape_cast %366 : vector<1x1x32xf32> to vector<1x32xf32>
    %c2_131 = arith.constant 2 : index
    %c1_132 = arith.constant 1 : index
    %c0_133 = arith.constant 0 : index
    %368 = vector.load %arg4[%c2_131, %c1_132, %c0_133] : memref<6x8x128xf32, #tpu.memory_space<vmem>>, vector<1x1x32xf32>
    %369 = vector.shape_cast %368 : vector<1x1x32xf32> to vector<1x32xf32>
    %cst_134 = arith.constant dense<0.000000e+00> : vector<2x14xf32>
    %370 = vector.multi_reduction <add>, %365, %cst_134 [2] : vector<2x14x32xf32> to vector<2x14xf32>
    %371 = vector.shape_cast %370 : vector<2x14xf32> to vector<2x14x1xf32>
    %cst_135 = arith.constant 3.200000e+01 : f32
    %372 = vector.broadcast %cst_135 : f32 to vector<2x14x1xf32>
    %373 = arith.divf %371, %372 : vector<2x14x1xf32>
    %374 = arith.mulf %365, %365 : vector<2x14x32xf32>
    %cst_136 = arith.constant dense<0.000000e+00> : vector<2x14xf32>
    %375 = vector.multi_reduction <add>, %374, %cst_136 [2] : vector<2x14x32xf32> to vector<2x14xf32>
    %376 = vector.shape_cast %375 : vector<2x14xf32> to vector<2x14x1xf32>
    %cst_137 = arith.constant 3.200000e+01 : f32
    %377 = vector.broadcast %cst_137 : f32 to vector<2x14x1xf32>
    %378 = arith.divf %376, %377 : vector<2x14x1xf32>
    %379 = vector.broadcast %373 : vector<2x14x1xf32> to vector<2x14x32xf32>
    %380 = arith.subf %365, %379 : vector<2x14x32xf32>
    %381 = arith.mulf %373, %373 : vector<2x14x1xf32>
    %382 = arith.subf %378, %381 : vector<2x14x1xf32>
    %cst_138 = arith.constant 9.99999974E-6 : f32
    %383 = vector.broadcast %cst_138 : f32 to vector<2x14x1xf32>
    %384 = arith.addf %382, %383 : vector<2x14x1xf32>
    %385 = math.rsqrt %384 : vector<2x14x1xf32>
    %386 = vector.broadcast %385 : vector<2x14x1xf32> to vector<2x14x32xf32>
    %387 = arith.mulf %380, %386 : vector<2x14x32xf32>
    %388 = vector.shape_cast %367 : vector<1x32xf32> to vector<1x1x32xf32>
    %389 = vector.broadcast %388 : vector<1x1x32xf32> to vector<2x14x32xf32>
    %390 = arith.mulf %387, %389 : vector<2x14x32xf32>
    %391 = vector.shape_cast %369 : vector<1x32xf32> to vector<1x1x32xf32>
    %392 = vector.broadcast %391 : vector<1x1x32xf32> to vector<2x14x32xf32>
    %393 = arith.addf %390, %392 : vector<2x14x32xf32>
    %c2_139 = arith.constant 2 : index
    %c0_140 = arith.constant 0 : index
    %c0_141 = arith.constant 0 : index
    %394 = vector.load %arg3[%c2_139, %c0_140, %c0_141] : memref<4x160x96xf32, #tpu.memory_space<vmem>>, vector<1x32x96xf32>
    %395 = vector.shape_cast %394 : vector<1x32x96xf32> to vector<32x96xf32>
    "tpu.trace_start"() <{level = 10 : i32, message = "bnd,de->bne"}> : () -> ()
    %cst_142 = arith.constant dense<0.000000e+00> : vector<2x14x96xf32>
    %396 = tpu.matmul %393, %395, %cst_142 {dimension_numbers = #tpu.dot_dimension_numbers<[2], [0], [0, 1], [1], [0, 0, 0, 1, 1, 1], [], []>} : vector<2x14x32xf32>, vector<32x96xf32>, vector<2x14x96xf32> -> vector<2x14x96xf32>
    "tpu.trace_stop"() : () -> ()
    %397 = vector.extract_strided_slice %396 {offsets = [0, 0, 0], sizes = [2, 14, 32], strides = [1, 1, 1]} : vector<2x14x96xf32> to vector<2x14x32xf32>
    %398 = vector.extract_strided_slice %396 {offsets = [0, 0, 32], sizes = [2, 14, 32], strides = [1, 1, 1]} : vector<2x14x96xf32> to vector<2x14x32xf32>
    %399 = vector.extract_strided_slice %396 {offsets = [0, 0, 64], sizes = [2, 14, 32], strides = [1, 1, 1]} : vector<2x14x96xf32> to vector<2x14x32xf32>
    %cst_143 = arith.constant 0.000000e+00 : f32
    %400 = vector.broadcast %cst_143 : f32 to vector<2x14x32xf32>
    %401 = vector.shape_cast %10 : vector<1x32xf32> to vector<1x1x32xf32>
    %402 = vector.broadcast %401 : vector<1x1x32xf32> to vector<2x14x32xf32>
    %403 = arith.mulf %397, %402 : vector<2x14x32xf32>
    "tpu.trace_start"() <{level = 10 : i32, message = "bid,bjd->bij"}> : () -> ()
    %cst_144 = arith.constant dense<0.000000e+00> : vector<2x14x14xf32>
    %404 = tpu.matmul %403, %398, %cst_144 {dimension_numbers = #tpu.dot_dimension_numbers<[2], [2], [1], [1], [0, 0, 0, 1, 1, 1], [0], [0]>} : vector<2x14x32xf32>, vector<2x14x32xf32>, vector<2x14x14xf32> -> vector<2x14x14xf32>
    "tpu.trace_stop"() : () -> ()
    %cst_145 = arith.constant dense<0xFF800000> : vector<2x14xf32>
    %405 = vector.multi_reduction <maximumf>, %404, %cst_145 [2] : vector<2x14x14xf32> to vector<2x14xf32>
    %406 = vector.shape_cast %405 : vector<2x14xf32> to vector<2x14x1xf32>
    %407 = vector.broadcast %406 : vector<2x14x1xf32> to vector<2x14x14xf32>
    %408 = arith.subf %404, %407 : vector<2x14x14xf32>
    %409 = math.exp %408 : vector<2x14x14xf32>
    %cst_146 = arith.constant dense<0.000000e+00> : vector<2x14xf32>
    %410 = vector.multi_reduction <add>, %409, %cst_146 [2] : vector<2x14x14xf32> to vector<2x14xf32>
    %411 = vector.shape_cast %410 : vector<2x14xf32> to vector<2x14x1xf32>
    %412 = tpu.reciprocal %411 {approx = true} : vector<2x14x1xf32> -> vector<2x14x1xf32>
    %413 = vector.broadcast %412 : vector<2x14x1xf32> to vector<2x14x14xf32>
    %414 = arith.mulf %409, %413 : vector<2x14x14xf32>
    "tpu.trace_start"() <{level = 10 : i32, message = "bij,bjd->bid"}> : () -> ()
    %cst_147 = arith.constant dense<0.000000e+00> : vector<2x14x32xf32>
    %415 = tpu.matmul %414, %399, %cst_147 {dimension_numbers = #tpu.dot_dimension_numbers<[2], [1], [1], [2], [0, 0, 0, 1, 1, 2], [0], [0]>} : vector<2x14x14xf32>, vector<2x14x32xf32>, vector<2x14x32xf32> -> vector<2x14x32xf32>
    "tpu.trace_stop"() : () -> ()
    %416 = vector.shape_cast %10 : vector<1x32xf32> to vector<1x1x32xf32>
    %417 = vector.broadcast %416 : vector<1x1x32xf32> to vector<2x14x32xf32>
    %418 = arith.mulf %415, %417 : vector<2x14x32xf32>
    %419 = arith.addf %400, %418 : vector<2x14x32xf32>
    %420 = vector.shape_cast %17 : vector<1x32xf32> to vector<1x1x32xf32>
    %421 = vector.broadcast %420 : vector<1x1x32xf32> to vector<2x14x32xf32>
    %422 = arith.mulf %397, %421 : vector<2x14x32xf32>
    "tpu.trace_start"() <{level = 10 : i32, message = "bid,bjd->bij"}> : () -> ()
    %cst_148 = arith.constant dense<0.000000e+00> : vector<2x14x14xf32>
    %423 = tpu.matmul %422, %398, %cst_148 {dimension_numbers = #tpu.dot_dimension_numbers<[2], [2], [1], [1], [0, 0, 0, 1, 1, 1], [0], [0]>} : vector<2x14x32xf32>, vector<2x14x32xf32>, vector<2x14x14xf32> -> vector<2x14x14xf32>
    "tpu.trace_stop"() : () -> ()
    %cst_149 = arith.constant dense<0xFF800000> : vector<2x14xf32>
    %424 = vector.multi_reduction <maximumf>, %423, %cst_149 [2] : vector<2x14x14xf32> to vector<2x14xf32>
    %425 = vector.shape_cast %424 : vector<2x14xf32> to vector<2x14x1xf32>
    %426 = vector.broadcast %425 : vector<2x14x1xf32> to vector<2x14x14xf32>
    %427 = arith.subf %423, %426 : vector<2x14x14xf32>
    %428 = math.exp %427 : vector<2x14x14xf32>
    %cst_150 = arith.constant dense<0.000000e+00> : vector<2x14xf32>
    %429 = vector.multi_reduction <add>, %428, %cst_150 [2] : vector<2x14x14xf32> to vector<2x14xf32>
    %430 = vector.shape_cast %429 : vector<2x14xf32> to vector<2x14x1xf32>
    %431 = tpu.reciprocal %430 {approx = true} : vector<2x14x1xf32> -> vector<2x14x1xf32>
    %432 = vector.broadcast %431 : vector<2x14x1xf32> to vector<2x14x14xf32>
    %433 = arith.mulf %428, %432 : vector<2x14x14xf32>
    "tpu.trace_start"() <{level = 10 : i32, message = "bij,bjd->bid"}> : () -> ()
    %cst_151 = arith.constant dense<0.000000e+00> : vector<2x14x32xf32>
    %434 = tpu.matmul %433, %399, %cst_151 {dimension_numbers = #tpu.dot_dimension_numbers<[2], [1], [1], [2], [0, 0, 0, 1, 1, 2], [0], [0]>} : vector<2x14x14xf32>, vector<2x14x32xf32>, vector<2x14x32xf32> -> vector<2x14x32xf32>
    "tpu.trace_stop"() : () -> ()
    %435 = vector.shape_cast %17 : vector<1x32xf32> to vector<1x1x32xf32>
    %436 = vector.broadcast %435 : vector<1x1x32xf32> to vector<2x14x32xf32>
    %437 = arith.mulf %434, %436 : vector<2x14x32xf32>
    %438 = arith.addf %419, %437 : vector<2x14x32xf32>
    %439 = vector.shape_cast %24 : vector<1x32xf32> to vector<1x1x32xf32>
    %440 = vector.broadcast %439 : vector<1x1x32xf32> to vector<2x14x32xf32>
    %441 = arith.mulf %397, %440 : vector<2x14x32xf32>
    "tpu.trace_start"() <{level = 10 : i32, message = "bid,bjd->bij"}> : () -> ()
    %cst_152 = arith.constant dense<0.000000e+00> : vector<2x14x14xf32>
    %442 = tpu.matmul %441, %398, %cst_152 {dimension_numbers = #tpu.dot_dimension_numbers<[2], [2], [1], [1], [0, 0, 0, 1, 1, 1], [0], [0]>} : vector<2x14x32xf32>, vector<2x14x32xf32>, vector<2x14x14xf32> -> vector<2x14x14xf32>
    "tpu.trace_stop"() : () -> ()
    %cst_153 = arith.constant dense<0xFF800000> : vector<2x14xf32>
    %443 = vector.multi_reduction <maximumf>, %442, %cst_153 [2] : vector<2x14x14xf32> to vector<2x14xf32>
    %444 = vector.shape_cast %443 : vector<2x14xf32> to vector<2x14x1xf32>
    %445 = vector.broadcast %444 : vector<2x14x1xf32> to vector<2x14x14xf32>
    %446 = arith.subf %442, %445 : vector<2x14x14xf32>
    %447 = math.exp %446 : vector<2x14x14xf32>
    %cst_154 = arith.constant dense<0.000000e+00> : vector<2x14xf32>
    %448 = vector.multi_reduction <add>, %447, %cst_154 [2] : vector<2x14x14xf32> to vector<2x14xf32>
    %449 = vector.shape_cast %448 : vector<2x14xf32> to vector<2x14x1xf32>
    %450 = tpu.reciprocal %449 {approx = true} : vector<2x14x1xf32> -> vector<2x14x1xf32>
    %451 = vector.broadcast %450 : vector<2x14x1xf32> to vector<2x14x14xf32>
    %452 = arith.mulf %447, %451 : vector<2x14x14xf32>
    "tpu.trace_start"() <{level = 10 : i32, message = "bij,bjd->bid"}> : () -> ()
    %cst_155 = arith.constant dense<0.000000e+00> : vector<2x14x32xf32>
    %453 = tpu.matmul %452, %399, %cst_155 {dimension_numbers = #tpu.dot_dimension_numbers<[2], [1], [1], [2], [0, 0, 0, 1, 1, 2], [0], [0]>} : vector<2x14x14xf32>, vector<2x14x32xf32>, vector<2x14x32xf32> -> vector<2x14x32xf32>
    "tpu.trace_stop"() : () -> ()
    %454 = vector.shape_cast %24 : vector<1x32xf32> to vector<1x1x32xf32>
    %455 = vector.broadcast %454 : vector<1x1x32xf32> to vector<2x14x32xf32>
    %456 = arith.mulf %453, %455 : vector<2x14x32xf32>
    %457 = arith.addf %438, %456 : vector<2x14x32xf32>
    %458 = vector.shape_cast %31 : vector<1x32xf32> to vector<1x1x32xf32>
    %459 = vector.broadcast %458 : vector<1x1x32xf32> to vector<2x14x32xf32>
    %460 = arith.mulf %397, %459 : vector<2x14x32xf32>
    "tpu.trace_start"() <{level = 10 : i32, message = "bid,bjd->bij"}> : () -> ()
    %cst_156 = arith.constant dense<0.000000e+00> : vector<2x14x14xf32>
    %461 = tpu.matmul %460, %398, %cst_156 {dimension_numbers = #tpu.dot_dimension_numbers<[2], [2], [1], [1], [0, 0, 0, 1, 1, 1], [0], [0]>} : vector<2x14x32xf32>, vector<2x14x32xf32>, vector<2x14x14xf32> -> vector<2x14x14xf32>
    "tpu.trace_stop"() : () -> ()
    %cst_157 = arith.constant dense<0xFF800000> : vector<2x14xf32>
    %462 = vector.multi_reduction <maximumf>, %461, %cst_157 [2] : vector<2x14x14xf32> to vector<2x14xf32>
    %463 = vector.shape_cast %462 : vector<2x14xf32> to vector<2x14x1xf32>
    %464 = vector.broadcast %463 : vector<2x14x1xf32> to vector<2x14x14xf32>
    %465 = arith.subf %461, %464 : vector<2x14x14xf32>
    %466 = math.exp %465 : vector<2x14x14xf32>
    %cst_158 = arith.constant dense<0.000000e+00> : vector<2x14xf32>
    %467 = vector.multi_reduction <add>, %466, %cst_158 [2] : vector<2x14x14xf32> to vector<2x14xf32>
    %468 = vector.shape_cast %467 : vector<2x14xf32> to vector<2x14x1xf32>
    %469 = tpu.reciprocal %468 {approx = true} : vector<2x14x1xf32> -> vector<2x14x1xf32>
    %470 = vector.broadcast %469 : vector<2x14x1xf32> to vector<2x14x14xf32>
    %471 = arith.mulf %466, %470 : vector<2x14x14xf32>
    "tpu.trace_start"() <{level = 10 : i32, message = "bij,bjd->bid"}> : () -> ()
    %cst_159 = arith.constant dense<0.000000e+00> : vector<2x14x32xf32>
    %472 = tpu.matmul %471, %399, %cst_159 {dimension_numbers = #tpu.dot_dimension_numbers<[2], [1], [1], [2], [0, 0, 0, 1, 1, 2], [0], [0]>} : vector<2x14x14xf32>, vector<2x14x32xf32>, vector<2x14x32xf32> -> vector<2x14x32xf32>
    "tpu.trace_stop"() : () -> ()
    %473 = vector.shape_cast %31 : vector<1x32xf32> to vector<1x1x32xf32>
    %474 = vector.broadcast %473 : vector<1x1x32xf32> to vector<2x14x32xf32>
    %475 = arith.mulf %472, %474 : vector<2x14x32xf32>
    %476 = arith.addf %457, %475 : vector<2x14x32xf32>
    %c2_160 = arith.constant 2 : index
    %c32_161 = arith.constant 32 : index
    %c0_162 = arith.constant 0 : index
    %477 = vector.load %arg3[%c2_160, %c32_161, %c0_162] : memref<4x160x96xf32, #tpu.memory_space<vmem>>, vector<1x32x32xf32>
    %478 = vector.shape_cast %477 : vector<1x32x32xf32> to vector<32x32xf32>
    "tpu.trace_start"() <{level = 10 : i32, message = "bnd,de->bne"}> : () -> ()
    %cst_163 = arith.constant dense<0.000000e+00> : vector<2x14x32xf32>
    %479 = tpu.matmul %476, %478, %cst_163 {dimension_numbers = #tpu.dot_dimension_numbers<[2], [0], [0, 1], [1], [0, 0, 0, 1, 1, 1], [], []>} : vector<2x14x32xf32>, vector<32x32xf32>, vector<2x14x32xf32> -> vector<2x14x32xf32>
    "tpu.trace_stop"() : () -> ()
    %c2_164 = arith.constant 2 : index
    %c4_165 = arith.constant 4 : index
    %c0_166 = arith.constant 0 : index
    %480 = vector.load %arg4[%c2_164, %c4_165, %c0_166] : memref<6x8x128xf32, #tpu.memory_space<vmem>>, vector<1x1x32xf32>
    %481 = vector.shape_cast %480 : vector<1x1x32xf32> to vector<1x32xf32>
    %482 = vector.shape_cast %481 : vector<1x32xf32> to vector<1x1x32xf32>
    %483 = vector.broadcast %482 : vector<1x1x32xf32> to vector<2x14x32xf32>
    %484 = arith.addf %479, %483 : vector<2x14x32xf32>
    %485 = arith.addf %484, %365 : vector<2x14x32xf32>
    %c2_167 = arith.constant 2 : index
    %c2_168 = arith.constant 2 : index
    %c0_169 = arith.constant 0 : index
    %486 = vector.load %arg4[%c2_167, %c2_168, %c0_169] : memref<6x8x128xf32, #tpu.memory_space<vmem>>, vector<1x1x32xf32>
    %487 = vector.shape_cast %486 : vector<1x1x32xf32> to vector<1x32xf32>
    %c2_170 = arith.constant 2 : index
    %c3_171 = arith.constant 3 : index
    %c0_172 = arith.constant 0 : index
    %488 = vector.load %arg4[%c2_170, %c3_171, %c0_172] : memref<6x8x128xf32, #tpu.memory_space<vmem>>, vector<1x1x32xf32>
    %489 = vector.shape_cast %488 : vector<1x1x32xf32> to vector<1x32xf32>
    %cst_173 = arith.constant dense<0.000000e+00> : vector<2x14xf32>
    %490 = vector.multi_reduction <add>, %485, %cst_173 [2] : vector<2x14x32xf32> to vector<2x14xf32>
    %491 = vector.shape_cast %490 : vector<2x14xf32> to vector<2x14x1xf32>
    %cst_174 = arith.constant 3.200000e+01 : f32
    %492 = vector.broadcast %cst_174 : f32 to vector<2x14x1xf32>
    %493 = arith.divf %491, %492 : vector<2x14x1xf32>
    %494 = arith.mulf %485, %485 : vector<2x14x32xf32>
    %cst_175 = arith.constant dense<0.000000e+00> : vector<2x14xf32>
    %495 = vector.multi_reduction <add>, %494, %cst_175 [2] : vector<2x14x32xf32> to vector<2x14xf32>
    %496 = vector.shape_cast %495 : vector<2x14xf32> to vector<2x14x1xf32>
    %cst_176 = arith.constant 3.200000e+01 : f32
    %497 = vector.broadcast %cst_176 : f32 to vector<2x14x1xf32>
    %498 = arith.divf %496, %497 : vector<2x14x1xf32>
    %499 = vector.broadcast %493 : vector<2x14x1xf32> to vector<2x14x32xf32>
    %500 = arith.subf %485, %499 : vector<2x14x32xf32>
    %501 = arith.mulf %493, %493 : vector<2x14x1xf32>
    %502 = arith.subf %498, %501 : vector<2x14x1xf32>
    %cst_177 = arith.constant 9.99999974E-6 : f32
    %503 = vector.broadcast %cst_177 : f32 to vector<2x14x1xf32>
    %504 = arith.addf %502, %503 : vector<2x14x1xf32>
    %505 = math.rsqrt %504 : vector<2x14x1xf32>
    %506 = vector.broadcast %505 : vector<2x14x1xf32> to vector<2x14x32xf32>
    %507 = arith.mulf %500, %506 : vector<2x14x32xf32>
    %508 = vector.shape_cast %487 : vector<1x32xf32> to vector<1x1x32xf32>
    %509 = vector.broadcast %508 : vector<1x1x32xf32> to vector<2x14x32xf32>
    %510 = arith.mulf %507, %509 : vector<2x14x32xf32>
    %511 = vector.shape_cast %489 : vector<1x32xf32> to vector<1x1x32xf32>
    %512 = vector.broadcast %511 : vector<1x1x32xf32> to vector<2x14x32xf32>
    %513 = arith.addf %510, %512 : vector<2x14x32xf32>
    %c2_178 = arith.constant 2 : index
    %c64_179 = arith.constant 64 : index
    %c0_180 = arith.constant 0 : index
    %514 = vector.load %arg3[%c2_178, %c64_179, %c0_180] : memref<4x160x96xf32, #tpu.memory_space<vmem>>, vector<1x32x64xf32>
    %515 = vector.shape_cast %514 : vector<1x32x64xf32> to vector<32x64xf32>
    "tpu.trace_start"() <{level = 10 : i32, message = "bnd,dm->bnm"}> : () -> ()
    %cst_181 = arith.constant dense<0.000000e+00> : vector<2x14x64xf32>
    %516 = tpu.matmul %513, %515, %cst_181 {dimension_numbers = #tpu.dot_dimension_numbers<[2], [0], [0, 1], [1], [0, 0, 0, 1, 1, 1], [], []>} : vector<2x14x32xf32>, vector<32x64xf32>, vector<2x14x64xf32> -> vector<2x14x64xf32>
    "tpu.trace_stop"() : () -> ()
    %c2_182 = arith.constant 2 : index
    %c6_183 = arith.constant 6 : index
    %c0_184 = arith.constant 0 : index
    %517 = vector.load %arg4[%c2_182, %c6_183, %c0_184] : memref<6x8x128xf32, #tpu.memory_space<vmem>>, vector<1x1x64xf32>
    %518 = vector.shape_cast %517 : vector<1x1x64xf32> to vector<1x64xf32>
    %519 = vector.shape_cast %518 : vector<1x64xf32> to vector<1x1x64xf32>
    %520 = vector.broadcast %519 : vector<1x1x64xf32> to vector<2x14x64xf32>
    %521 = arith.addf %516, %520 : vector<2x14x64xf32>
    %cst_185 = arith.constant 0.000000e+00 : f32
    %522 = vector.broadcast %cst_185 : f32 to vector<2x14x64xf32>
    %523 = arith.maximumf %521, %522 : vector<2x14x64xf32>
    %c2_186 = arith.constant 2 : index
    %c96_187 = arith.constant 96 : index
    %c0_188 = arith.constant 0 : index
    %524 = vector.load %arg3[%c2_186, %c96_187, %c0_188] : memref<4x160x96xf32, #tpu.memory_space<vmem>>, vector<1x64x32xf32>
    %525 = vector.shape_cast %524 : vector<1x64x32xf32> to vector<64x32xf32>
    "tpu.trace_start"() <{level = 10 : i32, message = "bnm,md->bnd"}> : () -> ()
    %cst_189 = arith.constant dense<0.000000e+00> : vector<2x14x32xf32>
    %526 = tpu.matmul %523, %525, %cst_189 {dimension_numbers = #tpu.dot_dimension_numbers<[2], [0], [0, 1], [1], [0, 0, 0, 1, 1, 1], [], []>} : vector<2x14x64xf32>, vector<64x32xf32>, vector<2x14x32xf32> -> vector<2x14x32xf32>
    "tpu.trace_stop"() : () -> ()
    %c2_190 = arith.constant 2 : index
    %c5_191 = arith.constant 5 : index
    %c0_192 = arith.constant 0 : index
    %527 = vector.load %arg4[%c2_190, %c5_191, %c0_192] : memref<6x8x128xf32, #tpu.memory_space<vmem>>, vector<1x1x32xf32>
    %528 = vector.shape_cast %527 : vector<1x1x32xf32> to vector<1x32xf32>
    %529 = vector.shape_cast %528 : vector<1x32xf32> to vector<1x1x32xf32>
    %530 = vector.broadcast %529 : vector<1x1x32xf32> to vector<2x14x32xf32>
    %531 = arith.addf %526, %530 : vector<2x14x32xf32>
    %532 = arith.addf %531, %485 : vector<2x14x32xf32>
    %c3_193 = arith.constant 3 : index
    %c0_194 = arith.constant 0 : index
    %c0_195 = arith.constant 0 : index
    %533 = vector.load %arg4[%c3_193, %c0_194, %c0_195] : memref<6x8x128xf32, #tpu.memory_space<vmem>>, vector<1x1x32xf32>
    %534 = vector.shape_cast %533 : vector<1x1x32xf32> to vector<1x32xf32>
    %c3_196 = arith.constant 3 : index
    %c1_197 = arith.constant 1 : index
    %c0_198 = arith.constant 0 : index
    %535 = vector.load %arg4[%c3_196, %c1_197, %c0_198] : memref<6x8x128xf32, #tpu.memory_space<vmem>>, vector<1x1x32xf32>
    %536 = vector.shape_cast %535 : vector<1x1x32xf32> to vector<1x32xf32>
    %cst_199 = arith.constant dense<0.000000e+00> : vector<2x14xf32>
    %537 = vector.multi_reduction <add>, %532, %cst_199 [2] : vector<2x14x32xf32> to vector<2x14xf32>
    %538 = vector.shape_cast %537 : vector<2x14xf32> to vector<2x14x1xf32>
    %cst_200 = arith.constant 3.200000e+01 : f32
    %539 = vector.broadcast %cst_200 : f32 to vector<2x14x1xf32>
    %540 = arith.divf %538, %539 : vector<2x14x1xf32>
    %541 = arith.mulf %532, %532 : vector<2x14x32xf32>
    %cst_201 = arith.constant dense<0.000000e+00> : vector<2x14xf32>
    %542 = vector.multi_reduction <add>, %541, %cst_201 [2] : vector<2x14x32xf32> to vector<2x14xf32>
    %543 = vector.shape_cast %542 : vector<2x14xf32> to vector<2x14x1xf32>
    %cst_202 = arith.constant 3.200000e+01 : f32
    %544 = vector.broadcast %cst_202 : f32 to vector<2x14x1xf32>
    %545 = arith.divf %543, %544 : vector<2x14x1xf32>
    %546 = vector.broadcast %540 : vector<2x14x1xf32> to vector<2x14x32xf32>
    %547 = arith.subf %532, %546 : vector<2x14x32xf32>
    %548 = arith.mulf %540, %540 : vector<2x14x1xf32>
    %549 = arith.subf %545, %548 : vector<2x14x1xf32>
    %cst_203 = arith.constant 9.99999974E-6 : f32
    %550 = vector.broadcast %cst_203 : f32 to vector<2x14x1xf32>
    %551 = arith.addf %549, %550 : vector<2x14x1xf32>
    %552 = math.rsqrt %551 : vector<2x14x1xf32>
    %553 = vector.broadcast %552 : vector<2x14x1xf32> to vector<2x14x32xf32>
    %554 = arith.mulf %547, %553 : vector<2x14x32xf32>
    %555 = vector.shape_cast %534 : vector<1x32xf32> to vector<1x1x32xf32>
    %556 = vector.broadcast %555 : vector<1x1x32xf32> to vector<2x14x32xf32>
    %557 = arith.mulf %554, %556 : vector<2x14x32xf32>
    %558 = vector.shape_cast %536 : vector<1x32xf32> to vector<1x1x32xf32>
    %559 = vector.broadcast %558 : vector<1x1x32xf32> to vector<2x14x32xf32>
    %560 = arith.addf %557, %559 : vector<2x14x32xf32>
    %c3_204 = arith.constant 3 : index
    %c0_205 = arith.constant 0 : index
    %c0_206 = arith.constant 0 : index
    %561 = vector.load %arg3[%c3_204, %c0_205, %c0_206] : memref<4x160x96xf32, #tpu.memory_space<vmem>>, vector<1x32x96xf32>
    %562 = vector.shape_cast %561 : vector<1x32x96xf32> to vector<32x96xf32>
    "tpu.trace_start"() <{level = 10 : i32, message = "bnd,de->bne"}> : () -> ()
    %cst_207 = arith.constant dense<0.000000e+00> : vector<2x14x96xf32>
    %563 = tpu.matmul %560, %562, %cst_207 {dimension_numbers = #tpu.dot_dimension_numbers<[2], [0], [0, 1], [1], [0, 0, 0, 1, 1, 1], [], []>} : vector<2x14x32xf32>, vector<32x96xf32>, vector<2x14x96xf32> -> vector<2x14x96xf32>
    "tpu.trace_stop"() : () -> ()
    %564 = vector.extract_strided_slice %563 {offsets = [0, 0, 0], sizes = [2, 14, 32], strides = [1, 1, 1]} : vector<2x14x96xf32> to vector<2x14x32xf32>
    %565 = vector.extract_strided_slice %563 {offsets = [0, 0, 32], sizes = [2, 14, 32], strides = [1, 1, 1]} : vector<2x14x96xf32> to vector<2x14x32xf32>
    %566 = vector.extract_strided_slice %563 {offsets = [0, 0, 64], sizes = [2, 14, 32], strides = [1, 1, 1]} : vector<2x14x96xf32> to vector<2x14x32xf32>
    %cst_208 = arith.constant 0.000000e+00 : f32
    %567 = vector.broadcast %cst_208 : f32 to vector<2x14x32xf32>
    %568 = vector.shape_cast %10 : vector<1x32xf32> to vector<1x1x32xf32>
    %569 = vector.broadcast %568 : vector<1x1x32xf32> to vector<2x14x32xf32>
    %570 = arith.mulf %564, %569 : vector<2x14x32xf32>
    "tpu.trace_start"() <{level = 10 : i32, message = "bid,bjd->bij"}> : () -> ()
    %cst_209 = arith.constant dense<0.000000e+00> : vector<2x14x14xf32>
    %571 = tpu.matmul %570, %565, %cst_209 {dimension_numbers = #tpu.dot_dimension_numbers<[2], [2], [1], [1], [0, 0, 0, 1, 1, 1], [0], [0]>} : vector<2x14x32xf32>, vector<2x14x32xf32>, vector<2x14x14xf32> -> vector<2x14x14xf32>
    "tpu.trace_stop"() : () -> ()
    %cst_210 = arith.constant dense<0xFF800000> : vector<2x14xf32>
    %572 = vector.multi_reduction <maximumf>, %571, %cst_210 [2] : vector<2x14x14xf32> to vector<2x14xf32>
    %573 = vector.shape_cast %572 : vector<2x14xf32> to vector<2x14x1xf32>
    %574 = vector.broadcast %573 : vector<2x14x1xf32> to vector<2x14x14xf32>
    %575 = arith.subf %571, %574 : vector<2x14x14xf32>
    %576 = math.exp %575 : vector<2x14x14xf32>
    %cst_211 = arith.constant dense<0.000000e+00> : vector<2x14xf32>
    %577 = vector.multi_reduction <add>, %576, %cst_211 [2] : vector<2x14x14xf32> to vector<2x14xf32>
    %578 = vector.shape_cast %577 : vector<2x14xf32> to vector<2x14x1xf32>
    %579 = tpu.reciprocal %578 {approx = true} : vector<2x14x1xf32> -> vector<2x14x1xf32>
    %580 = vector.broadcast %579 : vector<2x14x1xf32> to vector<2x14x14xf32>
    %581 = arith.mulf %576, %580 : vector<2x14x14xf32>
    "tpu.trace_start"() <{level = 10 : i32, message = "bij,bjd->bid"}> : () -> ()
    %cst_212 = arith.constant dense<0.000000e+00> : vector<2x14x32xf32>
    %582 = tpu.matmul %581, %566, %cst_212 {dimension_numbers = #tpu.dot_dimension_numbers<[2], [1], [1], [2], [0, 0, 0, 1, 1, 2], [0], [0]>} : vector<2x14x14xf32>, vector<2x14x32xf32>, vector<2x14x32xf32> -> vector<2x14x32xf32>
    "tpu.trace_stop"() : () -> ()
    %583 = vector.shape_cast %10 : vector<1x32xf32> to vector<1x1x32xf32>
    %584 = vector.broadcast %583 : vector<1x1x32xf32> to vector<2x14x32xf32>
    %585 = arith.mulf %582, %584 : vector<2x14x32xf32>
    %586 = arith.addf %567, %585 : vector<2x14x32xf32>
    %587 = vector.shape_cast %17 : vector<1x32xf32> to vector<1x1x32xf32>
    %588 = vector.broadcast %587 : vector<1x1x32xf32> to vector<2x14x32xf32>
    %589 = arith.mulf %564, %588 : vector<2x14x32xf32>
    "tpu.trace_start"() <{level = 10 : i32, message = "bid,bjd->bij"}> : () -> ()
    %cst_213 = arith.constant dense<0.000000e+00> : vector<2x14x14xf32>
    %590 = tpu.matmul %589, %565, %cst_213 {dimension_numbers = #tpu.dot_dimension_numbers<[2], [2], [1], [1], [0, 0, 0, 1, 1, 1], [0], [0]>} : vector<2x14x32xf32>, vector<2x14x32xf32>, vector<2x14x14xf32> -> vector<2x14x14xf32>
    "tpu.trace_stop"() : () -> ()
    %cst_214 = arith.constant dense<0xFF800000> : vector<2x14xf32>
    %591 = vector.multi_reduction <maximumf>, %590, %cst_214 [2] : vector<2x14x14xf32> to vector<2x14xf32>
    %592 = vector.shape_cast %591 : vector<2x14xf32> to vector<2x14x1xf32>
    %593 = vector.broadcast %592 : vector<2x14x1xf32> to vector<2x14x14xf32>
    %594 = arith.subf %590, %593 : vector<2x14x14xf32>
    %595 = math.exp %594 : vector<2x14x14xf32>
    %cst_215 = arith.constant dense<0.000000e+00> : vector<2x14xf32>
    %596 = vector.multi_reduction <add>, %595, %cst_215 [2] : vector<2x14x14xf32> to vector<2x14xf32>
    %597 = vector.shape_cast %596 : vector<2x14xf32> to vector<2x14x1xf32>
    %598 = tpu.reciprocal %597 {approx = true} : vector<2x14x1xf32> -> vector<2x14x1xf32>
    %599 = vector.broadcast %598 : vector<2x14x1xf32> to vector<2x14x14xf32>
    %600 = arith.mulf %595, %599 : vector<2x14x14xf32>
    "tpu.trace_start"() <{level = 10 : i32, message = "bij,bjd->bid"}> : () -> ()
    %cst_216 = arith.constant dense<0.000000e+00> : vector<2x14x32xf32>
    %601 = tpu.matmul %600, %566, %cst_216 {dimension_numbers = #tpu.dot_dimension_numbers<[2], [1], [1], [2], [0, 0, 0, 1, 1, 2], [0], [0]>} : vector<2x14x14xf32>, vector<2x14x32xf32>, vector<2x14x32xf32> -> vector<2x14x32xf32>
    "tpu.trace_stop"() : () -> ()
    %602 = vector.shape_cast %17 : vector<1x32xf32> to vector<1x1x32xf32>
    %603 = vector.broadcast %602 : vector<1x1x32xf32> to vector<2x14x32xf32>
    %604 = arith.mulf %601, %603 : vector<2x14x32xf32>
    %605 = arith.addf %586, %604 : vector<2x14x32xf32>
    %606 = vector.shape_cast %24 : vector<1x32xf32> to vector<1x1x32xf32>
    %607 = vector.broadcast %606 : vector<1x1x32xf32> to vector<2x14x32xf32>
    %608 = arith.mulf %564, %607 : vector<2x14x32xf32>
    "tpu.trace_start"() <{level = 10 : i32, message = "bid,bjd->bij"}> : () -> ()
    %cst_217 = arith.constant dense<0.000000e+00> : vector<2x14x14xf32>
    %609 = tpu.matmul %608, %565, %cst_217 {dimension_numbers = #tpu.dot_dimension_numbers<[2], [2], [1], [1], [0, 0, 0, 1, 1, 1], [0], [0]>} : vector<2x14x32xf32>, vector<2x14x32xf32>, vector<2x14x14xf32> -> vector<2x14x14xf32>
    "tpu.trace_stop"() : () -> ()
    %cst_218 = arith.constant dense<0xFF800000> : vector<2x14xf32>
    %610 = vector.multi_reduction <maximumf>, %609, %cst_218 [2] : vector<2x14x14xf32> to vector<2x14xf32>
    %611 = vector.shape_cast %610 : vector<2x14xf32> to vector<2x14x1xf32>
    %612 = vector.broadcast %611 : vector<2x14x1xf32> to vector<2x14x14xf32>
    %613 = arith.subf %609, %612 : vector<2x14x14xf32>
    %614 = math.exp %613 : vector<2x14x14xf32>
    %cst_219 = arith.constant dense<0.000000e+00> : vector<2x14xf32>
    %615 = vector.multi_reduction <add>, %614, %cst_219 [2] : vector<2x14x14xf32> to vector<2x14xf32>
    %616 = vector.shape_cast %615 : vector<2x14xf32> to vector<2x14x1xf32>
    %617 = tpu.reciprocal %616 {approx = true} : vector<2x14x1xf32> -> vector<2x14x1xf32>
    %618 = vector.broadcast %617 : vector<2x14x1xf32> to vector<2x14x14xf32>
    %619 = arith.mulf %614, %618 : vector<2x14x14xf32>
    "tpu.trace_start"() <{level = 10 : i32, message = "bij,bjd->bid"}> : () -> ()
    %cst_220 = arith.constant dense<0.000000e+00> : vector<2x14x32xf32>
    %620 = tpu.matmul %619, %566, %cst_220 {dimension_numbers = #tpu.dot_dimension_numbers<[2], [1], [1], [2], [0, 0, 0, 1, 1, 2], [0], [0]>} : vector<2x14x14xf32>, vector<2x14x32xf32>, vector<2x14x32xf32> -> vector<2x14x32xf32>
    "tpu.trace_stop"() : () -> ()
    %621 = vector.shape_cast %24 : vector<1x32xf32> to vector<1x1x32xf32>
    %622 = vector.broadcast %621 : vector<1x1x32xf32> to vector<2x14x32xf32>
    %623 = arith.mulf %620, %622 : vector<2x14x32xf32>
    %624 = arith.addf %605, %623 : vector<2x14x32xf32>
    %625 = vector.shape_cast %31 : vector<1x32xf32> to vector<1x1x32xf32>
    %626 = vector.broadcast %625 : vector<1x1x32xf32> to vector<2x14x32xf32>
    %627 = arith.mulf %564, %626 : vector<2x14x32xf32>
    "tpu.trace_start"() <{level = 10 : i32, message = "bid,bjd->bij"}> : () -> ()
    %cst_221 = arith.constant dense<0.000000e+00> : vector<2x14x14xf32>
    %628 = tpu.matmul %627, %565, %cst_221 {dimension_numbers = #tpu.dot_dimension_numbers<[2], [2], [1], [1], [0, 0, 0, 1, 1, 1], [0], [0]>} : vector<2x14x32xf32>, vector<2x14x32xf32>, vector<2x14x14xf32> -> vector<2x14x14xf32>
    "tpu.trace_stop"() : () -> ()
    %cst_222 = arith.constant dense<0xFF800000> : vector<2x14xf32>
    %629 = vector.multi_reduction <maximumf>, %628, %cst_222 [2] : vector<2x14x14xf32> to vector<2x14xf32>
    %630 = vector.shape_cast %629 : vector<2x14xf32> to vector<2x14x1xf32>
    %631 = vector.broadcast %630 : vector<2x14x1xf32> to vector<2x14x14xf32>
    %632 = arith.subf %628, %631 : vector<2x14x14xf32>
    %633 = math.exp %632 : vector<2x14x14xf32>
    %cst_223 = arith.constant dense<0.000000e+00> : vector<2x14xf32>
    %634 = vector.multi_reduction <add>, %633, %cst_223 [2] : vector<2x14x14xf32> to vector<2x14xf32>
    %635 = vector.shape_cast %634 : vector<2x14xf32> to vector<2x14x1xf32>
    %636 = tpu.reciprocal %635 {approx = true} : vector<2x14x1xf32> -> vector<2x14x1xf32>
    %637 = vector.broadcast %636 : vector<2x14x1xf32> to vector<2x14x14xf32>
    %638 = arith.mulf %633, %637 : vector<2x14x14xf32>
    "tpu.trace_start"() <{level = 10 : i32, message = "bij,bjd->bid"}> : () -> ()
    %cst_224 = arith.constant dense<0.000000e+00> : vector<2x14x32xf32>
    %639 = tpu.matmul %638, %566, %cst_224 {dimension_numbers = #tpu.dot_dimension_numbers<[2], [1], [1], [2], [0, 0, 0, 1, 1, 2], [0], [0]>} : vector<2x14x14xf32>, vector<2x14x32xf32>, vector<2x14x32xf32> -> vector<2x14x32xf32>
    "tpu.trace_stop"() : () -> ()
    %640 = vector.shape_cast %31 : vector<1x32xf32> to vector<1x1x32xf32>
    %641 = vector.broadcast %640 : vector<1x1x32xf32> to vector<2x14x32xf32>
    %642 = arith.mulf %639, %641 : vector<2x14x32xf32>
    %643 = arith.addf %624, %642 : vector<2x14x32xf32>
    %c3_225 = arith.constant 3 : index
    %c32_226 = arith.constant 32 : index
    %c0_227 = arith.constant 0 : index
    %644 = vector.load %arg3[%c3_225, %c32_226, %c0_227] : memref<4x160x96xf32, #tpu.memory_space<vmem>>, vector<1x32x32xf32>
    %645 = vector.shape_cast %644 : vector<1x32x32xf32> to vector<32x32xf32>
    "tpu.trace_start"() <{level = 10 : i32, message = "bnd,de->bne"}> : () -> ()
    %cst_228 = arith.constant dense<0.000000e+00> : vector<2x14x32xf32>
    %646 = tpu.matmul %643, %645, %cst_228 {dimension_numbers = #tpu.dot_dimension_numbers<[2], [0], [0, 1], [1], [0, 0, 0, 1, 1, 1], [], []>} : vector<2x14x32xf32>, vector<32x32xf32>, vector<2x14x32xf32> -> vector<2x14x32xf32>
    "tpu.trace_stop"() : () -> ()
    %c3_229 = arith.constant 3 : index
    %c4_230 = arith.constant 4 : index
    %c0_231 = arith.constant 0 : index
    %647 = vector.load %arg4[%c3_229, %c4_230, %c0_231] : memref<6x8x128xf32, #tpu.memory_space<vmem>>, vector<1x1x32xf32>
    %648 = vector.shape_cast %647 : vector<1x1x32xf32> to vector<1x32xf32>
    %649 = vector.shape_cast %648 : vector<1x32xf32> to vector<1x1x32xf32>
    %650 = vector.broadcast %649 : vector<1x1x32xf32> to vector<2x14x32xf32>
    %651 = arith.addf %646, %650 : vector<2x14x32xf32>
    %652 = arith.addf %651, %532 : vector<2x14x32xf32>
    %c3_232 = arith.constant 3 : index
    %c2_233 = arith.constant 2 : index
    %c0_234 = arith.constant 0 : index
    %653 = vector.load %arg4[%c3_232, %c2_233, %c0_234] : memref<6x8x128xf32, #tpu.memory_space<vmem>>, vector<1x1x32xf32>
    %654 = vector.shape_cast %653 : vector<1x1x32xf32> to vector<1x32xf32>
    %c3_235 = arith.constant 3 : index
    %c3_236 = arith.constant 3 : index
    %c0_237 = arith.constant 0 : index
    %655 = vector.load %arg4[%c3_235, %c3_236, %c0_237] : memref<6x8x128xf32, #tpu.memory_space<vmem>>, vector<1x1x32xf32>
    %656 = vector.shape_cast %655 : vector<1x1x32xf32> to vector<1x32xf32>
    %cst_238 = arith.constant dense<0.000000e+00> : vector<2x14xf32>
    %657 = vector.multi_reduction <add>, %652, %cst_238 [2] : vector<2x14x32xf32> to vector<2x14xf32>
    %658 = vector.shape_cast %657 : vector<2x14xf32> to vector<2x14x1xf32>
    %cst_239 = arith.constant 3.200000e+01 : f32
    %659 = vector.broadcast %cst_239 : f32 to vector<2x14x1xf32>
    %660 = arith.divf %658, %659 : vector<2x14x1xf32>
    %661 = arith.mulf %652, %652 : vector<2x14x32xf32>
    %cst_240 = arith.constant dense<0.000000e+00> : vector<2x14xf32>
    %662 = vector.multi_reduction <add>, %661, %cst_240 [2] : vector<2x14x32xf32> to vector<2x14xf32>
    %663 = vector.shape_cast %662 : vector<2x14xf32> to vector<2x14x1xf32>
    %cst_241 = arith.constant 3.200000e+01 : f32
    %664 = vector.broadcast %cst_241 : f32 to vector<2x14x1xf32>
    %665 = arith.divf %663, %664 : vector<2x14x1xf32>
    %666 = vector.broadcast %660 : vector<2x14x1xf32> to vector<2x14x32xf32>
    %667 = arith.subf %652, %666 : vector<2x14x32xf32>
    %668 = arith.mulf %660, %660 : vector<2x14x1xf32>
    %669 = arith.subf %665, %668 : vector<2x14x1xf32>
    %cst_242 = arith.constant 9.99999974E-6 : f32
    %670 = vector.broadcast %cst_242 : f32 to vector<2x14x1xf32>
    %671 = arith.addf %669, %670 : vector<2x14x1xf32>
    %672 = math.rsqrt %671 : vector<2x14x1xf32>
    %673 = vector.broadcast %672 : vector<2x14x1xf32> to vector<2x14x32xf32>
    %674 = arith.mulf %667, %673 : vector<2x14x32xf32>
    %675 = vector.shape_cast %654 : vector<1x32xf32> to vector<1x1x32xf32>
    %676 = vector.broadcast %675 : vector<1x1x32xf32> to vector<2x14x32xf32>
    %677 = arith.mulf %674, %676 : vector<2x14x32xf32>
    %678 = vector.shape_cast %656 : vector<1x32xf32> to vector<1x1x32xf32>
    %679 = vector.broadcast %678 : vector<1x1x32xf32> to vector<2x14x32xf32>
    %680 = arith.addf %677, %679 : vector<2x14x32xf32>
    %c3_243 = arith.constant 3 : index
    %c64_244 = arith.constant 64 : index
    %c0_245 = arith.constant 0 : index
    %681 = vector.load %arg3[%c3_243, %c64_244, %c0_245] : memref<4x160x96xf32, #tpu.memory_space<vmem>>, vector<1x32x64xf32>
    %682 = vector.shape_cast %681 : vector<1x32x64xf32> to vector<32x64xf32>
    "tpu.trace_start"() <{level = 10 : i32, message = "bnd,dm->bnm"}> : () -> ()
    %cst_246 = arith.constant dense<0.000000e+00> : vector<2x14x64xf32>
    %683 = tpu.matmul %680, %682, %cst_246 {dimension_numbers = #tpu.dot_dimension_numbers<[2], [0], [0, 1], [1], [0, 0, 0, 1, 1, 1], [], []>} : vector<2x14x32xf32>, vector<32x64xf32>, vector<2x14x64xf32> -> vector<2x14x64xf32>
    "tpu.trace_stop"() : () -> ()
    %c3_247 = arith.constant 3 : index
    %c6_248 = arith.constant 6 : index
    %c0_249 = arith.constant 0 : index
    %684 = vector.load %arg4[%c3_247, %c6_248, %c0_249] : memref<6x8x128xf32, #tpu.memory_space<vmem>>, vector<1x1x64xf32>
    %685 = vector.shape_cast %684 : vector<1x1x64xf32> to vector<1x64xf32>
    %686 = vector.shape_cast %685 : vector<1x64xf32> to vector<1x1x64xf32>
    %687 = vector.broadcast %686 : vector<1x1x64xf32> to vector<2x14x64xf32>
    %688 = arith.addf %683, %687 : vector<2x14x64xf32>
    %cst_250 = arith.constant 0.000000e+00 : f32
    %689 = vector.broadcast %cst_250 : f32 to vector<2x14x64xf32>
    %690 = arith.maximumf %688, %689 : vector<2x14x64xf32>
    %c3_251 = arith.constant 3 : index
    %c96_252 = arith.constant 96 : index
    %c0_253 = arith.constant 0 : index
    %691 = vector.load %arg3[%c3_251, %c96_252, %c0_253] : memref<4x160x96xf32, #tpu.memory_space<vmem>>, vector<1x64x32xf32>
    %692 = vector.shape_cast %691 : vector<1x64x32xf32> to vector<64x32xf32>
    "tpu.trace_start"() <{level = 10 : i32, message = "bnm,md->bnd"}> : () -> ()
    %cst_254 = arith.constant dense<0.000000e+00> : vector<2x14x32xf32>
    %693 = tpu.matmul %690, %692, %cst_254 {dimension_numbers = #tpu.dot_dimension_numbers<[2], [0], [0, 1], [1], [0, 0, 0, 1, 1, 1], [], []>} : vector<2x14x64xf32>, vector<64x32xf32>, vector<2x14x32xf32> -> vector<2x14x32xf32>
    "tpu.trace_stop"() : () -> ()
    %c3_255 = arith.constant 3 : index
    %c5_256 = arith.constant 5 : index
    %c0_257 = arith.constant 0 : index
    %694 = vector.load %arg4[%c3_255, %c5_256, %c0_257] : memref<6x8x128xf32, #tpu.memory_space<vmem>>, vector<1x1x32xf32>
    %695 = vector.shape_cast %694 : vector<1x1x32xf32> to vector<1x32xf32>
    %696 = vector.shape_cast %695 : vector<1x32xf32> to vector<1x1x32xf32>
    %697 = vector.broadcast %696 : vector<1x1x32xf32> to vector<2x14x32xf32>
    %698 = arith.addf %693, %697 : vector<2x14x32xf32>
    %699 = arith.addf %698, %652 : vector<2x14x32xf32>
    %700 = vector.extract_strided_slice %699 {offsets = [0, 0, 0], sizes = [2, 1, 32], strides = [1, 1, 1]} : vector<2x14x32xf32> to vector<2x1x32xf32>
    %701 = vector.shape_cast %700 : vector<2x1x32xf32> to vector<2x32xf32>
    %c0_258 = arith.constant 0 : index
    %c0_259 = arith.constant 0 : index
    %702 = vector.load %arg5[%c0_258, %c0_259] : memref<32x56xf32, #tpu.memory_space<vmem>>, vector<32x56xf32>
    %cst_260 = arith.constant dense<0.000000e+00> : vector<2x56xf32>
    %703 = tpu.matmul %701, %702, %cst_260 {dimension_numbers = #tpu.dot_dimension_numbers<[1], [0], [0], [1], [0, 0, 1, 1], [], []>} : vector<2x32xf32>, vector<32x56xf32>, vector<2x56xf32> -> vector<2x56xf32>
    %c4_261 = arith.constant 4 : index
    %c0_262 = arith.constant 0 : index
    %c0_263 = arith.constant 0 : index
    %704 = vector.load %arg4[%c4_261, %c0_262, %c0_263] : memref<6x8x128xf32, #tpu.memory_space<vmem>>, vector<1x1x56xf32>
    %705 = vector.shape_cast %704 : vector<1x1x56xf32> to vector<1x56xf32>
    %706 = vector.broadcast %705 : vector<1x56xf32> to vector<2x56xf32>
    %707 = arith.addf %703, %706 : vector<2x56xf32>
    %708 = vector.extract_strided_slice %707 {offsets = [0, 0], sizes = [2, 48], strides = [1, 1]} : vector<2x56xf32> to vector<2x48xf32>
    %709 = vector.extract_strided_slice %707 {offsets = [0, 48], sizes = [2, 8], strides = [1, 1]} : vector<2x56xf32> to vector<2x8xf32>
    %cst_264 = arith.constant 0.000000e+00 : f32
    %710 = vector.broadcast %cst_264 : f32 to vector<2x8xf32>
    %711 = arith.maximumf %709, %710 : vector<2x8xf32>
    %c0_265 = arith.constant 0 : index
    %c0_266 = arith.constant 0 : index
    %712 = vector.load %arg1[%c0_265, %c0_266] : memref<6x48xf32, #tpu.memory_space<vmem>>, vector<6x48xf32>
    "tpu.trace_start"() <{level = 10 : i32, message = "xe,de->xd"}> : () -> ()
    %cst_267 = arith.constant dense<0.000000e+00> : vector<6x2xf32>
    %713 = tpu.matmul %712, %708, %cst_267 {dimension_numbers = #tpu.dot_dimension_numbers<[1], [1], [0], [0], [0, 0, 1, 0], [], []>} : vector<6x48xf32>, vector<2x48xf32>, vector<6x2xf32> -> vector<6x2xf32>
    "tpu.trace_stop"() : () -> ()
    %cst_268 = arith.constant dense<0xFF800000> : vector<6xf32>
    %714 = vector.multi_reduction <maximumf>, %713, %cst_268 [1] : vector<6x2xf32> to vector<6xf32>
    %715 = vector.shape_cast %714 : vector<6xf32> to vector<6x1xf32>
    %716 = vector.broadcast %715 : vector<6x1xf32> to vector<6x2xf32>
    %717 = arith.subf %713, %716 : vector<6x2xf32>
    %718 = math.exp %717 : vector<6x2xf32>
    %cst_269 = arith.constant dense<0.000000e+00> : vector<6xf32>
    %719 = vector.multi_reduction <add>, %718, %cst_269 [1] : vector<6x2xf32> to vector<6xf32>
    %720 = vector.shape_cast %719 : vector<6xf32> to vector<6x1xf32>
    %721 = math.log %720 : vector<6x1xf32>
    %722 = arith.addf %721, %715 : vector<6x1xf32>
    %723 = tpu.iota {dimensions = array<i32: 0>} : vector<6x2xi32>
    %724 = tpu.iota {dimensions = array<i32: 1>} : vector<6x2xi32>
    %725 = arith.cmpi eq, %723, %724 : vector<6x2xi32>
    %c2_i32 = arith.constant 2 : i32
    %726 = vector.broadcast %c2_i32 : i32 to vector<6x2xi32>
    %727 = arith.addi %724, %726 : vector<6x2xi32>
    %728 = arith.cmpi eq, %723, %727 : vector<6x2xi32>
    %729 = arith.ori %725, %728 : vector<6x2xi1>
    %c4_i32 = arith.constant 4 : i32
    %730 = vector.broadcast %c4_i32 : i32 to vector<6x2xi32>
    %731 = arith.addi %724, %730 : vector<6x2xi32>
    %732 = arith.cmpi eq, %723, %731 : vector<6x2xi32>
    %733 = arith.ori %729, %732 : vector<6x2xi1>
    %734 = vector.broadcast %722 : vector<6x1xf32> to vector<6x2xf32>
    %735 = arith.subf %713, %734 : vector<6x2xf32>
    %cst_270 = arith.constant 0.000000e+00 : f32
    %736 = vector.broadcast %cst_270 : f32 to vector<6x2xf32>
    %737 = arith.select %733, %735, %736 : vector<6x2xi1>, vector<6x2xf32>
    %738 = vector.shape_cast %737 : vector<6x2xf32> to vector<1x6x2xf32>
    %cst_271 = arith.constant dense<0.000000e+00> : vector<1xf32>
    %739 = vector.multi_reduction <add>, %738, %cst_271 [1, 2] : vector<1x6x2xf32> to vector<1xf32>
    %740 = vector.shape_cast %739 : vector<1xf32> to vector<1x1x1xf32>
    %741 = vector.extract %740[0, 0, 0] : f32 from vector<1x1x1xf32>
    %cst_272 = arith.constant -0.166666672 : f32
    %742 = arith.mulf %741, %cst_272 : f32
    %c5_273 = arith.constant 5 : index
    %c0_274 = arith.constant 0 : index
    %c0_275 = arith.constant 0 : index
    %743 = vector.load %arg4[%c5_273, %c0_274, %c0_275] : memref<6x8x128xf32, #tpu.memory_space<vmem>>, vector<1x8x128xf32>
    %744 = vector.shape_cast %743 : vector<1x8x128xf32> to vector<8x128xf32>
    %cst_276 = arith.constant dense<0.000000e+00> : vector<2x128xf32>
    %745 = tpu.matmul %711, %744, %cst_276 {dimension_numbers = #tpu.dot_dimension_numbers<[1], [0], [0], [1], [0, 0, 1, 1], [], []>} : vector<2x8xf32>, vector<8x128xf32>, vector<2x128xf32> -> vector<2x128xf32>
    %c4_277 = arith.constant 4 : index
    %c1_278 = arith.constant 1 : index
    %c0_279 = arith.constant 0 : index
    %746 = vector.load %arg4[%c4_277, %c1_278, %c0_279] : memref<6x8x128xf32, #tpu.memory_space<vmem>>, vector<1x1x128xf32>
    %747 = vector.shape_cast %746 : vector<1x1x128xf32> to vector<1x128xf32>
    %748 = vector.broadcast %747 : vector<1x128xf32> to vector<2x128xf32>
    %749 = arith.addf %745, %748 : vector<2x128xf32>
    %750 = tpu.iota {dimensions = array<i32: 0>} : vector<2x128xi32>
    %751 = tpu.iota {dimensions = array<i32: 1>} : vector<2x128xi32>
    %c0_i32_280 = arith.constant 0 : i32
    %752 = vector.broadcast %c0_i32_280 : i32 to vector<2x128xi32>
    %753 = arith.cmpi eq, %750, %752 : vector<2x128xi32>
    %c127_i32 = arith.constant 127 : i32
    %754 = vector.broadcast %c127_i32 : i32 to vector<2x128xi32>
    %755 = arith.cmpi eq, %751, %754 : vector<2x128xi32>
    %756 = arith.andi %753, %755 : vector<2x128xi1>
    %757 = vector.broadcast %742 : f32 to vector<2x128xf32>
    %758 = arith.select %756, %757, %749 : vector<2x128xi1>, vector<2x128xf32>
    %c0_281 = arith.constant 0 : index
    %c0_282 = arith.constant 0 : index
    %759 = vector.load %arg6[%c0_281, %c0_282] : memref<2x128xf32, #tpu.memory_space<vmem>>, vector<2x128xf32>
    tpu.vector_store %arg6[%c0_281, %c0_282], %758 {strides = array<i32>} : memref<2x128xf32, #tpu.memory_space<vmem>>, vector<2x128xf32>,
    return
  }
}

</mosaic_0001>

<llo_original>
// kernel: tc_forward.1
$region0: #{tc_forward.1}
  #allocation0 [shape = 'u32[]', space=smem, size = 0x4, offset = 0x4, fixed_abs, tag = 'smem constant byte address 0x4 - core index']
  #allocation1 [shape = 'u32[72,128]{1,0:T(1,128)}', space=vmem, size = 0x9000, scoped, tag = 'internal scratch']
  %s0 = inlined_call_operand.vmem [shape: f32[2,14,18], index: 0, kind: input, shape index: {}]
  %s1 = inlined_call_operand.vmem [shape: f32[6,48], index: 1, kind: input, shape index: {}]
  %s2 = inlined_call_operand.vmem [shape: f32[18,32], index: 2, kind: input, shape index: {}]
  %s3 = inlined_call_operand.hbm [shape: f32[4,160,96], index: 3, kind: input, shape index: {}]
  %s4 = inlined_call_operand.vmem [shape: f32[6,8,128], index: 4, kind: input, shape index: {}]
  %s5 = inlined_call_operand.vmem [shape: f32[32,56], index: 5, kind: input, shape index: {}]
  %s6 = inlined_call_operand.vmem [shape: f32[2,128], index: 6, kind: output, shape index: {}]
  %s7 = sld [smem:[#allocation0]]
  $region38: #{tc_forward.1} parent=0
    _
  %s9 = ssub.s32 1, %s7
  %s10 = scalar_select 0, %s9, %s7
  $region1: #{tc_forward.1} parent=0
    #allocation2 [shape = 'u8[327680]{0}', space=vmem, size = 0x50000, scoped, tag = 'input window, operand 3, single buffered']
    #allocation3 [shape = 's32[1]{0}', space=sflag, size = 0x4, scoped, tag = 'scoped memory for tc_forward.1']
    %11 = vsyncpa [#allocation3], 0
    // Predicated region
    $region2: #{tc_forward.1} parent=1 // pred_check
      _
    $region3: #{tc_forward.1} parent=1 // pred_check_branch
      %13 = sbr.rel (0) target = $region5
    $region4: #{tc_forward.1} parent=1 // pred_region
      _
    $region5: #{tc_forward.1} parent=1 // pred_fallthru
      _
    // Predicated region
    $region6: #{tc_forward.1} parent=1 // pred_check
      _
    $region7: #{tc_forward.1} parent=1 // pred_check_branch
      %15 = sbr.rel (0) target = $region9
    $region8: #{tc_forward.1} parent=1 // pred_region
      _
    $region9: #{tc_forward.1} parent=1 // pred_fallthru
      _
    // Predicated region
    $region10: #{tc_forward.1} parent=1 // pred_check
      _
    $region11: #{tc_forward.1} parent=1 // pred_check_branch
      %17 = sbr.rel (0) target = $region13
    $region12: #{tc_forward.1} parent=1 // pred_region
      _
    $region13: #{tc_forward.1} parent=1 // pred_fallthru
      _
    // Predicated region
    $region14: #{tc_forward.1} parent=1 // pred_check
      _
    $region15: #{tc_forward.1} parent=1 // pred_check_branch
      %19 = sbr.rel (0) target = $region17
    $region16: #{tc_forward.1} parent=1 // pred_region
      %21 = vsyncadd [#allocation3], 0
      %s22 = sshll.u32 %s3, 4
      %s23 = int_to_ptr.hbm [resolvable:$true] %s22
      %s24 = sshll.u32 [#allocation2], 4
      %s25 = int_to_ptr.vmem [resolvable:$true] %s24
      %30 = dma.hbm_to_vmem [thread:$0]  %s23, 10240, %s25, [#allocation3], 128, 128, 8
    $region17: #{tc_forward.1} parent=1 // pred_fallthru
      _
    // Predicated region
    $region18: #{tc_forward.1} parent=1 // pred_check
      _
    $region19: #{tc_forward.1} parent=1 // pred_check_branch
      %32 = sbr.rel (0) target = $region21
    $region20: #{tc_forward.1} parent=1 // pred_region
      _
    $region21: #{tc_forward.1} parent=1 // pred_fallthru
      _
    // Predicated region
    $region22: #{tc_forward.1} parent=1 // pred_check
      _
    $region23: #{tc_forward.1} parent=1 // pred_check_branch
      %34 = sbr.rel (0) target = $region25
    $region24: #{tc_forward.1} parent=1 // pred_region
      _
    $region25: #{tc_forward.1} parent=1 // pred_fallthru
      _
    // Predicated region
    $region26: #{tc_forward.1} parent=1 // pred_check
      _
    $region27: #{tc_forward.1} parent=1 // pred_check_branch
      %36 = sbr.rel (0) target = $region29
    $region28: #{tc_forward.1} parent=1 // pred_region
      %38 = dma.done [#allocation3], 10240
    $region29: #{tc_forward.1} parent=1 // pred_fallthru
      _
    %v39 = vld [vmem:[%s0] sm:$0xff]
    %v40 = vld [vmem:[%s0 + $0x8] sm:$0x3f]
    %v41 = vld [vmem:[%s0 + $0x10] sm:$0xff]
    %v42 = vld [vmem:[%s0 + $0x18] sm:$0x3f]
    %v43 = vld [vmem:[%s2] sm:$0xff]
    %v44 = vld [vmem:[%s2 + $0x8] sm:$0xff]
    %v45 = vld [vmem:[%s2 + $0x10] sm:$0x3]
    %v50 = vrot.slane %v39, 2
    %v51 = vrot.slane %v39, 4
    %v52 = vrot.slane %v39, 6
    %v53 = vrot.slane %v40, 2
    %v54 = vrot.slane %v40, 4
    %v55 = vrot.slane %v41, 2
    %v56 = vrot.slane %v41, 4
    %v57 = vrot.slane %v41, 6
    %v58 = vrot.slane %v42, 2
    %v59 = vrot.slane %v42, 4
    %60 = vst [vmem:[#allocation1] ss:$4 sm:$0xff] %v39
    %s61 = scalar_lea.vmem [#allocation1], 1
    %62 = vst [vmem:[%s61] ss:$4 sm:$0xff] %v50
    %s63 = scalar_lea.vmem [#allocation1], 2
    %64 = vst [vmem:[%s63] ss:$4 sm:$0xff] %v51
    %s65 = scalar_lea.vmem [#allocation1], 3
    %66 = vst [vmem:[%s65] ss:$4 sm:$0xff] %v52
    %s67 = scalar_lea.vmem [#allocation1], 32
    %68 = vst [vmem:[%s67] ss:$4 sm:$0xff] %v40
    %s69 = scalar_lea.vmem [#allocation1], 33
    %70 = vst [vmem:[%s69] ss:$4 sm:$0xff] %v53
    %s71 = scalar_lea.vmem [#allocation1], 34
    %72 = vst [vmem:[%s71] ss:$4 sm:$0xff] %v54
    %s73 = scalar_lea.vmem [#allocation1], 35
    %74 = vst [vmem:[%s73] ss:$4 sm:$0xff] %v41
    %v75 = vld.sshfl [vmem:[#allocation1] sm:$0xff pattern:$0x73625140]
    %v76 = vld.sshfl [vmem:[#allocation1 + $0x20] sm:$0xff pattern:$0x73625140]
    %77 = vst [vmem:[#allocation1] ss:$4 sm:$0xff] %v55
    %78 = vst [vmem:[%s61] ss:$4 sm:$0xff] %v56
    %79 = vst [vmem:[%s63] ss:$4 sm:$0xff] %v57
    %80 = vst [vmem:[%s65] ss:$4 sm:$0xff] %v42
    %81 = vst [vmem:[%s67] ss:$4 sm:$0xff] %v58
    %82 = vst [vmem:[%s69] ss:$4 sm:$0xff] %v59
    %v83 = vld.sshfl [vmem:[#allocation1] sm:$0xff pattern:$0x73625140]
    %v84 = vld.sshfl [vmem:[#allocation1 + $0x20] sm:$0xff pattern:$0x73625140]
    %vm85 = vcmask 146432
    %v86 = vsel %vm85, %v75, 0
    %v88 = vsel %vm85, %v76, 0
    %v90 = vsel %vm85, %v83, 0
    %v92 = vsel %vm85, %v84, 0
    %vm94 = vcmask 1041408
    %v96 = vsel %vm94, %v45, 0
    %98 = vmatpush.msra.mxu0 0.0
    %99 = vmatpush.msra.mxu0 0.0
    %100 = vmatpush.msra.mxu0 0.0
    %101 = vmatpush.msra.mxu0 0.0
    %102 = vmatpush.msra.mxu0 0.0
    %103 = vmatpush.msra.mxu0 0.0
    %104 = vmatpush.msra.mxu0 0.0
    %105 = vmatpush.msra.mxu0 0.0
    %106 = vmatpush.msra.mxu0 0.0
    %107 = vmatpush.msra.mxu0 0.0
    %108 = vmatpush.msra.mxu0 0.0
    %109 = vmatpush.msra.mxu0 0.0
    %110 = vmatpush.msra.mxu0 0.0
    %111 = vmatpush.msra.mxu0 %v96
    %112 = vmatpush.msra.mxu0 %v44
    %113 = vmatpush.msra.mxu0 %v43
    %114 = vmatmul.f32.gmra.mxu0 %v86
    %v115 = vpop.f32.mrf.mxu0
    %v116 = vadd.f32 0.0, %v115
    %117 = vmatmul.f32.gmra.mxu0 %v88
    %v118 = vpop.f32.mrf.mxu0
    %v119 = vadd.f32 0.0, %v118
    %120 = vmatmul.f32.gmra.mxu0 %v90
    %v121 = vpop.f32.mrf.mxu0
    %v122 = vadd.f32 0.0, %v121
    %123 = vmatmul.f32.gmra.mxu0 %v92
    %v124 = vpop.f32.mrf.mxu0
    %v125 = vadd.f32 0.0, %v124
    %126 = vdwg.mxu0
    %v131 = vrot.slane %v116, 2
    %v132 = vrot.slane %v116, 4
    %v133 = vrot.slane %v116, 6
    %v134 = vrot.slane %v119, 2
    %v135 = vrot.slane %v119, 4
    %v136 = vrot.slane %v119, 6
    %v137 = vrot.slane %v122, 2
    %v138 = vrot.slane %v122, 4
    %v139 = vrot.slane %v122, 6
    %v140 = vrot.slane %v125, 2
    %v151 = vlaneseq
    %v152 = vand.u32 %v151, 127
    %vm153 = vcmp.ge.s32.totalorder %v152, 0
    %vm154 = vcmp.lt.s32.totalorder %v152, 8
    %vm155 = vmand %vm153, %vm154
    %v156 = vsel %vm155, 1, 0
    %v157 = vcvt.s32.f32 %v156
    %vm158 = vcmp.ge.s32.totalorder %v152, 8
    %vm159 = vcmp.lt.s32.totalorder %v152, 16
    %vm160 = vmand %vm158, %vm159
    %v161 = vsel %vm160, 1, 0
    %v162 = vcvt.s32.f32 %v161
    %vm163 = vcmp.ge.s32.totalorder %v152, 16
    %vm164 = vcmp.lt.s32.totalorder %v152, 24
    %vm165 = vmand %vm163, %vm164
    %v166 = vsel %vm165, 1, 0
    %v167 = vcvt.s32.f32 %v166
    %vm168 = vcmp.ge.s32.totalorder %v152, 24
    %vm169 = vcmp.lt.s32.totalorder %v152, 32
    %vm170 = vmand %vm168, %vm169
    %v171 = vsel %vm170, 1, 0
    %v172 = vcvt.s32.f32 %v171
    %v173 = vld [vmem:[%s4] sm:$0x1]
    %v174 = vld [vmem:[%s4 + $0x1] sm:$0x1]
    %175 = vst [vmem:[#allocation1] ss:$4 sm:$0xff] %v116
    %s176 = scalar_lea.vmem [#allocation1], 1
    %177 = vst [vmem:[%s176] ss:$4 sm:$0xff] %v131
    %s178 = scalar_lea.vmem [#allocation1], 2
    %179 = vst [vmem:[%s178] ss:$4 sm:$0xff] %v132
    %s180 = scalar_lea.vmem [#allocation1], 3
    %181 = vst [vmem:[%s180] ss:$4 sm:$0xff] %v133
    %s182 = scalar_lea.vmem [#allocation1], 32
    %183 = vst [vmem:[%s182] ss:$4 sm:$0xff] %v119
    %s184 = scalar_lea.vmem [#allocation1], 33
    %185 = vst [vmem:[%s184] ss:$4 sm:$0xff] %v134
    %s186 = scalar_lea.vmem [#allocation1], 34
    %187 = vst [vmem:[%s186] ss:$4 sm:$0xff] %v135
    %v188 = vld.sshfl [vmem:[#allocation1] sm:$0xff pattern:$0x73625140]
    %v189 = vld.sshfl [vmem:[#allocation1 + $0x20] sm:$0xff pattern:$0x73625140]
    %190 = vst [vmem:[#allocation1] ss:$4 sm:$0xff] %v136
    %191 = vst [vmem:[%s176] ss:$4 sm:$0xff] %v122
    %192 = vst [vmem:[%s178] ss:$4 sm:$0xff] %v137
    %193 = vst [vmem:[%s180] ss:$4 sm:$0xff] %v138
    %194 = vst [vmem:[%s182] ss:$4 sm:$0xff] %v139
    %195 = vst [vmem:[%s184] ss:$4 sm:$0xff] %v125
    %196 = vst [vmem:[%s186] ss:$4 sm:$0xff] %v140
    %v197 = vld.sshfl [vmem:[#allocation1] sm:$0xff pattern:$0x73625140]
    %v198 = vld.sshfl [vmem:[#allocation1 + $0x20] sm:$0xff pattern:$0x73625140]
    %vm203 = vcmask 261120
    %v204 = vsel %vm203, %v188, 0.0
    %205 = vadd.xlane.f32.xlu0 %v204
    %v206 = vpop.xlane.xlu0 %205
    %vm207 = vcmask 259072
    %v208 = vsel %vm207, %v189, 0.0
    %209 = vadd.xlane.f32.xlu0 %v208
    %v210 = vpop.xlane.xlu0 %209
    %v211 = vsel %vm203, %v197, 0.0
    %212 = vadd.xlane.f32.xlu0 %v211
    %v213 = vpop.xlane.xlu0 %212
    %v214 = vsel %vm207, %v198, 0.0
    %215 = vadd.xlane.f32.xlu0 %v214
    %v216 = vpop.xlane.xlu0 %215
    %v217 = vrcp.pop 32.0
    %v218 = vmul.f32 32.0, %v217
    %v219 = vsub.f32 1.0, %v218
    %v220 = vmul.f32 %v217, %v219
    %v221 = vadd.f32 %v217, %v220
    %vm222 = vweird.f32 %v217
    %v223 = vsel %vm222, %v217, %v221
    %v224 = vmul.f32 %v206, %v223
    %v225 = vmul.f32 %v210, %v223
    %v226 = vmul.f32 %v213, %v223
    %v227 = vmul.f32 %v216, %v223
    %v228 = vmul.f32 %v116, %v116
    %v229 = vmul.f32 %v131, %v131
    %v230 = vmul.f32 %v132, %v132
    %v231 = vmul.f32 %v133, %v133
    %v232 = vmul.f32 %v119, %v119
    %v233 = vmul.f32 %v134, %v134
    %v234 = vmul.f32 %v135, %v135
    %v235 = vmul.f32 %v136, %v136
    %v236 = vmul.f32 %v122, %v122
    %v237 = vmul.f32 %v137, %v137
    %v238 = vmul.f32 %v138, %v138
    %v239 = vmul.f32 %v139, %v139
    %v240 = vmul.f32 %v125, %v125
    %v241 = vmul.f32 %v140, %v140
    %256 = vst [vmem:[#allocation1] ss:$4 sm:$0xff] %v228
    %s257 = scalar_lea.vmem [#allocation1], 1
    %258 = vst [vmem:[%s257] ss:$4 sm:$0xff] %v229
    %s259 = scalar_lea.vmem [#allocation1], 2
    %260 = vst [vmem:[%s259] ss:$4 sm:$0xff] %v230
    %s261 = scalar_lea.vmem [#allocation1], 3
    %262 = vst [vmem:[%s261] ss:$4 sm:$0xff] %v231
    %s263 = scalar_lea.vmem [#allocation1], 32
    %264 = vst [vmem:[%s263] ss:$4 sm:$0xff] %v232
    %s265 = scalar_lea.vmem [#allocation1], 33
    %266 = vst [vmem:[%s265] ss:$4 sm:$0xff] %v233
    %s267 = scalar_lea.vmem [#allocation1], 34
    %268 = vst [vmem:[%s267] ss:$4 sm:$0xff] %v234
    %v269 = vld.sshfl [vmem:[#allocation1] sm:$0xff pattern:$0x73625140]
    %v270 = vld.sshfl [vmem:[#allocation1 + $0x20] sm:$0xff pattern:$0x73625140]
    %271 = vst [vmem:[#allocation1] ss:$4 sm:$0xff] %v235
    %272 = vst [vmem:[%s257] ss:$4 sm:$0xff] %v236
    %273 = vst [vmem:[%s259] ss:$4 sm:$0xff] %v237
    %274 = vst [vmem:[%s261] ss:$4 sm:$0xff] %v238
    %275 = vst [vmem:[%s263] ss:$4 sm:$0xff] %v239
    %276 = vst [vmem:[%s265] ss:$4 sm:$0xff] %v240
    %277 = vst [vmem:[%s267] ss:$4 sm:$0xff] %v241
    %v278 = vld.sshfl [vmem:[#allocation1] sm:$0xff pattern:$0x73625140]
    %v279 = vld.sshfl [vmem:[#allocation1 + $0x20] sm:$0xff pattern:$0x73625140]
    %v284 = vsel %vm203, %v269, 0.0
    %285 = vadd.xlane.f32.xlu0 %v284
    %v286 = vpop.xlane.xlu0 %285
    %v287 = vsel %vm207, %v270, 0.0
    %288 = vadd.xlane.f32.xlu0 %v287
    %v289 = vpop.xlane.xlu0 %288
    %v290 = vsel %vm203, %v278, 0.0
    %291 = vadd.xlane.f32.xlu0 %v290
    %v292 = vpop.xlane.xlu0 %291
    %v293 = vsel %vm207, %v279, 0.0
    %294 = vadd.xlane.f32.xlu0 %v293
    %v295 = vpop.xlane.xlu0 %294
    %v296 = vmul.f32 %v286, %v223
    %v297 = vmul.f32 %v289, %v223
    %v298 = vmul.f32 %v292, %v223
    %v299 = vmul.f32 %v295, %v223
    %v305 = vunpack.c.l.s4 269488144
    %v306 = vunpack.c.0.s8 %v305
    %v307 = vperm.slane %v224, %v306
    %v309 = vunpack.c.l.s4 842150450
    %v310 = vunpack.c.0.s8 %v309
    %v311 = vperm.slane %v224, %v310
    %v313 = vunpack.c.l.s4 1414812756
    %v314 = vunpack.c.0.s8 %v313
    %v315 = vperm.slane %v224, %v314
    %v317 = vunpack.c.l.s4 1987475062
    %v318 = vunpack.c.0.s8 %v317
    %v319 = vperm.slane %v224, %v318
    %v321 = vunpack.c.l.s4 269488144
    %v322 = vunpack.c.0.s8 %v321
    %v323 = vperm.slane %v225, %v322
    %v325 = vunpack.c.l.s4 842150450
    %v326 = vunpack.c.0.s8 %v325
    %v327 = vperm.slane %v225, %v326
    %v329 = vunpack.c.l.s4 1414812756
    %v330 = vunpack.c.0.s8 %v329
    %v331 = vperm.slane %v225, %v330
    %v333 = vunpack.c.l.s4 269488144
    %v334 = vunpack.c.0.s8 %v333
    %v335 = vperm.slane %v226, %v334
    %v337 = vunpack.c.l.s4 842150450
    %v338 = vunpack.c.0.s8 %v337
    %v339 = vperm.slane %v226, %v338
    %v341 = vunpack.c.l.s4 1414812756
    %v342 = vunpack.c.0.s8 %v341
    %v343 = vperm.slane %v226, %v342
    %v345 = vunpack.c.l.s4 1987475062
    %v346 = vunpack.c.0.s8 %v345
    %v347 = vperm.slane %v226, %v346
    %v349 = vunpack.c.l.s4 269488144
    %v350 = vunpack.c.0.s8 %v349
    %v351 = vperm.slane %v227, %v350
    %v353 = vunpack.c.l.s4 842150450
    %v354 = vunpack.c.0.s8 %v353
    %v355 = vperm.slane %v227, %v354
    %v357 = vunpack.c.l.s4 1414812756
    %v358 = vunpack.c.0.s8 %v357
    %v359 = vperm.slane %v227, %v358
    %v374 = vsub.f32 %v116, %v307
    %v375 = vsub.f32 %v131, %v311
    %v376 = vsub.f32 %v132, %v315
    %v377 = vsub.f32 %v133, %v319
    %v378 = vsub.f32 %v119, %v323
    %v379 = vsub.f32 %v134, %v327
    %v380 = vsub.f32 %v135, %v331
    %v381 = vsub.f32 %v136, %v335
    %v382 = vsub.f32 %v122, %v339
    %v383 = vsub.f32 %v137, %v343
    %v384 = vsub.f32 %v138, %v347
    %v385 = vsub.f32 %v139, %v351
    %v386 = vsub.f32 %v125, %v355
    %v387 = vsub.f32 %v140, %v359
    %v388 = vmul.f32 %v224, %v224
    %v389 = vmul.f32 %v225, %v225
    %v390 = vmul.f32 %v226, %v226
    %v391 = vmul.f32 %v227, %v227
    %v392 = vsub.f32 %v296, %v388
    %v393 = vsub.f32 %v297, %v389
    %v394 = vsub.f32 %v298, %v390
    %v395 = vsub.f32 %v299, %v391
    %v396 = vadd.f32 %v392, 1e-05
    %v397 = vadd.f32 %v393, 1e-05
    %v398 = vadd.f32 %v394, 1e-05
    %v399 = vadd.f32 %v395, 1e-05
    %v400 = vrsqrt.pop %v396
    %v401 = vmul.f32 %v400, %v396
    %v402 = vmul.f32 %v401, %v400
    %v403 = vmul.f32 0.5, %v402
    %v404 = vsub.f32 1.5, %v403
    %v405 = vmul.f32 %v400, %v404
    %vm406 = vweird.f32 %v396
    %vm407 = vweird.f32 %v400
    %vm408 = vmor %vm406, %vm407
    %v409 = vsel %vm408, %v400, %v405
    %v410 = vrsqrt.pop %v397
    %v411 = vmul.f32 %v410, %v397
    %v412 = vmul.f32 %v411, %v410
    %v413 = vmul.f32 0.5, %v412
    %v414 = vsub.f32 1.5, %v413
    %v415 = vmul.f32 %v410, %v414
    %vm416 = vweird.f32 %v397
    %vm417 = vweird.f32 %v410
    %vm418 = vmor %vm416, %vm417
    %v419 = vsel %vm418, %v410, %v415
    %v420 = vrsqrt.pop %v398
    %v421 = vmul.f32 %v420, %v398
    %v422 = vmul.f32 %v421, %v420
    %v423 = vmul.f32 0.5, %v422
    %v424 = vsub.f32 1.5, %v423
    %v425 = vmul.f32 %v420, %v424
    %vm426 = vweird.f32 %v398
    %vm427 = vweird.f32 %v420
    %vm428 = vmor %vm426, %vm427
    %v429 = vsel %vm428, %v420, %v425
    %v430 = vrsqrt.pop %v399
    %v431 = vmul.f32 %v430, %v399
    %v432 = vmul.f32 %v431, %v430
    %v433 = vmul.f32 0.5, %v432
    %v434 = vsub.f32 1.5, %v433
    %v435 = vmul.f32 %v430, %v434
    %vm436 = vweird.f32 %v399
    %vm437 = vweird.f32 %v430
    %vm438 = vmor %vm436, %vm437
    %v439 = vsel %vm438, %v430, %v435
    %v445 = vunpack.c.l.s4 269488144
    %v446 = vunpack.c.0.s8 %v445
    %v447 = vperm.slane %v409, %v446
    %v449 = vunpack.c.l.s4 842150450
    %v450 = vunpack.c.0.s8 %v449
    %v451 = vperm.slane %v409, %v450
    %v453 = vunpack.c.l.s4 1414812756
    %v454 = vunpack.c.0.s8 %v453
    %v455 = vperm.slane %v409, %v454
    %v457 = vunpack.c.l.s4 1987475062
    %v458 = vunpack.c.0.s8 %v457
    %v459 = vperm.slane %v409, %v458
    %v461 = vunpack.c.l.s4 269488144
    %v462 = vunpack.c.0.s8 %v461
    %v463 = vperm.slane %v419, %v462
    %v465 = vunpack.c.l.s4 842150450
    %v466 = vunpack.c.0.s8 %v465
    %v467 = vperm.slane %v419, %v466
    %v469 = vunpack.c.l.s4 1414812756
    %v470 = vunpack.c.0.s8 %v469
    %v471 = vperm.slane %v419, %v470
    %v473 = vunpack.c.l.s4 269488144
    %v474 = vunpack.c.0.s8 %v473
    %v475 = vperm.slane %v429, %v474
    %v477 = vunpack.c.l.s4 842150450
    %v478 = vunpack.c.0.s8 %v477
    %v479 = vperm.slane %v429, %v478
    %v481 = vunpack.c.l.s4 1414812756
    %v482 = vunpack.c.0.s8 %v481
    %v483 = vperm.slane %v429, %v482
    %v485 = vunpack.c.l.s4 1987475062
    %v486 = vunpack.c.0.s8 %v485
    %v487 = vperm.slane %v429, %v486
    %v489 = vunpack.c.l.s4 269488144
    %v490 = vunpack.c.0.s8 %v489
    %v491 = vperm.slane %v439, %v490
    %v493 = vunpack.c.l.s4 842150450
    %v494 = vunpack.c.0.s8 %v493
    %v495 = vperm.slane %v439, %v494
    %v497 = vunpack.c.l.s4 1414812756
    %v498 = vunpack.c.0.s8 %v497
    %v499 = vperm.slane %v439, %v498
    %v514 = vmul.f32 %v374, %v447
    %v515 = vmul.f32 %v375, %v451
    %v516 = vmul.f32 %v376, %v455
    %v517 = vmul.f32 %v377, %v459
    %v518 = vmul.f32 %v378, %v463
    %v519 = vmul.f32 %v379, %v467
    %v520 = vmul.f32 %v380, %v471
    %v521 = vmul.f32 %v381, %v475
    %v522 = vmul.f32 %v382, %v479
    %v523 = vmul.f32 %v383, %v483
    %v524 = vmul.f32 %v384, %v487
    %v525 = vmul.f32 %v385, %v491
    %v526 = vmul.f32 %v386, %v495
    %v527 = vmul.f32 %v387, %v499
    %v528 = vperm.slane %v173, 0
    %v530 = vrot.slane %v528, 2
    %v531 = vrot.slane %v528, 4
    %v532 = vrot.slane %v528, 6
    %v536 = vmul.f32 %v514, %v528
    %v537 = vmul.f32 %v515, %v530
    %v538 = vmul.f32 %v516, %v531
    %v539 = vmul.f32 %v517, %v532
    %v540 = vmul.f32 %v518, %v528
    %v541 = vmul.f32 %v519, %v530
    %v542 = vmul.f32 %v520, %v531
    %v543 = vmul.f32 %v521, %v528
    %v544 = vmul.f32 %v522, %v530
    %v545 = vmul.f32 %v523, %v531
    %v546 = vmul.f32 %v524, %v532
    %v547 = vmul.f32 %v525, %v528
    %v548 = vmul.f32 %v526, %v530
    %v549 = vmul.f32 %v527, %v531
    %v550 = vperm.slane %v174, 0
    %v552 = vrot.slane %v550, 2
    %v553 = vrot.slane %v550, 4
    %v554 = vrot.slane %v550, 6
    %v558 = vadd.f32 %v536, %v550
    %v559 = vadd.f32 %v537, %v552
    %v560 = vadd.f32 %v538, %v553
    %v561 = vadd.f32 %v539, %v554
    %v562 = vadd.f32 %v540, %v550
    %v563 = vadd.f32 %v541, %v552
    %v564 = vadd.f32 %v542, %v553
    %v565 = vadd.f32 %v543, %v550
    %v566 = vadd.f32 %v544, %v552
    %v567 = vadd.f32 %v545, %v553
    %v568 = vadd.f32 %v546, %v554
    %v569 = vadd.f32 %v547, %v550
    %v570 = vadd.f32 %v548, %v552
    %v571 = vadd.f32 %v549, %v553
    %v572 = vld [vmem:[#allocation2] sm:$0xff]
    %v573 = vld [vmem:[#allocation2 + $0x8] sm:$0xff]
    %v574 = vld [vmem:[#allocation2 + $0x10] sm:$0xff]
    %v575 = vld [vmem:[#allocation2 + $0x18] sm:$0xff]
    %590 = vst [vmem:[#allocation1] ss:$4 sm:$0xff] %v558
    %s591 = scalar_lea.vmem [#allocation1], 1
    %592 = vst [vmem:[%s591] ss:$4 sm:$0xff] %v559
    %s593 = scalar_lea.vmem [#allocation1], 2
    %594 = vst [vmem:[%s593] ss:$4 sm:$0xff] %v560
    %s595 = scalar_lea.vmem [#allocation1], 3
    %596 = vst [vmem:[%s595] ss:$4 sm:$0xff] %v561
    %s597 = scalar_lea.vmem [#allocation1], 32
    %598 = vst [vmem:[%s597] ss:$4 sm:$0xff] %v562
    %s599 = scalar_lea.vmem [#allocation1], 33
    %600 = vst [vmem:[%s599] ss:$4 sm:$0xff] %v563
    %s601 = scalar_lea.vmem [#allocation1], 34
    %602 = vst [vmem:[%s601] ss:$4 sm:$0xff] %v564
    %s603 = scalar_lea.vmem [#allocation1], 35
    %604 = vst [vmem:[%s603] ss:$4 sm:$0xff] %v565
    %v605 = vld.sshfl [vmem:[#allocation1] sm:$0xff pattern:$0x73625140]
    %v606 = vld.sshfl [vmem:[#allocation1 + $0x20] sm:$0xff pattern:$0x73625140]
    %607 = vst [vmem:[#allocation1] ss:$4 sm:$0xff] %v566
    %608 = vst [vmem:[%s591] ss:$4 sm:$0xff] %v567
    %609 = vst [vmem:[%s593] ss:$4 sm:$0xff] %v568
    %610 = vst [vmem:[%s595] ss:$4 sm:$0xff] %v569
    %611 = vst [vmem:[%s597] ss:$4 sm:$0xff] %v570
    %612 = vst [vmem:[%s599] ss:$4 sm:$0xff] %v571
    %v613 = vld.sshfl [vmem:[#allocation1] sm:$0xff pattern:$0x73625140]
    %v614 = vld.sshfl [vmem:[#allocation1 + $0x20] sm:$0xff pattern:$0x73625140]
    %v615 = vsel %vm203, %v605, 0
    %v617 = vsel %vm203, %v606, 0
    %v619 = vsel %vm203, %v613, 0
    %v621 = vsel %vm203, %v614, 0
    %623 = vmatpush.msra.mxu0 0.0
    %624 = vmatpush.msra.mxu0 0.0
    %625 = vmatpush.msra.mxu0 0.0
    %626 = vmatpush.msra.mxu0 0.0
    %627 = vmatpush.msra.mxu0 0.0
    %628 = vmatpush.msra.mxu0 0.0
    %629 = vmatpush.msra.mxu0 0.0
    %630 = vmatpush.msra.mxu0 0.0
    %631 = vmatpush.msra.mxu0 0.0
    %632 = vmatpush.msra.mxu0 0.0
    %633 = vmatpush.msra.mxu0 0.0
    %634 = vmatpush.msra.mxu0 0.0
    %635 = vmatpush.msra.mxu0 %v575
    %636 = vmatpush.msra.mxu0 %v574
    %637 = vmatpush.msra.mxu0 %v573
    %638 = vmatpush.msra.mxu0 %v572
    %639 = vmatmul.f32.gmra.mxu0 %v615
    %v640 = vpop.f32.mrf.mxu0
    %v641 = vadd.f32 0.0, %v640
    %642 = vmatmul.f32.gmra.mxu0 %v617
    %v643 = vpop.f32.mrf.mxu0
    %v644 = vadd.f32 0.0, %v643
    %645 = vmatmul.f32.gmra.mxu0 %v619
    %v646 = vpop.f32.mrf.mxu0
    %v647 = vadd.f32 0.0, %v646
    %648 = vmatmul.f32.gmra.mxu0 %v621
    %v649 = vpop.f32.mrf.mxu0
    %v650 = vadd.f32 0.0, %v649
    %651 = vdwg.mxu0
    %v656 = vrot.slane %v641, 2
    %v657 = vrot.slane %v641, 4
    %v658 = vrot.slane %v641, 6
    %v659 = vrot.slane %v644, 2
    %v660 = vrot.slane %v644, 4
    %v661 = vrot.slane %v644, 6
    %v662 = vrot.slane %v647, 2
    %v663 = vrot.slane %v647, 4
    %v664 = vrot.slane %v647, 6
    %v665 = vrot.slane %v650, 2
    %v677 = vrot.slane %v157, 2
    %v678 = vrot.slane %v157, 4
    %v679 = vrot.slane %v157, 6
    %v683 = vmul.f32 %v641, %v157
    %v684 = vmul.f32 %v656, %v677
    %v685 = vmul.f32 %v657, %v678
    %v686 = vmul.f32 %v658, %v679
    %v687 = vmul.f32 %v644, %v157
    %v688 = vmul.f32 %v659, %v677
    %v689 = vmul.f32 %v660, %v678
    %v690 = vmul.f32 %v661, %v157
    %v691 = vmul.f32 %v647, %v677
    %v692 = vmul.f32 %v662, %v678
    %v693 = vmul.f32 %v663, %v679
    %v694 = vmul.f32 %v664, %v157
    %v695 = vmul.f32 %v650, %v677
    %v696 = vmul.f32 %v665, %v678
    %704 = vst [vmem:[#allocation1] ss:$4 sm:$0xff] %v683
    %s705 = scalar_lea.vmem [#allocation1], 1
    %706 = vst [vmem:[%s705] ss:$4 sm:$0xff] %v684
    %s707 = scalar_lea.vmem [#allocation1], 2
    %708 = vst [vmem:[%s707] ss:$4 sm:$0xff] %v685
    %s709 = scalar_lea.vmem [#allocation1], 3
    %710 = vst [vmem:[%s709] ss:$4 sm:$0xff] %v686
    %s711 = scalar_lea.vmem [#allocation1], 32
    %712 = vst [vmem:[%s711] ss:$4 sm:$0xff] %v687
    %s713 = scalar_lea.vmem [#allocation1], 33
    %714 = vst [vmem:[%s713] ss:$4 sm:$0xff] %v688
    %s715 = scalar_lea.vmem [#allocation1], 34
    %716 = vst [vmem:[%s715] ss:$4 sm:$0xff] %v689
    %v717 = vld.sshfl [vmem:[#allocation1] sm:$0xff pattern:$0x73625140]
    %v718 = vld.sshfl [vmem:[#allocation1 + $0x20] sm:$0xff pattern:$0x73625140]
    %719 = vst [vmem:[#allocation1] ss:$4 sm:$0xff] %v641
    %s720 = scalar_lea.vmem [#allocation1], 1
    %721 = vst [vmem:[%s720] ss:$4 sm:$0xff] %v656
    %s722 = scalar_lea.vmem [#allocation1], 2
    %723 = vst [vmem:[%s722] ss:$4 sm:$0xff] %v657
    %s724 = scalar_lea.vmem [#allocation1], 3
    %725 = vst [vmem:[%s724] ss:$4 sm:$0xff] %v658
    %s726 = scalar_lea.vmem [#allocation1], 32
    %727 = vst [vmem:[%s726] ss:$4 sm:$0xff] %v644
    %s728 = scalar_lea.vmem [#allocation1], 33
    %729 = vst [vmem:[%s728] ss:$4 sm:$0xff] %v659
    %s730 = scalar_lea.vmem [#allocation1], 34
    %731 = vst [vmem:[%s730] ss:$4 sm:$0xff] %v660
    %v732 = vld.sshfl [vmem:[#allocation1] sm:$0xff pattern:$0x73625140]
    %v733 = vld.sshfl [vmem:[#allocation1 + $0x20] sm:$0xff pattern:$0x73625140]
    %734 = vrot.lane.b32.xlu0 %v732, 96
    %v735 = vpop.permute.xlu0 %734
    %736 = vrot.lane.b32.xlu0 %v733, 96
    %v737 = vpop.permute.xlu0 %736
    %v738 = vsel %vm203, %v717, 0
    %v740 = vsel %vm203, %v718, 0
    %v742 = vsel %vm203, %v735, 0
    %v744 = vsel %vm203, %v737, 0
    %746 = vmatpush.xpose.msra.mxu0 0.0
    %747 = vmatpush.xpose.msra.mxu0 0.0
    %748 = vmatpush.xpose.msra.mxu0 0.0
    %749 = vmatpush.xpose.msra.mxu0 0.0
    %750 = vmatpush.xpose.msra.mxu0 0.0
    %751 = vmatpush.xpose.msra.mxu0 0.0
    %752 = vmatpush.xpose.msra.mxu0 0.0
    %753 = vmatpush.xpose.msra.mxu0 0.0
    %754 = vmatpush.xpose.msra.mxu0 0.0
    %755 = vmatpush.xpose.msra.mxu0 0.0
    %756 = vmatpush.xpose.msra.mxu0 0.0
    %757 = vmatpush.xpose.msra.mxu0 0.0
    %758 = vmatpush.xpose.msra.mxu0 0.0
    %759 = vmatpush.xpose.msra.mxu0 0.0
    %760 = vmatpush.xpose.msra.mxu0 %v744
    %761 = vmatpush.xpose.msra.mxu0 %v742
    %762 = vmatmul.f32.gmra.mxu0 %v738
    %v763 = vpop.f32.mrf.mxu0
    %v764 = vadd.f32 0.0, %v763
    %765 = vmatmul.f32.gmra.mxu0 %v740
    %v766 = vpop.f32.mrf.mxu0
    %v767 = vadd.f32 0.0, %v766
    %768 = vdwg.mxu0
    %776 = vst [vmem:[#allocation1] ss:$4 sm:$0xff] %v690
    %s777 = scalar_lea.vmem [#allocation1], 1
    %778 = vst [vmem:[%s777] ss:$4 sm:$0xff] %v691
    %s779 = scalar_lea.vmem [#allocation1], 2
    %780 = vst [vmem:[%s779] ss:$4 sm:$0xff] %v692
    %s781 = scalar_lea.vmem [#allocation1], 3
    %782 = vst [vmem:[%s781] ss:$4 sm:$0xff] %v693
    %s783 = scalar_lea.vmem [#allocation1], 32
    %784 = vst [vmem:[%s783] ss:$4 sm:$0xff] %v694
    %s785 = scalar_lea.vmem [#allocation1], 33
    %786 = vst [vmem:[%s785] ss:$4 sm:$0xff] %v695
    %s787 = scalar_lea.vmem [#allocation1], 34
    %788 = vst [vmem:[%s787] ss:$4 sm:$0xff] %v696
    %v789 = vld.sshfl [vmem:[#allocation1] sm:$0xff pattern:$0x73625140]
    %v790 = vld.sshfl [vmem:[#allocation1 + $0x20] sm:$0xff pattern:$0x73625140]
    %791 = vst [vmem:[#allocation1] ss:$4 sm:$0xff] %v661
    %s792 = scalar_lea.vmem [#allocation1], 1
    %793 = vst [vmem:[%s792] ss:$4 sm:$0xff] %v647
    %s794 = scalar_lea.vmem [#allocation1], 2
    %795 = vst [vmem:[%s794] ss:$4 sm:$0xff] %v662
    %s796 = scalar_lea.vmem [#allocation1], 3
    %797 = vst [vmem:[%s796] ss:$4 sm:$0xff] %v663
    %s798 = scalar_lea.vmem [#allocation1], 32
    %799 = vst [vmem:[%s798] ss:$4 sm:$0xff] %v664
    %s800 = scalar_lea.vmem [#allocation1], 33
    %801 = vst [vmem:[%s800] ss:$4 sm:$0xff] %v650
    %s802 = scalar_lea.vmem [#allocation1], 34
    %803 = vst [vmem:[%s802] ss:$4 sm:$0xff] %v665
    %v804 = vld.sshfl [vmem:[#allocation1] sm:$0xff pattern:$0x73625140]
    %v805 = vld.sshfl [vmem:[#allocation1 + $0x20] sm:$0xff pattern:$0x73625140]
    %806 = vrot.lane.b32.xlu0 %v804, 96
    %v807 = vpop.permute.xlu0 %806
    %808 = vrot.lane.b32.xlu0 %v805, 96
    %v809 = vpop.permute.xlu0 %808
    %v810 = vsel %vm203, %v789, 0
    %v812 = vsel %vm203, %v790, 0
    %v814 = vsel %vm203, %v807, 0
    %v816 = vsel %vm203, %v809, 0
    %818 = vmatpush.xpose.msra.mxu0 0.0
    %819 = vmatpush.xpose.msra.mxu0 0.0
    %820 = vmatpush.xpose.msra.mxu0 0.0
    %821 = vmatpush.xpose.msra.mxu0 0.0
    %822 = vmatpush.xpose.msra.mxu0 0.0
    %823 = vmatpush.xpose.msra.mxu0 0.0
    %824 = vmatpush.xpose.msra.mxu0 0.0
    %825 = vmatpush.xpose.msra.mxu0 0.0
    %826 = vmatpush.xpose.msra.mxu0 0.0
    %827 = vmatpush.xpose.msra.mxu0 0.0
    %828 = vmatpush.xpose.msra.mxu0 0.0
    %829 = vmatpush.xpose.msra.mxu0 0.0
    %830 = vmatpush.xpose.msra.mxu0 0.0
    %831 = vmatpush.xpose.msra.mxu0 0.0
    %832 = vmatpush.xpose.msra.mxu0 %v816
    %833 = vmatpush.xpose.msra.mxu0 %v814
    %834 = vmatmul.f32.gmra.mxu0 %v810
    %v835 = vpop.f32.mrf.mxu0
    %v836 = vadd.f32 0.0, %v835
    %837 = vmatmul.f32.gmra.mxu0 %v812
    %v838 = vpop.f32.mrf.mxu0
    %v839 = vadd.f32 0.0, %v838
    %840 = vdwg.mxu0
    %vm841 = vcmask 113664
    %v842 = vsel %vm841, %v764, -inf
    %843 = vmax.xlane.f32.xlu0 %v842
    %v844 = vpop.xlane.xlu0 %843
    %vm845 = vcmask 111616
    %v846 = vsel %vm845, %v767, -inf
    %847 = vmax.xlane.f32.xlu0 %v846
    %v848 = vpop.xlane.xlu0 %847
    %v849 = vsel %vm841, %v836, -inf
    %850 = vmax.xlane.f32.xlu0 %v849
    %v851 = vpop.xlane.xlu0 %850
    %v852 = vsel %vm845, %v839, -inf
    %853 = vmax.xlane.f32.xlu0 %v852
    %v854 = vpop.xlane.xlu0 %853
    %v855 = vsub.f32 %v764, %v844
    %v856 = vsub.f32 %v767, %v848
    %v857 = vsub.f32 %v836, %v851
    %v858 = vsub.f32 %v839, %v854
    %v859 = vmul.f32 %v855, 1.442695
    %v860 = vpow.pop %v859
    %v861 = vmul.f32 %v856, 1.442695
    %v862 = vpow.pop %v861
    %v863 = vmul.f32 %v857, 1.442695
    %v864 = vpow.pop %v863
    %v865 = vmul.f32 %v858, 1.442695
    %v866 = vpow.pop %v865
    %v867 = vsel %vm841, %v860, 0.0
    %868 = vadd.xlane.f32.xlu0 %v867
    %v869 = vpop.xlane.xlu0 %868
    %v870 = vsel %vm845, %v862, 0.0
    %871 = vadd.xlane.f32.xlu0 %v870
    %v872 = vpop.xlane.xlu0 %871
    %v873 = vsel %vm841, %v864, 0.0
    %874 = vadd.xlane.f32.xlu0 %v873
    %v875 = vpop.xlane.xlu0 %874
    %v876 = vsel %vm845, %v866, 0.0
    %877 = vadd.xlane.f32.xlu0 %v876
    %v878 = vpop.xlane.xlu0 %877
    %v879 = vrcp.pop %v869
    %v880 = vrcp.pop %v872
    %v881 = vrcp.pop %v875
    %v882 = vrcp.pop %v878
    %v883 = vmul.f32 %v860, %v879
    %v884 = vmul.f32 %v862, %v880
    %v885 = vmul.f32 %v864, %v881
    %v886 = vmul.f32 %v866, %v882
    %887 = vst [vmem:[#allocation1] ss:$4 sm:$0xff] %v641
    %s888 = scalar_lea.vmem [#allocation1], 1
    %889 = vst [vmem:[%s888] ss:$4 sm:$0xff] %v656
    %s890 = scalar_lea.vmem [#allocation1], 2
    %891 = vst [vmem:[%s890] ss:$4 sm:$0xff] %v657
    %s892 = scalar_lea.vmem [#allocation1], 3
    %893 = vst [vmem:[%s892] ss:$4 sm:$0xff] %v658
    %s894 = scalar_lea.vmem [#allocation1], 32
    %895 = vst [vmem:[%s894] ss:$4 sm:$0xff] %v644
    %s896 = scalar_lea.vmem [#allocation1], 33
    %897 = vst [vmem:[%s896] ss:$4 sm:$0xff] %v659
    %s898 = scalar_lea.vmem [#allocation1], 34
    %899 = vst [vmem:[%s898] ss:$4 sm:$0xff] %v660
    %v900 = vld.sshfl [vmem:[#allocation1] sm:$0xff pattern:$0x73625140]
    %v901 = vld.sshfl [vmem:[#allocation1 + $0x20] sm:$0xff pattern:$0x73625140]
    %902 = vrot.lane.b32.xlu0 %v900, 64
    %v903 = vpop.permute.xlu0 %902
    %904 = vrot.lane.b32.xlu0 %v901, 64
    %v905 = vpop.permute.xlu0 %904
    %v908 = vsel %vm841, %v883, 0
    %v911 = vsel %vm841, %v884, 0
    %vm913 = vcmask 1045504
    %v914 = vsel %vm913, %v905, 0
    %916 = vmatpush.msra.mxu0 0.0
    %917 = vmatpush.msra.mxu0 0.0
    %918 = vmatpush.msra.mxu0 0.0
    %919 = vmatpush.msra.mxu0 0.0
    %920 = vmatpush.msra.mxu0 0.0
    %921 = vmatpush.msra.mxu0 0.0
    %922 = vmatpush.msra.mxu0 0.0
    %923 = vmatpush.msra.mxu0 0.0
    %924 = vmatpush.msra.mxu0 0.0
    %925 = vmatpush.msra.mxu0 0.0
    %926 = vmatpush.msra.mxu0 0.0
    %927 = vmatpush.msra.mxu0 0.0
    %928 = vmatpush.msra.mxu0 0.0
    %929 = vmatpush.msra.mxu0 0.0
    %930 = vmatpush.msra.mxu0 %v914
    %931 = vmatpush.msra.mxu0 %v903
    %932 = vmatmul.f32.gmra.mxu0 %v908
    %v933 = vpop.f32.mrf.mxu0
    %v934 = vadd.f32 0.0, %v933
    %935 = vmatmul.f32.gmra.mxu0 %v911
    %v936 = vpop.f32.mrf.mxu0
    %v937 = vadd.f32 0.0, %v936
    %938 = vdwg.mxu0
    %939 = vst [vmem:[#allocation1] ss:$4 sm:$0xff] %v661
    %s940 = scalar_lea.vmem [#allocation1], 1
    %941 = vst [vmem:[%s940] ss:$4 sm:$0xff] %v647
    %s942 = scalar_lea.vmem [#allocation1], 2
    %943 = vst [vmem:[%s942] ss:$4 sm:$0xff] %v662
    %s944 = scalar_lea.vmem [#allocation1], 3
    %945 = vst [vmem:[%s944] ss:$4 sm:$0xff] %v663
    %s946 = scalar_lea.vmem [#allocation1], 32
    %947 = vst [vmem:[%s946] ss:$4 sm:$0xff] %v664
    %s948 = scalar_lea.vmem [#allocation1], 33
    %949 = vst [vmem:[%s948] ss:$4 sm:$0xff] %v650
    %s950 = scalar_lea.vmem [#allocation1], 34
    %951 = vst [vmem:[%s950] ss:$4 sm:$0xff] %v665
    %v952 = vld.sshfl [vmem:[#allocation1] sm:$0xff pattern:$0x73625140]
    %v953 = vld.sshfl [vmem:[#allocation1 + $0x20] sm:$0xff pattern:$0x73625140]
    %954 = vrot.lane.b32.xlu0 %v952, 64
    %v955 = vpop.permute.xlu0 %954
    %956 = vrot.lane.b32.xlu0 %v953, 64
    %v957 = vpop.permute.xlu0 %956
    %v960 = vsel %vm841, %v885, 0
    %v963 = vsel %vm841, %v886, 0
    %v965 = vsel %vm913, %v957, 0
    %967 = vmatpush.msra.mxu0 0.0
    %968 = vmatpush.msra.mxu0 0.0
    %969 = vmatpush.msra.mxu0 0.0
    %970 = vmatpush.msra.mxu0 0.0
    %971 = vmatpush.msra.mxu0 0.0
    %972 = vmatpush.msra.mxu0 0.0
    %973 = vmatpush.msra.mxu0 0.0
    %974 = vmatpush.msra.mxu0 0.0
    %975 = vmatpush.msra.mxu0 0.0
    %976 = vmatpush.msra.mxu0 0.0
    %977 = vmatpush.msra.mxu0 0.0
    %978 = vmatpush.msra.mxu0 0.0
    %979 = vmatpush.msra.mxu0 0.0
    %980 = vmatpush.msra.mxu0 0.0
    %981 = vmatpush.msra.mxu0 %v965
    %982 = vmatpush.msra.mxu0 %v955
    %983 = vmatmul.f32.gmra.mxu0 %v960
    %v984 = vpop.f32.mrf.mxu0
    %v985 = vadd.f32 0.0, %v984
    %986 = vmatmul.f32.gmra.mxu0 %v963
    %v987 = vpop.f32.mrf.mxu0
    %v988 = vadd.f32 0.0, %v987
    %989 = vdwg.mxu0
    %v990 = vmul.f32 %v934, %v157
    %v991 = vmul.f32 %v937, %v157
    %v992 = vmul.f32 %v985, %v157
    %v993 = vmul.f32 %v988, %v157
    %v994 = vadd.f32 %v990, 0.0
    %v995 = vadd.f32 %v991, 0.0
    %v996 = vadd.f32 %v992, 0.0
    %v997 = vadd.f32 %v993, 0.0
    %v999 = vrot.slane %v162, 2
    %v1000 = vrot.slane %v162, 4
    %v1001 = vrot.slane %v162, 6
    %v1005 = vmul.f32 %v641, %v162
    %v1006 = vmul.f32 %v656, %v999
    %v1007 = vmul.f32 %v657, %v1000
    %v1008 = vmul.f32 %v658, %v1001
    %v1009 = vmul.f32 %v644, %v162
    %v1010 = vmul.f32 %v659, %v999
    %v1011 = vmul.f32 %v660, %v1000
    %v1012 = vmul.f32 %v661, %v162
    %v1013 = vmul.f32 %v647, %v999
    %v1014 = vmul.f32 %v662, %v1000
    %v1015 = vmul.f32 %v663, %v1001
    %v1016 = vmul.f32 %v664, %v162
    %v1017 = vmul.f32 %v650, %v999
    %v1018 = vmul.f32 %v665, %v1000
    %1026 = vst [vmem:[#allocation1] ss:$4 sm:$0xff] %v1005
    %s1027 = scalar_lea.vmem [#allocation1], 1
    %1028 = vst [vmem:[%s1027] ss:$4 sm:$0xff] %v1006
    %s1029 = scalar_lea.vmem [#allocation1], 2
    %1030 = vst [vmem:[%s1029] ss:$4 sm:$0xff] %v1007
    %s1031 = scalar_lea.vmem [#allocation1], 3
    %1032 = vst [vmem:[%s1031] ss:$4 sm:$0xff] %v1008
    %s1033 = scalar_lea.vmem [#allocation1], 32
    %1034 = vst [vmem:[%s1033] ss:$4 sm:$0xff] %v1009
    %s1035 = scalar_lea.vmem [#allocation1], 33
    %1036 = vst [vmem:[%s1035] ss:$4 sm:$0xff] %v1010
    %s1037 = scalar_lea.vmem [#allocation1], 34
    %1038 = vst [vmem:[%s1037] ss:$4 sm:$0xff] %v1011
    %v1039 = vld.sshfl [vmem:[#allocation1] sm:$0xff pattern:$0x73625140]
    %v1040 = vld.sshfl [vmem:[#allocation1 + $0x20] sm:$0xff pattern:$0x73625140]
    %1041 = vst [vmem:[#allocation1] ss:$4 sm:$0xff] %v641
    %s1042 = scalar_lea.vmem [#allocation1], 1
    %1043 = vst [vmem:[%s1042] ss:$4 sm:$0xff] %v656
    %s1044 = scalar_lea.vmem [#allocation1], 2
    %1045 = vst [vmem:[%s1044] ss:$4 sm:$0xff] %v657
    %s1046 = scalar_lea.vmem [#allocation1], 3
    %1047 = vst [vmem:[%s1046] ss:$4 sm:$0xff] %v658
    %s1048 = scalar_lea.vmem [#allocation1], 32
    %1049 = vst [vmem:[%s1048] ss:$4 sm:$0xff] %v644
    %s1050 = scalar_lea.vmem [#allocation1], 33
    %1051 = vst [vmem:[%s1050] ss:$4 sm:$0xff] %v659
    %s1052 = scalar_lea.vmem [#allocation1], 34
    %1053 = vst [vmem:[%s1052] ss:$4 sm:$0xff] %v660
    %v1054 = vld.sshfl [vmem:[#allocation1] sm:$0xff pattern:$0x73625140]
    %v1055 = vld.sshfl [vmem:[#allocation1 + $0x20] sm:$0xff pattern:$0x73625140]
    %1056 = vrot.lane.b32.xlu0 %v1054, 96
    %v1057 = vpop.permute.xlu0 %1056
    %1058 = vrot.lane.b32.xlu0 %v1055, 96
    %v1059 = vpop.permute.xlu0 %1058
    %v1060 = vsel %vm203, %v1039, 0
    %v1062 = vsel %vm203, %v1040, 0
    %v1064 = vsel %vm203, %v1057, 0
    %v1066 = vsel %vm203, %v1059, 0
    %1068 = vmatpush.xpose.msra.mxu0 0.0
    %1069 = vmatpush.xpose.msra.mxu0 0.0
    %1070 = vmatpush.xpose.msra.mxu0 0.0
    %1071 = vmatpush.xpose.msra.mxu0 0.0
    %1072 = vmatpush.xpose.msra.mxu0 0.0
    %1073 = vmatpush.xpose.msra.mxu0 0.0
    %1074 = vmatpush.xpose.msra.mxu0 0.0
    %1075 = vmatpush.xpose.msra.mxu0 0.0
    %1076 = vmatpush.xpose.msra.mxu0 0.0
    %1077 = vmatpush.xpose.msra.mxu0 0.0
    %1078 = vmatpush.xpose.msra.mxu0 0.0
    %1079 = vmatpush.xpose.msra.mxu0 0.0
    %1080 = vmatpush.xpose.msra.mxu0 0.0
    %1081 = vmatpush.xpose.msra.mxu0 0.0
    %1082 = vmatpush.xpose.msra.mxu0 %v1066
    %1083 = vmatpush.xpose.msra.mxu0 %v1064
    %1084 = vmatmul.f32.gmra.mxu0 %v1060
    %v1085 = vpop.f32.mrf.mxu0
    %v1086 = vadd.f32 0.0, %v1085
    %1087 = vmatmul.f32.gmra.mxu0 %v1062
    %v1088 = vpop.f32.mrf.mxu0
    %v1089 = vadd.f32 0.0, %v1088
    %1090 = vdwg.mxu0
    %1098 = vst [vmem:[#allocation1] ss:$4 sm:$0xff] %v1012
    %s1099 = scalar_lea.vmem [#allocation1], 1
    %1100 = vst [vmem:[%s1099] ss:$4 sm:$0xff] %v1013
    %s1101 = scalar_lea.vmem [#allocation1], 2
    %1102 = vst [vmem:[%s1101] ss:$4 sm:$0xff] %v1014
    %s1103 = scalar_lea.vmem [#allocation1], 3
    %1104 = vst [vmem:[%s1103] ss:$4 sm:$0xff] %v1015
    %s1105 = scalar_lea.vmem [#allocation1], 32
    %1106 = vst [vmem:[%s1105] ss:$4 sm:$0xff] %v1016
    %s1107 = scalar_lea.vmem [#allocation1], 33
    %1108 = vst [vmem:[%s1107] ss:$4 sm:$0xff] %v1017
    %s1109 = scalar_lea.vmem [#allocation1], 34
    %1110 = vst [vmem:[%s1109] ss:$4 sm:$0xff] %v1018
    %v1111 = vld.sshfl [vmem:[#allocation1] sm:$0xff pattern:$0x73625140]
    %v1112 = vld.sshfl [vmem:[#allocation1 + $0x20] sm:$0xff pattern:$0x73625140]
    %1113 = vst [vmem:[#allocation1] ss:$4 sm:$0xff] %v661
    %s1114 = scalar_lea.vmem [#allocation1], 1
    %1115 = vst [vmem:[%s1114] ss:$4 sm:$0xff] %v647
    %s1116 = scalar_lea.vmem [#allocation1], 2
    %1117 = vst [vmem:[%s1116] ss:$4 sm:$0xff] %v662
    %s1118 = scalar_lea.vmem [#allocation1], 3
    %1119 = vst [vmem:[%s1118] ss:$4 sm:$0xff] %v663
    %s1120 = scalar_lea.vmem [#allocation1], 32
    %1121 = vst [vmem:[%s1120] ss:$4 sm:$0xff] %v664
    %s1122 = scalar_lea.vmem [#allocation1], 33
    %1123 = vst [vmem:[%s1122] ss:$4 sm:$0xff] %v650
    %s1124 = scalar_lea.vmem [#allocation1], 34
    %1125 = vst [vmem:[%s1124] ss:$4 sm:$0xff] %v665
    %v1126 = vld.sshfl [vmem:[#allocation1] sm:$0xff pattern:$0x73625140]
    %v1127 = vld.sshfl [vmem:[#allocation1 + $0x20] sm:$0xff pattern:$0x73625140]
    %1128 = vrot.lane.b32.xlu0 %v1126, 96
    %v1129 = vpop.permute.xlu0 %1128
    %1130 = vrot.lane.b32.xlu0 %v1127, 96
    %v1131 = vpop.permute.xlu0 %1130
    %v1132 = vsel %vm203, %v1111, 0
    %v1134 = vsel %vm203, %v1112, 0
    %v1136 = vsel %vm203, %v1129, 0
    %v1138 = vsel %vm203, %v1131, 0
    %1140 = vmatpush.xpose.msra.mxu0 0.0
    %1141 = vmatpush.xpose.msra.mxu0 0.0
    %1142 = vmatpush.xpose.msra.mxu0 0.0
    %1143 = vmatpush.xpose.msra.mxu0 0.0
    %1144 = vmatpush.xpose.msra.mxu0 0.0
    %1145 = vmatpush.xpose.msra.mxu0 0.0
    %1146 = vmatpush.xpose.msra.mxu0 0.0
    %1147 = vmatpush.xpose.msra.mxu0 0.0
    %1148 = vmatpush.xpose.msra.mxu0 0.0
    %1149 = vmatpush.xpose.msra.mxu0 0.0
    %1150 = vmatpush.xpose.msra.mxu0 0.0
    %1151 = vmatpush.xpose.msra.mxu0 0.0
    %1152 = vmatpush.xpose.msra.mxu0 0.0
    %1153 = vmatpush.xpose.msra.mxu0 0.0
    %1154 = vmatpush.xpose.msra.mxu0 %v1138
    %1155 = vmatpush.xpose.msra.mxu0 %v1136
    %1156 = vmatmul.f32.gmra.mxu0 %v1132
    %v1157 = vpop.f32.mrf.mxu0
    %v1158 = vadd.f32 0.0, %v1157
    %1159 = vmatmul.f32.gmra.mxu0 %v1134
    %v1160 = vpop.f32.mrf.mxu0
    %v1161 = vadd.f32 0.0, %v1160
    %1162 = vdwg.mxu0
    %v1163 = vsel %vm841, %v1086, -inf
    %1164 = vmax.xlane.f32.xlu0 %v1163
    %v1165 = vpop.xlane.xlu0 %1164
    %v1166 = vsel %vm845, %v1089, -inf
    %1167 = vmax.xlane.f32.xlu0 %v1166
    %v1168 = vpop.xlane.xlu0 %1167
    %v1169 = vsel %vm841, %v1158, -inf
    %1170 = vmax.xlane.f32.xlu0 %v1169
    %v1171 = vpop.xlane.xlu0 %1170
    %v1172 = vsel %vm845, %v1161, -inf
    %1173 = vmax.xlane.f32.xlu0 %v1172
    %v1174 = vpop.xlane.xlu0 %1173
    %v1175 = vsub.f32 %v1086, %v1165
    %v1176 = vsub.f32 %v1089, %v1168
    %v1177 = vsub.f32 %v1158, %v1171
    %v1178 = vsub.f32 %v1161, %v1174
    %v1179 = vmul.f32 %v1175, 1.442695
    %v1180 = vpow.pop %v1179
    %v1181 = vmul.f32 %v1176, 1.442695
    %v1182 = vpow.pop %v1181
    %v1183 = vmul.f32 %v1177, 1.442695
    %v1184 = vpow.pop %v1183
    %v1185 = vmul.f32 %v1178, 1.442695
    %v1186 = vpow.pop %v1185
    %v1187 = vsel %vm841, %v1180, 0.0
    %1188 = vadd.xlane.f32.xlu0 %v1187
    %v1189 = vpop.xlane.xlu0 %1188
    %v1190 = vsel %vm845, %v1182, 0.0
    %1191 = vadd.xlane.f32.xlu0 %v1190
    %v1192 = vpop.xlane.xlu0 %1191
    %v1193 = vsel %vm841, %v1184, 0.0
    %1194 = vadd.xlane.f32.xlu0 %v1193
    %v1195 = vpop.xlane.xlu0 %1194
    %v1196 = vsel %vm845, %v1186, 0.0
    %1197 = vadd.xlane.f32.xlu0 %v1196
    %v1198 = vpop.xlane.xlu0 %1197
    %v1199 = vrcp.pop %v1189
    %v1200 = vrcp.pop %v1192
    %v1201 = vrcp.pop %v1195
    %v1202 = vrcp.pop %v1198
    %v1203 = vmul.f32 %v1180, %v1199
    %v1204 = vmul.f32 %v1182, %v1200
    %v1205 = vmul.f32 %v1184, %v1201
    %v1206 = vmul.f32 %v1186, %v1202
    %1207 = vst [vmem:[#allocation1] ss:$4 sm:$0xff] %v641
    %s1208 = scalar_lea.vmem [#allocation1], 1
    %1209 = vst [vmem:[%s1208] ss:$4 sm:$0xff] %v656
    %s1210 = scalar_lea.vmem [#allocation1], 2
    %1211 = vst [vmem:[%s1210] ss:$4 sm:$0xff] %v657
    %s1212 = scalar_lea.vmem [#allocation1], 3
    %1213 = vst [vmem:[%s1212] ss:$4 sm:$0xff] %v658
    %s1214 = scalar_lea.vmem [#allocation1], 32
    %1215 = vst [vmem:[%s1214] ss:$4 sm:$0xff] %v644
    %s1216 = scalar_lea.vmem [#allocation1], 33
    %1217 = vst [vmem:[%s1216] ss:$4 sm:$0xff] %v659
    %s1218 = scalar_lea.vmem [#allocation1], 34
    %1219 = vst [vmem:[%s1218] ss:$4 sm:$0xff] %v660
    %v1220 = vld.sshfl [vmem:[#allocation1] sm:$0xff pattern:$0x73625140]
    %v1221 = vld.sshfl [vmem:[#allocation1 + $0x20] sm:$0xff pattern:$0x73625140]
    %1222 = vrot.lane.b32.xlu0 %v1220, 64
    %v1223 = vpop.permute.xlu0 %1222
    %1224 = vrot.lane.b32.xlu0 %v1221, 64
    %v1225 = vpop.permute.xlu0 %1224
    %v1228 = vsel %vm841, %v1203, 0
    %v1231 = vsel %vm841, %v1204, 0
    %v1233 = vsel %vm913, %v1225, 0
    %1235 = vmatpush.msra.mxu0 0.0
    %1236 = vmatpush.msra.mxu0 0.0
    %1237 = vmatpush.msra.mxu0 0.0
    %1238 = vmatpush.msra.mxu0 0.0
    %1239 = vmatpush.msra.mxu0 0.0
    %1240 = vmatpush.msra.mxu0 0.0
    %1241 = vmatpush.msra.mxu0 0.0
    %1242 = vmatpush.msra.mxu0 0.0
    %1243 = vmatpush.msra.mxu0 0.0
    %1244 = vmatpush.msra.mxu0 0.0
    %1245 = vmatpush.msra.mxu0 0.0
    %1246 = vmatpush.msra.mxu0 0.0
    %1247 = vmatpush.msra.mxu0 0.0
    %1248 = vmatpush.msra.mxu0 0.0
    %1249 = vmatpush.msra.mxu0 %v1233
    %1250 = vmatpush.msra.mxu0 %v1223
    %1251 = vmatmul.f32.gmra.mxu0 %v1228
    %v1252 = vpop.f32.mrf.mxu0
    %v1253 = vadd.f32 0.0, %v1252
    %1254 = vmatmul.f32.gmra.mxu0 %v1231
    %v1255 = vpop.f32.mrf.mxu0
    %v1256 = vadd.f32 0.0, %v1255
    %1257 = vdwg.mxu0
    %1258 = vst [vmem:[#allocation1] ss:$4 sm:$0xff] %v661
    %s1259 = scalar_lea.vmem [#allocation1], 1
    %1260 = vst [vmem:[%s1259] ss:$4 sm:$0xff] %v647
    %s1261 = scalar_lea.vmem [#allocation1], 2
    %1262 = vst [vmem:[%s1261] ss:$4 sm:$0xff] %v662
    %s1263 = scalar_lea.vmem [#allocation1], 3
    %1264 = vst [vmem:[%s1263] ss:$4 sm:$0xff] %v663
    %s1265 = scalar_lea.vmem [#allocation1], 32
    %1266 = vst [vmem:[%s1265] ss:$4 sm:$0xff] %v664
    %s1267 = scalar_lea.vmem [#allocation1], 33
    %1268 = vst [vmem:[%s1267] ss:$4 sm:$0xff] %v650
    %s1269 = scalar_lea.vmem [#allocation1], 34
    %1270 = vst [vmem:[%s1269] ss:$4 sm:$0xff] %v665
    %v1271 = vld.sshfl [vmem:[#allocation1] sm:$0xff pattern:$0x73625140]
    %v1272 = vld.sshfl [vmem:[#allocation1 + $0x20] sm:$0xff pattern:$0x73625140]
    %1273 = vrot.lane.b32.xlu0 %v1271, 64
    %v1274 = vpop.permute.xlu0 %1273
    %1275 = vrot.lane.b32.xlu0 %v1272, 64
    %v1276 = vpop.permute.xlu0 %1275
    %v1279 = vsel %vm841, %v1205, 0
    %v1282 = vsel %vm841, %v1206, 0
    %v1284 = vsel %vm913, %v1276, 0
    %1286 = vmatpush.msra.mxu0 0.0
    %1287 = vmatpush.msra.mxu0 0.0
    %1288 = vmatpush.msra.mxu0 0.0
    %1289 = vmatpush.msra.mxu0 0.0
    %1290 = vmatpush.msra.mxu0 0.0
    %1291 = vmatpush.msra.mxu0 0.0
    %1292 = vmatpush.msra.mxu0 0.0
    %1293 = vmatpush.msra.mxu0 0.0
    %1294 = vmatpush.msra.mxu0 0.0
    %1295 = vmatpush.msra.mxu0 0.0
    %1296 = vmatpush.msra.mxu0 0.0
    %1297 = vmatpush.msra.mxu0 0.0
    %1298 = vmatpush.msra.mxu0 0.0
    %1299 = vmatpush.msra.mxu0 0.0
    %1300 = vmatpush.msra.mxu0 %v1284
    %1301 = vmatpush.msra.mxu0 %v1274
    %1302 = vmatmul.f32.gmra.mxu0 %v1279
    %v1303 = vpop.f32.mrf.mxu0
    %v1304 = vadd.f32 0.0, %v1303
    %1305 = vmatmul.f32.gmra.mxu0 %v1282
    %v1306 = vpop.f32.mrf.mxu0
    %v1307 = vadd.f32 0.0, %v1306
    %1308 = vdwg.mxu0
    %v1309 = vmul.f32 %v1253, %v162
    %v1310 = vmul.f32 %v1256, %v162
    %v1311 = vmul.f32 %v1304, %v162
    %v1312 = vmul.f32 %v1307, %v162
    %v1313 = vadd.f32 %v994, %v1309
    %v1314 = vadd.f32 %v995, %v1310
    %v1315 = vadd.f32 %v996, %v1311
    %v1316 = vadd.f32 %v997, %v1312
    %v1318 = vrot.slane %v167, 2
    %v1319 = vrot.slane %v167, 4
    %v1320 = vrot.slane %v167, 6
    %v1324 = vmul.f32 %v641, %v167
    %v1325 = vmul.f32 %v656, %v1318
    %v1326 = vmul.f32 %v657, %v1319
    %v1327 = vmul.f32 %v658, %v1320
    %v1328 = vmul.f32 %v644, %v167
    %v1329 = vmul.f32 %v659, %v1318
    %v1330 = vmul.f32 %v660, %v1319
    %v1331 = vmul.f32 %v661, %v167
    %v1332 = vmul.f32 %v647, %v1318
    %v1333 = vmul.f32 %v662, %v1319
    %v1334 = vmul.f32 %v663, %v1320
    %v1335 = vmul.f32 %v664, %v167
    %v1336 = vmul.f32 %v650, %v1318
    %v1337 = vmul.f32 %v665, %v1319
    %1345 = vst [vmem:[#allocation1] ss:$4 sm:$0xff] %v1324
    %s1346 = scalar_lea.vmem [#allocation1], 1
    %1347 = vst [vmem:[%s1346] ss:$4 sm:$0xff] %v1325
    %s1348 = scalar_lea.vmem [#allocation1], 2
    %1349 = vst [vmem:[%s1348] ss:$4 sm:$0xff] %v1326
    %s1350 = scalar_lea.vmem [#allocation1], 3
    %1351 = vst [vmem:[%s1350] ss:$4 sm:$0xff] %v1327
    %s1352 = scalar_lea.vmem [#allocation1], 32
    %1353 = vst [vmem:[%s1352] ss:$4 sm:$0xff] %v1328
    %s1354 = scalar_lea.vmem [#allocation1], 33
    %1355 = vst [vmem:[%s1354] ss:$4 sm:$0xff] %v1329
    %s1356 = scalar_lea.vmem [#allocation1], 34
    %1357 = vst [vmem:[%s1356] ss:$4 sm:$0xff] %v1330
    %v1358 = vld.sshfl [vmem:[#allocation1] sm:$0xff pattern:$0x73625140]
    %v1359 = vld.sshfl [vmem:[#allocation1 + $0x20] sm:$0xff pattern:$0x73625140]
    %1360 = vst [vmem:[#allocation1] ss:$4 sm:$0xff] %v641
    %s1361 = scalar_lea.vmem [#allocation1], 1
    %1362 = vst [vmem:[%s1361] ss:$4 sm:$0xff] %v656
    %s1363 = scalar_lea.vmem [#allocation1], 2
    %1364 = vst [vmem:[%s1363] ss:$4 sm:$0xff] %v657
    %s1365 = scalar_lea.vmem [#allocation1], 3
    %1366 = vst [vmem:[%s1365] ss:$4 sm:$0xff] %v658
    %s1367 = scalar_lea.vmem [#allocation1], 32
    %1368 = vst [vmem:[%s1367] ss:$4 sm:$0xff] %v644
    %s1369 = scalar_lea.vmem [#allocation1], 33
    %1370 = vst [vmem:[%s1369] ss:$4 sm:$0xff] %v659
    %s1371 = scalar_lea.vmem [#allocation1], 34
    %1372 = vst [vmem:[%s1371] ss:$4 sm:$0xff] %v660
    %v1373 = vld.sshfl [vmem:[#allocation1] sm:$0xff pattern:$0x73625140]
    %v1374 = vld.sshfl [vmem:[#allocation1 + $0x20] sm:$0xff pattern:$0x73625140]
    %1375 = vrot.lane.b32.xlu0 %v1373, 96
    %v1376 = vpop.permute.xlu0 %1375
    %1377 = vrot.lane.b32.xlu0 %v1374, 96
    %v1378 = vpop.permute.xlu0 %1377
    %v1379 = vsel %vm203, %v1358, 0
    %v1381 = vsel %vm203, %v1359, 0
    %v1383 = vsel %vm203, %v1376, 0
    %v1385 = vsel %vm203, %v1378, 0
    %1387 = vmatpush.xpose.msra.mxu0 0.0
    %1388 = vmatpush.xpose.msra.mxu0 0.0
    %1389 = vmatpush.xpose.msra.mxu0 0.0
    %1390 = vmatpush.xpose.msra.mxu0 0.0
    %1391 = vmatpush.xpose.msra.mxu0 0.0
    %1392 = vmatpush.xpose.msra.mxu0 0.0
    %1393 = vmatpush.xpose.msra.mxu0 0.0
    %1394 = vmatpush.xpose.msra.mxu0 0.0
    %1395 = vmatpush.xpose.msra.mxu0 0.0
    %1396 = vmatpush.xpose.msra.mxu0 0.0
    %1397 = vmatpush.xpose.msra.mxu0 0.0
    %1398 = vmatpush.xpose.msra.mxu0 0.0
    %1399 = vmatpush.xpose.msra.mxu0 0.0
    %1400 = vmatpush.xpose.msra.mxu0 0.0
    %1401 = vmatpush.xpose.msra.mxu0 %v1385
    %1402 = vmatpush.xpose.msra.mxu0 %v1383
    %1403 = vmatmul.f32.gmra.mxu0 %v1379
    %v1404 = vpop.f32.mrf.mxu0
    %v1405 = vadd.f32 0.0, %v1404
    %1406 = vmatmul.f32.gmra.mxu0 %v1381
    %v1407 = vpop.f32.mrf.mxu0
    %v1408 = vadd.f32 0.0, %v1407
    %1409 = vdwg.mxu0
    %1417 = vst [vmem:[#allocation1] ss:$4 sm:$0xff] %v1331
    %s1418 = scalar_lea.vmem [#allocation1], 1
    %1419 = vst [vmem:[%s1418] ss:$4 sm:$0xff] %v1332
    %s1420 = scalar_lea.vmem [#allocation1], 2
    %1421 = vst [vmem:[%s1420] ss:$4 sm:$0xff] %v1333
    %s1422 = scalar_lea.vmem [#allocation1], 3
    %1423 = vst [vmem:[%s1422] ss:$4 sm:$0xff] %v1334
    %s1424 = scalar_lea.vmem [#allocation1], 32
    %1425 = vst [vmem:[%s1424] ss:$4 sm:$0xff] %v1335
    %s1426 = scalar_lea.vmem [#allocation1], 33
    %1427 = vst [vmem:[%s1426] ss:$4 sm:$0xff] %v1336
    %s1428 = scalar_lea.vmem [#allocation1], 34
    %1429 = vst [vmem:[%s1428] ss:$4 sm:$0xff] %v1337
    %v1430 = vld.sshfl [vmem:[#allocation1] sm:$0xff pattern:$0x73625140]
    %v1431 = vld.sshfl [vmem:[#allocation1 + $0x20] sm:$0xff pattern:$0x73625140]
    %1432 = vst [vmem:[#allocation1] ss:$4 sm:$0xff] %v661
    %s1433 = scalar_lea.vmem [#allocation1], 1
    %1434 = vst [vmem:[%s1433] ss:$4 sm:$0xff] %v647
    %s1435 = scalar_lea.vmem [#allocation1], 2
    %1436 = vst [vmem:[%s1435] ss:$4 sm:$0xff] %v662
    %s1437 = scalar_lea.vmem [#allocation1], 3
    %1438 = vst [vmem:[%s1437] ss:$4 sm:$0xff] %v663
    %s1439 = scalar_lea.vmem [#allocation1], 32
    %1440 = vst [vmem:[%s1439] ss:$4 sm:$0xff] %v664
    %s1441 = scalar_lea.vmem [#allocation1], 33
    %1442 = vst [vmem:[%s1441] ss:$4 sm:$0xff] %v650
    %s1443 = scalar_lea.vmem [#allocation1], 34
    %1444 = vst [vmem:[%s1443] ss:$4 sm:$0xff] %v665
    %v1445 = vld.sshfl [vmem:[#allocation1] sm:$0xff pattern:$0x73625140]
    %v1446 = vld.sshfl [vmem:[#allocation1 + $0x20] sm:$0xff pattern:$0x73625140]
    %1447 = vrot.lane.b32.xlu0 %v1445, 96
    %v1448 = vpop.permute.xlu0 %1447
    %1449 = vrot.lane.b32.xlu0 %v1446, 96
    %v1450 = vpop.permute.xlu0 %1449
    %v1451 = vsel %vm203, %v1430, 0
    %v1453 = vsel %vm203, %v1431, 0
    %v1455 = vsel %vm203, %v1448, 0
    %v1457 = vsel %vm203, %v1450, 0
    %1459 = vmatpush.xpose.msra.mxu0 0.0
    %1460 = vmatpush.xpose.msra.mxu0 0.0
    %1461 = vmatpush.xpose.msra.mxu0 0.0
    %1462 = vmatpush.xpose.msra.mxu0 0.0
    %1463 = vmatpush.xpose.msra.mxu0 0.0
    %1464 = vmatpush.xpose.msra.mxu0 0.0
    %1465 = vmatpush.xpose.msra.mxu0 0.0
    %1466 = vmatpush.xpose.msra.mxu0 0.0
    %1467 = vmatpush.xpose.msra.mxu0 0.0
    %1468 = vmatpush.xpose.msra.mxu0 0.0
    %1469 = vmatpush.xpose.msra.mxu0 0.0
    %1470 = vmatpush.xpose.msra.mxu0 0.0
    %1471 = vmatpush.xpose.msra.mxu0 0.0
    %1472 = vmatpush.xpose.msra.mxu0 0.0
    %1473 = vmatpush.xpose.msra.mxu0 %v1457
    %1474 = vmatpush.xpose.msra.mxu0 %v1455
    %1475 = vmatmul.f32.gmra.mxu0 %v1451
    %v1476 = vpop.f32.mrf.mxu0
    %v1477 = vadd.f32 0.0, %v1476
    %1478 = vmatmul.f32.gmra.mxu0 %v1453
    %v1479 = vpop.f32.mrf.mxu0
    %v1480 = vadd.f32 0.0, %v1479
    %1481 = vdwg.mxu0
    %v1482 = vsel %vm841, %v1405, -inf
    %1483 = vmax.xlane.f32.xlu0 %v1482
    %v1484 = vpop.xlane.xlu0 %1483
    %v1485 = vsel %vm845, %v1408, -inf
    %1486 = vmax.xlane.f32.xlu0 %v1485
    %v1487 = vpop.xlane.xlu0 %1486
    %v1488 = vsel %vm841, %v1477, -inf
    %1489 = vmax.xlane.f32.xlu0 %v1488
    %v1490 = vpop.xlane.xlu0 %1489
    %v1491 = vsel %vm845, %v1480, -inf
    %1492 = vmax.xlane.f32.xlu0 %v1491
    %v1493 = vpop.xlane.xlu0 %1492
    %v1494 = vsub.f32 %v1405, %v1484
    %v1495 = vsub.f32 %v1408, %v1487
    %v1496 = vsub.f32 %v1477, %v1490
    %v1497 = vsub.f32 %v1480, %v1493
    %v1498 = vmul.f32 %v1494, 1.442695
    %v1499 = vpow.pop %v1498
    %v1500 = vmul.f32 %v1495, 1.442695
    %v1501 = vpow.pop %v1500
    %v1502 = vmul.f32 %v1496, 1.442695
    %v1503 = vpow.pop %v1502
    %v1504 = vmul.f32 %v1497, 1.442695
    %v1505 = vpow.pop %v1504
    %v1506 = vsel %vm841, %v1499, 0.0
    %1507 = vadd.xlane.f32.xlu0 %v1506
    %v1508 = vpop.xlane.xlu0 %1507
    %v1509 = vsel %vm845, %v1501, 0.0
    %1510 = vadd.xlane.f32.xlu0 %v1509
    %v1511 = vpop.xlane.xlu0 %1510
    %v1512 = vsel %vm841, %v1503, 0.0
    %1513 = vadd.xlane.f32.xlu0 %v1512
    %v1514 = vpop.xlane.xlu0 %1513
    %v1515 = vsel %vm845, %v1505, 0.0
    %1516 = vadd.xlane.f32.xlu0 %v1515
    %v1517 = vpop.xlane.xlu0 %1516
    %v1518 = vrcp.pop %v1508
    %v1519 = vrcp.pop %v1511
    %v1520 = vrcp.pop %v1514
    %v1521 = vrcp.pop %v1517
    %v1522 = vmul.f32 %v1499, %v1518
    %v1523 = vmul.f32 %v1501, %v1519
    %v1524 = vmul.f32 %v1503, %v1520
    %v1525 = vmul.f32 %v1505, %v1521
    %1526 = vst [vmem:[#allocation1] ss:$4 sm:$0xff] %v641
    %s1527 = scalar_lea.vmem [#allocation1], 1
    %1528 = vst [vmem:[%s1527] ss:$4 sm:$0xff] %v656
    %s1529 = scalar_lea.vmem [#allocation1], 2
    %1530 = vst [vmem:[%s1529] ss:$4 sm:$0xff] %v657
    %s1531 = scalar_lea.vmem [#allocation1], 3
    %1532 = vst [vmem:[%s1531] ss:$4 sm:$0xff] %v658
    %s1533 = scalar_lea.vmem [#allocation1], 32
    %1534 = vst [vmem:[%s1533] ss:$4 sm:$0xff] %v644
    %s1535 = scalar_lea.vmem [#allocation1], 33
    %1536 = vst [vmem:[%s1535] ss:$4 sm:$0xff] %v659
    %s1537 = scalar_lea.vmem [#allocation1], 34
    %1538 = vst [vmem:[%s1537] ss:$4 sm:$0xff] %v660
    %v1539 = vld.sshfl [vmem:[#allocation1] sm:$0xff pattern:$0x73625140]
    %v1540 = vld.sshfl [vmem:[#allocation1 + $0x20] sm:$0xff pattern:$0x73625140]
    %1541 = vrot.lane.b32.xlu0 %v1539, 64
    %v1542 = vpop.permute.xlu0 %1541
    %1543 = vrot.lane.b32.xlu0 %v1540, 64
    %v1544 = vpop.permute.xlu0 %1543
    %v1547 = vsel %vm841, %v1522, 0
    %v1550 = vsel %vm841, %v1523, 0
    %v1552 = vsel %vm913, %v1544, 0
    %1554 = vmatpush.msra.mxu0 0.0
    %1555 = vmatpush.msra.mxu0 0.0
    %1556 = vmatpush.msra.mxu0 0.0
    %1557 = vmatpush.msra.mxu0 0.0
    %1558 = vmatpush.msra.mxu0 0.0
    %1559 = vmatpush.msra.mxu0 0.0
    %1560 = vmatpush.msra.mxu0 0.0
    %1561 = vmatpush.msra.mxu0 0.0
    %1562 = vmatpush.msra.mxu0 0.0
    %1563 = vmatpush.msra.mxu0 0.0
    %1564 = vmatpush.msra.mxu0 0.0
    %1565 = vmatpush.msra.mxu0 0.0
    %1566 = vmatpush.msra.mxu0 0.0
    %1567 = vmatpush.msra.mxu0 0.0
    %1568 = vmatpush.msra.mxu0 %v1552
    %1569 = vmatpush.msra.mxu0 %v1542
    %1570 = vmatmul.f32.gmra.mxu0 %v1547
    %v1571 = vpop.f32.mrf.mxu0
    %v1572 = vadd.f32 0.0, %v1571
    %1573 = vmatmul.f32.gmra.mxu0 %v1550
    %v1574 = vpop.f32.mrf.mxu0
    %v1575 = vadd.f32 0.0, %v1574
    %1576 = vdwg.mxu0
    %1577 = vst [vmem:[#allocation1] ss:$4 sm:$0xff] %v661
    %s1578 = scalar_lea.vmem [#allocation1], 1
    %1579 = vst [vmem:[%s1578] ss:$4 sm:$0xff] %v647
    %s1580 = scalar_lea.vmem [#allocation1], 2
    %1581 = vst [vmem:[%s1580] ss:$4 sm:$0xff] %v662
    %s1582 = scalar_lea.vmem [#allocation1], 3
    %1583 = vst [vmem:[%s1582] ss:$4 sm:$0xff] %v663
    %s1584 = scalar_lea.vmem [#allocation1], 32
    %1585 = vst [vmem:[%s1584] ss:$4 sm:$0xff] %v664
    %s1586 = scalar_lea.vmem [#allocation1], 33
    %1587 = vst [vmem:[%s1586] ss:$4 sm:$0xff] %v650
    %s1588 = scalar_lea.vmem [#allocation1], 34
    %1589 = vst [vmem:[%s1588] ss:$4 sm:$0xff] %v665
    %v1590 = vld.sshfl [vmem:[#allocation1] sm:$0xff pattern:$0x73625140]
    %v1591 = vld.sshfl [vmem:[#allocation1 + $0x20] sm:$0xff pattern:$0x73625140]
    %1592 = vrot.lane.b32.xlu0 %v1590, 64
    %v1593 = vpop.permute.xlu0 %1592
    %1594 = vrot.lane.b32.xlu0 %v1591, 64
    %v1595 = vpop.permute.xlu0 %1594
    %v1598 = vsel %vm841, %v1524, 0
    %v1601 = vsel %vm841, %v1525, 0
    %v1603 = vsel %vm913, %v1595, 0
    %1605 = vmatpush.msra.mxu0 0.0
    %1606 = vmatpush.msra.mxu0 0.0
    %1607 = vmatpush.msra.mxu0 0.0
    %1608 = vmatpush.msra.mxu0 0.0
    %1609 = vmatpush.msra.mxu0 0.0
    %1610 = vmatpush.msra.mxu0 0.0
    %1611 = vmatpush.msra.mxu0 0.0
    %1612 = vmatpush.msra.mxu0 0.0
    %1613 = vmatpush.msra.mxu0 0.0
    %1614 = vmatpush.msra.mxu0 0.0
    %1615 = vmatpush.msra.mxu0 0.0
    %1616 = vmatpush.msra.mxu0 0.0
    %1617 = vmatpush.msra.mxu0 0.0
    %1618 = vmatpush.msra.mxu0 0.0
    %1619 = vmatpush.msra.mxu0 %v1603
    %1620 = vmatpush.msra.mxu0 %v1593
    %1621 = vmatmul.f32.gmra.mxu0 %v1598
    %v1622 = vpop.f32.mrf.mxu0
    %v1623 = vadd.f32 0.0, %v1622
    %1624 = vmatmul.f32.gmra.mxu0 %v1601
    %v1625 = vpop.f32.mrf.mxu0
    %v1626 = vadd.f32 0.0, %v1625
    %1627 = vdwg.mxu0
    %v1628 = vmul.f32 %v1572, %v167
    %v1629 = vmul.f32 %v1575, %v167
    %v1630 = vmul.f32 %v1623, %v167
    %v1631 = vmul.f32 %v1626, %v167
    %v1632 = vadd.f32 %v1313, %v1628
    %v1633 = vadd.f32 %v1314, %v1629
    %v1634 = vadd.f32 %v1315, %v1630
    %v1635 = vadd.f32 %v1316, %v1631
    %v1637 = vrot.slane %v172, 2
    %v1638 = vrot.slane %v172, 4
    %v1639 = vrot.slane %v172, 6
    %v1643 = vmul.f32 %v641, %v172
    %v1644 = vmul.f32 %v656, %v1637
    %v1645 = vmul.f32 %v657, %v1638
    %v1646 = vmul.f32 %v658, %v1639
    %v1647 = vmul.f32 %v644, %v172
    %v1648 = vmul.f32 %v659, %v1637
    %v1649 = vmul.f32 %v660, %v1638
    %v1650 = vmul.f32 %v661, %v172
    %v1651 = vmul.f32 %v647, %v1637
    %v1652 = vmul.f32 %v662, %v1638
    %v1653 = vmul.f32 %v663, %v1639
    %v1654 = vmul.f32 %v664, %v172
    %v1655 = vmul.f32 %v650, %v1637
    %v1656 = vmul.f32 %v665, %v1638
    %1664 = vst [vmem:[#allocation1] ss:$4 sm:$0xff] %v1643
    %s1665 = scalar_lea.vmem [#allocation1], 1
    %1666 = vst [vmem:[%s1665] ss:$4 sm:$0xff] %v1644
    %s1667 = scalar_lea.vmem [#allocation1], 2
    %1668 = vst [vmem:[%s1667] ss:$4 sm:$0xff] %v1645
    %s1669 = scalar_lea.vmem [#allocation1], 3
    %1670 = vst [vmem:[%s1669] ss:$4 sm:$0xff] %v1646
    %s1671 = scalar_lea.vmem [#allocation1], 32
    %1672 = vst [vmem:[%s1671] ss:$4 sm:$0xff] %v1647
    %s1673 = scalar_lea.vmem [#allocation1], 33
    %1674 = vst [vmem:[%s1673] ss:$4 sm:$0xff] %v1648
    %s1675 = scalar_lea.vmem [#allocation1], 34
    %1676 = vst [vmem:[%s1675] ss:$4 sm:$0xff] %v1649
    %v1677 = vld.sshfl [vmem:[#allocation1] sm:$0xff pattern:$0x73625140]
    %v1678 = vld.sshfl [vmem:[#allocation1 + $0x20] sm:$0xff pattern:$0x73625140]
    %1679 = vst [vmem:[#allocation1] ss:$4 sm:$0xff] %v641
    %s1680 = scalar_lea.vmem [#allocation1], 1
    %1681 = vst [vmem:[%s1680] ss:$4 sm:$0xff] %v656
    %s1682 = scalar_lea.vmem [#allocation1], 2
    %1683 = vst [vmem:[%s1682] ss:$4 sm:$0xff] %v657
    %s1684 = scalar_lea.vmem [#allocation1], 3
    %1685 = vst [vmem:[%s1684] ss:$4 sm:$0xff] %v658
    %s1686 = scalar_lea.vmem [#allocation1], 32
    %1687 = vst [vmem:[%s1686] ss:$4 sm:$0xff] %v644
    %s1688 = scalar_lea.vmem [#allocation1], 33
    %1689 = vst [vmem:[%s1688] ss:$4 sm:$0xff] %v659
    %s1690 = scalar_lea.vmem [#allocation1], 34
    %1691 = vst [vmem:[%s1690] ss:$4 sm:$0xff] %v660
    %v1692 = vld.sshfl [vmem:[#allocation1] sm:$0xff pattern:$0x73625140]
    %v1693 = vld.sshfl [vmem:[#allocation1 + $0x20] sm:$0xff pattern:$0x73625140]
    %1694 = vrot.lane.b32.xlu0 %v1692, 96
    %v1695 = vpop.permute.xlu0 %1694
    %1696 = vrot.lane.b32.xlu0 %v1693, 96
    %v1697 = vpop.permute.xlu0 %1696
    %v1698 = vsel %vm203, %v1677, 0
    %v1700 = vsel %vm203, %v1678, 0
    %v1702 = vsel %vm203, %v1695, 0
    %v1704 = vsel %vm203, %v1697, 0
    %1706 = vmatpush.xpose.msra.mxu0 0.0
    %1707 = vmatpush.xpose.msra.mxu0 0.0
    %1708 = vmatpush.xpose.msra.mxu0 0.0
    %1709 = vmatpush.xpose.msra.mxu0 0.0
    %1710 = vmatpush.xpose.msra.mxu0 0.0
    %1711 = vmatpush.xpose.msra.mxu0 0.0
    %1712 = vmatpush.xpose.msra.mxu0 0.0
    %1713 = vmatpush.xpose.msra.mxu0 0.0
    %1714 = vmatpush.xpose.msra.mxu0 0.0
    %1715 = vmatpush.xpose.msra.mxu0 0.0
    %1716 = vmatpush.xpose.msra.mxu0 0.0
    %1717 = vmatpush.xpose.msra.mxu0 0.0
    %1718 = vmatpush.xpose.msra.mxu0 0.0
    %1719 = vmatpush.xpose.msra.mxu0 0.0
    %1720 = vmatpush.xpose.msra.mxu0 %v1704
    %1721 = vmatpush.xpose.msra.mxu0 %v1702
    %1722 = vmatmul.f32.gmra.mxu0 %v1698
    %v1723 = vpop.f32.mrf.mxu0
    %v1724 = vadd.f32 0.0, %v1723
    %1725 = vmatmul.f32.gmra.mxu0 %v1700
    %v1726 = vpop.f32.mrf.mxu0
    %v1727 = vadd.f32 0.0, %v1726
    %1728 = vdwg.mxu0
    %1736 = vst [vmem:[#allocation1] ss:$4 sm:$0xff] %v1650
    %s1737 = scalar_lea.vmem [#allocation1], 1
    %1738 = vst [vmem:[%s1737] ss:$4 sm:$0xff] %v1651
    %s1739 = scalar_lea.vmem [#allocation1], 2
    %1740 = vst [vmem:[%s1739] ss:$4 sm:$0xff] %v1652
    %s1741 = scalar_lea.vmem [#allocation1], 3
    %1742 = vst [vmem:[%s1741] ss:$4 sm:$0xff] %v1653
    %s1743 = scalar_lea.vmem [#allocation1], 32
    %1744 = vst [vmem:[%s1743] ss:$4 sm:$0xff] %v1654
    %s1745 = scalar_lea.vmem [#allocation1], 33
    %1746 = vst [vmem:[%s1745] ss:$4 sm:$0xff] %v1655
    %s1747 = scalar_lea.vmem [#allocation1], 34
    %1748 = vst [vmem:[%s1747] ss:$4 sm:$0xff] %v1656
    %v1749 = vld.sshfl [vmem:[#allocation1] sm:$0xff pattern:$0x73625140]
    %v1750 = vld.sshfl [vmem:[#allocation1 + $0x20] sm:$0xff pattern:$0x73625140]
    %1751 = vst [vmem:[#allocation1] ss:$4 sm:$0xff] %v661
    %s1752 = scalar_lea.vmem [#allocation1], 1
    %1753 = vst [vmem:[%s1752] ss:$4 sm:$0xff] %v647
    %s1754 = scalar_lea.vmem [#allocation1], 2
    %1755 = vst [vmem:[%s1754] ss:$4 sm:$0xff] %v662
    %s1756 = scalar_lea.vmem [#allocation1], 3
    %1757 = vst [vmem:[%s1756] ss:$4 sm:$0xff] %v663
    %s1758 = scalar_lea.vmem [#allocation1], 32
    %1759 = vst [vmem:[%s1758] ss:$4 sm:$0xff] %v664
    %s1760 = scalar_lea.vmem [#allocation1], 33
    %1761 = vst [vmem:[%s1760] ss:$4 sm:$0xff] %v650
    %s1762 = scalar_lea.vmem [#allocation1], 34
    %1763 = vst [vmem:[%s1762] ss:$4 sm:$0xff] %v665
    %v1764 = vld.sshfl [vmem:[#allocation1] sm:$0xff pattern:$0x73625140]
    %v1765 = vld.sshfl [vmem:[#allocation1 + $0x20] sm:$0xff pattern:$0x73625140]
    %1766 = vrot.lane.b32.xlu0 %v1764, 96
    %v1767 = vpop.permute.xlu0 %1766
    %1768 = vrot.lane.b32.xlu0 %v1765, 96
    %v1769 = vpop.permute.xlu0 %1768
    %v1770 = vsel %vm203, %v1749, 0
    %v1772 = vsel %vm203, %v1750, 0
    %v1774 = vsel %vm203, %v1767, 0
    %v1776 = vsel %vm203, %v1769, 0
    %1778 = vmatpush.xpose.msra.mxu0 0.0
    %1779 = vmatpush.xpose.msra.mxu0 0.0
    %1780 = vmatpush.xpose.msra.mxu0 0.0
    %1781 = vmatpush.xpose.msra.mxu0 0.0
    %1782 = vmatpush.xpose.msra.mxu0 0.0
    %1783 = vmatpush.xpose.msra.mxu0 0.0
    %1784 = vmatpush.xpose.msra.mxu0 0.0
    %1785 = vmatpush.xpose.msra.mxu0 0.0
    %1786 = vmatpush.xpose.msra.mxu0 0.0
    %1787 = vmatpush.xpose.msra.mxu0 0.0
    %1788 = vmatpush.xpose.msra.mxu0 0.0
    %1789 = vmatpush.xpose.msra.mxu0 0.0
    %1790 = vmatpush.xpose.msra.mxu0 0.0
    %1791 = vmatpush.xpose.msra.mxu0 0.0
    %1792 = vmatpush.xpose.msra.mxu0 %v1776
    %1793 = vmatpush.xpose.msra.mxu0 %v1774
    %1794 = vmatmul.f32.gmra.mxu0 %v1770
    %v1795 = vpop.f32.mrf.mxu0
    %v1796 = vadd.f32 0.0, %v1795
    %1797 = vmatmul.f32.gmra.mxu0 %v1772
    %v1798 = vpop.f32.mrf.mxu0
    %v1799 = vadd.f32 0.0, %v1798
    %1800 = vdwg.mxu0
    %v1801 = vsel %vm841, %v1724, -inf
    %1802 = vmax.xlane.f32.xlu0 %v1801
    %v1803 = vpop.xlane.xlu0 %1802
    %v1804 = vsel %vm845, %v1727, -inf
    %1805 = vmax.xlane.f32.xlu0 %v1804
    %v1806 = vpop.xlane.xlu0 %1805
    %v1807 = vsel %vm841, %v1796, -inf
    %1808 = vmax.xlane.f32.xlu0 %v1807
    %v1809 = vpop.xlane.xlu0 %1808
    %v1810 = vsel %vm845, %v1799, -inf
    %1811 = vmax.xlane.f32.xlu0 %v1810
    %v1812 = vpop.xlane.xlu0 %1811
    %v1813 = vsub.f32 %v1724, %v1803
    %v1814 = vsub.f32 %v1727, %v1806
    %v1815 = vsub.f32 %v1796, %v1809
    %v1816 = vsub.f32 %v1799, %v1812
    %v1817 = vmul.f32 %v1813, 1.442695
    %v1818 = vpow.pop %v1817
    %v1819 = vmul.f32 %v1814, 1.442695
    %v1820 = vpow.pop %v1819
    %v1821 = vmul.f32 %v1815, 1.442695
    %v1822 = vpow.pop %v1821
    %v1823 = vmul.f32 %v1816, 1.442695
    %v1824 = vpow.pop %v1823
    %v1825 = vsel %vm841, %v1818, 0.0
    %1826 = vadd.xlane.f32.xlu0 %v1825
    %v1827 = vpop.xlane.xlu0 %1826
    %v1828 = vsel %vm845, %v1820, 0.0
    %1829 = vadd.xlane.f32.xlu0 %v1828
    %v1830 = vpop.xlane.xlu0 %1829
    %v1831 = vsel %vm841, %v1822, 0.0
    %1832 = vadd.xlane.f32.xlu0 %v1831
    %v1833 = vpop.xlane.xlu0 %1832
    %v1834 = vsel %vm845, %v1824, 0.0
    %1835 = vadd.xlane.f32.xlu0 %v1834
    %v1836 = vpop.xlane.xlu0 %1835
    %v1837 = vrcp.pop %v1827
    %v1838 = vrcp.pop %v1830
    %v1839 = vrcp.pop %v1833
    %v1840 = vrcp.pop %v1836
    %v1841 = vmul.f32 %v1818, %v1837
    %v1842 = vmul.f32 %v1820, %v1838
    %v1843 = vmul.f32 %v1822, %v1839
    %v1844 = vmul.f32 %v1824, %v1840
    %1845 = vst [vmem:[#allocation1] ss:$4 sm:$0xff] %v641
    %s1846 = scalar_lea.vmem [#allocation1], 1
    %1847 = vst [vmem:[%s1846] ss:$4 sm:$0xff] %v656
    %s1848 = scalar_lea.vmem [#allocation1], 2
    %1849 = vst [vmem:[%s1848] ss:$4 sm:$0xff] %v657
    %s1850 = scalar_lea.vmem [#allocation1], 3
    %1851 = vst [vmem:[%s1850] ss:$4 sm:$0xff] %v658
    %s1852 = scalar_lea.vmem [#allocation1], 32
    %1853 = vst [vmem:[%s1852] ss:$4 sm:$0xff] %v644
    %s1854 = scalar_lea.vmem [#allocation1], 33
    %1855 = vst [vmem:[%s1854] ss:$4 sm:$0xff] %v659
    %s1856 = scalar_lea.vmem [#allocation1], 34
    %1857 = vst [vmem:[%s1856] ss:$4 sm:$0xff] %v660
    %v1858 = vld.sshfl [vmem:[#allocation1] sm:$0xff pattern:$0x73625140]
    %v1859 = vld.sshfl [vmem:[#allocation1 + $0x20] sm:$0xff pattern:$0x73625140]
    %1860 = vrot.lane.b32.xlu0 %v1858, 64
    %v1861 = vpop.permute.xlu0 %1860
    %1862 = vrot.lane.b32.xlu0 %v1859, 64
    %v1863 = vpop.permute.xlu0 %1862
    %v1866 = vsel %vm841, %v1841, 0
    %v1869 = vsel %vm841, %v1842, 0
    %v1871 = vsel %vm913, %v1863, 0
    %1873 = vmatpush.msra.mxu0 0.0
    %1874 = vmatpush.msra.mxu0 0.0
    %1875 = vmatpush.msra.mxu0 0.0
    %1876 = vmatpush.msra.mxu0 0.0
    %1877 = vmatpush.msra.mxu0 0.0
    %1878 = vmatpush.msra.mxu0 0.0
    %1879 = vmatpush.msra.mxu0 0.0
    %1880 = vmatpush.msra.mxu0 0.0
    %1881 = vmatpush.msra.mxu0 0.0
    %1882 = vmatpush.msra.mxu0 0.0
    %1883 = vmatpush.msra.mxu0 0.0
    %1884 = vmatpush.msra.mxu0 0.0
    %1885 = vmatpush.msra.mxu0 0.0
    %1886 = vmatpush.msra.mxu0 0.0
    %1887 = vmatpush.msra.mxu0 %v1871
    %1888 = vmatpush.msra.mxu0 %v1861
    %1889 = vmatmul.f32.gmra.mxu0 %v1866
    %v1890 = vpop.f32.mrf.mxu0
    %v1891 = vadd.f32 0.0, %v1890
    %1892 = vmatmul.f32.gmra.mxu0 %v1869
    %v1893 = vpop.f32.mrf.mxu0
    %v1894 = vadd.f32 0.0, %v1893
    %1895 = vdwg.mxu0
    %1896 = vst [vmem:[#allocation1] ss:$4 sm:$0xff] %v661
    %s1897 = scalar_lea.vmem [#allocation1], 1
    %1898 = vst [vmem:[%s1897] ss:$4 sm:$0xff] %v647
    %s1899 = scalar_lea.vmem [#allocation1], 2
    %1900 = vst [vmem:[%s1899] ss:$4 sm:$0xff] %v662
    %s1901 = scalar_lea.vmem [#allocation1], 3
    %1902 = vst [vmem:[%s1901] ss:$4 sm:$0xff] %v663
    %s1903 = scalar_lea.vmem [#allocation1], 32
    %1904 = vst [vmem:[%s1903] ss:$4 sm:$0xff] %v664
    %s1905 = scalar_lea.vmem [#allocation1], 33
    %1906 = vst [vmem:[%s1905] ss:$4 sm:$0xff] %v650
    %s1907 = scalar_lea.vmem [#allocation1], 34
    %1908 = vst [vmem:[%s1907] ss:$4 sm:$0xff] %v665
    %v1909 = vld.sshfl [vmem:[#allocation1] sm:$0xff pattern:$0x73625140]
    %v1910 = vld.sshfl [vmem:[#allocation1 + $0x20] sm:$0xff pattern:$0x73625140]
    %1911 = vrot.lane.b32.xlu0 %v1909, 64
    %v1912 = vpop.permute.xlu0 %1911
    %1913 = vrot.lane.b32.xlu0 %v1910, 64
    %v1914 = vpop.permute.xlu0 %1913
    %v1917 = vsel %vm841, %v1843, 0
    %v1920 = vsel %vm841, %v1844, 0
    %v1922 = vsel %vm913, %v1914, 0
    %1924 = vmatpush.msra.mxu0 0.0
    %1925 = vmatpush.msra.mxu0 0.0
    %1926 = vmatpush.msra.mxu0 0.0
    %1927 = vmatpush.msra.mxu0 0.0
    %1928 = vmatpush.msra.mxu0 0.0
    %1929 = vmatpush.msra.mxu0 0.0
    %1930 = vmatpush.msra.mxu0 0.0
    %1931 = vmatpush.msra.mxu0 0.0
    %1932 = vmatpush.msra.mxu0 0.0
    %1933 = vmatpush.msra.mxu0 0.0
    %1934 = vmatpush.msra.mxu0 0.0
    %1935 = vmatpush.msra.mxu0 0.0
    %1936 = vmatpush.msra.mxu0 0.0
    %1937 = vmatpush.msra.mxu0 0.0
    %1938 = vmatpush.msra.mxu0 %v1922
    %1939 = vmatpush.msra.mxu0 %v1912
    %1940 = vmatmul.f32.gmra.mxu0 %v1917
    %v1941 = vpop.f32.mrf.mxu0
    %v1942 = vadd.f32 0.0, %v1941
    %1943 = vmatmul.f32.gmra.mxu0 %v1920
    %v1944 = vpop.f32.mrf.mxu0
    %v1945 = vadd.f32 0.0, %v1944
    %1946 = vdwg.mxu0
    %v1947 = vmul.f32 %v1891, %v172
    %v1948 = vmul.f32 %v1894, %v172
    %v1949 = vmul.f32 %v1942, %v172
    %v1950 = vmul.f32 %v1945, %v172
    %v1951 = vadd.f32 %v1632, %v1947
    %v1952 = vadd.f32 %v1633, %v1948
    %v1953 = vadd.f32 %v1634, %v1949
    %v1954 = vadd.f32 %v1635, %v1950
    %v1955 = vld [vmem:[#allocation2 + $0x20] sm:$0xff]
    %v1956 = vld [vmem:[#allocation2 + $0x28] sm:$0xff]
    %v1957 = vld [vmem:[#allocation2 + $0x30] sm:$0xff]
    %v1958 = vld [vmem:[#allocation2 + $0x38] sm:$0xff]
    %v1959 = vld [vmem:[%s4 + $0x4] sm:$0x1]
    %v1960 = vperm.slane %v1959, 0
    %v1965 = vrot.slane %v1951, 2
    %v1966 = vrot.slane %v1951, 4
    %v1967 = vrot.slane %v1951, 6
    %v1968 = vrot.slane %v1952, 2
    %v1969 = vrot.slane %v1952, 4
    %v1970 = vrot.slane %v1953, 2
    %v1971 = vrot.slane %v1953, 4
    %v1972 = vrot.slane %v1953, 6
    %v1973 = vrot.slane %v1954, 2
    %v1974 = vrot.slane %v1954, 4
    %v1976 = vrot.slane %v1960, 2
    %v1977 = vrot.slane %v1960, 4
    %v1978 = vrot.slane %v1960, 6
    %1979 = vst [vmem:[#allocation1] ss:$4 sm:$0xff] %v1951
    %s1980 = scalar_lea.vmem [#allocation1], 1
    %1981 = vst [vmem:[%s1980] ss:$4 sm:$0xff] %v1965
    %s1982 = scalar_lea.vmem [#allocation1], 2
    %1983 = vst [vmem:[%s1982] ss:$4 sm:$0xff] %v1966
    %s1984 = scalar_lea.vmem [#allocation1], 3
    %1985 = vst [vmem:[%s1984] ss:$4 sm:$0xff] %v1967
    %s1986 = scalar_lea.vmem [#allocation1], 32
    %1987 = vst [vmem:[%s1986] ss:$4 sm:$0xff] %v1952
    %s1988 = scalar_lea.vmem [#allocation1], 33
    %1989 = vst [vmem:[%s1988] ss:$4 sm:$0xff] %v1968
    %s1990 = scalar_lea.vmem [#allocation1], 34
    %1991 = vst [vmem:[%s1990] ss:$4 sm:$0xff] %v1969
    %s1992 = scalar_lea.vmem [#allocation1], 35
    %1993 = vst [vmem:[%s1992] ss:$4 sm:$0xff] %v1953
    %v1994 = vld.sshfl [vmem:[#allocation1] sm:$0xff pattern:$0x73625140]
    %v1995 = vld.sshfl [vmem:[#allocation1 + $0x20] sm:$0xff pattern:$0x73625140]
    %1996 = vst [vmem:[#allocation1] ss:$4 sm:$0xff] %v1970
    %1997 = vst [vmem:[%s1980] ss:$4 sm:$0xff] %v1971
    %1998 = vst [vmem:[%s1982] ss:$4 sm:$0xff] %v1972
    %1999 = vst [vmem:[%s1984] ss:$4 sm:$0xff] %v1954
    %2000 = vst [vmem:[%s1986] ss:$4 sm:$0xff] %v1973
    %2001 = vst [vmem:[%s1988] ss:$4 sm:$0xff] %v1974
    %v2002 = vld.sshfl [vmem:[#allocation1] sm:$0xff pattern:$0x73625140]
    %v2003 = vld.sshfl [vmem:[#allocation1 + $0x20] sm:$0xff pattern:$0x73625140]
    %2004 = vst [vmem:[#allocation1] ss:$4 sm:$0xff] %v1960
    %s2005 = scalar_lea.vmem [#allocation1], 1
    %2006 = vst [vmem:[%s2005] ss:$4 sm:$0xff] %v1976
    %s2007 = scalar_lea.vmem [#allocation1], 2
    %2008 = vst [vmem:[%s2007] ss:$4 sm:$0xff] %v1977
    %s2009 = scalar_lea.vmem [#allocation1], 3
    %2010 = vst [vmem:[%s2009] ss:$4 sm:$0xff] %v1978
    %s2011 = scalar_lea.vmem [#allocation1], 32
    %2012 = vst [vmem:[%s2011] ss:$4 sm:$0xff] %v1960
    %s2013 = scalar_lea.vmem [#allocation1], 33
    %2014 = vst [vmem:[%s2013] ss:$4 sm:$0xff] %v1976
    %s2015 = scalar_lea.vmem [#allocation1], 34
    %2016 = vst [vmem:[%s2015] ss:$4 sm:$0xff] %v1977
    %s2017 = scalar_lea.vmem [#allocation1], 35
    %2018 = vst [vmem:[%s2017] ss:$4 sm:$0xff] %v1960
    %v2019 = vld.sshfl [vmem:[#allocation1] sm:$0xff pattern:$0x73625140]
    %v2020 = vld.sshfl [vmem:[#allocation1 + $0x20] sm:$0xff pattern:$0x73625140]
    %2021 = vst [vmem:[#allocation1] ss:$4 sm:$0xff] %v1976
    %2022 = vst [vmem:[%s2005] ss:$4 sm:$0xff] %v1977
    %2023 = vst [vmem:[%s2007] ss:$4 sm:$0xff] %v1978
    %2024 = vst [vmem:[%s2009] ss:$4 sm:$0xff] %v1960
    %2025 = vst [vmem:[%s2011] ss:$4 sm:$0xff] %v1976
    %2026 = vst [vmem:[%s2013] ss:$4 sm:$0xff] %v1977
    %v2027 = vld.sshfl [vmem:[#allocation1] sm:$0xff pattern:$0x73625140]
    %v2028 = vld.sshfl [vmem:[#allocation1 + $0x20] sm:$0xff pattern:$0x73625140]
    %v2033 = vsel %vm203, %v1994, 0
    %v2035 = vsel %vm203, %v1995, 0
    %v2037 = vsel %vm203, %v2002, 0
    %v2039 = vsel %vm203, %v2003, 0
    %2041 = vmatpush.msra.mxu0 0.0
    %2042 = vmatpush.msra.mxu0 0.0
    %2043 = vmatpush.msra.mxu0 0.0
    %2044 = vmatpush.msra.mxu0 0.0
    %2045 = vmatpush.msra.mxu0 0.0
    %2046 = vmatpush.msra.mxu0 0.0
    %2047 = vmatpush.msra.mxu0 0.0
    %2048 = vmatpush.msra.mxu0 0.0
    %2049 = vmatpush.msra.mxu0 0.0
    %2050 = vmatpush.msra.mxu0 0.0
    %2051 = vmatpush.msra.mxu0 0.0
    %2052 = vmatpush.msra.mxu0 0.0
    %2053 = vmatpush.msra.mxu0 %v1958
    %2054 = vmatpush.msra.mxu0 %v1957
    %2055 = vmatpush.msra.mxu0 %v1956
    %2056 = vmatpush.msra.mxu0 %v1955
    %2057 = vmatmul.f32.gmra.mxu0 %v2033
    %v2058 = vpop.f32.mrf.mxu0
    %v2059 = vadd.f32 %v2019, %v2058
    %2060 = vmatmul.f32.gmra.mxu0 %v2035
    %v2061 = vpop.f32.mrf.mxu0
    %v2062 = vadd.f32 %v2020, %v2061
    %2063 = vmatmul.f32.gmra.mxu0 %v2037
    %v2064 = vpop.f32.mrf.mxu0
    %v2065 = vadd.f32 %v2027, %v2064
    %2066 = vmatmul.f32.gmra.mxu0 %v2039
    %v2067 = vpop.f32.mrf.mxu0
    %v2068 = vadd.f32 %v2028, %v2067
    %2069 = vdwg.mxu0
    %v2074 = vrot.slane %v2059, 2
    %v2075 = vrot.slane %v2059, 4
    %v2076 = vrot.slane %v2059, 6
    %v2077 = vrot.slane %v2062, 2
    %v2078 = vrot.slane %v2062, 4
    %v2079 = vrot.slane %v2062, 6
    %v2080 = vrot.slane %v2065, 2
    %v2081 = vrot.slane %v2065, 4
    %v2082 = vrot.slane %v2065, 6
    %v2083 = vrot.slane %v2068, 2
    %v2094 = vadd.f32 %v2059, %v116
    %v2095 = vadd.f32 %v2074, %v131
    %v2096 = vadd.f32 %v2075, %v132
    %v2097 = vadd.f32 %v2076, %v133
    %v2098 = vadd.f32 %v2062, %v119
    %v2099 = vadd.f32 %v2077, %v134
    %v2100 = vadd.f32 %v2078, %v135
    %v2101 = vadd.f32 %v2079, %v136
    %v2102 = vadd.f32 %v2065, %v122
    %v2103 = vadd.f32 %v2080, %v137
    %v2104 = vadd.f32 %v2081, %v138
    %v2105 = vadd.f32 %v2082, %v139
    %v2106 = vadd.f32 %v2068, %v125
    %v2107 = vadd.f32 %v2083, %v140
    %v2108 = vld [vmem:[%s4 + $0x2] sm:$0x1]
    %v2109 = vld [vmem:[%s4 + $0x3] sm:$0x1]
    %2124 = vst [vmem:[#allocation1] ss:$4 sm:$0xff] %v2094
    %s2125 = scalar_lea.vmem [#allocation1], 1
    %2126 = vst [vmem:[%s2125] ss:$4 sm:$0xff] %v2095
    %s2127 = scalar_lea.vmem [#allocation1], 2
    %2128 = vst [vmem:[%s2127] ss:$4 sm:$0xff] %v2096
    %s2129 = scalar_lea.vmem [#allocation1], 3
    %2130 = vst [vmem:[%s2129] ss:$4 sm:$0xff] %v2097
    %s2131 = scalar_lea.vmem [#allocation1], 32
    %2132 = vst [vmem:[%s2131] ss:$4 sm:$0xff] %v2098
    %s2133 = scalar_lea.vmem [#allocation1], 33
    %2134 = vst [vmem:[%s2133] ss:$4 sm:$0xff] %v2099
    %s2135 = scalar_lea.vmem [#allocation1], 34
    %2136 = vst [vmem:[%s2135] ss:$4 sm:$0xff] %v2100
    %v2137 = vld.sshfl [vmem:[#allocation1] sm:$0xff pattern:$0x73625140]
    %v2138 = vld.sshfl [vmem:[#allocation1 + $0x20] sm:$0xff pattern:$0x73625140]
    %2139 = vst [vmem:[#allocation1] ss:$4 sm:$0xff] %v2101
    %2140 = vst [vmem:[%s2125] ss:$4 sm:$0xff] %v2102
    %2141 = vst [vmem:[%s2127] ss:$4 sm:$0xff] %v2103
    %2142 = vst [vmem:[%s2129] ss:$4 sm:$0xff] %v2104
    %2143 = vst [vmem:[%s2131] ss:$4 sm:$0xff] %v2105
    %2144 = vst [vmem:[%s2133] ss:$4 sm:$0xff] %v2106
    %2145 = vst [vmem:[%s2135] ss:$4 sm:$0xff] %v2107
    %v2146 = vld.sshfl [vmem:[#allocation1] sm:$0xff pattern:$0x73625140]
    %v2147 = vld.sshfl [vmem:[#allocation1 + $0x20] sm:$0xff pattern:$0x73625140]
    %v2152 = vsel %vm203, %v2137, 0.0
    %2153 = vadd.xlane.f32.xlu0 %v2152
    %v2154 = vpop.xlane.xlu0 %2153
    %v2155 = vsel %vm207, %v2138, 0.0
    %2156 = vadd.xlane.f32.xlu0 %v2155
    %v2157 = vpop.xlane.xlu0 %2156
    %v2158 = vsel %vm203, %v2146, 0.0
    %2159 = vadd.xlane.f32.xlu0 %v2158
    %v2160 = vpop.xlane.xlu0 %2159
    %v2161 = vsel %vm207, %v2147, 0.0
    %2162 = vadd.xlane.f32.xlu0 %v2161
    %v2163 = vpop.xlane.xlu0 %2162
    %v2164 = vmul.f32 %v2154, %v223
    %v2165 = vmul.f32 %v2157, %v223
    %v2166 = vmul.f32 %v2160, %v223
    %v2167 = vmul.f32 %v2163, %v223
    %v2168 = vmul.f32 %v2094, %v2094
    %v2169 = vmul.f32 %v2095, %v2095
    %v2170 = vmul.f32 %v2096, %v2096
    %v2171 = vmul.f32 %v2097, %v2097
    %v2172 = vmul.f32 %v2098, %v2098
    %v2173 = vmul.f32 %v2099, %v2099
    %v2174 = vmul.f32 %v2100, %v2100
    %v2175 = vmul.f32 %v2101, %v2101
    %v2176 = vmul.f32 %v2102, %v2102
    %v2177 = vmul.f32 %v2103, %v2103
    %v2178 = vmul.f32 %v2104, %v2104
    %v2179 = vmul.f32 %v2105, %v2105
    %v2180 = vmul.f32 %v2106, %v2106
    %v2181 = vmul.f32 %v2107, %v2107
    %2196 = vst [vmem:[#allocation1] ss:$4 sm:$0xff] %v2168
    %s2197 = scalar_lea.vmem [#allocation1], 1
    %2198 = vst [vmem:[%s2197] ss:$4 sm:$0xff] %v2169
    %s2199 = scalar_lea.vmem [#allocation1], 2
    %2200 = vst [vmem:[%s2199] ss:$4 sm:$0xff] %v2170
    %s2201 = scalar_lea.vmem [#allocation1], 3
    %2202 = vst [vmem:[%s2201] ss:$4 sm:$0xff] %v2171
    %s2203 = scalar_lea.vmem [#allocation1], 32
    %2204 = vst [vmem:[%s2203] ss:$4 sm:$0xff] %v2172
    %s2205 = scalar_lea.vmem [#allocation1], 33
    %2206 = vst [vmem:[%s2205] ss:$4 sm:$0xff] %v2173
    %s2207 = scalar_lea.vmem [#allocation1], 34
    %2208 = vst [vmem:[%s2207] ss:$4 sm:$0xff] %v2174
    %v2209 = vld.sshfl [vmem:[#allocation1] sm:$0xff pattern:$0x73625140]
    %v2210 = vld.sshfl [vmem:[#allocation1 + $0x20] sm:$0xff pattern:$0x73625140]
    %2211 = vst [vmem:[#allocation1] ss:$4 sm:$0xff] %v2175
    %2212 = vst [vmem:[%s2197] ss:$4 sm:$0xff] %v2176
    %2213 = vst [vmem:[%s2199] ss:$4 sm:$0xff] %v2177
    %2214 = vst [vmem:[%s2201] ss:$4 sm:$0xff] %v2178
    %2215 = vst [vmem:[%s2203] ss:$4 sm:$0xff] %v2179
    %2216 = vst [vmem:[%s2205] ss:$4 sm:$0xff] %v2180
    %2217 = vst [vmem:[%s2207] ss:$4 sm:$0xff] %v2181
    %v2218 = vld.sshfl [vmem:[#allocation1] sm:$0xff pattern:$0x73625140]
    %v2219 = vld.sshfl [vmem:[#allocation1 + $0x20] sm:$0xff pattern:$0x73625140]
    %v2224 = vsel %vm203, %v2209, 0.0
    %2225 = vadd.xlane.f32.xlu0 %v2224
    %v2226 = vpop.xlane.xlu0 %2225
    %v2227 = vsel %vm207, %v2210, 0.0
    %2228 = vadd.xlane.f32.xlu0 %v2227
    %v2229 = vpop.xlane.xlu0 %2228
    %v2230 = vsel %vm203, %v2218, 0.0
    %2231 = vadd.xlane.f32.xlu0 %v2230
    %v2232 = vpop.xlane.xlu0 %2231
    %v2233 = vsel %vm207, %v2219, 0.0
    %2234 = vadd.xlane.f32.xlu0 %v2233
    %v2235 = vpop.xlane.xlu0 %2234
    %v2236 = vmul.f32 %v2226, %v223
    %v2237 = vmul.f32 %v2229, %v223
    %v2238 = vmul.f32 %v2232, %v223
    %v2239 = vmul.f32 %v2235, %v223
    %v2245 = vunpack.c.l.s4 269488144
    %v2246 = vunpack.c.0.s8 %v2245
    %v2247 = vperm.slane %v2164, %v2246
    %v2249 = vunpack.c.l.s4 842150450
    %v2250 = vunpack.c.0.s8 %v2249
    %v2251 = vperm.slane %v2164, %v2250
    %v2253 = vunpack.c.l.s4 1414812756
    %v2254 = vunpack.c.0.s8 %v2253
    %v2255 = vperm.slane %v2164, %v2254
    %v2257 = vunpack.c.l.s4 1987475062
    %v2258 = vunpack.c.0.s8 %v2257
    %v2259 = vperm.slane %v2164, %v2258
    %v2261 = vunpack.c.l.s4 269488144
    %v2262 = vunpack.c.0.s8 %v2261
    %v2263 = vperm.slane %v2165, %v2262
    %v2265 = vunpack.c.l.s4 842150450
    %v2266 = vunpack.c.0.s8 %v2265
    %v2267 = vperm.slane %v2165, %v2266
    %v2269 = vunpack.c.l.s4 1414812756
    %v2270 = vunpack.c.0.s8 %v2269
    %v2271 = vperm.slane %v2165, %v2270
    %v2273 = vunpack.c.l.s4 269488144
    %v2274 = vunpack.c.0.s8 %v2273
    %v2275 = vperm.slane %v2166, %v2274
    %v2277 = vunpack.c.l.s4 842150450
    %v2278 = vunpack.c.0.s8 %v2277
    %v2279 = vperm.slane %v2166, %v2278
    %v2281 = vunpack.c.l.s4 1414812756
    %v2282 = vunpack.c.0.s8 %v2281
    %v2283 = vperm.slane %v2166, %v2282
    %v2285 = vunpack.c.l.s4 1987475062
    %v2286 = vunpack.c.0.s8 %v2285
    %v2287 = vperm.slane %v2166, %v2286
    %v2289 = vunpack.c.l.s4 269488144
    %v2290 = vunpack.c.0.s8 %v2289
    %v2291 = vperm.slane %v2167, %v2290
    %v2293 = vunpack.c.l.s4 842150450
    %v2294 = vunpack.c.0.s8 %v2293
    %v2295 = vperm.slane %v2167, %v2294
    %v2297 = vunpack.c.l.s4 1414812756
    %v2298 = vunpack.c.0.s8 %v2297
    %v2299 = vperm.slane %v2167, %v2298
    %v2314 = vsub.f32 %v2094, %v2247
    %v2315 = vsub.f32 %v2095, %v2251
    %v2316 = vsub.f32 %v2096, %v2255
    %v2317 = vsub.f32 %v2097, %v2259
    %v2318 = vsub.f32 %v2098, %v2263
    %v2319 = vsub.f32 %v2099, %v2267
    %v2320 = vsub.f32 %v2100, %v2271
    %v2321 = vsub.f32 %v2101, %v2275
    %v2322 = vsub.f32 %v2102, %v2279
    %v2323 = vsub.f32 %v2103, %v2283
    %v2324 = vsub.f32 %v2104, %v2287
    %v2325 = vsub.f32 %v2105, %v2291
    %v2326 = vsub.f32 %v2106, %v2295
    %v2327 = vsub.f32 %v2107, %v2299
    %v2328 = vmul.f32 %v2164, %v2164
    %v2329 = vmul.f32 %v2165, %v2165
    %v2330 = vmul.f32 %v2166, %v2166
    %v2331 = vmul.f32 %v2167, %v2167
    %v2332 = vsub.f32 %v2236, %v2328
    %v2333 = vsub.f32 %v2237, %v2329
    %v2334 = vsub.f32 %v2238, %v2330
    %v2335 = vsub.f32 %v2239, %v2331
    %v2336 = vadd.f32 %v2332, 1e-05
    %v2337 = vadd.f32 %v2333, 1e-05
    %v2338 = vadd.f32 %v2334, 1e-05
    %v2339 = vadd.f32 %v2335, 1e-05
    %v2340 = vrsqrt.pop %v2336
    %v2341 = vmul.f32 %v2340, %v2336
    %v2342 = vmul.f32 %v2341, %v2340
    %v2343 = vmul.f32 0.5, %v2342
    %v2344 = vsub.f32 1.5, %v2343
    %v2345 = vmul.f32 %v2340, %v2344
    %vm2346 = vweird.f32 %v2336
    %vm2347 = vweird.f32 %v2340
    %vm2348 = vmor %vm2346, %vm2347
    %v2349 = vsel %vm2348, %v2340, %v2345
    %v2350 = vrsqrt.pop %v2337
    %v2351 = vmul.f32 %v2350, %v2337
    %v2352 = vmul.f32 %v2351, %v2350
    %v2353 = vmul.f32 0.5, %v2352
    %v2354 = vsub.f32 1.5, %v2353
    %v2355 = vmul.f32 %v2350, %v2354
    %vm2356 = vweird.f32 %v2337
    %vm2357 = vweird.f32 %v2350
    %vm2358 = vmor %vm2356, %vm2357
    %v2359 = vsel %vm2358, %v2350, %v2355
    %v2360 = vrsqrt.pop %v2338
    %v2361 = vmul.f32 %v2360, %v2338
    %v2362 = vmul.f32 %v2361, %v2360
    %v2363 = vmul.f32 0.5, %v2362
    %v2364 = vsub.f32 1.5, %v2363
    %v2365 = vmul.f32 %v2360, %v2364
    %vm2366 = vweird.f32 %v2338
    %vm2367 = vweird.f32 %v2360
    %vm2368 = vmor %vm2366, %vm2367
    %v2369 = vsel %vm2368, %v2360, %v2365
    %v2370 = vrsqrt.pop %v2339
    %v2371 = vmul.f32 %v2370, %v2339
    %v2372 = vmul.f32 %v2371, %v2370
    %v2373 = vmul.f32 0.5, %v2372
    %v2374 = vsub.f32 1.5, %v2373
    %v2375 = vmul.f32 %v2370, %v2374
    %vm2376 = vweird.f32 %v2339
    %vm2377 = vweird.f32 %v2370
    %vm2378 = vmor %vm2376, %vm2377
    %v2379 = vsel %vm2378, %v2370, %v2375
    %v2385 = vunpack.c.l.s4 269488144
    %v2386 = vunpack.c.0.s8 %v2385
    %v2387 = vperm.slane %v2349, %v2386
    %v2389 = vunpack.c.l.s4 842150450
    %v2390 = vunpack.c.0.s8 %v2389
    %v2391 = vperm.slane %v2349, %v2390
    %v2393 = vunpack.c.l.s4 1414812756
    %v2394 = vunpack.c.0.s8 %v2393
    %v2395 = vperm.slane %v2349, %v2394
    %v2397 = vunpack.c.l.s4 1987475062
    %v2398 = vunpack.c.0.s8 %v2397
    %v2399 = vperm.slane %v2349, %v2398
    %v2401 = vunpack.c.l.s4 269488144
    %v2402 = vunpack.c.0.s8 %v2401
    %v2403 = vperm.slane %v2359, %v2402
    %v2405 = vunpack.c.l.s4 842150450
    %v2406 = vunpack.c.0.s8 %v2405
    %v2407 = vperm.slane %v2359, %v2406
    %v2409 = vunpack.c.l.s4 1414812756
    %v2410 = vunpack.c.0.s8 %v2409
    %v2411 = vperm.slane %v2359, %v2410
    %v2413 = vunpack.c.l.s4 269488144
    %v2414 = vunpack.c.0.s8 %v2413
    %v2415 = vperm.slane %v2369, %v2414
    %v2417 = vunpack.c.l.s4 842150450
    %v2418 = vunpack.c.0.s8 %v2417
    %v2419 = vperm.slane %v2369, %v2418
    %v2421 = vunpack.c.l.s4 1414812756
    %v2422 = vunpack.c.0.s8 %v2421
    %v2423 = vperm.slane %v2369, %v2422
    %v2425 = vunpack.c.l.s4 1987475062
    %v2426 = vunpack.c.0.s8 %v2425
    %v2427 = vperm.slane %v2369, %v2426
    %v2429 = vunpack.c.l.s4 269488144
    %v2430 = vunpack.c.0.s8 %v2429
    %v2431 = vperm.slane %v2379, %v2430
    %v2433 = vunpack.c.l.s4 842150450
    %v2434 = vunpack.c.0.s8 %v2433
    %v2435 = vperm.slane %v2379, %v2434
    %v2437 = vunpack.c.l.s4 1414812756
    %v2438 = vunpack.c.0.s8 %v2437
    %v2439 = vperm.slane %v2379, %v2438
    %v2454 = vmul.f32 %v2314, %v2387
    %v2455 = vmul.f32 %v2315, %v2391
    %v2456 = vmul.f32 %v2316, %v2395
    %v2457 = vmul.f32 %v2317, %v2399
    %v2458 = vmul.f32 %v2318, %v2403
    %v2459 = vmul.f32 %v2319, %v2407
    %v2460 = vmul.f32 %v2320, %v2411
    %v2461 = vmul.f32 %v2321, %v2415
    %v2462 = vmul.f32 %v2322, %v2419
    %v2463 = vmul.f32 %v2323, %v2423
    %v2464 = vmul.f32 %v2324, %v2427
    %v2465 = vmul.f32 %v2325, %v2431
    %v2466 = vmul.f32 %v2326, %v2435
    %v2467 = vmul.f32 %v2327, %v2439
    %v2468 = vperm.slane %v2108, 0
    %v2470 = vrot.slane %v2468, 2
    %v2471 = vrot.slane %v2468, 4
    %v2472 = vrot.slane %v2468, 6
    %v2476 = vmul.f32 %v2454, %v2468
    %v2477 = vmul.f32 %v2455, %v2470
    %v2478 = vmul.f32 %v2456, %v2471
    %v2479 = vmul.f32 %v2457, %v2472
    %v2480 = vmul.f32 %v2458, %v2468
    %v2481 = vmul.f32 %v2459, %v2470
    %v2482 = vmul.f32 %v2460, %v2471
    %v2483 = vmul.f32 %v2461, %v2468
    %v2484 = vmul.f32 %v2462, %v2470
    %v2485 = vmul.f32 %v2463, %v2471
    %v2486 = vmul.f32 %v2464, %v2472
    %v2487 = vmul.f32 %v2465, %v2468
    %v2488 = vmul.f32 %v2466, %v2470
    %v2489 = vmul.f32 %v2467, %v2471
    %v2490 = vperm.slane %v2109, 0
    %v2492 = vrot.slane %v2490, 2
    %v2493 = vrot.slane %v2490, 4
    %v2494 = vrot.slane %v2490, 6
    %v2498 = vadd.f32 %v2476, %v2490
    %v2499 = vadd.f32 %v2477, %v2492
    %v2500 = vadd.f32 %v2478, %v2493
    %v2501 = vadd.f32 %v2479, %v2494
    %v2502 = vadd.f32 %v2480, %v2490
    %v2503 = vadd.f32 %v2481, %v2492
    %v2504 = vadd.f32 %v2482, %v2493
    %v2505 = vadd.f32 %v2483, %v2490
    %v2506 = vadd.f32 %v2484, %v2492
    %v2507 = vadd.f32 %v2485, %v2493
    %v2508 = vadd.f32 %v2486, %v2494
    %v2509 = vadd.f32 %v2487, %v2490
    %v2510 = vadd.f32 %v2488, %v2492
    %v2511 = vadd.f32 %v2489, %v2493
    %v2512 = vld [vmem:[#allocation2 + $0x40] sm:$0xff]
    %v2513 = vld [vmem:[#allocation2 + $0x48] sm:$0xff]
    %v2514 = vld [vmem:[#allocation2 + $0x50] sm:$0xff]
    %v2515 = vld [vmem:[#allocation2 + $0x58] sm:$0xff]
    %v2516 = vld [vmem:[%s4 + $0x6] sm:$0x1]
    %v2517 = vperm.slane %v2516, 0
    %v2519 = vrot.slane %v2517, 2
    %v2520 = vrot.slane %v2517, 4
    %v2521 = vrot.slane %v2517, 6
    %2536 = vst [vmem:[#allocation1] ss:$4 sm:$0xff] %v2498
    %s2537 = scalar_lea.vmem [#allocation1], 1
    %2538 = vst [vmem:[%s2537] ss:$4 sm:$0xff] %v2499
    %s2539 = scalar_lea.vmem [#allocation1], 2
    %2540 = vst [vmem:[%s2539] ss:$4 sm:$0xff] %v2500
    %s2541 = scalar_lea.vmem [#allocation1], 3
    %2542 = vst [vmem:[%s2541] ss:$4 sm:$0xff] %v2501
    %s2543 = scalar_lea.vmem [#allocation1], 32
    %2544 = vst [vmem:[%s2543] ss:$4 sm:$0xff] %v2502
    %s2545 = scalar_lea.vmem [#allocation1], 33
    %2546 = vst [vmem:[%s2545] ss:$4 sm:$0xff] %v2503
    %s2547 = scalar_lea.vmem [#allocation1], 34
    %2548 = vst [vmem:[%s2547] ss:$4 sm:$0xff] %v2504
    %s2549 = scalar_lea.vmem [#allocation1], 35
    %2550 = vst [vmem:[%s2549] ss:$4 sm:$0xff] %v2505
    %v2551 = vld.sshfl [vmem:[#allocation1] sm:$0xff pattern:$0x73625140]
    %v2552 = vld.sshfl [vmem:[#allocation1 + $0x20] sm:$0xff pattern:$0x73625140]
    %2553 = vst [vmem:[#allocation1] ss:$4 sm:$0xff] %v2506
    %2554 = vst [vmem:[%s2537] ss:$4 sm:$0xff] %v2507
    %2555 = vst [vmem:[%s2539] ss:$4 sm:$0xff] %v2508
    %2556 = vst [vmem:[%s2541] ss:$4 sm:$0xff] %v2509
    %2557 = vst [vmem:[%s2543] ss:$4 sm:$0xff] %v2510
    %2558 = vst [vmem:[%s2545] ss:$4 sm:$0xff] %v2511
    %v2559 = vld.sshfl [vmem:[#allocation1] sm:$0xff pattern:$0x73625140]
    %v2560 = vld.sshfl [vmem:[#allocation1 + $0x20] sm:$0xff pattern:$0x73625140]
    %2561 = vst [vmem:[#allocation1] ss:$4 sm:$0xff] %v2517
    %s2562 = scalar_lea.vmem [#allocation1], 1
    %2563 = vst [vmem:[%s2562] ss:$4 sm:$0xff] %v2519
    %s2564 = scalar_lea.vmem [#allocation1], 2
    %2565 = vst [vmem:[%s2564] ss:$4 sm:$0xff] %v2520
    %s2566 = scalar_lea.vmem [#allocation1], 3
    %2567 = vst [vmem:[%s2566] ss:$4 sm:$0xff] %v2521
    %s2568 = scalar_lea.vmem [#allocation1], 32
    %2569 = vst [vmem:[%s2568] ss:$4 sm:$0xff] %v2517
    %s2570 = scalar_lea.vmem [#allocation1], 33
    %2571 = vst [vmem:[%s2570] ss:$4 sm:$0xff] %v2519
    %s2572 = scalar_lea.vmem [#allocation1], 34
    %2573 = vst [vmem:[%s2572] ss:$4 sm:$0xff] %v2520
    %s2574 = scalar_lea.vmem [#allocation1], 35
    %2575 = vst [vmem:[%s2574] ss:$4 sm:$0xff] %v2517
    %v2576 = vld.sshfl [vmem:[#allocation1] sm:$0xff pattern:$0x73625140]
    %v2577 = vld.sshfl [vmem:[#allocation1 + $0x20] sm:$0xff pattern:$0x73625140]
    %2578 = vst [vmem:[#allocation1] ss:$4 sm:$0xff] %v2519
    %2579 = vst [vmem:[%s2562] ss:$4 sm:$0xff] %v2520
    %2580 = vst [vmem:[%s2564] ss:$4 sm:$0xff] %v2521
    %2581 = vst [vmem:[%s2566] ss:$4 sm:$0xff] %v2517
    %2582 = vst [vmem:[%s2568] ss:$4 sm:$0xff] %v2519
    %2583 = vst [vmem:[%s2570] ss:$4 sm:$0xff] %v2520
    %v2584 = vld.sshfl [vmem:[#allocation1] sm:$0xff pattern:$0x73625140]
    %v2585 = vld.sshfl [vmem:[#allocation1 + $0x20] sm:$0xff pattern:$0x73625140]
    %v2590 = vsel %vm203, %v2551, 0
    %v2592 = vsel %vm203, %v2552, 0
    %v2594 = vsel %vm203, %v2559, 0
    %v2596 = vsel %vm203, %v2560, 0
    %2598 = vmatpush.msra.mxu0 0.0
    %2599 = vmatpush.msra.mxu0 0.0
    %2600 = vmatpush.msra.mxu0 0.0
    %2601 = vmatpush.msra.mxu0 0.0
    %2602 = vmatpush.msra.mxu0 0.0
    %2603 = vmatpush.msra.mxu0 0.0
    %2604 = vmatpush.msra.mxu0 0.0
    %2605 = vmatpush.msra.mxu0 0.0
    %2606 = vmatpush.msra.mxu0 0.0
    %2607 = vmatpush.msra.mxu0 0.0
    %2608 = vmatpush.msra.mxu0 0.0
    %2609 = vmatpush.msra.mxu0 0.0
    %2610 = vmatpush.msra.mxu0 %v2515
    %2611 = vmatpush.msra.mxu0 %v2514
    %2612 = vmatpush.msra.mxu0 %v2513
    %2613 = vmatpush.msra.mxu0 %v2512
    %2614 = vmatmul.f32.gmra.mxu0 %v2590
    %v2615 = vpop.f32.mrf.mxu0
    %v2616 = vadd.f32 %v2576, %v2615
    %2617 = vmatmul.f32.gmra.mxu0 %v2592
    %v2618 = vpop.f32.mrf.mxu0
    %v2619 = vadd.f32 %v2577, %v2618
    %2620 = vmatmul.f32.gmra.mxu0 %v2594
    %v2621 = vpop.f32.mrf.mxu0
    %v2622 = vadd.f32 %v2584, %v2621
    %2623 = vmatmul.f32.gmra.mxu0 %v2596
    %v2624 = vpop.f32.mrf.mxu0
    %v2625 = vadd.f32 %v2585, %v2624
    %2626 = vdwg.mxu0
    %v2631 = vrot.slane %v2616, 2
    %v2632 = vrot.slane %v2616, 4
    %v2633 = vrot.slane %v2616, 6
    %v2634 = vrot.slane %v2619, 2
    %v2635 = vrot.slane %v2619, 4
    %v2636 = vrot.slane %v2619, 6
    %v2637 = vrot.slane %v2622, 2
    %v2638 = vrot.slane %v2622, 4
    %v2639 = vrot.slane %v2622, 6
    %v2640 = vrot.slane %v2625, 2
    %v2651 = vmax.f32 %v2616, 0.0
    %v2652 = vmax.f32 %v2631, 0.0
    %v2653 = vmax.f32 %v2632, 0.0
    %v2654 = vmax.f32 %v2633, 0.0
    %v2655 = vmax.f32 %v2619, 0.0
    %v2656 = vmax.f32 %v2634, 0.0
    %v2657 = vmax.f32 %v2635, 0.0
    %v2658 = vmax.f32 %v2636, 0.0
    %v2659 = vmax.f32 %v2622, 0.0
    %v2660 = vmax.f32 %v2637, 0.0
    %v2661 = vmax.f32 %v2638, 0.0
    %v2662 = vmax.f32 %v2639, 0.0
    %v2663 = vmax.f32 %v2625, 0.0
    %v2664 = vmax.f32 %v2640, 0.0
    %v2665 = vld [vmem:[#allocation2 + $0x60] sm:$0xff]
    %v2666 = vld [vmem:[#allocation2 + $0x68] sm:$0xff]
    %v2667 = vld [vmem:[#allocation2 + $0x70] sm:$0xff]
    %v2668 = vld [vmem:[#allocation2 + $0x78] sm:$0xff]
    %v2669 = vld [vmem:[#allocation2 + $0x80] sm:$0xff]
    %v2670 = vld [vmem:[#allocation2 + $0x88] sm:$0xff]
    %v2671 = vld [vmem:[#allocation2 + $0x90] sm:$0xff]
    %v2672 = vld [vmem:[#allocation2 + $0x98] sm:$0xff]
    %v2673 = vld [vmem:[%s4 + $0x5] sm:$0x1]
    %v2674 = vperm.slane %v2673, 0
    %v2676 = vrot.slane %v2674, 2
    %v2677 = vrot.slane %v2674, 4
    %v2678 = vrot.slane %v2674, 6
    %2693 = vst [vmem:[#allocation1] ss:$4 sm:$0xff] %v2651
    %s2694 = scalar_lea.vmem [#allocation1], 1
    %2695 = vst [vmem:[%s2694] ss:$4 sm:$0xff] %v2652
    %s2696 = scalar_lea.vmem [#allocation1], 2
    %2697 = vst [vmem:[%s2696] ss:$4 sm:$0xff] %v2653
    %s2698 = scalar_lea.vmem [#allocation1], 3
    %2699 = vst [vmem:[%s2698] ss:$4 sm:$0xff] %v2654
    %s2700 = scalar_lea.vmem [#allocation1], 32
    %2701 = vst [vmem:[%s2700] ss:$4 sm:$0xff] %v2655
    %s2702 = scalar_lea.vmem [#allocation1], 33
    %2703 = vst [vmem:[%s2702] ss:$4 sm:$0xff] %v2656
    %s2704 = scalar_lea.vmem [#allocation1], 34
    %2705 = vst [vmem:[%s2704] ss:$4 sm:$0xff] %v2657
    %s2706 = scalar_lea.vmem [#allocation1], 35
    %2707 = vst [vmem:[%s2706] ss:$4 sm:$0xff] %v2658
    %v2708 = vld.sshfl [vmem:[#allocation1] sm:$0xff pattern:$0x73625140]
    %v2709 = vld.sshfl [vmem:[#allocation1 + $0x20] sm:$0xff pattern:$0x73625140]
    %2710 = vst [vmem:[#allocation1] ss:$4 sm:$0xff] %v2659
    %2711 = vst [vmem:[%s2694] ss:$4 sm:$0xff] %v2660
    %2712 = vst [vmem:[%s2696] ss:$4 sm:$0xff] %v2661
    %2713 = vst [vmem:[%s2698] ss:$4 sm:$0xff] %v2662
    %2714 = vst [vmem:[%s2700] ss:$4 sm:$0xff] %v2663
    %2715 = vst [vmem:[%s2702] ss:$4 sm:$0xff] %v2664
    %v2716 = vld.sshfl [vmem:[#allocation1] sm:$0xff pattern:$0x73625140]
    %v2717 = vld.sshfl [vmem:[#allocation1 + $0x20] sm:$0xff pattern:$0x73625140]
    %2718 = vst [vmem:[#allocation1] ss:$4 sm:$0xff] %v2674
    %s2719 = scalar_lea.vmem [#allocation1], 1
    %2720 = vst [vmem:[%s2719] ss:$4 sm:$0xff] %v2676
    %s2721 = scalar_lea.vmem [#allocation1], 2
    %2722 = vst [vmem:[%s2721] ss:$4 sm:$0xff] %v2677
    %s2723 = scalar_lea.vmem [#allocation1], 3
    %2724 = vst [vmem:[%s2723] ss:$4 sm:$0xff] %v2678
    %s2725 = scalar_lea.vmem [#allocation1], 32
    %2726 = vst [vmem:[%s2725] ss:$4 sm:$0xff] %v2674
    %s2727 = scalar_lea.vmem [#allocation1], 33
    %2728 = vst [vmem:[%s2727] ss:$4 sm:$0xff] %v2676
    %s2729 = scalar_lea.vmem [#allocation1], 34
    %2730 = vst [vmem:[%s2729] ss:$4 sm:$0xff] %v2677
    %s2731 = scalar_lea.vmem [#allocation1], 35
    %2732 = vst [vmem:[%s2731] ss:$4 sm:$0xff] %v2674
    %v2733 = vld.sshfl [vmem:[#allocation1] sm:$0xff pattern:$0x73625140]
    %v2734 = vld.sshfl [vmem:[#allocation1 + $0x20] sm:$0xff pattern:$0x73625140]
    %2735 = vst [vmem:[#allocation1] ss:$4 sm:$0xff] %v2676
    %2736 = vst [vmem:[%s2719] ss:$4 sm:$0xff] %v2677
    %2737 = vst [vmem:[%s2721] ss:$4 sm:$0xff] %v2678
    %2738 = vst [vmem:[%s2723] ss:$4 sm:$0xff] %v2674
    %2739 = vst [vmem:[%s2725] ss:$4 sm:$0xff] %v2676
    %2740 = vst [vmem:[%s2727] ss:$4 sm:$0xff] %v2677
    %v2741 = vld.sshfl [vmem:[#allocation1] sm:$0xff pattern:$0x73625140]
    %v2742 = vld.sshfl [vmem:[#allocation1 + $0x20] sm:$0xff pattern:$0x73625140]
    %vm2747 = vcmask 523264
    %v2748 = vsel %vm2747, %v2708, 0
    %v2750 = vsel %vm2747, %v2709, 0
    %v2752 = vsel %vm2747, %v2716, 0
    %v2754 = vsel %vm2747, %v2717, 0
    %2756 = vmatpush.msra.mxu0 0.0
    %2757 = vmatpush.msra.mxu0 0.0
    %2758 = vmatpush.msra.mxu0 0.0
    %2759 = vmatpush.msra.mxu0 0.0
    %2760 = vmatpush.msra.mxu0 0.0
    %2761 = vmatpush.msra.mxu0 0.0
    %2762 = vmatpush.msra.mxu0 0.0
    %2763 = vmatpush.msra.mxu0 0.0
    %2764 = vmatpush.msra.mxu0 %v2672
    %2765 = vmatpush.msra.mxu0 %v2671
    %2766 = vmatpush.msra.mxu0 %v2670
    %2767 = vmatpush.msra.mxu0 %v2669
    %2768 = vmatpush.msra.mxu0 %v2668
    %2769 = vmatpush.msra.mxu0 %v2667
    %2770 = vmatpush.msra.mxu0 %v2666
    %2771 = vmatpush.msra.mxu0 %v2665
    %2772 = vmatmul.f32.gmra.mxu0 %v2748
    %v2773 = vpop.f32.mrf.mxu0
    %v2774 = vadd.f32 %v2733, %v2773
    %2775 = vmatmul.f32.gmra.mxu0 %v2750
    %v2776 = vpop.f32.mrf.mxu0
    %v2777 = vadd.f32 %v2734, %v2776
    %2778 = vmatmul.f32.gmra.mxu0 %v2752
    %v2779 = vpop.f32.mrf.mxu0
    %v2780 = vadd.f32 %v2741, %v2779
    %2781 = vmatmul.f32.gmra.mxu0 %v2754
    %v2782 = vpop.f32.mrf.mxu0
    %v2783 = vadd.f32 %v2742, %v2782
    %2784 = vdwg.mxu0
    %v2789 = vrot.slane %v2774, 2
    %v2790 = vrot.slane %v2774, 4
    %v2791 = vrot.slane %v2774, 6
    %v2792 = vrot.slane %v2777, 2
    %v2793 = vrot.slane %v2777, 4
    %v2794 = vrot.slane %v2777, 6
    %v2795 = vrot.slane %v2780, 2
    %v2796 = vrot.slane %v2780, 4
    %v2797 = vrot.slane %v2780, 6
    %v2798 = vrot.slane %v2783, 2
    %v2809 = vadd.f32 %v2774, %v2094
    %v2810 = vadd.f32 %v2789, %v2095
    %v2811 = vadd.f32 %v2790, %v2096
    %v2812 = vadd.f32 %v2791, %v2097
    %v2813 = vadd.f32 %v2777, %v2098
    %v2814 = vadd.f32 %v2792, %v2099
    %v2815 = vadd.f32 %v2793, %v2100
    %v2816 = vadd.f32 %v2794, %v2101
    %v2817 = vadd.f32 %v2780, %v2102
    %v2818 = vadd.f32 %v2795, %v2103
    %v2819 = vadd.f32 %v2796, %v2104
    %v2820 = vadd.f32 %v2797, %v2105
    %v2821 = vadd.f32 %v2783, %v2106
    %v2822 = vadd.f32 %v2798, %v2107
    %s2823 = scalar_lea.vmem %s4, 8
    %v2824 = vld [vmem:[%s2823] sm:$0x1]
    %v2825 = vld [vmem:[%s2823 + $0x1] sm:$0x1]
    %2840 = vst [vmem:[#allocation1] ss:$4 sm:$0xff] %v2809
    %s2841 = scalar_lea.vmem [#allocation1], 1
    %2842 = vst [vmem:[%s2841] ss:$4 sm:$0xff] %v2810
    %s2843 = scalar_lea.vmem [#allocation1], 2
    %2844 = vst [vmem:[%s2843] ss:$4 sm:$0xff] %v2811
    %s2845 = scalar_lea.vmem [#allocation1], 3
    %2846 = vst [vmem:[%s2845] ss:$4 sm:$0xff] %v2812
    %s2847 = scalar_lea.vmem [#allocation1], 32
    %2848 = vst [vmem:[%s2847] ss:$4 sm:$0xff] %v2813
    %s2849 = scalar_lea.vmem [#allocation1], 33
    %2850 = vst [vmem:[%s2849] ss:$4 sm:$0xff] %v2814
    %s2851 = scalar_lea.vmem [#allocation1], 34
    %2852 = vst [vmem:[%s2851] ss:$4 sm:$0xff] %v2815
    %v2853 = vld.sshfl [vmem:[#allocation1] sm:$0xff pattern:$0x73625140]
    %v2854 = vld.sshfl [vmem:[#allocation1 + $0x20] sm:$0xff pattern:$0x73625140]
    %2855 = vst [vmem:[#allocation1] ss:$4 sm:$0xff] %v2816
    %2856 = vst [vmem:[%s2841] ss:$4 sm:$0xff] %v2817
    %2857 = vst [vmem:[%s2843] ss:$4 sm:$0xff] %v2818
    %2858 = vst [vmem:[%s2845] ss:$4 sm:$0xff] %v2819
    %2859 = vst [vmem:[%s2847] ss:$4 sm:$0xff] %v2820
    %2860 = vst [vmem:[%s2849] ss:$4 sm:$0xff] %v2821
    %2861 = vst [vmem:[%s2851] ss:$4 sm:$0xff] %v2822
    %v2862 = vld.sshfl [vmem:[#allocation1] sm:$0xff pattern:$0x73625140]
    %v2863 = vld.sshfl [vmem:[#allocation1 + $0x20] sm:$0xff pattern:$0x73625140]
    %v2868 = vsel %vm203, %v2853, 0.0
    %2869 = vadd.xlane.f32.xlu0 %v2868
    %v2870 = vpop.xlane.xlu0 %2869
    %v2871 = vsel %vm207, %v2854, 0.0
    %2872 = vadd.xlane.f32.xlu0 %v2871
    %v2873 = vpop.xlane.xlu0 %2872
    %v2874 = vsel %vm203, %v2862, 0.0
    %2875 = vadd.xlane.f32.xlu0 %v2874
    %v2876 = vpop.xlane.xlu0 %2875
    %v2877 = vsel %vm207, %v2863, 0.0
    %2878 = vadd.xlane.f32.xlu0 %v2877
    %v2879 = vpop.xlane.xlu0 %2878
    %v2880 = vmul.f32 %v2870, %v223
    %v2881 = vmul.f32 %v2873, %v223
    %v2882 = vmul.f32 %v2876, %v223
    %v2883 = vmul.f32 %v2879, %v223
    %v2884 = vmul.f32 %v2809, %v2809
    %v2885 = vmul.f32 %v2810, %v2810
    %v2886 = vmul.f32 %v2811, %v2811
    %v2887 = vmul.f32 %v2812, %v2812
    %v2888 = vmul.f32 %v2813, %v2813
    %v2889 = vmul.f32 %v2814, %v2814
    %v2890 = vmul.f32 %v2815, %v2815
    %v2891 = vmul.f32 %v2816, %v2816
    %v2892 = vmul.f32 %v2817, %v2817
    %v2893 = vmul.f32 %v2818, %v2818
    %v2894 = vmul.f32 %v2819, %v2819
    %v2895 = vmul.f32 %v2820, %v2820
    %v2896 = vmul.f32 %v2821, %v2821
    %v2897 = vmul.f32 %v2822, %v2822
    %2912 = vst [vmem:[#allocation1] ss:$4 sm:$0xff] %v2884
    %s2913 = scalar_lea.vmem [#allocation1], 1
    %2914 = vst [vmem:[%s2913] ss:$4 sm:$0xff] %v2885
    %s2915 = scalar_lea.vmem [#allocation1], 2
    %2916 = vst [vmem:[%s2915] ss:$4 sm:$0xff] %v2886
    %s2917 = scalar_lea.vmem [#allocation1], 3
    %2918 = vst [vmem:[%s2917] ss:$4 sm:$0xff] %v2887
    %s2919 = scalar_lea.vmem [#allocation1], 32
    %2920 = vst [vmem:[%s2919] ss:$4 sm:$0xff] %v2888
    %s2921 = scalar_lea.vmem [#allocation1], 33
    %2922 = vst [vmem:[%s2921] ss:$4 sm:$0xff] %v2889
    %s2923 = scalar_lea.vmem [#allocation1], 34
    %2924 = vst [vmem:[%s2923] ss:$4 sm:$0xff] %v2890
    %v2925 = vld.sshfl [vmem:[#allocation1] sm:$0xff pattern:$0x73625140]
    %v2926 = vld.sshfl [vmem:[#allocation1 + $0x20] sm:$0xff pattern:$0x73625140]
    %2927 = vst [vmem:[#allocation1] ss:$4 sm:$0xff] %v2891
    %2928 = vst [vmem:[%s2913] ss:$4 sm:$0xff] %v2892
    %2929 = vst [vmem:[%s2915] ss:$4 sm:$0xff] %v2893
    %2930 = vst [vmem:[%s2917] ss:$4 sm:$0xff] %v2894
    %2931 = vst [vmem:[%s2919] ss:$4 sm:$0xff] %v2895
    %2932 = vst [vmem:[%s2921] ss:$4 sm:$0xff] %v2896
    %2933 = vst [vmem:[%s2923] ss:$4 sm:$0xff] %v2897
    %v2934 = vld.sshfl [vmem:[#allocation1] sm:$0xff pattern:$0x73625140]
    %v2935 = vld.sshfl [vmem:[#allocation1 + $0x20] sm:$0xff pattern:$0x73625140]
    %v2940 = vsel %vm203, %v2925, 0.0
    %2941 = vadd.xlane.f32.xlu0 %v2940
    %v2942 = vpop.xlane.xlu0 %2941
    %v2943 = vsel %vm207, %v2926, 0.0
    %2944 = vadd.xlane.f32.xlu0 %v2943
    %v2945 = vpop.xlane.xlu0 %2944
    %v2946 = vsel %vm203, %v2934, 0.0
    %2947 = vadd.xlane.f32.xlu0 %v2946
    %v2948 = vpop.xlane.xlu0 %2947
    %v2949 = vsel %vm207, %v2935, 0.0
    %2950 = vadd.xlane.f32.xlu0 %v2949
    %v2951 = vpop.xlane.xlu0 %2950
    %v2952 = vmul.f32 %v2942, %v223
    %v2953 = vmul.f32 %v2945, %v223
    %v2954 = vmul.f32 %v2948, %v223
    %v2955 = vmul.f32 %v2951, %v223
    %v2961 = vunpack.c.l.s4 269488144
    %v2962 = vunpack.c.0.s8 %v2961
    %v2963 = vperm.slane %v2880, %v2962
    %v2965 = vunpack.c.l.s4 842150450
    %v2966 = vunpack.c.0.s8 %v2965
    %v2967 = vperm.slane %v2880, %v2966
    %v2969 = vunpack.c.l.s4 1414812756
    %v2970 = vunpack.c.0.s8 %v2969
    %v2971 = vperm.slane %v2880, %v2970
    %v2973 = vunpack.c.l.s4 1987475062
    %v2974 = vunpack.c.0.s8 %v2973
    %v2975 = vperm.slane %v2880, %v2974
    %v2977 = vunpack.c.l.s4 269488144
    %v2978 = vunpack.c.0.s8 %v2977
    %v2979 = vperm.slane %v2881, %v2978
    %v2981 = vunpack.c.l.s4 842150450
    %v2982 = vunpack.c.0.s8 %v2981
    %v2983 = vperm.slane %v2881, %v2982
    %v2985 = vunpack.c.l.s4 1414812756
    %v2986 = vunpack.c.0.s8 %v2985
    %v2987 = vperm.slane %v2881, %v2986
    %v2989 = vunpack.c.l.s4 269488144
    %v2990 = vunpack.c.0.s8 %v2989
    %v2991 = vperm.slane %v2882, %v2990
    %v2993 = vunpack.c.l.s4 842150450
    %v2994 = vunpack.c.0.s8 %v2993
    %v2995 = vperm.slane %v2882, %v2994
    %v2997 = vunpack.c.l.s4 1414812756
    %v2998 = vunpack.c.0.s8 %v2997
    %v2999 = vperm.slane %v2882, %v2998
    %v3001 = vunpack.c.l.s4 1987475062
    %v3002 = vunpack.c.0.s8 %v3001
    %v3003 = vperm.slane %v2882, %v3002
    %v3005 = vunpack.c.l.s4 269488144
    %v3006 = vunpack.c.0.s8 %v3005
    %v3007 = vperm.slane %v2883, %v3006
    %v3009 = vunpack.c.l.s4 842150450
    %v3010 = vunpack.c.0.s8 %v3009
    %v3011 = vperm.slane %v2883, %v3010
    %v3013 = vunpack.c.l.s4 1414812756
    %v3014 = vunpack.c.0.s8 %v3013
    %v3015 = vperm.slane %v2883, %v3014
    %v3030 = vsub.f32 %v2809, %v2963
    %v3031 = vsub.f32 %v2810, %v2967
    %v3032 = vsub.f32 %v2811, %v2971
    %v3033 = vsub.f32 %v2812, %v2975
    %v3034 = vsub.f32 %v2813, %v2979
    %v3035 = vsub.f32 %v2814, %v2983
    %v3036 = vsub.f32 %v2815, %v2987
    %v3037 = vsub.f32 %v2816, %v2991
    %v3038 = vsub.f32 %v2817, %v2995
    %v3039 = vsub.f32 %v2818, %v2999
    %v3040 = vsub.f32 %v2819, %v3003
    %v3041 = vsub.f32 %v2820, %v3007
    %v3042 = vsub.f32 %v2821, %v3011
    %v3043 = vsub.f32 %v2822, %v3015
    %v3044 = vmul.f32 %v2880, %v2880
    %v3045 = vmul.f32 %v2881, %v2881
    %v3046 = vmul.f32 %v2882, %v2882
    %v3047 = vmul.f32 %v2883, %v2883
    %v3048 = vsub.f32 %v2952, %v3044
    %v3049 = vsub.f32 %v2953, %v3045
    %v3050 = vsub.f32 %v2954, %v3046
    %v3051 = vsub.f32 %v2955, %v3047
    %v3052 = vadd.f32 %v3048, 1e-05
    %v3053 = vadd.f32 %v3049, 1e-05
    %v3054 = vadd.f32 %v3050, 1e-05
    %v3055 = vadd.f32 %v3051, 1e-05
    %v3056 = vrsqrt.pop %v3052
    %v3057 = vmul.f32 %v3056, %v3052
    %v3058 = vmul.f32 %v3057, %v3056
    %v3059 = vmul.f32 0.5, %v3058
    %v3060 = vsub.f32 1.5, %v3059
    %v3061 = vmul.f32 %v3056, %v3060
    %vm3062 = vweird.f32 %v3052
    %vm3063 = vweird.f32 %v3056
    %vm3064 = vmor %vm3062, %vm3063
    %v3065 = vsel %vm3064, %v3056, %v3061
    %v3066 = vrsqrt.pop %v3053
    %v3067 = vmul.f32 %v3066, %v3053
    %v3068 = vmul.f32 %v3067, %v3066
    %v3069 = vmul.f32 0.5, %v3068
    %v3070 = vsub.f32 1.5, %v3069
    %v3071 = vmul.f32 %v3066, %v3070
    %vm3072 = vweird.f32 %v3053
    %vm3073 = vweird.f32 %v3066
    %vm3074 = vmor %vm3072, %vm3073
    %v3075 = vsel %vm3074, %v3066, %v3071
    %v3076 = vrsqrt.pop %v3054
    %v3077 = vmul.f32 %v3076, %v3054
    %v3078 = vmul.f32 %v3077, %v3076
    %v3079 = vmul.f32 0.5, %v3078
    %v3080 = vsub.f32 1.5, %v3079
    %v3081 = vmul.f32 %v3076, %v3080
    %vm3082 = vweird.f32 %v3054
    %vm3083 = vweird.f32 %v3076
    %vm3084 = vmor %vm3082, %vm3083
    %v3085 = vsel %vm3084, %v3076, %v3081
    %v3086 = vrsqrt.pop %v3055
    %v3087 = vmul.f32 %v3086, %v3055
    %v3088 = vmul.f32 %v3087, %v3086
    %v3089 = vmul.f32 0.5, %v3088
    %v3090 = vsub.f32 1.5, %v3089
    %v3091 = vmul.f32 %v3086, %v3090
    %vm3092 = vweird.f32 %v3055
    %vm3093 = vweird.f32 %v3086
    %vm3094 = vmor %vm3092, %vm3093
    %v3095 = vsel %vm3094, %v3086, %v3091
    %v3101 = vunpack.c.l.s4 269488144
    %v3102 = vunpack.c.0.s8 %v3101
    %v3103 = vperm.slane %v3065, %v3102
    %v3105 = vunpack.c.l.s4 842150450
    %v3106 = vunpack.c.0.s8 %v3105
    %v3107 = vperm.slane %v3065, %v3106
    %v3109 = vunpack.c.l.s4 1414812756
    %v3110 = vunpack.c.0.s8 %v3109
    %v3111 = vperm.slane %v3065, %v3110
    %v3113 = vunpack.c.l.s4 1987475062
    %v3114 = vunpack.c.0.s8 %v3113
    %v3115 = vperm.slane %v3065, %v3114
    %v3117 = vunpack.c.l.s4 269488144
    %v3118 = vunpack.c.0.s8 %v3117
    %v3119 = vperm.slane %v3075, %v3118
    %v3121 = vunpack.c.l.s4 842150450
    %v3122 = vunpack.c.0.s8 %v3121
    %v3123 = vperm.slane %v3075, %v3122
    %v3125 = vunpack.c.l.s4 1414812756
    %v3126 = vunpack.c.0.s8 %v3125
    %v3127 = vperm.slane %v3075, %v3126
    %v3129 = vunpack.c.l.s4 269488144
    %v3130 = vunpack.c.0.s8 %v3129
    %v3131 = vperm.slane %v3085, %v3130
    %v3133 = vunpack.c.l.s4 842150450
    %v3134 = vunpack.c.0.s8 %v3133
    %v3135 = vperm.slane %v3085, %v3134
    %v3137 = vunpack.c.l.s4 1414812756
    %v3138 = vunpack.c.0.s8 %v3137
    %v3139 = vperm.slane %v3085, %v3138
    %v3141 = vunpack.c.l.s4 1987475062
    %v3142 = vunpack.c.0.s8 %v3141
    %v3143 = vperm.slane %v3085, %v3142
    %v3145 = vunpack.c.l.s4 269488144
    %v3146 = vunpack.c.0.s8 %v3145
    %v3147 = vperm.slane %v3095, %v3146
    %v3149 = vunpack.c.l.s4 842150450
    %v3150 = vunpack.c.0.s8 %v3149
    %v3151 = vperm.slane %v3095, %v3150
    %v3153 = vunpack.c.l.s4 1414812756
    %v3154 = vunpack.c.0.s8 %v3153
    %v3155 = vperm.slane %v3095, %v3154
    %v3170 = vmul.f32 %v3030, %v3103
    %v3171 = vmul.f32 %v3031, %v3107
    %v3172 = vmul.f32 %v3032, %v3111
    %v3173 = vmul.f32 %v3033, %v3115
    %v3174 = vmul.f32 %v3034, %v3119
    %v3175 = vmul.f32 %v3035, %v3123
    %v3176 = vmul.f32 %v3036, %v3127
    %v3177 = vmul.f32 %v3037, %v3131
    %v3178 = vmul.f32 %v3038, %v3135
    %v3179 = vmul.f32 %v3039, %v3139
    %v3180 = vmul.f32 %v3040, %v3143
    %v3181 = vmul.f32 %v3041, %v3147
    %v3182 = vmul.f32 %v3042, %v3151
    %v3183 = vmul.f32 %v3043, %v3155
    %v3184 = vperm.slane %v2824, 0
    %v3186 = vrot.slane %v3184, 2
    %v3187 = vrot.slane %v3184, 4
    %v3188 = vrot.slane %v3184, 6
    %v3192 = vmul.f32 %v3170, %v3184
    %v3193 = vmul.f32 %v3171, %v3186
    %v3194 = vmul.f32 %v3172, %v3187
    %v3195 = vmul.f32 %v3173, %v3188
    %v3196 = vmul.f32 %v3174, %v3184
    %v3197 = vmul.f32 %v3175, %v3186
    %v3198 = vmul.f32 %v3176, %v3187
    %v3199 = vmul.f32 %v3177, %v3184
    %v3200 = vmul.f32 %v3178, %v3186
    %v3201 = vmul.f32 %v3179, %v3187
    %v3202 = vmul.f32 %v3180, %v3188
    %v3203 = vmul.f32 %v3181, %v3184
    %v3204 = vmul.f32 %v3182, %v3186
    %v3205 = vmul.f32 %v3183, %v3187
    %v3206 = vperm.slane %v2825, 0
    %v3208 = vrot.slane %v3206, 2
    %v3209 = vrot.slane %v3206, 4
    %v3210 = vrot.slane %v3206, 6
    %v3214 = vadd.f32 %v3192, %v3206
    %v3215 = vadd.f32 %v3193, %v3208
    %v3216 = vadd.f32 %v3194, %v3209
    %v3217 = vadd.f32 %v3195, %v3210
    %v3218 = vadd.f32 %v3196, %v3206
    %v3219 = vadd.f32 %v3197, %v3208
    %v3220 = vadd.f32 %v3198, %v3209
    %v3221 = vadd.f32 %v3199, %v3206
    %v3222 = vadd.f32 %v3200, %v3208
    %v3223 = vadd.f32 %v3201, %v3209
    %v3224 = vadd.f32 %v3202, %v3210
    %v3225 = vadd.f32 %v3203, %v3206
    %v3226 = vadd.f32 %v3204, %v3208
    %v3227 = vadd.f32 %v3205, %v3209
    %s3228 = scalar_lea.vmem [#allocation2], 160
    %v3229 = vld [vmem:[%s3228] sm:$0xff]
    %v3230 = vld [vmem:[%s3228 + $0x8] sm:$0xff]
    %v3231 = vld [vmem:[%s3228 + $0x10] sm:$0xff]
    %v3232 = vld [vmem:[%s3228 + $0x18] sm:$0xff]
    %3247 = vst [vmem:[#allocation1] ss:$4 sm:$0xff] %v3214
    %s3248 = scalar_lea.vmem [#allocation1], 1
    %3249 = vst [vmem:[%s3248] ss:$4 sm:$0xff] %v3215
    %s3250 = scalar_lea.vmem [#allocation1], 2
    %3251 = vst [vmem:[%s3250] ss:$4 sm:$0xff] %v3216
    %s3252 = scalar_lea.vmem [#allocation1], 3
    %3253 = vst [vmem:[%s3252] ss:$4 sm:$0xff] %v3217
    %s3254 = scalar_lea.vmem [#allocation1], 32
    %3255 = vst [vmem:[%s3254] ss:$4 sm:$0xff] %v3218
    %s3256 = scalar_lea.vmem [#allocation1], 33
    %3257 = vst [vmem:[%s3256] ss:$4 sm:$0xff] %v3219
    %s3258 = scalar_lea.vmem [#allocation1], 34
    %3259 = vst [vmem:[%s3258] ss:$4 sm:$0xff] %v3220
    %s3260 = scalar_lea.vmem [#allocation1], 35
    %3261 = vst [vmem:[%s3260] ss:$4 sm:$0xff] %v3221
    %v3262 = vld.sshfl [vmem:[#allocation1] sm:$0xff pattern:$0x73625140]
    %v3263 = vld.sshfl [vmem:[#allocation1 + $0x20] sm:$0xff pattern:$0x73625140]
    %3264 = vst [vmem:[#allocation1] ss:$4 sm:$0xff] %v3222
    %3265 = vst [vmem:[%s3248] ss:$4 sm:$0xff] %v3223
    %3266 = vst [vmem:[%s3250] ss:$4 sm:$0xff] %v3224
    %3267 = vst [vmem:[%s3252] ss:$4 sm:$0xff] %v3225
    %3268 = vst [vmem:[%s3254] ss:$4 sm:$0xff] %v3226
    %3269 = vst [vmem:[%s3256] ss:$4 sm:$0xff] %v3227
    %v3270 = vld.sshfl [vmem:[#allocation1] sm:$0xff pattern:$0x73625140]
    %v3271 = vld.sshfl [vmem:[#allocation1 + $0x20] sm:$0xff pattern:$0x73625140]
    %v3272 = vsel %vm203, %v3262, 0
    %v3274 = vsel %vm203, %v3263, 0
    %v3276 = vsel %vm203, %v3270, 0
    %v3278 = vsel %vm203, %v3271, 0
    %3280 = vmatpush.msra.mxu0 0.0
    %3281 = vmatpush.msra.mxu0 0.0
    %3282 = vmatpush.msra.mxu0 0.0
    %3283 = vmatpush.msra.mxu0 0.0
    %3284 = vmatpush.msra.mxu0 0.0
    %3285 = vmatpush.msra.mxu0 0.0
    %3286 = vmatpush.msra.mxu0 0.0
    %3287 = vmatpush.msra.mxu0 0.0
    %3288 = vmatpush.msra.mxu0 0.0
    %3289 = vmatpush.msra.mxu0 0.0
    %3290 = vmatpush.msra.mxu0 0.0
    %3291 = vmatpush.msra.mxu0 0.0
    %3292 = vmatpush.msra.mxu0 %v3232
    %3293 = vmatpush.msra.mxu0 %v3231
    %3294 = vmatpush.msra.mxu0 %v3230
    %3295 = vmatpush.msra.mxu0 %v3229
    %3296 = vmatmul.f32.gmra.mxu0 %v3272
    %v3297 = vpop.f32.mrf.mxu0
    %v3298 = vadd.f32 0.0, %v3297
    %3299 = vmatmul.f32.gmra.mxu0 %v3274
    %v3300 = vpop.f32.mrf.mxu0
    %v3301 = vadd.f32 0.0, %v3300
    %3302 = vmatmul.f32.gmra.mxu0 %v3276
    %v3303 = vpop.f32.mrf.mxu0
    %v3304 = vadd.f32 0.0, %v3303
    %3305 = vmatmul.f32.gmra.mxu0 %v3278
    %v3306 = vpop.f32.mrf.mxu0
    %v3307 = vadd.f32 0.0, %v3306
    %3308 = vdwg.mxu0
    %v3313 = vrot.slane %v3298, 2
    %v3314 = vrot.slane %v3298, 4
    %v3315 = vrot.slane %v3298, 6
    %v3316 = vrot.slane %v3301, 2
    %v3317 = vrot.slane %v3301, 4
    %v3318 = vrot.slane %v3301, 6
    %v3319 = vrot.slane %v3304, 2
    %v3320 = vrot.slane %v3304, 4
    %v3321 = vrot.slane %v3304, 6
    %v3322 = vrot.slane %v3307, 2
    %v3333 = vmul.f32 %v3298, %v157
    %v3334 = vmul.f32 %v3313, %v677
    %v3335 = vmul.f32 %v3314, %v678
    %v3336 = vmul.f32 %v3315, %v679
    %v3337 = vmul.f32 %v3301, %v157
    %v3338 = vmul.f32 %v3316, %v677
    %v3339 = vmul.f32 %v3317, %v678
    %v3340 = vmul.f32 %v3318, %v157
    %v3341 = vmul.f32 %v3304, %v677
    %v3342 = vmul.f32 %v3319, %v678
    %v3343 = vmul.f32 %v3320, %v679
    %v3344 = vmul.f32 %v3321, %v157
    %v3345 = vmul.f32 %v3307, %v677
    %v3346 = vmul.f32 %v3322, %v678
    %3354 = vst [vmem:[#allocation1] ss:$4 sm:$0xff] %v3333
    %s3355 = scalar_lea.vmem [#allocation1], 1
    %3356 = vst [vmem:[%s3355] ss:$4 sm:$0xff] %v3334
    %s3357 = scalar_lea.vmem [#allocation1], 2
    %3358 = vst [vmem:[%s3357] ss:$4 sm:$0xff] %v3335
    %s3359 = scalar_lea.vmem [#allocation1], 3
    %3360 = vst [vmem:[%s3359] ss:$4 sm:$0xff] %v3336
    %s3361 = scalar_lea.vmem [#allocation1], 32
    %3362 = vst [vmem:[%s3361] ss:$4 sm:$0xff] %v3337
    %s3363 = scalar_lea.vmem [#allocation1], 33
    %3364 = vst [vmem:[%s3363] ss:$4 sm:$0xff] %v3338
    %s3365 = scalar_lea.vmem [#allocation1], 34
    %3366 = vst [vmem:[%s3365] ss:$4 sm:$0xff] %v3339
    %v3367 = vld.sshfl [vmem:[#allocation1] sm:$0xff pattern:$0x73625140]
    %v3368 = vld.sshfl [vmem:[#allocation1 + $0x20] sm:$0xff pattern:$0x73625140]
    %3369 = vst [vmem:[#allocation1] ss:$4 sm:$0xff] %v3298
    %s3370 = scalar_lea.vmem [#allocation1], 1
    %3371 = vst [vmem:[%s3370] ss:$4 sm:$0xff] %v3313
    %s3372 = scalar_lea.vmem [#allocation1], 2
    %3373 = vst [vmem:[%s3372] ss:$4 sm:$0xff] %v3314
    %s3374 = scalar_lea.vmem [#allocation1], 3
    %3375 = vst [vmem:[%s3374] ss:$4 sm:$0xff] %v3315
    %s3376 = scalar_lea.vmem [#allocation1], 32
    %3377 = vst [vmem:[%s3376] ss:$4 sm:$0xff] %v3301
    %s3378 = scalar_lea.vmem [#allocation1], 33
    %3379 = vst [vmem:[%s3378] ss:$4 sm:$0xff] %v3316
    %s3380 = scalar_lea.vmem [#allocation1], 34
    %3381 = vst [vmem:[%s3380] ss:$4 sm:$0xff] %v3317
    %v3382 = vld.sshfl [vmem:[#allocation1] sm:$0xff pattern:$0x73625140]
    %v3383 = vld.sshfl [vmem:[#allocation1 + $0x20] sm:$0xff pattern:$0x73625140]
    %3384 = vrot.lane.b32.xlu0 %v3382, 96
    %v3385 = vpop.permute.xlu0 %3384
    %3386 = vrot.lane.b32.xlu0 %v3383, 96
    %v3387 = vpop.permute.xlu0 %3386
    %v3388 = vsel %vm203, %v3367, 0
    %v3390 = vsel %vm203, %v3368, 0
    %v3392 = vsel %vm203, %v3385, 0
    %v3394 = vsel %vm203, %v3387, 0
    %3396 = vmatpush.xpose.msra.mxu0 0.0
    %3397 = vmatpush.xpose.msra.mxu0 0.0
    %3398 = vmatpush.xpose.msra.mxu0 0.0
    %3399 = vmatpush.xpose.msra.mxu0 0.0
    %3400 = vmatpush.xpose.msra.mxu0 0.0
    %3401 = vmatpush.xpose.msra.mxu0 0.0
    %3402 = vmatpush.xpose.msra.mxu0 0.0
    %3403 = vmatpush.xpose.msra.mxu0 0.0
    %3404 = vmatpush.xpose.msra.mxu0 0.0
    %3405 = vmatpush.xpose.msra.mxu0 0.0
    %3406 = vmatpush.xpose.msra.mxu0 0.0
    %3407 = vmatpush.xpose.msra.mxu0 0.0
    %3408 = vmatpush.xpose.msra.mxu0 0.0
    %3409 = vmatpush.xpose.msra.mxu0 0.0
    %3410 = vmatpush.xpose.msra.mxu0 %v3394
    %3411 = vmatpush.xpose.msra.mxu0 %v3392
    %3412 = vmatmul.f32.gmra.mxu0 %v3388
    %v3413 = vpop.f32.mrf.mxu0
    %v3414 = vadd.f32 0.0, %v3413
    %3415 = vmatmul.f32.gmra.mxu0 %v3390
    %v3416 = vpop.f32.mrf.mxu0
    %v3417 = vadd.f32 0.0, %v3416
    %3418 = vdwg.mxu0
    %3426 = vst [vmem:[#allocation1] ss:$4 sm:$0xff] %v3340
    %s3427 = scalar_lea.vmem [#allocation1], 1
    %3428 = vst [vmem:[%s3427] ss:$4 sm:$0xff] %v3341
    %s3429 = scalar_lea.vmem [#allocation1], 2
    %3430 = vst [vmem:[%s3429] ss:$4 sm:$0xff] %v3342
    %s3431 = scalar_lea.vmem [#allocation1], 3
    %3432 = vst [vmem:[%s3431] ss:$4 sm:$0xff] %v3343
    %s3433 = scalar_lea.vmem [#allocation1], 32
    %3434 = vst [vmem:[%s3433] ss:$4 sm:$0xff] %v3344
    %s3435 = scalar_lea.vmem [#allocation1], 33
    %3436 = vst [vmem:[%s3435] ss:$4 sm:$0xff] %v3345
    %s3437 = scalar_lea.vmem [#allocation1], 34
    %3438 = vst [vmem:[%s3437] ss:$4 sm:$0xff] %v3346
    %v3439 = vld.sshfl [vmem:[#allocation1] sm:$0xff pattern:$0x73625140]
    %v3440 = vld.sshfl [vmem:[#allocation1 + $0x20] sm:$0xff pattern:$0x73625140]
    %3441 = vst [vmem:[#allocation1] ss:$4 sm:$0xff] %v3318
    %s3442 = scalar_lea.vmem [#allocation1], 1
    %3443 = vst [vmem:[%s3442] ss:$4 sm:$0xff] %v3304
    %s3444 = scalar_lea.vmem [#allocation1], 2
    %3445 = vst [vmem:[%s3444] ss:$4 sm:$0xff] %v3319
    %s3446 = scalar_lea.vmem [#allocation1], 3
    %3447 = vst [vmem:[%s3446] ss:$4 sm:$0xff] %v3320
    %s3448 = scalar_lea.vmem [#allocation1], 32
    %3449 = vst [vmem:[%s3448] ss:$4 sm:$0xff] %v3321
    %s3450 = scalar_lea.vmem [#allocation1], 33
    %3451 = vst [vmem:[%s3450] ss:$4 sm:$0xff] %v3307
    %s3452 = scalar_lea.vmem [#allocation1], 34
    %3453 = vst [vmem:[%s3452] ss:$4 sm:$0xff] %v3322
    %v3454 = vld.sshfl [vmem:[#allocation1] sm:$0xff pattern:$0x73625140]
    %v3455 = vld.sshfl [vmem:[#allocation1 + $0x20] sm:$0xff pattern:$0x73625140]
    %3456 = vrot.lane.b32.xlu0 %v3454, 96
    %v3457 = vpop.permute.xlu0 %3456
    %3458 = vrot.lane.b32.xlu0 %v3455, 96
    %v3459 = vpop.permute.xlu0 %3458
    %v3460 = vsel %vm203, %v3439, 0
    %v3462 = vsel %vm203, %v3440, 0
    %v3464 = vsel %vm203, %v3457, 0
    %v3466 = vsel %vm203, %v3459, 0
    %3468 = vmatpush.xpose.msra.mxu0 0.0
    %3469 = vmatpush.xpose.msra.mxu0 0.0
    %3470 = vmatpush.xpose.msra.mxu0 0.0
    %3471 = vmatpush.xpose.msra.mxu0 0.0
    %3472 = vmatpush.xpose.msra.mxu0 0.0
    %3473 = vmatpush.xpose.msra.mxu0 0.0
    %3474 = vmatpush.xpose.msra.mxu0 0.0
    %3475 = vmatpush.xpose.msra.mxu0 0.0
    %3476 = vmatpush.xpose.msra.mxu0 0.0
    %3477 = vmatpush.xpose.msra.mxu0 0.0
    %3478 = vmatpush.xpose.msra.mxu0 0.0
    %3479 = vmatpush.xpose.msra.mxu0 0.0
    %3480 = vmatpush.xpose.msra.mxu0 0.0
    %3481 = vmatpush.xpose.msra.mxu0 0.0
    %3482 = vmatpush.xpose.msra.mxu0 %v3466
    %3483 = vmatpush.xpose.msra.mxu0 %v3464
    %3484 = vmatmul.f32.gmra.mxu0 %v3460
    %v3485 = vpop.f32.mrf.mxu0
    %v3486 = vadd.f32 0.0, %v3485
    %3487 = vmatmul.f32.gmra.mxu0 %v3462
    %v3488 = vpop.f32.mrf.mxu0
    %v3489 = vadd.f32 0.0, %v3488
    %3490 = vdwg.mxu0
    %v3491 = vsel %vm841, %v3414, -inf
    %3492 = vmax.xlane.f32.xlu0 %v3491
    %v3493 = vpop.xlane.xlu0 %3492
    %v3494 = vsel %vm845, %v3417, -inf
    %3495 = vmax.xlane.f32.xlu0 %v3494
    %v3496 = vpop.xlane.xlu0 %3495
    %v3497 = vsel %vm841, %v3486, -inf
    %3498 = vmax.xlane.f32.xlu0 %v3497
    %v3499 = vpop.xlane.xlu0 %3498
    %v3500 = vsel %vm845, %v3489, -inf
    %3501 = vmax.xlane.f32.xlu0 %v3500
    %v3502 = vpop.xlane.xlu0 %3501
    %v3503 = vsub.f32 %v3414, %v3493
    %v3504 = vsub.f32 %v3417, %v3496
    %v3505 = vsub.f32 %v3486, %v3499
    %v3506 = vsub.f32 %v3489, %v3502
    %v3507 = vmul.f32 %v3503, 1.442695
    %v3508 = vpow.pop %v3507
    %v3509 = vmul.f32 %v3504, 1.442695
    %v3510 = vpow.pop %v3509
    %v3511 = vmul.f32 %v3505, 1.442695
    %v3512 = vpow.pop %v3511
    %v3513 = vmul.f32 %v3506, 1.442695
    %v3514 = vpow.pop %v3513
    %v3515 = vsel %vm841, %v3508, 0.0
    %3516 = vadd.xlane.f32.xlu0 %v3515
    %v3517 = vpop.xlane.xlu0 %3516
    %v3518 = vsel %vm845, %v3510, 0.0
    %3519 = vadd.xlane.f32.xlu0 %v3518
    %v3520 = vpop.xlane.xlu0 %3519
    %v3521 = vsel %vm841, %v3512, 0.0
    %3522 = vadd.xlane.f32.xlu0 %v3521
    %v3523 = vpop.xlane.xlu0 %3522
    %v3524 = vsel %vm845, %v3514, 0.0
    %3525 = vadd.xlane.f32.xlu0 %v3524
    %v3526 = vpop.xlane.xlu0 %3525
    %v3527 = vrcp.pop %v3517
    %v3528 = vrcp.pop %v3520
    %v3529 = vrcp.pop %v3523
    %v3530 = vrcp.pop %v3526
    %v3531 = vmul.f32 %v3508, %v3527
    %v3532 = vmul.f32 %v3510, %v3528
    %v3533 = vmul.f32 %v3512, %v3529
    %v3534 = vmul.f32 %v3514, %v3530
    %3535 = vst [vmem:[#allocation1] ss:$4 sm:$0xff] %v3298
    %s3536 = scalar_lea.vmem [#allocation1], 1
    %3537 = vst [vmem:[%s3536] ss:$4 sm:$0xff] %v3313
    %s3538 = scalar_lea.vmem [#allocation1], 2
    %3539 = vst [vmem:[%s3538] ss:$4 sm:$0xff] %v3314
    %s3540 = scalar_lea.vmem [#allocation1], 3
    %3541 = vst [vmem:[%s3540] ss:$4 sm:$0xff] %v3315
    %s3542 = scalar_lea.vmem [#allocation1], 32
    %3543 = vst [vmem:[%s3542] ss:$4 sm:$0xff] %v3301
    %s3544 = scalar_lea.vmem [#allocation1], 33
    %3545 = vst [vmem:[%s3544] ss:$4 sm:$0xff] %v3316
    %s3546 = scalar_lea.vmem [#allocation1], 34
    %3547 = vst [vmem:[%s3546] ss:$4 sm:$0xff] %v3317
    %v3548 = vld.sshfl [vmem:[#allocation1] sm:$0xff pattern:$0x73625140]
    %v3549 = vld.sshfl [vmem:[#allocation1 + $0x20] sm:$0xff pattern:$0x73625140]
    %3550 = vrot.lane.b32.xlu0 %v3548, 64
    %v3551 = vpop.permute.xlu0 %3550
    %3552 = vrot.lane.b32.xlu0 %v3549, 64
    %v3553 = vpop.permute.xlu0 %3552
    %v3556 = vsel %vm841, %v3531, 0
    %v3559 = vsel %vm841, %v3532, 0
    %v3561 = vsel %vm913, %v3553, 0
    %3563 = vmatpush.msra.mxu0 0.0
    %3564 = vmatpush.msra.mxu0 0.0
    %3565 = vmatpush.msra.mxu0 0.0
    %3566 = vmatpush.msra.mxu0 0.0
    %3567 = vmatpush.msra.mxu0 0.0
    %3568 = vmatpush.msra.mxu0 0.0
    %3569 = vmatpush.msra.mxu0 0.0
    %3570 = vmatpush.msra.mxu0 0.0
    %3571 = vmatpush.msra.mxu0 0.0
    %3572 = vmatpush.msra.mxu0 0.0
    %3573 = vmatpush.msra.mxu0 0.0
    %3574 = vmatpush.msra.mxu0 0.0
    %3575 = vmatpush.msra.mxu0 0.0
    %3576 = vmatpush.msra.mxu0 0.0
    %3577 = vmatpush.msra.mxu0 %v3561
    %3578 = vmatpush.msra.mxu0 %v3551
    %3579 = vmatmul.f32.gmra.mxu0 %v3556
    %v3580 = vpop.f32.mrf.mxu0
    %v3581 = vadd.f32 0.0, %v3580
    %3582 = vmatmul.f32.gmra.mxu0 %v3559
    %v3583 = vpop.f32.mrf.mxu0
    %v3584 = vadd.f32 0.0, %v3583
    %3585 = vdwg.mxu0
    %3586 = vst [vmem:[#allocation1] ss:$4 sm:$0xff] %v3318
    %s3587 = scalar_lea.vmem [#allocation1], 1
    %3588 = vst [vmem:[%s3587] ss:$4 sm:$0xff] %v3304
    %s3589 = scalar_lea.vmem [#allocation1], 2
    %3590 = vst [vmem:[%s3589] ss:$4 sm:$0xff] %v3319
    %s3591 = scalar_lea.vmem [#allocation1], 3
    %3592 = vst [vmem:[%s3591] ss:$4 sm:$0xff] %v3320
    %s3593 = scalar_lea.vmem [#allocation1], 32
    %3594 = vst [vmem:[%s3593] ss:$4 sm:$0xff] %v3321
    %s3595 = scalar_lea.vmem [#allocation1], 33
    %3596 = vst [vmem:[%s3595] ss:$4 sm:$0xff] %v3307
    %s3597 = scalar_lea.vmem [#allocation1], 34
    %3598 = vst [vmem:[%s3597] ss:$4 sm:$0xff] %v3322
    %v3599 = vld.sshfl [vmem:[#allocation1] sm:$0xff pattern:$0x73625140]
    %v3600 = vld.sshfl [vmem:[#allocation1 + $0x20] sm:$0xff pattern:$0x73625140]
    %3601 = vrot.lane.b32.xlu0 %v3599, 64
    %v3602 = vpop.permute.xlu0 %3601
    %3603 = vrot.lane.b32.xlu0 %v3600, 64
    %v3604 = vpop.permute.xlu0 %3603
    %v3607 = vsel %vm841, %v3533, 0
    %v3610 = vsel %vm841, %v3534, 0
    %v3612 = vsel %vm913, %v3604, 0
    %3614 = vmatpush.msra.mxu0 0.0
    %3615 = vmatpush.msra.mxu0 0.0
    %3616 = vmatpush.msra.mxu0 0.0
    %3617 = vmatpush.msra.mxu0 0.0
    %3618 = vmatpush.msra.mxu0 0.0
    %3619 = vmatpush.msra.mxu0 0.0
    %3620 = vmatpush.msra.mxu0 0.0
    %3621 = vmatpush.msra.mxu0 0.0
    %3622 = vmatpush.msra.mxu0 0.0
    %3623 = vmatpush.msra.mxu0 0.0
    %3624 = vmatpush.msra.mxu0 0.0
    %3625 = vmatpush.msra.mxu0 0.0
    %3626 = vmatpush.msra.mxu0 0.0
    %3627 = vmatpush.msra.mxu0 0.0
    %3628 = vmatpush.msra.mxu0 %v3612
    %3629 = vmatpush.msra.mxu0 %v3602
    %3630 = vmatmul.f32.gmra.mxu0 %v3607
    %v3631 = vpop.f32.mrf.mxu0
    %v3632 = vadd.f32 0.0, %v3631
    %3633 = vmatmul.f32.gmra.mxu0 %v3610
    %v3634 = vpop.f32.mrf.mxu0
    %v3635 = vadd.f32 0.0, %v3634
    %3636 = vdwg.mxu0
    %v3637 = vmul.f32 %v3581, %v157
    %v3638 = vmul.f32 %v3584, %v157
    %v3639 = vmul.f32 %v3632, %v157
    %v3640 = vmul.f32 %v3635, %v157
    %v3641 = vadd.f32 %v3637, 0.0
    %v3642 = vadd.f32 %v3638, 0.0
    %v3643 = vadd.f32 %v3639, 0.0
    %v3644 = vadd.f32 %v3640, 0.0
    %v3645 = vmul.f32 %v3298, %v162
    %v3646 = vmul.f32 %v3313, %v999
    %v3647 = vmul.f32 %v3314, %v1000
    %v3648 = vmul.f32 %v3315, %v1001
    %v3649 = vmul.f32 %v3301, %v162
    %v3650 = vmul.f32 %v3316, %v999
    %v3651 = vmul.f32 %v3317, %v1000
    %v3652 = vmul.f32 %v3318, %v162
    %v3653 = vmul.f32 %v3304, %v999
    %v3654 = vmul.f32 %v3319, %v1000
    %v3655 = vmul.f32 %v3320, %v1001
    %v3656 = vmul.f32 %v3321, %v162
    %v3657 = vmul.f32 %v3307, %v999
    %v3658 = vmul.f32 %v3322, %v1000
    %3666 = vst [vmem:[#allocation1] ss:$4 sm:$0xff] %v3645
    %s3667 = scalar_lea.vmem [#allocation1], 1
    %3668 = vst [vmem:[%s3667] ss:$4 sm:$0xff] %v3646
    %s3669 = scalar_lea.vmem [#allocation1], 2
    %3670 = vst [vmem:[%s3669] ss:$4 sm:$0xff] %v3647
    %s3671 = scalar_lea.vmem [#allocation1], 3
    %3672 = vst [vmem:[%s3671] ss:$4 sm:$0xff] %v3648
    %s3673 = scalar_lea.vmem [#allocation1], 32
    %3674 = vst [vmem:[%s3673] ss:$4 sm:$0xff] %v3649
    %s3675 = scalar_lea.vmem [#allocation1], 33
    %3676 = vst [vmem:[%s3675] ss:$4 sm:$0xff] %v3650
    %s3677 = scalar_lea.vmem [#allocation1], 34
    %3678 = vst [vmem:[%s3677] ss:$4 sm:$0xff] %v3651
    %v3679 = vld.sshfl [vmem:[#allocation1] sm:$0xff pattern:$0x73625140]
    %v3680 = vld.sshfl [vmem:[#allocation1 + $0x20] sm:$0xff pattern:$0x73625140]
    %3681 = vst [vmem:[#allocation1] ss:$4 sm:$0xff] %v3298
    %s3682 = scalar_lea.vmem [#allocation1], 1
    %3683 = vst [vmem:[%s3682] ss:$4 sm:$0xff] %v3313
    %s3684 = scalar_lea.vmem [#allocation1], 2
    %3685 = vst [vmem:[%s3684] ss:$4 sm:$0xff] %v3314
    %s3686 = scalar_lea.vmem [#allocation1], 3
    %3687 = vst [vmem:[%s3686] ss:$4 sm:$0xff] %v3315
    %s3688 = scalar_lea.vmem [#allocation1], 32
    %3689 = vst [vmem:[%s3688] ss:$4 sm:$0xff] %v3301
    %s3690 = scalar_lea.vmem [#allocation1], 33
    %3691 = vst [vmem:[%s3690] ss:$4 sm:$0xff] %v3316
    %s3692 = scalar_lea.vmem [#allocation1], 34
    %3693 = vst [vmem:[%s3692] ss:$4 sm:$0xff] %v3317
    %v3694 = vld.sshfl [vmem:[#allocation1] sm:$0xff pattern:$0x73625140]
    %v3695 = vld.sshfl [vmem:[#allocation1 + $0x20] sm:$0xff pattern:$0x73625140]
    %3696 = vrot.lane.b32.xlu0 %v3694, 96
    %v3697 = vpop.permute.xlu0 %3696
    %3698 = vrot.lane.b32.xlu0 %v3695, 96
    %v3699 = vpop.permute.xlu0 %3698
    %v3700 = vsel %vm203, %v3679, 0
    %v3702 = vsel %vm203, %v3680, 0
    %v3704 = vsel %vm203, %v3697, 0
    %v3706 = vsel %vm203, %v3699, 0
    %3708 = vmatpush.xpose.msra.mxu0 0.0
    %3709 = vmatpush.xpose.msra.mxu0 0.0
    %3710 = vmatpush.xpose.msra.mxu0 0.0
    %3711 = vmatpush.xpose.msra.mxu0 0.0
    %3712 = vmatpush.xpose.msra.mxu0 0.0
    %3713 = vmatpush.xpose.msra.mxu0 0.0
    %3714 = vmatpush.xpose.msra.mxu0 0.0
    %3715 = vmatpush.xpose.msra.mxu0 0.0
    %3716 = vmatpush.xpose.msra.mxu0 0.0
    %3717 = vmatpush.xpose.msra.mxu0 0.0
    %3718 = vmatpush.xpose.msra.mxu0 0.0
    %3719 = vmatpush.xpose.msra.mxu0 0.0
    %3720 = vmatpush.xpose.msra.mxu0 0.0
    %3721 = vmatpush.xpose.msra.mxu0 0.0
    %3722 = vmatpush.xpose.msra.mxu0 %v3706
    %3723 = vmatpush.xpose.msra.mxu0 %v3704
    %3724 = vmatmul.f32.gmra.mxu0 %v3700
    %v3725 = vpop.f32.mrf.mxu0
    %v3726 = vadd.f32 0.0, %v3725
    %3727 = vmatmul.f32.gmra.mxu0 %v3702
    %v3728 = vpop.f32.mrf.mxu0
    %v3729 = vadd.f32 0.0, %v3728
    %3730 = vdwg.mxu0
    %3738 = vst [vmem:[#allocation1] ss:$4 sm:$0xff] %v3652
    %s3739 = scalar_lea.vmem [#allocation1], 1
    %3740 = vst [vmem:[%s3739] ss:$4 sm:$0xff] %v3653
    %s3741 = scalar_lea.vmem [#allocation1], 2
    %3742 = vst [vmem:[%s3741] ss:$4 sm:$0xff] %v3654
    %s3743 = scalar_lea.vmem [#allocation1], 3
    %3744 = vst [vmem:[%s3743] ss:$4 sm:$0xff] %v3655
    %s3745 = scalar_lea.vmem [#allocation1], 32
    %3746 = vst [vmem:[%s3745] ss:$4 sm:$0xff] %v3656
    %s3747 = scalar_lea.vmem [#allocation1], 33
    %3748 = vst [vmem:[%s3747] ss:$4 sm:$0xff] %v3657
    %s3749 = scalar_lea.vmem [#allocation1], 34
    %3750 = vst [vmem:[%s3749] ss:$4 sm:$0xff] %v3658
    %v3751 = vld.sshfl [vmem:[#allocation1] sm:$0xff pattern:$0x73625140]
    %v3752 = vld.sshfl [vmem:[#allocation1 + $0x20] sm:$0xff pattern:$0x73625140]
    %3753 = vst [vmem:[#allocation1] ss:$4 sm:$0xff] %v3318
    %s3754 = scalar_lea.vmem [#allocation1], 1
    %3755 = vst [vmem:[%s3754] ss:$4 sm:$0xff] %v3304
    %s3756 = scalar_lea.vmem [#allocation1], 2
    %3757 = vst [vmem:[%s3756] ss:$4 sm:$0xff] %v3319
    %s3758 = scalar_lea.vmem [#allocation1], 3
    %3759 = vst [vmem:[%s3758] ss:$4 sm:$0xff] %v3320
    %s3760 = scalar_lea.vmem [#allocation1], 32
    %3761 = vst [vmem:[%s3760] ss:$4 sm:$0xff] %v3321
    %s3762 = scalar_lea.vmem [#allocation1], 33
    %3763 = vst [vmem:[%s3762] ss:$4 sm:$0xff] %v3307
    %s3764 = scalar_lea.vmem [#allocation1], 34
    %3765 = vst [vmem:[%s3764] ss:$4 sm:$0xff] %v3322
    %v3766 = vld.sshfl [vmem:[#allocation1] sm:$0xff pattern:$0x73625140]
    %v3767 = vld.sshfl [vmem:[#allocation1 + $0x20] sm:$0xff pattern:$0x73625140]
    %3768 = vrot.lane.b32.xlu0 %v3766, 96
    %v3769 = vpop.permute.xlu0 %3768
    %3770 = vrot.lane.b32.xlu0 %v3767, 96
    %v3771 = vpop.permute.xlu0 %3770
    %v3772 = vsel %vm203, %v3751, 0
    %v3774 = vsel %vm203, %v3752, 0
    %v3776 = vsel %vm203, %v3769, 0
    %v3778 = vsel %vm203, %v3771, 0
    %3780 = vmatpush.xpose.msra.mxu0 0.0
    %3781 = vmatpush.xpose.msra.mxu0 0.0
    %3782 = vmatpush.xpose.msra.mxu0 0.0
    %3783 = vmatpush.xpose.msra.mxu0 0.0
    %3784 = vmatpush.xpose.msra.mxu0 0.0
    %3785 = vmatpush.xpose.msra.mxu0 0.0
    %3786 = vmatpush.xpose.msra.mxu0 0.0
    %3787 = vmatpush.xpose.msra.mxu0 0.0
    %3788 = vmatpush.xpose.msra.mxu0 0.0
    %3789 = vmatpush.xpose.msra.mxu0 0.0
    %3790 = vmatpush.xpose.msra.mxu0 0.0
    %3791 = vmatpush.xpose.msra.mxu0 0.0
    %3792 = vmatpush.xpose.msra.mxu0 0.0
    %3793 = vmatpush.xpose.msra.mxu0 0.0
    %3794 = vmatpush.xpose.msra.mxu0 %v3778
    %3795 = vmatpush.xpose.msra.mxu0 %v3776
    %3796 = vmatmul.f32.gmra.mxu0 %v3772
    %v3797 = vpop.f32.mrf.mxu0
    %v3798 = vadd.f32 0.0, %v3797
    %3799 = vmatmul.f32.gmra.mxu0 %v3774
    %v3800 = vpop.f32.mrf.mxu0
    %v3801 = vadd.f32 0.0, %v3800
    %3802 = vdwg.mxu0
    %v3803 = vsel %vm841, %v3726, -inf
    %3804 = vmax.xlane.f32.xlu0 %v3803
    %v3805 = vpop.xlane.xlu0 %3804
    %v3806 = vsel %vm845, %v3729, -inf
    %3807 = vmax.xlane.f32.xlu0 %v3806
    %v3808 = vpop.xlane.xlu0 %3807
    %v3809 = vsel %vm841, %v3798, -inf
    %3810 = vmax.xlane.f32.xlu0 %v3809
    %v3811 = vpop.xlane.xlu0 %3810
    %v3812 = vsel %vm845, %v3801, -inf
    %3813 = vmax.xlane.f32.xlu0 %v3812
    %v3814 = vpop.xlane.xlu0 %3813
    %v3815 = vsub.f32 %v3726, %v3805
    %v3816 = vsub.f32 %v3729, %v3808
    %v3817 = vsub.f32 %v3798, %v3811
    %v3818 = vsub.f32 %v3801, %v3814
    %v3819 = vmul.f32 %v3815, 1.442695
    %v3820 = vpow.pop %v3819
    %v3821 = vmul.f32 %v3816, 1.442695
    %v3822 = vpow.pop %v3821
    %v3823 = vmul.f32 %v3817, 1.442695
    %v3824 = vpow.pop %v3823
    %v3825 = vmul.f32 %v3818, 1.442695
    %v3826 = vpow.pop %v3825
    %v3827 = vsel %vm841, %v3820, 0.0
    %3828 = vadd.xlane.f32.xlu0 %v3827
    %v3829 = vpop.xlane.xlu0 %3828
    %v3830 = vsel %vm845, %v3822, 0.0
    %3831 = vadd.xlane.f32.xlu0 %v3830
    %v3832 = vpop.xlane.xlu0 %3831
    %v3833 = vsel %vm841, %v3824, 0.0
    %3834 = vadd.xlane.f32.xlu0 %v3833
    %v3835 = vpop.xlane.xlu0 %3834
    %v3836 = vsel %vm845, %v3826, 0.0
    %3837 = vadd.xlane.f32.xlu0 %v3836
    %v3838 = vpop.xlane.xlu0 %3837
    %v3839 = vrcp.pop %v3829
    %v3840 = vrcp.pop %v3832
    %v3841 = vrcp.pop %v3835
    %v3842 = vrcp.pop %v3838
    %v3843 = vmul.f32 %v3820, %v3839
    %v3844 = vmul.f32 %v3822, %v3840
    %v3845 = vmul.f32 %v3824, %v3841
    %v3846 = vmul.f32 %v3826, %v3842
    %3847 = vst [vmem:[#allocation1] ss:$4 sm:$0xff] %v3298
    %s3848 = scalar_lea.vmem [#allocation1], 1
    %3849 = vst [vmem:[%s3848] ss:$4 sm:$0xff] %v3313
    %s3850 = scalar_lea.vmem [#allocation1], 2
    %3851 = vst [vmem:[%s3850] ss:$4 sm:$0xff] %v3314
    %s3852 = scalar_lea.vmem [#allocation1], 3
    %3853 = vst [vmem:[%s3852] ss:$4 sm:$0xff] %v3315
    %s3854 = scalar_lea.vmem [#allocation1], 32
    %3855 = vst [vmem:[%s3854] ss:$4 sm:$0xff] %v3301
    %s3856 = scalar_lea.vmem [#allocation1], 33
    %3857 = vst [vmem:[%s3856] ss:$4 sm:$0xff] %v3316
    %s3858 = scalar_lea.vmem [#allocation1], 34
    %3859 = vst [vmem:[%s3858] ss:$4 sm:$0xff] %v3317
    %v3860 = vld.sshfl [vmem:[#allocation1] sm:$0xff pattern:$0x73625140]
    %v3861 = vld.sshfl [vmem:[#allocation1 + $0x20] sm:$0xff pattern:$0x73625140]
    %3862 = vrot.lane.b32.xlu0 %v3860, 64
    %v3863 = vpop.permute.xlu0 %3862
    %3864 = vrot.lane.b32.xlu0 %v3861, 64
    %v3865 = vpop.permute.xlu0 %3864
    %v3868 = vsel %vm841, %v3843, 0
    %v3871 = vsel %vm841, %v3844, 0
    %v3873 = vsel %vm913, %v3865, 0
    %3875 = vmatpush.msra.mxu0 0.0
    %3876 = vmatpush.msra.mxu0 0.0
    %3877 = vmatpush.msra.mxu0 0.0
    %3878 = vmatpush.msra.mxu0 0.0
    %3879 = vmatpush.msra.mxu0 0.0
    %3880 = vmatpush.msra.mxu0 0.0
    %3881 = vmatpush.msra.mxu0 0.0
    %3882 = vmatpush.msra.mxu0 0.0
    %3883 = vmatpush.msra.mxu0 0.0
    %3884 = vmatpush.msra.mxu0 0.0
    %3885 = vmatpush.msra.mxu0 0.0
    %3886 = vmatpush.msra.mxu0 0.0
    %3887 = vmatpush.msra.mxu0 0.0
    %3888 = vmatpush.msra.mxu0 0.0
    %3889 = vmatpush.msra.mxu0 %v3873
    %3890 = vmatpush.msra.mxu0 %v3863
    %3891 = vmatmul.f32.gmra.mxu0 %v3868
    %v3892 = vpop.f32.mrf.mxu0
    %v3893 = vadd.f32 0.0, %v3892
    %3894 = vmatmul.f32.gmra.mxu0 %v3871
    %v3895 = vpop.f32.mrf.mxu0
    %v3896 = vadd.f32 0.0, %v3895
    %3897 = vdwg.mxu0
    %3898 = vst [vmem:[#allocation1] ss:$4 sm:$0xff] %v3318
    %s3899 = scalar_lea.vmem [#allocation1], 1
    %3900 = vst [vmem:[%s3899] ss:$4 sm:$0xff] %v3304
    %s3901 = scalar_lea.vmem [#allocation1], 2
    %3902 = vst [vmem:[%s3901] ss:$4 sm:$0xff] %v3319
    %s3903 = scalar_lea.vmem [#allocation1], 3
    %3904 = vst [vmem:[%s3903] ss:$4 sm:$0xff] %v3320
    %s3905 = scalar_lea.vmem [#allocation1], 32
    %3906 = vst [vmem:[%s3905] ss:$4 sm:$0xff] %v3321
    %s3907 = scalar_lea.vmem [#allocation1], 33
    %3908 = vst [vmem:[%s3907] ss:$4 sm:$0xff] %v3307
    %s3909 = scalar_lea.vmem [#allocation1], 34
    %3910 = vst [vmem:[%s3909] ss:$4 sm:$0xff] %v3322
    %v3911 = vld.sshfl [vmem:[#allocation1] sm:$0xff pattern:$0x73625140]
    %v3912 = vld.sshfl [vmem:[#allocation1 + $0x20] sm:$0xff pattern:$0x73625140]
    %3913 = vrot.lane.b32.xlu0 %v3911, 64
    %v3914 = vpop.permute.xlu0 %3913
    %3915 = vrot.lane.b32.xlu0 %v3912, 64
    %v3916 = vpop.permute.xlu0 %3915
    %v3919 = vsel %vm841, %v3845, 0
    %v3922 = vsel %vm841, %v3846, 0
    %v3924 = vsel %vm913, %v3916, 0
    %3926 = vmatpush.msra.mxu0 0.0
    %3927 = vmatpush.msra.mxu0 0.0
    %3928 = vmatpush.msra.mxu0 0.0
    %3929 = vmatpush.msra.mxu0 0.0
    %3930 = vmatpush.msra.mxu0 0.0
    %3931 = vmatpush.msra.mxu0 0.0
    %3932 = vmatpush.msra.mxu0 0.0
    %3933 = vmatpush.msra.mxu0 0.0
    %3934 = vmatpush.msra.mxu0 0.0
    %3935 = vmatpush.msra.mxu0 0.0
    %3936 = vmatpush.msra.mxu0 0.0
    %3937 = vmatpush.msra.mxu0 0.0
    %3938 = vmatpush.msra.mxu0 0.0
    %3939 = vmatpush.msra.mxu0 0.0
    %3940 = vmatpush.msra.mxu0 %v3924
    %3941 = vmatpush.msra.mxu0 %v3914
    %3942 = vmatmul.f32.gmra.mxu0 %v3919
    %v3943 = vpop.f32.mrf.mxu0
    %v3944 = vadd.f32 0.0, %v3943
    %3945 = vmatmul.f32.gmra.mxu0 %v3922
    %v3946 = vpop.f32.mrf.mxu0
    %v3947 = vadd.f32 0.0, %v3946
    %3948 = vdwg.mxu0
    %v3949 = vmul.f32 %v3893, %v162
    %v3950 = vmul.f32 %v3896, %v162
    %v3951 = vmul.f32 %v3944, %v162
    %v3952 = vmul.f32 %v3947, %v162
    %v3953 = vadd.f32 %v3641, %v3949
    %v3954 = vadd.f32 %v3642, %v3950
    %v3955 = vadd.f32 %v3643, %v3951
    %v3956 = vadd.f32 %v3644, %v3952
    %v3957 = vmul.f32 %v3298, %v167
    %v3958 = vmul.f32 %v3313, %v1318
    %v3959 = vmul.f32 %v3314, %v1319
    %v3960 = vmul.f32 %v3315, %v1320
    %v3961 = vmul.f32 %v3301, %v167
    %v3962 = vmul.f32 %v3316, %v1318
    %v3963 = vmul.f32 %v3317, %v1319
    %v3964 = vmul.f32 %v3318, %v167
    %v3965 = vmul.f32 %v3304, %v1318
    %v3966 = vmul.f32 %v3319, %v1319
    %v3967 = vmul.f32 %v3320, %v1320
    %v3968 = vmul.f32 %v3321, %v167
    %v3969 = vmul.f32 %v3307, %v1318
    %v3970 = vmul.f32 %v3322, %v1319
    %3978 = vst [vmem:[#allocation1] ss:$4 sm:$0xff] %v3957
    %s3979 = scalar_lea.vmem [#allocation1], 1
    %3980 = vst [vmem:[%s3979] ss:$4 sm:$0xff] %v3958
    %s3981 = scalar_lea.vmem [#allocation1], 2
    %3982 = vst [vmem:[%s3981] ss:$4 sm:$0xff] %v3959
    %s3983 = scalar_lea.vmem [#allocation1], 3
    %3984 = vst [vmem:[%s3983] ss:$4 sm:$0xff] %v3960
    %s3985 = scalar_lea.vmem [#allocation1], 32
    %3986 = vst [vmem:[%s3985] ss:$4 sm:$0xff] %v3961
    %s3987 = scalar_lea.vmem [#allocation1], 33
    %3988 = vst [vmem:[%s3987] ss:$4 sm:$0xff] %v3962
    %s3989 = scalar_lea.vmem [#allocation1], 34
    %3990 = vst [vmem:[%s3989] ss:$4 sm:$0xff] %v3963
    %v3991 = vld.sshfl [vmem:[#allocation1] sm:$0xff pattern:$0x73625140]
    %v3992 = vld.sshfl [vmem:[#allocation1 + $0x20] sm:$0xff pattern:$0x73625140]
    %3993 = vst [vmem:[#allocation1] ss:$4 sm:$0xff] %v3298
    %s3994 = scalar_lea.vmem [#allocation1], 1
    %3995 = vst [vmem:[%s3994] ss:$4 sm:$0xff] %v3313
    %s3996 = scalar_lea.vmem [#allocation1], 2
    %3997 = vst [vmem:[%s3996] ss:$4 sm:$0xff] %v3314
    %s3998 = scalar_lea.vmem [#allocation1], 3
    %3999 = vst [vmem:[%s3998] ss:$4 sm:$0xff] %v3315
    %s4000 = scalar_lea.vmem [#allocation1], 32
    %4001 = vst [vmem:[%s4000] ss:$4 sm:$0xff] %v3301
    %s4002 = scalar_lea.vmem [#allocation1], 33
    %4003 = vst [vmem:[%s4002] ss:$4 sm:$0xff] %v3316
    %s4004 = scalar_lea.vmem [#allocation1], 34
    %4005 = vst [vmem:[%s4004] ss:$4 sm:$0xff] %v3317
    %v4006 = vld.sshfl [vmem:[#allocation1] sm:$0xff pattern:$0x73625140]
    %v4007 = vld.sshfl [vmem:[#allocation1 + $0x20] sm:$0xff pattern:$0x73625140]
    %4008 = vrot.lane.b32.xlu0 %v4006, 96
    %v4009 = vpop.permute.xlu0 %4008
    %4010 = vrot.lane.b32.xlu0 %v4007, 96
    %v4011 = vpop.permute.xlu0 %4010
    %v4012 = vsel %vm203, %v3991, 0
    %v4014 = vsel %vm203, %v3992, 0
    %v4016 = vsel %vm203, %v4009, 0
    %v4018 = vsel %vm203, %v4011, 0
    %4020 = vmatpush.xpose.msra.mxu0 0.0
    %4021 = vmatpush.xpose.msra.mxu0 0.0
    %4022 = vmatpush.xpose.msra.mxu0 0.0
    %4023 = vmatpush.xpose.msra.mxu0 0.0
    %4024 = vmatpush.xpose.msra.mxu0 0.0
    %4025 = vmatpush.xpose.msra.mxu0 0.0
    %4026 = vmatpush.xpose.msra.mxu0 0.0
    %4027 = vmatpush.xpose.msra.mxu0 0.0
    %4028 = vmatpush.xpose.msra.mxu0 0.0
    %4029 = vmatpush.xpose.msra.mxu0 0.0
    %4030 = vmatpush.xpose.msra.mxu0 0.0
    %4031 = vmatpush.xpose.msra.mxu0 0.0
    %4032 = vmatpush.xpose.msra.mxu0 0.0
    %4033 = vmatpush.xpose.msra.mxu0 0.0
    %4034 = vmatpush.xpose.msra.mxu0 %v4018
    %4035 = vmatpush.xpose.msra.mxu0 %v4016
    %4036 = vmatmul.f32.gmra.mxu0 %v4012
    %v4037 = vpop.f32.mrf.mxu0
    %v4038 = vadd.f32 0.0, %v4037
    %4039 = vmatmul.f32.gmra.mxu0 %v4014
    %v4040 = vpop.f32.mrf.mxu0
    %v4041 = vadd.f32 0.0, %v4040
    %4042 = vdwg.mxu0
    %4050 = vst [vmem:[#allocation1] ss:$4 sm:$0xff] %v3964
    %s4051 = scalar_lea.vmem [#allocation1], 1
    %4052 = vst [vmem:[%s4051] ss:$4 sm:$0xff] %v3965
    %s4053 = scalar_lea.vmem [#allocation1], 2
    %4054 = vst [vmem:[%s4053] ss:$4 sm:$0xff] %v3966
    %s4055 = scalar_lea.vmem [#allocation1], 3
    %4056 = vst [vmem:[%s4055] ss:$4 sm:$0xff] %v3967
    %s4057 = scalar_lea.vmem [#allocation1], 32
    %4058 = vst [vmem:[%s4057] ss:$4 sm:$0xff] %v3968
    %s4059 = scalar_lea.vmem [#allocation1], 33
    %4060 = vst [vmem:[%s4059] ss:$4 sm:$0xff] %v3969
    %s4061 = scalar_lea.vmem [#allocation1], 34
    %4062 = vst [vmem:[%s4061] ss:$4 sm:$0xff] %v3970
    %v4063 = vld.sshfl [vmem:[#allocation1] sm:$0xff pattern:$0x73625140]
    %v4064 = vld.sshfl [vmem:[#allocation1 + $0x20] sm:$0xff pattern:$0x73625140]
    %4065 = vst [vmem:[#allocation1] ss:$4 sm:$0xff] %v3318
    %s4066 = scalar_lea.vmem [#allocation1], 1
    %4067 = vst [vmem:[%s4066] ss:$4 sm:$0xff] %v3304
    %s4068 = scalar_lea.vmem [#allocation1], 2
    %4069 = vst [vmem:[%s4068] ss:$4 sm:$0xff] %v3319
    %s4070 = scalar_lea.vmem [#allocation1], 3
    %4071 = vst [vmem:[%s4070] ss:$4 sm:$0xff] %v3320
    %s4072 = scalar_lea.vmem [#allocation1], 32
    %4073 = vst [vmem:[%s4072] ss:$4 sm:$0xff] %v3321
    %s4074 = scalar_lea.vmem [#allocation1], 33
    %4075 = vst [vmem:[%s4074] ss:$4 sm:$0xff] %v3307
    %s4076 = scalar_lea.vmem [#allocation1], 34
    %4077 = vst [vmem:[%s4076] ss:$4 sm:$0xff] %v3322
    %v4078 = vld.sshfl [vmem:[#allocation1] sm:$0xff pattern:$0x73625140]
    %v4079 = vld.sshfl [vmem:[#allocation1 + $0x20] sm:$0xff pattern:$0x73625140]
    %4080 = vrot.lane.b32.xlu0 %v4078, 96
    %v4081 = vpop.permute.xlu0 %4080
    %4082 = vrot.lane.b32.xlu0 %v4079, 96
    %v4083 = vpop.permute.xlu0 %4082
    %v4084 = vsel %vm203, %v4063, 0
    %v4086 = vsel %vm203, %v4064, 0
    %v4088 = vsel %vm203, %v4081, 0
    %v4090 = vsel %vm203, %v4083, 0
    %4092 = vmatpush.xpose.msra.mxu0 0.0
    %4093 = vmatpush.xpose.msra.mxu0 0.0
    %4094 = vmatpush.xpose.msra.mxu0 0.0
    %4095 = vmatpush.xpose.msra.mxu0 0.0
    %4096 = vmatpush.xpose.msra.mxu0 0.0
    %4097 = vmatpush.xpose.msra.mxu0 0.0
    %4098 = vmatpush.xpose.msra.mxu0 0.0
    %4099 = vmatpush.xpose.msra.mxu0 0.0
    %4100 = vmatpush.xpose.msra.mxu0 0.0
    %4101 = vmatpush.xpose.msra.mxu0 0.0
    %4102 = vmatpush.xpose.msra.mxu0 0.0
    %4103 = vmatpush.xpose.msra.mxu0 0.0
    %4104 = vmatpush.xpose.msra.mxu0 0.0
    %4105 = vmatpush.xpose.msra.mxu0 0.0
    %4106 = vmatpush.xpose.msra.mxu0 %v4090
    %4107 = vmatpush.xpose.msra.mxu0 %v4088
    %4108 = vmatmul.f32.gmra.mxu0 %v4084
    %v4109 = vpop.f32.mrf.mxu0
    %v4110 = vadd.f32 0.0, %v4109
    %4111 = vmatmul.f32.gmra.mxu0 %v4086
    %v4112 = vpop.f32.mrf.mxu0
    %v4113 = vadd.f32 0.0, %v4112
    %4114 = vdwg.mxu0
    %v4115 = vsel %vm841, %v4038, -inf
    %4116 = vmax.xlane.f32.xlu0 %v4115
    %v4117 = vpop.xlane.xlu0 %4116
    %v4118 = vsel %vm845, %v4041, -inf
    %4119 = vmax.xlane.f32.xlu0 %v4118
    %v4120 = vpop.xlane.xlu0 %4119
    %v4121 = vsel %vm841, %v4110, -inf
    %4122 = vmax.xlane.f32.xlu0 %v4121
    %v4123 = vpop.xlane.xlu0 %4122
    %v4124 = vsel %vm845, %v4113, -inf
    %4125 = vmax.xlane.f32.xlu0 %v4124
    %v4126 = vpop.xlane.xlu0 %4125
    %v4127 = vsub.f32 %v4038, %v4117
    %v4128 = vsub.f32 %v4041, %v4120
    %v4129 = vsub.f32 %v4110, %v4123
    %v4130 = vsub.f32 %v4113, %v4126
    %v4131 = vmul.f32 %v4127, 1.442695
    %v4132 = vpow.pop %v4131
    %v4133 = vmul.f32 %v4128, 1.442695
    %v4134 = vpow.pop %v4133
    %v4135 = vmul.f32 %v4129, 1.442695
    %v4136 = vpow.pop %v4135
    %v4137 = vmul.f32 %v4130, 1.442695
    %v4138 = vpow.pop %v4137
    %v4139 = vsel %vm841, %v4132, 0.0
    %4140 = vadd.xlane.f32.xlu0 %v4139
    %v4141 = vpop.xlane.xlu0 %4140
    %v4142 = vsel %vm845, %v4134, 0.0
    %4143 = vadd.xlane.f32.xlu0 %v4142
    %v4144 = vpop.xlane.xlu0 %4143
    %v4145 = vsel %vm841, %v4136, 0.0
    %4146 = vadd.xlane.f32.xlu0 %v4145
    %v4147 = vpop.xlane.xlu0 %4146
    %v4148 = vsel %vm845, %v4138, 0.0
    %4149 = vadd.xlane.f32.xlu0 %v4148
    %v4150 = vpop.xlane.xlu0 %4149
    %v4151 = vrcp.pop %v4141
    %v4152 = vrcp.pop %v4144
    %v4153 = vrcp.pop %v4147
    %v4154 = vrcp.pop %v4150
    %v4155 = vmul.f32 %v4132, %v4151
    %v4156 = vmul.f32 %v4134, %v4152
    %v4157 = vmul.f32 %v4136, %v4153
    %v4158 = vmul.f32 %v4138, %v4154
    %4159 = vst [vmem:[#allocation1] ss:$4 sm:$0xff] %v3298
    %s4160 = scalar_lea.vmem [#allocation1], 1
    %4161 = vst [vmem:[%s4160] ss:$4 sm:$0xff] %v3313
    %s4162 = scalar_lea.vmem [#allocation1], 2
    %4163 = vst [vmem:[%s4162] ss:$4 sm:$0xff] %v3314
    %s4164 = scalar_lea.vmem [#allocation1], 3
    %4165 = vst [vmem:[%s4164] ss:$4 sm:$0xff] %v3315
    %s4166 = scalar_lea.vmem [#allocation1], 32
    %4167 = vst [vmem:[%s4166] ss:$4 sm:$0xff] %v3301
    %s4168 = scalar_lea.vmem [#allocation1], 33
    %4169 = vst [vmem:[%s4168] ss:$4 sm:$0xff] %v3316
    %s4170 = scalar_lea.vmem [#allocation1], 34
    %4171 = vst [vmem:[%s4170] ss:$4 sm:$0xff] %v3317
    %v4172 = vld.sshfl [vmem:[#allocation1] sm:$0xff pattern:$0x73625140]
    %v4173 = vld.sshfl [vmem:[#allocation1 + $0x20] sm:$0xff pattern:$0x73625140]
    %4174 = vrot.lane.b32.xlu0 %v4172, 64
    %v4175 = vpop.permute.xlu0 %4174
    %4176 = vrot.lane.b32.xlu0 %v4173, 64
    %v4177 = vpop.permute.xlu0 %4176
    %v4180 = vsel %vm841, %v4155, 0
    %v4183 = vsel %vm841, %v4156, 0
    %v4185 = vsel %vm913, %v4177, 0
    %4187 = vmatpush.msra.mxu0 0.0
    %4188 = vmatpush.msra.mxu0 0.0
    %4189 = vmatpush.msra.mxu0 0.0
    %4190 = vmatpush.msra.mxu0 0.0
    %4191 = vmatpush.msra.mxu0 0.0
    %4192 = vmatpush.msra.mxu0 0.0
    %4193 = vmatpush.msra.mxu0 0.0
    %4194 = vmatpush.msra.mxu0 0.0
    %4195 = vmatpush.msra.mxu0 0.0
    %4196 = vmatpush.msra.mxu0 0.0
    %4197 = vmatpush.msra.mxu0 0.0
    %4198 = vmatpush.msra.mxu0 0.0
    %4199 = vmatpush.msra.mxu0 0.0
    %4200 = vmatpush.msra.mxu0 0.0
    %4201 = vmatpush.msra.mxu0 %v4185
    %4202 = vmatpush.msra.mxu0 %v4175
    %4203 = vmatmul.f32.gmra.mxu0 %v4180
    %v4204 = vpop.f32.mrf.mxu0
    %v4205 = vadd.f32 0.0, %v4204
    %4206 = vmatmul.f32.gmra.mxu0 %v4183
    %v4207 = vpop.f32.mrf.mxu0
    %v4208 = vadd.f32 0.0, %v4207
    %4209 = vdwg.mxu0
    %4210 = vst [vmem:[#allocation1] ss:$4 sm:$0xff] %v3318
    %s4211 = scalar_lea.vmem [#allocation1], 1
    %4212 = vst [vmem:[%s4211] ss:$4 sm:$0xff] %v3304
    %s4213 = scalar_lea.vmem [#allocation1], 2
    %4214 = vst [vmem:[%s4213] ss:$4 sm:$0xff] %v3319
    %s4215 = scalar_lea.vmem [#allocation1], 3
    %4216 = vst [vmem:[%s4215] ss:$4 sm:$0xff] %v3320
    %s4217 = scalar_lea.vmem [#allocation1], 32
    %4218 = vst [vmem:[%s4217] ss:$4 sm:$0xff] %v3321
    %s4219 = scalar_lea.vmem [#allocation1], 33
    %4220 = vst [vmem:[%s4219] ss:$4 sm:$0xff] %v3307
    %s4221 = scalar_lea.vmem [#allocation1], 34
    %4222 = vst [vmem:[%s4221] ss:$4 sm:$0xff] %v3322
    %v4223 = vld.sshfl [vmem:[#allocation1] sm:$0xff pattern:$0x73625140]
    %v4224 = vld.sshfl [vmem:[#allocation1 + $0x20] sm:$0xff pattern:$0x73625140]
    %4225 = vrot.lane.b32.xlu0 %v4223, 64
    %v4226 = vpop.permute.xlu0 %4225
    %4227 = vrot.lane.b32.xlu0 %v4224, 64
    %v4228 = vpop.permute.xlu0 %4227
    %v4231 = vsel %vm841, %v4157, 0
    %v4234 = vsel %vm841, %v4158, 0
    %v4236 = vsel %vm913, %v4228, 0
    %4238 = vmatpush.msra.mxu0 0.0
    %4239 = vmatpush.msra.mxu0 0.0
    %4240 = vmatpush.msra.mxu0 0.0
    %4241 = vmatpush.msra.mxu0 0.0
    %4242 = vmatpush.msra.mxu0 0.0
    %4243 = vmatpush.msra.mxu0 0.0
    %4244 = vmatpush.msra.mxu0 0.0
    %4245 = vmatpush.msra.mxu0 0.0
    %4246 = vmatpush.msra.mxu0 0.0
    %4247 = vmatpush.msra.mxu0 0.0
    %4248 = vmatpush.msra.mxu0 0.0
    %4249 = vmatpush.msra.mxu0 0.0
    %4250 = vmatpush.msra.mxu0 0.0
    %4251 = vmatpush.msra.mxu0 0.0
    %4252 = vmatpush.msra.mxu0 %v4236
    %4253 = vmatpush.msra.mxu0 %v4226
    %4254 = vmatmul.f32.gmra.mxu0 %v4231
    %v4255 = vpop.f32.mrf.mxu0
    %v4256 = vadd.f32 0.0, %v4255
    %4257 = vmatmul.f32.gmra.mxu0 %v4234
    %v4258 = vpop.f32.mrf.mxu0
    %v4259 = vadd.f32 0.0, %v4258
    %4260 = vdwg.mxu0
    %v4261 = vmul.f32 %v4205, %v167
    %v4262 = vmul.f32 %v4208, %v167
    %v4263 = vmul.f32 %v4256, %v167
    %v4264 = vmul.f32 %v4259, %v167
    %v4265 = vadd.f32 %v3953, %v4261
    %v4266 = vadd.f32 %v3954, %v4262
    %v4267 = vadd.f32 %v3955, %v4263
    %v4268 = vadd.f32 %v3956, %v4264
    %v4269 = vmul.f32 %v3298, %v172
    %v4270 = vmul.f32 %v3313, %v1637
    %v4271 = vmul.f32 %v3314, %v1638
    %v4272 = vmul.f32 %v3315, %v1639
    %v4273 = vmul.f32 %v3301, %v172
    %v4274 = vmul.f32 %v3316, %v1637
    %v4275 = vmul.f32 %v3317, %v1638
    %v4276 = vmul.f32 %v3318, %v172
    %v4277 = vmul.f32 %v3304, %v1637
    %v4278 = vmul.f32 %v3319, %v1638
    %v4279 = vmul.f32 %v3320, %v1639
    %v4280 = vmul.f32 %v3321, %v172
    %v4281 = vmul.f32 %v3307, %v1637
    %v4282 = vmul.f32 %v3322, %v1638
    %4290 = vst [vmem:[#allocation1] ss:$4 sm:$0xff] %v4269
    %s4291 = scalar_lea.vmem [#allocation1], 1
    %4292 = vst [vmem:[%s4291] ss:$4 sm:$0xff] %v4270
    %s4293 = scalar_lea.vmem [#allocation1], 2
    %4294 = vst [vmem:[%s4293] ss:$4 sm:$0xff] %v4271
    %s4295 = scalar_lea.vmem [#allocation1], 3
    %4296 = vst [vmem:[%s4295] ss:$4 sm:$0xff] %v4272
    %s4297 = scalar_lea.vmem [#allocation1], 32
    %4298 = vst [vmem:[%s4297] ss:$4 sm:$0xff] %v4273
    %s4299 = scalar_lea.vmem [#allocation1], 33
    %4300 = vst [vmem:[%s4299] ss:$4 sm:$0xff] %v4274
    %s4301 = scalar_lea.vmem [#allocation1], 34
    %4302 = vst [vmem:[%s4301] ss:$4 sm:$0xff] %v4275
    %v4303 = vld.sshfl [vmem:[#allocation1] sm:$0xff pattern:$0x73625140]
    %v4304 = vld.sshfl [vmem:[#allocation1 + $0x20] sm:$0xff pattern:$0x73625140]
    %4305 = vst [vmem:[#allocation1] ss:$4 sm:$0xff] %v3298
    %s4306 = scalar_lea.vmem [#allocation1], 1
    %4307 = vst [vmem:[%s4306] ss:$4 sm:$0xff] %v3313
    %s4308 = scalar_lea.vmem [#allocation1], 2
    %4309 = vst [vmem:[%s4308] ss:$4 sm:$0xff] %v3314
    %s4310 = scalar_lea.vmem [#allocation1], 3
    %4311 = vst [vmem:[%s4310] ss:$4 sm:$0xff] %v3315
    %s4312 = scalar_lea.vmem [#allocation1], 32
    %4313 = vst [vmem:[%s4312] ss:$4 sm:$0xff] %v3301
    %s4314 = scalar_lea.vmem [#allocation1], 33
    %4315 = vst [vmem:[%s4314] ss:$4 sm:$0xff] %v3316
    %s4316 = scalar_lea.vmem [#allocation1], 34
    %4317 = vst [vmem:[%s4316] ss:$4 sm:$0xff] %v3317
    %v4318 = vld.sshfl [vmem:[#allocation1] sm:$0xff pattern:$0x73625140]
    %v4319 = vld.sshfl [vmem:[#allocation1 + $0x20] sm:$0xff pattern:$0x73625140]
    %4320 = vrot.lane.b32.xlu0 %v4318, 96
    %v4321 = vpop.permute.xlu0 %4320
    %4322 = vrot.lane.b32.xlu0 %v4319, 96
    %v4323 = vpop.permute.xlu0 %4322
    %v4324 = vsel %vm203, %v4303, 0
    %v4326 = vsel %vm203, %v4304, 0
    %v4328 = vsel %vm203, %v4321, 0
    %v4330 = vsel %vm203, %v4323, 0
    %4332 = vmatpush.xpose.msra.mxu0 0.0
    %4333 = vmatpush.xpose.msra.mxu0 0.0
    %4334 = vmatpush.xpose.msra.mxu0 0.0
    %4335 = vmatpush.xpose.msra.mxu0 0.0
    %4336 = vmatpush.xpose.msra.mxu0 0.0
    %4337 = vmatpush.xpose.msra.mxu0 0.0
    %4338 = vmatpush.xpose.msra.mxu0 0.0
    %4339 = vmatpush.xpose.msra.mxu0 0.0
    %4340 = vmatpush.xpose.msra.mxu0 0.0
    %4341 = vmatpush.xpose.msra.mxu0 0.0
    %4342 = vmatpush.xpose.msra.mxu0 0.0
    %4343 = vmatpush.xpose.msra.mxu0 0.0
    %4344 = vmatpush.xpose.msra.mxu0 0.0
    %4345 = vmatpush.xpose.msra.mxu0 0.0
    %4346 = vmatpush.xpose.msra.mxu0 %v4330
    %4347 = vmatpush.xpose.msra.mxu0 %v4328
    %4348 = vmatmul.f32.gmra.mxu0 %v4324
    %v4349 = vpop.f32.mrf.mxu0
    %v4350 = vadd.f32 0.0, %v4349
    %4351 = vmatmul.f32.gmra.mxu0 %v4326
    %v4352 = vpop.f32.mrf.mxu0
    %v4353 = vadd.f32 0.0, %v4352
    %4354 = vdwg.mxu0
    %4362 = vst [vmem:[#allocation1] ss:$4 sm:$0xff] %v4276
    %s4363 = scalar_lea.vmem [#allocation1], 1
    %4364 = vst [vmem:[%s4363] ss:$4 sm:$0xff] %v4277
    %s4365 = scalar_lea.vmem [#allocation1], 2
    %4366 = vst [vmem:[%s4365] ss:$4 sm:$0xff] %v4278
    %s4367 = scalar_lea.vmem [#allocation1], 3
    %4368 = vst [vmem:[%s4367] ss:$4 sm:$0xff] %v4279
    %s4369 = scalar_lea.vmem [#allocation1], 32
    %4370 = vst [vmem:[%s4369] ss:$4 sm:$0xff] %v4280
    %s4371 = scalar_lea.vmem [#allocation1], 33
    %4372 = vst [vmem:[%s4371] ss:$4 sm:$0xff] %v4281
    %s4373 = scalar_lea.vmem [#allocation1], 34
    %4374 = vst [vmem:[%s4373] ss:$4 sm:$0xff] %v4282
    %v4375 = vld.sshfl [vmem:[#allocation1] sm:$0xff pattern:$0x73625140]
    %v4376 = vld.sshfl [vmem:[#allocation1 + $0x20] sm:$0xff pattern:$0x73625140]
    %4377 = vst [vmem:[#allocation1] ss:$4 sm:$0xff] %v3318
    %s4378 = scalar_lea.vmem [#allocation1], 1
    %4379 = vst [vmem:[%s4378] ss:$4 sm:$0xff] %v3304
    %s4380 = scalar_lea.vmem [#allocation1], 2
    %4381 = vst [vmem:[%s4380] ss:$4 sm:$0xff] %v3319
    %s4382 = scalar_lea.vmem [#allocation1], 3
    %4383 = vst [vmem:[%s4382] ss:$4 sm:$0xff] %v3320
    %s4384 = scalar_lea.vmem [#allocation1], 32
    %4385 = vst [vmem:[%s4384] ss:$4 sm:$0xff] %v3321
    %s4386 = scalar_lea.vmem [#allocation1], 33
    %4387 = vst [vmem:[%s4386] ss:$4 sm:$0xff] %v3307
    %s4388 = scalar_lea.vmem [#allocation1], 34
    %4389 = vst [vmem:[%s4388] ss:$4 sm:$0xff] %v3322
    %v4390 = vld.sshfl [vmem:[#allocation1] sm:$0xff pattern:$0x73625140]
    %v4391 = vld.sshfl [vmem:[#allocation1 + $0x20] sm:$0xff pattern:$0x73625140]
    %4392 = vrot.lane.b32.xlu0 %v4390, 96
    %v4393 = vpop.permute.xlu0 %4392
    %4394 = vrot.lane.b32.xlu0 %v4391, 96
    %v4395 = vpop.permute.xlu0 %4394
    %v4396 = vsel %vm203, %v4375, 0
    %v4398 = vsel %vm203, %v4376, 0
    %v4400 = vsel %vm203, %v4393, 0
    %v4402 = vsel %vm203, %v4395, 0
    %4404 = vmatpush.xpose.msra.mxu0 0.0
    %4405 = vmatpush.xpose.msra.mxu0 0.0
    %4406 = vmatpush.xpose.msra.mxu0 0.0
    %4407 = vmatpush.xpose.msra.mxu0 0.0
    %4408 = vmatpush.xpose.msra.mxu0 0.0
    %4409 = vmatpush.xpose.msra.mxu0 0.0
    %4410 = vmatpush.xpose.msra.mxu0 0.0
    %4411 = vmatpush.xpose.msra.mxu0 0.0
    %4412 = vmatpush.xpose.msra.mxu0 0.0
    %4413 = vmatpush.xpose.msra.mxu0 0.0
    %4414 = vmatpush.xpose.msra.mxu0 0.0
    %4415 = vmatpush.xpose.msra.mxu0 0.0
    %4416 = vmatpush.xpose.msra.mxu0 0.0
    %4417 = vmatpush.xpose.msra.mxu0 0.0
    %4418 = vmatpush.xpose.msra.mxu0 %v4402
    %4419 = vmatpush.xpose.msra.mxu0 %v4400
    %4420 = vmatmul.f32.gmra.mxu0 %v4396
    %v4421 = vpop.f32.mrf.mxu0
    %v4422 = vadd.f32 0.0, %v4421
    %4423 = vmatmul.f32.gmra.mxu0 %v4398
    %v4424 = vpop.f32.mrf.mxu0
    %v4425 = vadd.f32 0.0, %v4424
    %4426 = vdwg.mxu0
    %v4427 = vsel %vm841, %v4350, -inf
    %4428 = vmax.xlane.f32.xlu0 %v4427
    %v4429 = vpop.xlane.xlu0 %4428
    %v4430 = vsel %vm845, %v4353, -inf
    %4431 = vmax.xlane.f32.xlu0 %v4430
    %v4432 = vpop.xlane.xlu0 %4431
    %v4433 = vsel %vm841, %v4422, -inf
    %4434 = vmax.xlane.f32.xlu0 %v4433
    %v4435 = vpop.xlane.xlu0 %4434
    %v4436 = vsel %vm845, %v4425, -inf
    %4437 = vmax.xlane.f32.xlu0 %v4436
    %v4438 = vpop.xlane.xlu0 %4437
    %v4439 = vsub.f32 %v4350, %v4429
    %v4440 = vsub.f32 %v4353, %v4432
    %v4441 = vsub.f32 %v4422, %v4435
    %v4442 = vsub.f32 %v4425, %v4438
    %v4443 = vmul.f32 %v4439, 1.442695
    %v4444 = vpow.pop %v4443
    %v4445 = vmul.f32 %v4440, 1.442695
    %v4446 = vpow.pop %v4445
    %v4447 = vmul.f32 %v4441, 1.442695
    %v4448 = vpow.pop %v4447
    %v4449 = vmul.f32 %v4442, 1.442695
    %v4450 = vpow.pop %v4449
    %v4451 = vsel %vm841, %v4444, 0.0
    %4452 = vadd.xlane.f32.xlu0 %v4451
    %v4453 = vpop.xlane.xlu0 %4452
    %v4454 = vsel %vm845, %v4446, 0.0
    %4455 = vadd.xlane.f32.xlu0 %v4454
    %v4456 = vpop.xlane.xlu0 %4455
    %v4457 = vsel %vm841, %v4448, 0.0
    %4458 = vadd.xlane.f32.xlu0 %v4457
    %v4459 = vpop.xlane.xlu0 %4458
    %v4460 = vsel %vm845, %v4450, 0.0
    %4461 = vadd.xlane.f32.xlu0 %v4460
    %v4462 = vpop.xlane.xlu0 %4461
    %v4463 = vrcp.pop %v4453
    %v4464 = vrcp.pop %v4456
    %v4465 = vrcp.pop %v4459
    %v4466 = vrcp.pop %v4462
    %v4467 = vmul.f32 %v4444, %v4463
    %v4468 = vmul.f32 %v4446, %v4464
    %v4469 = vmul.f32 %v4448, %v4465
    %v4470 = vmul.f32 %v4450, %v4466
    %4471 = vst [vmem:[#allocation1] ss:$4 sm:$0xff] %v3298
    %s4472 = scalar_lea.vmem [#allocation1], 1
    %4473 = vst [vmem:[%s4472] ss:$4 sm:$0xff] %v3313
    %s4474 = scalar_lea.vmem [#allocation1], 2
    %4475 = vst [vmem:[%s4474] ss:$4 sm:$0xff] %v3314
    %s4476 = scalar_lea.vmem [#allocation1], 3
    %4477 = vst [vmem:[%s4476] ss:$4 sm:$0xff] %v3315
    %s4478 = scalar_lea.vmem [#allocation1], 32
    %4479 = vst [vmem:[%s4478] ss:$4 sm:$0xff] %v3301
    %s4480 = scalar_lea.vmem [#allocation1], 33
    %4481 = vst [vmem:[%s4480] ss:$4 sm:$0xff] %v3316
    %s4482 = scalar_lea.vmem [#allocation1], 34
    %4483 = vst [vmem:[%s4482] ss:$4 sm:$0xff] %v3317
    %v4484 = vld.sshfl [vmem:[#allocation1] sm:$0xff pattern:$0x73625140]
    %v4485 = vld.sshfl [vmem:[#allocation1 + $0x20] sm:$0xff pattern:$0x73625140]
    %4486 = vrot.lane.b32.xlu0 %v4484, 64
    %v4487 = vpop.permute.xlu0 %4486
    %4488 = vrot.lane.b32.xlu0 %v4485, 64
    %v4489 = vpop.permute.xlu0 %4488
    %v4492 = vsel %vm841, %v4467, 0
    %v4495 = vsel %vm841, %v4468, 0
    %v4497 = vsel %vm913, %v4489, 0
    %4499 = vmatpush.msra.mxu0 0.0
    %4500 = vmatpush.msra.mxu0 0.0
    %4501 = vmatpush.msra.mxu0 0.0
    %4502 = vmatpush.msra.mxu0 0.0
    %4503 = vmatpush.msra.mxu0 0.0
    %4504 = vmatpush.msra.mxu0 0.0
    %4505 = vmatpush.msra.mxu0 0.0
    %4506 = vmatpush.msra.mxu0 0.0
    %4507 = vmatpush.msra.mxu0 0.0
    %4508 = vmatpush.msra.mxu0 0.0
    %4509 = vmatpush.msra.mxu0 0.0
    %4510 = vmatpush.msra.mxu0 0.0
    %4511 = vmatpush.msra.mxu0 0.0
    %4512 = vmatpush.msra.mxu0 0.0
    %4513 = vmatpush.msra.mxu0 %v4497
    %4514 = vmatpush.msra.mxu0 %v4487
    %4515 = vmatmul.f32.gmra.mxu0 %v4492
    %v4516 = vpop.f32.mrf.mxu0
    %v4517 = vadd.f32 0.0, %v4516
    %4518 = vmatmul.f32.gmra.mxu0 %v4495
    %v4519 = vpop.f32.mrf.mxu0
    %v4520 = vadd.f32 0.0, %v4519
    %4521 = vdwg.mxu0
    %4522 = vst [vmem:[#allocation1] ss:$4 sm:$0xff] %v3318
    %s4523 = scalar_lea.vmem [#allocation1], 1
    %4524 = vst [vmem:[%s4523] ss:$4 sm:$0xff] %v3304
    %s4525 = scalar_lea.vmem [#allocation1], 2
    %4526 = vst [vmem:[%s4525] ss:$4 sm:$0xff] %v3319
    %s4527 = scalar_lea.vmem [#allocation1], 3
    %4528 = vst [vmem:[%s4527] ss:$4 sm:$0xff] %v3320
    %s4529 = scalar_lea.vmem [#allocation1], 32
    %4530 = vst [vmem:[%s4529] ss:$4 sm:$0xff] %v3321
    %s4531 = scalar_lea.vmem [#allocation1], 33
    %4532 = vst [vmem:[%s4531] ss:$4 sm:$0xff] %v3307
    %s4533 = scalar_lea.vmem [#allocation1], 34
    %4534 = vst [vmem:[%s4533] ss:$4 sm:$0xff] %v3322
    %v4535 = vld.sshfl [vmem:[#allocation1] sm:$0xff pattern:$0x73625140]
    %v4536 = vld.sshfl [vmem:[#allocation1 + $0x20] sm:$0xff pattern:$0x73625140]
    %4537 = vrot.lane.b32.xlu0 %v4535, 64
    %v4538 = vpop.permute.xlu0 %4537
    %4539 = vrot.lane.b32.xlu0 %v4536, 64
    %v4540 = vpop.permute.xlu0 %4539
    %v4543 = vsel %vm841, %v4469, 0
    %v4546 = vsel %vm841, %v4470, 0
    %v4548 = vsel %vm913, %v4540, 0
    %4550 = vmatpush.msra.mxu0 0.0
    %4551 = vmatpush.msra.mxu0 0.0
    %4552 = vmatpush.msra.mxu0 0.0
    %4553 = vmatpush.msra.mxu0 0.0
    %4554 = vmatpush.msra.mxu0 0.0
    %4555 = vmatpush.msra.mxu0 0.0
    %4556 = vmatpush.msra.mxu0 0.0
    %4557 = vmatpush.msra.mxu0 0.0
    %4558 = vmatpush.msra.mxu0 0.0
    %4559 = vmatpush.msra.mxu0 0.0
    %4560 = vmatpush.msra.mxu0 0.0
    %4561 = vmatpush.msra.mxu0 0.0
    %4562 = vmatpush.msra.mxu0 0.0
    %4563 = vmatpush.msra.mxu0 0.0
    %4564 = vmatpush.msra.mxu0 %v4548
    %4565 = vmatpush.msra.mxu0 %v4538
    %4566 = vmatmul.f32.gmra.mxu0 %v4543
    %v4567 = vpop.f32.mrf.mxu0
    %v4568 = vadd.f32 0.0, %v4567
    %4569 = vmatmul.f32.gmra.mxu0 %v4546
    %v4570 = vpop.f32.mrf.mxu0
    %v4571 = vadd.f32 0.0, %v4570
    %4572 = vdwg.mxu0
    %v4573 = vmul.f32 %v4517, %v172
    %v4574 = vmul.f32 %v4520, %v172
    %v4575 = vmul.f32 %v4568, %v172
    %v4576 = vmul.f32 %v4571, %v172
    %v4577 = vadd.f32 %v4265, %v4573
    %v4578 = vadd.f32 %v4266, %v4574
    %v4579 = vadd.f32 %v4267, %v4575
    %v4580 = vadd.f32 %v4268, %v4576
    %v4581 = vld [vmem:[%s3228 + $0x20] sm:$0xff]
    %v4582 = vld [vmem:[%s3228 + $0x28] sm:$0xff]
    %v4583 = vld [vmem:[%s3228 + $0x30] sm:$0xff]
    %v4584 = vld [vmem:[%s3228 + $0x38] sm:$0xff]
    %v4585 = vld [vmem:[%s2823 + $0x4] sm:$0x1]
    %v4586 = vperm.slane %v4585, 0
    %v4591 = vrot.slane %v4577, 2
    %v4592 = vrot.slane %v4577, 4
    %v4593 = vrot.slane %v4577, 6
    %v4594 = vrot.slane %v4578, 2
    %v4595 = vrot.slane %v4578, 4
    %v4596 = vrot.slane %v4579, 2
    %v4597 = vrot.slane %v4579, 4
    %v4598 = vrot.slane %v4579, 6
    %v4599 = vrot.slane %v4580, 2
    %v4600 = vrot.slane %v4580, 4
    %v4602 = vrot.slane %v4586, 2
    %v4603 = vrot.slane %v4586, 4
    %v4604 = vrot.slane %v4586, 6
    %4605 = vst [vmem:[#allocation1] ss:$4 sm:$0xff] %v4577
    %s4606 = scalar_lea.vmem [#allocation1], 1
    %4607 = vst [vmem:[%s4606] ss:$4 sm:$0xff] %v4591
    %s4608 = scalar_lea.vmem [#allocation1], 2
    %4609 = vst [vmem:[%s4608] ss:$4 sm:$0xff] %v4592
    %s4610 = scalar_lea.vmem [#allocation1], 3
    %4611 = vst [vmem:[%s4610] ss:$4 sm:$0xff] %v4593
    %s4612 = scalar_lea.vmem [#allocation1], 32
    %4613 = vst [vmem:[%s4612] ss:$4 sm:$0xff] %v4578
    %s4614 = scalar_lea.vmem [#allocation1], 33
    %4615 = vst [vmem:[%s4614] ss:$4 sm:$0xff] %v4594
    %s4616 = scalar_lea.vmem [#allocation1], 34
    %4617 = vst [vmem:[%s4616] ss:$4 sm:$0xff] %v4595
    %s4618 = scalar_lea.vmem [#allocation1], 35
    %4619 = vst [vmem:[%s4618] ss:$4 sm:$0xff] %v4579
    %v4620 = vld.sshfl [vmem:[#allocation1] sm:$0xff pattern:$0x73625140]
    %v4621 = vld.sshfl [vmem:[#allocation1 + $0x20] sm:$0xff pattern:$0x73625140]
    %4622 = vst [vmem:[#allocation1] ss:$4 sm:$0xff] %v4596
    %4623 = vst [vmem:[%s4606] ss:$4 sm:$0xff] %v4597
    %4624 = vst [vmem:[%s4608] ss:$4 sm:$0xff] %v4598
    %4625 = vst [vmem:[%s4610] ss:$4 sm:$0xff] %v4580
    %4626 = vst [vmem:[%s4612] ss:$4 sm:$0xff] %v4599
    %4627 = vst [vmem:[%s4614] ss:$4 sm:$0xff] %v4600
    %v4628 = vld.sshfl [vmem:[#allocation1] sm:$0xff pattern:$0x73625140]
    %v4629 = vld.sshfl [vmem:[#allocation1 + $0x20] sm:$0xff pattern:$0x73625140]
    %4630 = vst [vmem:[#allocation1] ss:$4 sm:$0xff] %v4586
    %s4631 = scalar_lea.vmem [#allocation1], 1
    %4632 = vst [vmem:[%s4631] ss:$4 sm:$0xff] %v4602
    %s4633 = scalar_lea.vmem [#allocation1], 2
    %4634 = vst [vmem:[%s4633] ss:$4 sm:$0xff] %v4603
    %s4635 = scalar_lea.vmem [#allocation1], 3
    %4636 = vst [vmem:[%s4635] ss:$4 sm:$0xff] %v4604
    %s4637 = scalar_lea.vmem [#allocation1], 32
    %4638 = vst [vmem:[%s4637] ss:$4 sm:$0xff] %v4586
    %s4639 = scalar_lea.vmem [#allocation1], 33
    %4640 = vst [vmem:[%s4639] ss:$4 sm:$0xff] %v4602
    %s4641 = scalar_lea.vmem [#allocation1], 34
    %4642 = vst [vmem:[%s4641] ss:$4 sm:$0xff] %v4603
    %s4643 = scalar_lea.vmem [#allocation1], 35
    %4644 = vst [vmem:[%s4643] ss:$4 sm:$0xff] %v4586
    %v4645 = vld.sshfl [vmem:[#allocation1] sm:$0xff pattern:$0x73625140]
    %v4646 = vld.sshfl [vmem:[#allocation1 + $0x20] sm:$0xff pattern:$0x73625140]
    %4647 = vst [vmem:[#allocation1] ss:$4 sm:$0xff] %v4602
    %4648 = vst [vmem:[%s4631] ss:$4 sm:$0xff] %v4603
    %4649 = vst [vmem:[%s4633] ss:$4 sm:$0xff] %v4604
    %4650 = vst [vmem:[%s4635] ss:$4 sm:$0xff] %v4586
    %4651 = vst [vmem:[%s4637] ss:$4 sm:$0xff] %v4602
    %4652 = vst [vmem:[%s4639] ss:$4 sm:$0xff] %v4603
    %v4653 = vld.sshfl [vmem:[#allocation1] sm:$0xff pattern:$0x73625140]
    %v4654 = vld.sshfl [vmem:[#allocation1 + $0x20] sm:$0xff pattern:$0x73625140]
    %v4659 = vsel %vm203, %v4620, 0
    %v4661 = vsel %vm203, %v4621, 0
    %v4663 = vsel %vm203, %v4628, 0
    %v4665 = vsel %vm203, %v4629, 0
    %4667 = vmatpush.msra.mxu0 0.0
    %4668 = vmatpush.msra.mxu0 0.0
    %4669 = vmatpush.msra.mxu0 0.0
    %4670 = vmatpush.msra.mxu0 0.0
    %4671 = vmatpush.msra.mxu0 0.0
    %4672 = vmatpush.msra.mxu0 0.0
    %4673 = vmatpush.msra.mxu0 0.0
    %4674 = vmatpush.msra.mxu0 0.0
    %4675 = vmatpush.msra.mxu0 0.0
    %4676 = vmatpush.msra.mxu0 0.0
    %4677 = vmatpush.msra.mxu0 0.0
    %4678 = vmatpush.msra.mxu0 0.0
    %4679 = vmatpush.msra.mxu0 %v4584
    %4680 = vmatpush.msra.mxu0 %v4583
    %4681 = vmatpush.msra.mxu0 %v4582
    %4682 = vmatpush.msra.mxu0 %v4581
    %4683 = vmatmul.f32.gmra.mxu0 %v4659
    %v4684 = vpop.f32.mrf.mxu0
    %v4685 = vadd.f32 %v4645, %v4684
    %4686 = vmatmul.f32.gmra.mxu0 %v4661
    %v4687 = vpop.f32.mrf.mxu0
    %v4688 = vadd.f32 %v4646, %v4687
    %4689 = vmatmul.f32.gmra.mxu0 %v4663
    %v4690 = vpop.f32.mrf.mxu0
    %v4691 = vadd.f32 %v4653, %v4690
    %4692 = vmatmul.f32.gmra.mxu0 %v4665
    %v4693 = vpop.f32.mrf.mxu0
    %v4694 = vadd.f32 %v4654, %v4693
    %4695 = vdwg.mxu0
    %v4700 = vrot.slane %v4685, 2
    %v4701 = vrot.slane %v4685, 4
    %v4702 = vrot.slane %v4685, 6
    %v4703 = vrot.slane %v4688, 2
    %v4704 = vrot.slane %v4688, 4
    %v4705 = vrot.slane %v4688, 6
    %v4706 = vrot.slane %v4691, 2
    %v4707 = vrot.slane %v4691, 4
    %v4708 = vrot.slane %v4691, 6
    %v4709 = vrot.slane %v4694, 2
    %v4720 = vadd.f32 %v4685, %v2809
    %v4721 = vadd.f32 %v4700, %v2810
    %v4722 = vadd.f32 %v4701, %v2811
    %v4723 = vadd.f32 %v4702, %v2812
    %v4724 = vadd.f32 %v4688, %v2813
    %v4725 = vadd.f32 %v4703, %v2814
    %v4726 = vadd.f32 %v4704, %v2815
    %v4727 = vadd.f32 %v4705, %v2816
    %v4728 = vadd.f32 %v4691, %v2817
    %v4729 = vadd.f32 %v4706, %v2818
    %v4730 = vadd.f32 %v4707, %v2819
    %v4731 = vadd.f32 %v4708, %v2820
    %v4732 = vadd.f32 %v4694, %v2821
    %v4733 = vadd.f32 %v4709, %v2822
    %v4734 = vld [vmem:[%s2823 + $0x2] sm:$0x1]
    %v4735 = vld [vmem:[%s2823 + $0x3] sm:$0x1]
    %4750 = vst [vmem:[#allocation1] ss:$4 sm:$0xff] %v4720
    %s4751 = scalar_lea.vmem [#allocation1], 1
    %4752 = vst [vmem:[%s4751] ss:$4 sm:$0xff] %v4721
    %s4753 = scalar_lea.vmem [#allocation1], 2
    %4754 = vst [vmem:[%s4753] ss:$4 sm:$0xff] %v4722
    %s4755 = scalar_lea.vmem [#allocation1], 3
    %4756 = vst [vmem:[%s4755] ss:$4 sm:$0xff] %v4723
    %s4757 = scalar_lea.vmem [#allocation1], 32
    %4758 = vst [vmem:[%s4757] ss:$4 sm:$0xff] %v4724
    %s4759 = scalar_lea.vmem [#allocation1], 33
    %4760 = vst [vmem:[%s4759] ss:$4 sm:$0xff] %v4725
    %s4761 = scalar_lea.vmem [#allocation1], 34
    %4762 = vst [vmem:[%s4761] ss:$4 sm:$0xff] %v4726
    %v4763 = vld.sshfl [vmem:[#allocation1] sm:$0xff pattern:$0x73625140]
    %v4764 = vld.sshfl [vmem:[#allocation1 + $0x20] sm:$0xff pattern:$0x73625140]
    %4765 = vst [vmem:[#allocation1] ss:$4 sm:$0xff] %v4727
    %4766 = vst [vmem:[%s4751] ss:$4 sm:$0xff] %v4728
    %4767 = vst [vmem:[%s4753] ss:$4 sm:$0xff] %v4729
    %4768 = vst [vmem:[%s4755] ss:$4 sm:$0xff] %v4730
    %4769 = vst [vmem:[%s4757] ss:$4 sm:$0xff] %v4731
    %4770 = vst [vmem:[%s4759] ss:$4 sm:$0xff] %v4732
    %4771 = vst [vmem:[%s4761] ss:$4 sm:$0xff] %v4733
    %v4772 = vld.sshfl [vmem:[#allocation1] sm:$0xff pattern:$0x73625140]
    %v4773 = vld.sshfl [vmem:[#allocation1 + $0x20] sm:$0xff pattern:$0x73625140]
    %v4778 = vsel %vm203, %v4763, 0.0
    %4779 = vadd.xlane.f32.xlu0 %v4778
    %v4780 = vpop.xlane.xlu0 %4779
    %v4781 = vsel %vm207, %v4764, 0.0
    %4782 = vadd.xlane.f32.xlu0 %v4781
    %v4783 = vpop.xlane.xlu0 %4782
    %v4784 = vsel %vm203, %v4772, 0.0
    %4785 = vadd.xlane.f32.xlu0 %v4784
    %v4786 = vpop.xlane.xlu0 %4785
    %v4787 = vsel %vm207, %v4773, 0.0
    %4788 = vadd.xlane.f32.xlu0 %v4787
    %v4789 = vpop.xlane.xlu0 %4788
    %v4790 = vmul.f32 %v4780, %v223
    %v4791 = vmul.f32 %v4783, %v223
    %v4792 = vmul.f32 %v4786, %v223
    %v4793 = vmul.f32 %v4789, %v223
    %v4794 = vmul.f32 %v4720, %v4720
    %v4795 = vmul.f32 %v4721, %v4721
    %v4796 = vmul.f32 %v4722, %v4722
    %v4797 = vmul.f32 %v4723, %v4723
    %v4798 = vmul.f32 %v4724, %v4724
    %v4799 = vmul.f32 %v4725, %v4725
    %v4800 = vmul.f32 %v4726, %v4726
    %v4801 = vmul.f32 %v4727, %v4727
    %v4802 = vmul.f32 %v4728, %v4728
    %v4803 = vmul.f32 %v4729, %v4729
    %v4804 = vmul.f32 %v4730, %v4730
    %v4805 = vmul.f32 %v4731, %v4731
    %v4806 = vmul.f32 %v4732, %v4732
    %v4807 = vmul.f32 %v4733, %v4733
    %4822 = vst [vmem:[#allocation1] ss:$4 sm:$0xff] %v4794
    %s4823 = scalar_lea.vmem [#allocation1], 1
    %4824 = vst [vmem:[%s4823] ss:$4 sm:$0xff] %v4795
    %s4825 = scalar_lea.vmem [#allocation1], 2
    %4826 = vst [vmem:[%s4825] ss:$4 sm:$0xff] %v4796
    %s4827 = scalar_lea.vmem [#allocation1], 3
    %4828 = vst [vmem:[%s4827] ss:$4 sm:$0xff] %v4797
    %s4829 = scalar_lea.vmem [#allocation1], 32
    %4830 = vst [vmem:[%s4829] ss:$4 sm:$0xff] %v4798
    %s4831 = scalar_lea.vmem [#allocation1], 33
    %4832 = vst [vmem:[%s4831] ss:$4 sm:$0xff] %v4799
    %s4833 = scalar_lea.vmem [#allocation1], 34
    %4834 = vst [vmem:[%s4833] ss:$4 sm:$0xff] %v4800
    %v4835 = vld.sshfl [vmem:[#allocation1] sm:$0xff pattern:$0x73625140]
    %v4836 = vld.sshfl [vmem:[#allocation1 + $0x20] sm:$0xff pattern:$0x73625140]
    %4837 = vst [vmem:[#allocation1] ss:$4 sm:$0xff] %v4801
    %4838 = vst [vmem:[%s4823] ss:$4 sm:$0xff] %v4802
    %4839 = vst [vmem:[%s4825] ss:$4 sm:$0xff] %v4803
    %4840 = vst [vmem:[%s4827] ss:$4 sm:$0xff] %v4804
    %4841 = vst [vmem:[%s4829] ss:$4 sm:$0xff] %v4805
    %4842 = vst [vmem:[%s4831] ss:$4 sm:$0xff] %v4806
    %4843 = vst [vmem:[%s4833] ss:$4 sm:$0xff] %v4807
    %v4844 = vld.sshfl [vmem:[#allocation1] sm:$0xff pattern:$0x73625140]
    %v4845 = vld.sshfl [vmem:[#allocation1 + $0x20] sm:$0xff pattern:$0x73625140]
    %v4850 = vsel %vm203, %v4835, 0.0
    %4851 = vadd.xlane.f32.xlu0 %v4850
    %v4852 = vpop.xlane.xlu0 %4851
    %v4853 = vsel %vm207, %v4836, 0.0
    %4854 = vadd.xlane.f32.xlu0 %v4853
    %v4855 = vpop.xlane.xlu0 %4854
    %v4856 = vsel %vm203, %v4844, 0.0
    %4857 = vadd.xlane.f32.xlu0 %v4856
    %v4858 = vpop.xlane.xlu0 %4857
    %v4859 = vsel %vm207, %v4845, 0.0
    %4860 = vadd.xlane.f32.xlu0 %v4859
    %v4861 = vpop.xlane.xlu0 %4860
    %v4862 = vmul.f32 %v4852, %v223
    %v4863 = vmul.f32 %v4855, %v223
    %v4864 = vmul.f32 %v4858, %v223
    %v4865 = vmul.f32 %v4861, %v223
    %v4871 = vunpack.c.l.s4 269488144
    %v4872 = vunpack.c.0.s8 %v4871
    %v4873 = vperm.slane %v4790, %v4872
    %v4875 = vunpack.c.l.s4 842150450
    %v4876 = vunpack.c.0.s8 %v4875
    %v4877 = vperm.slane %v4790, %v4876
    %v4879 = vunpack.c.l.s4 1414812756
    %v4880 = vunpack.c.0.s8 %v4879
    %v4881 = vperm.slane %v4790, %v4880
    %v4883 = vunpack.c.l.s4 1987475062
    %v4884 = vunpack.c.0.s8 %v4883
    %v4885 = vperm.slane %v4790, %v4884
    %v4887 = vunpack.c.l.s4 269488144
    %v4888 = vunpack.c.0.s8 %v4887
    %v4889 = vperm.slane %v4791, %v4888
    %v4891 = vunpack.c.l.s4 842150450
    %v4892 = vunpack.c.0.s8 %v4891
    %v4893 = vperm.slane %v4791, %v4892
    %v4895 = vunpack.c.l.s4 1414812756
    %v4896 = vunpack.c.0.s8 %v4895
    %v4897 = vperm.slane %v4791, %v4896
    %v4899 = vunpack.c.l.s4 269488144
    %v4900 = vunpack.c.0.s8 %v4899
    %v4901 = vperm.slane %v4792, %v4900
    %v4903 = vunpack.c.l.s4 842150450
    %v4904 = vunpack.c.0.s8 %v4903
    %v4905 = vperm.slane %v4792, %v4904
    %v4907 = vunpack.c.l.s4 1414812756
    %v4908 = vunpack.c.0.s8 %v4907
    %v4909 = vperm.slane %v4792, %v4908
    %v4911 = vunpack.c.l.s4 1987475062
    %v4912 = vunpack.c.0.s8 %v4911
    %v4913 = vperm.slane %v4792, %v4912
    %v4915 = vunpack.c.l.s4 269488144
    %v4916 = vunpack.c.0.s8 %v4915
    %v4917 = vperm.slane %v4793, %v4916
    %v4919 = vunpack.c.l.s4 842150450
    %v4920 = vunpack.c.0.s8 %v4919
    %v4921 = vperm.slane %v4793, %v4920
    %v4923 = vunpack.c.l.s4 1414812756
    %v4924 = vunpack.c.0.s8 %v4923
    %v4925 = vperm.slane %v4793, %v4924
    %v4940 = vsub.f32 %v4720, %v4873
    %v4941 = vsub.f32 %v4721, %v4877
    %v4942 = vsub.f32 %v4722, %v4881
    %v4943 = vsub.f32 %v4723, %v4885
    %v4944 = vsub.f32 %v4724, %v4889
    %v4945 = vsub.f32 %v4725, %v4893
    %v4946 = vsub.f32 %v4726, %v4897
    %v4947 = vsub.f32 %v4727, %v4901
    %v4948 = vsub.f32 %v4728, %v4905
    %v4949 = vsub.f32 %v4729, %v4909
    %v4950 = vsub.f32 %v4730, %v4913
    %v4951 = vsub.f32 %v4731, %v4917
    %v4952 = vsub.f32 %v4732, %v4921
    %v4953 = vsub.f32 %v4733, %v4925
    %v4954 = vmul.f32 %v4790, %v4790
    %v4955 = vmul.f32 %v4791, %v4791
    %v4956 = vmul.f32 %v4792, %v4792
    %v4957 = vmul.f32 %v4793, %v4793
    %v4958 = vsub.f32 %v4862, %v4954
    %v4959 = vsub.f32 %v4863, %v4955
    %v4960 = vsub.f32 %v4864, %v4956
    %v4961 = vsub.f32 %v4865, %v4957
    %v4962 = vadd.f32 %v4958, 1e-05
    %v4963 = vadd.f32 %v4959, 1e-05
    %v4964 = vadd.f32 %v4960, 1e-05
    %v4965 = vadd.f32 %v4961, 1e-05
    %v4966 = vrsqrt.pop %v4962
    %v4967 = vmul.f32 %v4966, %v4962
    %v4968 = vmul.f32 %v4967, %v4966
    %v4969 = vmul.f32 0.5, %v4968
    %v4970 = vsub.f32 1.5, %v4969
    %v4971 = vmul.f32 %v4966, %v4970
    %vm4972 = vweird.f32 %v4962
    %vm4973 = vweird.f32 %v4966
    %vm4974 = vmor %vm4972, %vm4973
    %v4975 = vsel %vm4974, %v4966, %v4971
    %v4976 = vrsqrt.pop %v4963
    %v4977 = vmul.f32 %v4976, %v4963
    %v4978 = vmul.f32 %v4977, %v4976
    %v4979 = vmul.f32 0.5, %v4978
    %v4980 = vsub.f32 1.5, %v4979
    %v4981 = vmul.f32 %v4976, %v4980
    %vm4982 = vweird.f32 %v4963
    %vm4983 = vweird.f32 %v4976
    %vm4984 = vmor %vm4982, %vm4983
    %v4985 = vsel %vm4984, %v4976, %v4981
    %v4986 = vrsqrt.pop %v4964
    %v4987 = vmul.f32 %v4986, %v4964
    %v4988 = vmul.f32 %v4987, %v4986
    %v4989 = vmul.f32 0.5, %v4988
    %v4990 = vsub.f32 1.5, %v4989
    %v4991 = vmul.f32 %v4986, %v4990
    %vm4992 = vweird.f32 %v4964
    %vm4993 = vweird.f32 %v4986
    %vm4994 = vmor %vm4992, %vm4993
    %v4995 = vsel %vm4994, %v4986, %v4991
    %v4996 = vrsqrt.pop %v4965
    %v4997 = vmul.f32 %v4996, %v4965
    %v4998 = vmul.f32 %v4997, %v4996
    %v4999 = vmul.f32 0.5, %v4998
    %v5000 = vsub.f32 1.5, %v4999
    %v5001 = vmul.f32 %v4996, %v5000
    %vm5002 = vweird.f32 %v4965
    %vm5003 = vweird.f32 %v4996
    %vm5004 = vmor %vm5002, %vm5003
    %v5005 = vsel %vm5004, %v4996, %v5001
    %v5011 = vunpack.c.l.s4 269488144
    %v5012 = vunpack.c.0.s8 %v5011
    %v5013 = vperm.slane %v4975, %v5012
    %v5015 = vunpack.c.l.s4 842150450
    %v5016 = vunpack.c.0.s8 %v5015
    %v5017 = vperm.slane %v4975, %v5016
    %v5019 = vunpack.c.l.s4 1414812756
    %v5020 = vunpack.c.0.s8 %v5019
    %v5021 = vperm.slane %v4975, %v5020
    %v5023 = vunpack.c.l.s4 1987475062
    %v5024 = vunpack.c.0.s8 %v5023
    %v5025 = vperm.slane %v4975, %v5024
    %v5027 = vunpack.c.l.s4 269488144
    %v5028 = vunpack.c.0.s8 %v5027
    %v5029 = vperm.slane %v4985, %v5028
    %v5031 = vunpack.c.l.s4 842150450
    %v5032 = vunpack.c.0.s8 %v5031
    %v5033 = vperm.slane %v4985, %v5032
    %v5035 = vunpack.c.l.s4 1414812756
    %v5036 = vunpack.c.0.s8 %v5035
    %v5037 = vperm.slane %v4985, %v5036
    %v5039 = vunpack.c.l.s4 269488144
    %v5040 = vunpack.c.0.s8 %v5039
    %v5041 = vperm.slane %v4995, %v5040
    %v5043 = vunpack.c.l.s4 842150450
    %v5044 = vunpack.c.0.s8 %v5043
    %v5045 = vperm.slane %v4995, %v5044
    %v5047 = vunpack.c.l.s4 1414812756
    %v5048 = vunpack.c.0.s8 %v5047
    %v5049 = vperm.slane %v4995, %v5048
    %v5051 = vunpack.c.l.s4 1987475062
    %v5052 = vunpack.c.0.s8 %v5051
    %v5053 = vperm.slane %v4995, %v5052
    %v5055 = vunpack.c.l.s4 269488144
    %v5056 = vunpack.c.0.s8 %v5055
    %v5057 = vperm.slane %v5005, %v5056
    %v5059 = vunpack.c.l.s4 842150450
    %v5060 = vunpack.c.0.s8 %v5059
    %v5061 = vperm.slane %v5005, %v5060
    %v5063 = vunpack.c.l.s4 1414812756
    %v5064 = vunpack.c.0.s8 %v5063
    %v5065 = vperm.slane %v5005, %v5064
    %v5080 = vmul.f32 %v4940, %v5013
    %v5081 = vmul.f32 %v4941, %v5017
    %v5082 = vmul.f32 %v4942, %v5021
    %v5083 = vmul.f32 %v4943, %v5025
    %v5084 = vmul.f32 %v4944, %v5029
    %v5085 = vmul.f32 %v4945, %v5033
    %v5086 = vmul.f32 %v4946, %v5037
    %v5087 = vmul.f32 %v4947, %v5041
    %v5088 = vmul.f32 %v4948, %v5045
    %v5089 = vmul.f32 %v4949, %v5049
    %v5090 = vmul.f32 %v4950, %v5053
    %v5091 = vmul.f32 %v4951, %v5057
    %v5092 = vmul.f32 %v4952, %v5061
    %v5093 = vmul.f32 %v4953, %v5065
    %v5094 = vperm.slane %v4734, 0
    %v5096 = vrot.slane %v5094, 2
    %v5097 = vrot.slane %v5094, 4
    %v5098 = vrot.slane %v5094, 6
    %v5102 = vmul.f32 %v5080, %v5094
    %v5103 = vmul.f32 %v5081, %v5096
    %v5104 = vmul.f32 %v5082, %v5097
    %v5105 = vmul.f32 %v5083, %v5098
    %v5106 = vmul.f32 %v5084, %v5094
    %v5107 = vmul.f32 %v5085, %v5096
    %v5108 = vmul.f32 %v5086, %v5097
    %v5109 = vmul.f32 %v5087, %v5094
    %v5110 = vmul.f32 %v5088, %v5096
    %v5111 = vmul.f32 %v5089, %v5097
    %v5112 = vmul.f32 %v5090, %v5098
    %v5113 = vmul.f32 %v5091, %v5094
    %v5114 = vmul.f32 %v5092, %v5096
    %v5115 = vmul.f32 %v5093, %v5097
    %v5116 = vperm.slane %v4735, 0
    %v5118 = vrot.slane %v5116, 2
    %v5119 = vrot.slane %v5116, 4
    %v5120 = vrot.slane %v5116, 6
    %v5124 = vadd.f32 %v5102, %v5116
    %v5125 = vadd.f32 %v5103, %v5118
    %v5126 = vadd.f32 %v5104, %v5119
    %v5127 = vadd.f32 %v5105, %v5120
    %v5128 = vadd.f32 %v5106, %v5116
    %v5129 = vadd.f32 %v5107, %v5118
    %v5130 = vadd.f32 %v5108, %v5119
    %v5131 = vadd.f32 %v5109, %v5116
    %v5132 = vadd.f32 %v5110, %v5118
    %v5133 = vadd.f32 %v5111, %v5119
    %v5134 = vadd.f32 %v5112, %v5120
    %v5135 = vadd.f32 %v5113, %v5116
    %v5136 = vadd.f32 %v5114, %v5118
    %v5137 = vadd.f32 %v5115, %v5119
    %v5138 = vld [vmem:[%s3228 + $0x40] sm:$0xff]
    %v5139 = vld [vmem:[%s3228 + $0x48] sm:$0xff]
    %v5140 = vld [vmem:[%s3228 + $0x50] sm:$0xff]
    %v5141 = vld [vmem:[%s3228 + $0x58] sm:$0xff]
    %v5142 = vld [vmem:[%s2823 + $0x6] sm:$0x1]
    %v5143 = vperm.slane %v5142, 0
    %v5145 = vrot.slane %v5143, 2
    %v5146 = vrot.slane %v5143, 4
    %v5147 = vrot.slane %v5143, 6
    %5162 = vst [vmem:[#allocation1] ss:$4 sm:$0xff] %v5124
    %s5163 = scalar_lea.vmem [#allocation1], 1
    %5164 = vst [vmem:[%s5163] ss:$4 sm:$0xff] %v5125
    %s5165 = scalar_lea.vmem [#allocation1], 2
    %5166 = vst [vmem:[%s5165] ss:$4 sm:$0xff] %v5126
    %s5167 = scalar_lea.vmem [#allocation1], 3
    %5168 = vst [vmem:[%s5167] ss:$4 sm:$0xff] %v5127
    %s5169 = scalar_lea.vmem [#allocation1], 32
    %5170 = vst [vmem:[%s5169] ss:$4 sm:$0xff] %v5128
    %s5171 = scalar_lea.vmem [#allocation1], 33
    %5172 = vst [vmem:[%s5171] ss:$4 sm:$0xff] %v5129
    %s5173 = scalar_lea.vmem [#allocation1], 34
    %5174 = vst [vmem:[%s5173] ss:$4 sm:$0xff] %v5130
    %s5175 = scalar_lea.vmem [#allocation1], 35
    %5176 = vst [vmem:[%s5175] ss:$4 sm:$0xff] %v5131
    %v5177 = vld.sshfl [vmem:[#allocation1] sm:$0xff pattern:$0x73625140]
    %v5178 = vld.sshfl [vmem:[#allocation1 + $0x20] sm:$0xff pattern:$0x73625140]
    %5179 = vst [vmem:[#allocation1] ss:$4 sm:$0xff] %v5132
    %5180 = vst [vmem:[%s5163] ss:$4 sm:$0xff] %v5133
    %5181 = vst [vmem:[%s5165] ss:$4 sm:$0xff] %v5134
    %5182 = vst [vmem:[%s5167] ss:$4 sm:$0xff] %v5135
    %5183 = vst [vmem:[%s5169] ss:$4 sm:$0xff] %v5136
    %5184 = vst [vmem:[%s5171] ss:$4 sm:$0xff] %v5137
    %v5185 = vld.sshfl [vmem:[#allocation1] sm:$0xff pattern:$0x73625140]
    %v5186 = vld.sshfl [vmem:[#allocation1 + $0x20] sm:$0xff pattern:$0x73625140]
    %5187 = vst [vmem:[#allocation1] ss:$4 sm:$0xff] %v5143
    %s5188 = scalar_lea.vmem [#allocation1], 1
    %5189 = vst [vmem:[%s5188] ss:$4 sm:$0xff] %v5145
    %s5190 = scalar_lea.vmem [#allocation1], 2
    %5191 = vst [vmem:[%s5190] ss:$4 sm:$0xff] %v5146
    %s5192 = scalar_lea.vmem [#allocation1], 3
    %5193 = vst [vmem:[%s5192] ss:$4 sm:$0xff] %v5147
    %s5194 = scalar_lea.vmem [#allocation1], 32
    %5195 = vst [vmem:[%s5194] ss:$4 sm:$0xff] %v5143
    %s5196 = scalar_lea.vmem [#allocation1], 33
    %5197 = vst [vmem:[%s5196] ss:$4 sm:$0xff] %v5145
    %s5198 = scalar_lea.vmem [#allocation1], 34
    %5199 = vst [vmem:[%s5198] ss:$4 sm:$0xff] %v5146
    %s5200 = scalar_lea.vmem [#allocation1], 35
    %5201 = vst [vmem:[%s5200] ss:$4 sm:$0xff] %v5143
    %v5202 = vld.sshfl [vmem:[#allocation1] sm:$0xff pattern:$0x73625140]
    %v5203 = vld.sshfl [vmem:[#allocation1 + $0x20] sm:$0xff pattern:$0x73625140]
    %5204 = vst [vmem:[#allocation1] ss:$4 sm:$0xff] %v5145
    %5205 = vst [vmem:[%s5188] ss:$4 sm:$0xff] %v5146
    %5206 = vst [vmem:[%s5190] ss:$4 sm:$0xff] %v5147
    %5207 = vst [vmem:[%s5192] ss:$4 sm:$0xff] %v5143
    %5208 = vst [vmem:[%s5194] ss:$4 sm:$0xff] %v5145
    %5209 = vst [vmem:[%s5196] ss:$4 sm:$0xff] %v5146
    %v5210 = vld.sshfl [vmem:[#allocation1] sm:$0xff pattern:$0x73625140]
    %v5211 = vld.sshfl [vmem:[#allocation1 + $0x20] sm:$0xff pattern:$0x73625140]
    %v5216 = vsel %vm203, %v5177, 0
    %v5218 = vsel %vm203, %v5178, 0
    %v5220 = vsel %vm203, %v5185, 0
    %v5222 = vsel %vm203, %v5186, 0
    %5224 = vmatpush.msra.mxu0 0.0
    %5225 = vmatpush.msra.mxu0 0.0
    %5226 = vmatpush.msra.mxu0 0.0
    %5227 = vmatpush.msra.mxu0 0.0
    %5228 = vmatpush.msra.mxu0 0.0
    %5229 = vmatpush.msra.mxu0 0.0
    %5230 = vmatpush.msra.mxu0 0.0
    %5231 = vmatpush.msra.mxu0 0.0
    %5232 = vmatpush.msra.mxu0 0.0
    %5233 = vmatpush.msra.mxu0 0.0
    %5234 = vmatpush.msra.mxu0 0.0
    %5235 = vmatpush.msra.mxu0 0.0
    %5236 = vmatpush.msra.mxu0 %v5141
    %5237 = vmatpush.msra.mxu0 %v5140
    %5238 = vmatpush.msra.mxu0 %v5139
    %5239 = vmatpush.msra.mxu0 %v5138
    %5240 = vmatmul.f32.gmra.mxu0 %v5216
    %v5241 = vpop.f32.mrf.mxu0
    %v5242 = vadd.f32 %v5202, %v5241
    %5243 = vmatmul.f32.gmra.mxu0 %v5218
    %v5244 = vpop.f32.mrf.mxu0
    %v5245 = vadd.f32 %v5203, %v5244
    %5246 = vmatmul.f32.gmra.mxu0 %v5220
    %v5247 = vpop.f32.mrf.mxu0
    %v5248 = vadd.f32 %v5210, %v5247
    %5249 = vmatmul.f32.gmra.mxu0 %v5222
    %v5250 = vpop.f32.mrf.mxu0
    %v5251 = vadd.f32 %v5211, %v5250
    %5252 = vdwg.mxu0
    %v5257 = vrot.slane %v5242, 2
    %v5258 = vrot.slane %v5242, 4
    %v5259 = vrot.slane %v5242, 6
    %v5260 = vrot.slane %v5245, 2
    %v5261 = vrot.slane %v5245, 4
    %v5262 = vrot.slane %v5245, 6
    %v5263 = vrot.slane %v5248, 2
    %v5264 = vrot.slane %v5248, 4
    %v5265 = vrot.slane %v5248, 6
    %v5266 = vrot.slane %v5251, 2
    %v5277 = vmax.f32 %v5242, 0.0
    %v5278 = vmax.f32 %v5257, 0.0
    %v5279 = vmax.f32 %v5258, 0.0
    %v5280 = vmax.f32 %v5259, 0.0
    %v5281 = vmax.f32 %v5245, 0.0
    %v5282 = vmax.f32 %v5260, 0.0
    %v5283 = vmax.f32 %v5261, 0.0
    %v5284 = vmax.f32 %v5262, 0.0
    %v5285 = vmax.f32 %v5248, 0.0
    %v5286 = vmax.f32 %v5263, 0.0
    %v5287 = vmax.f32 %v5264, 0.0
    %v5288 = vmax.f32 %v5265, 0.0
    %v5289 = vmax.f32 %v5251, 0.0
    %v5290 = vmax.f32 %v5266, 0.0
    %v5291 = vld [vmem:[%s3228 + $0x60] sm:$0xff]
    %v5292 = vld [vmem:[%s3228 + $0x68] sm:$0xff]
    %v5293 = vld [vmem:[%s3228 + $0x70] sm:$0xff]
    %v5294 = vld [vmem:[%s3228 + $0x78] sm:$0xff]
    %v5295 = vld [vmem:[%s3228 + $0x80] sm:$0xff]
    %v5296 = vld [vmem:[%s3228 + $0x88] sm:$0xff]
    %v5297 = vld [vmem:[%s3228 + $0x90] sm:$0xff]
    %v5298 = vld [vmem:[%s3228 + $0x98] sm:$0xff]
    %v5299 = vld [vmem:[%s2823 + $0x5] sm:$0x1]
    %v5300 = vperm.slane %v5299, 0
    %v5302 = vrot.slane %v5300, 2
    %v5303 = vrot.slane %v5300, 4
    %v5304 = vrot.slane %v5300, 6
    %5319 = vst [vmem:[#allocation1] ss:$4 sm:$0xff] %v5277
    %s5320 = scalar_lea.vmem [#allocation1], 1
    %5321 = vst [vmem:[%s5320] ss:$4 sm:$0xff] %v5278
    %s5322 = scalar_lea.vmem [#allocation1], 2
    %5323 = vst [vmem:[%s5322] ss:$4 sm:$0xff] %v5279
    %s5324 = scalar_lea.vmem [#allocation1], 3
    %5325 = vst [vmem:[%s5324] ss:$4 sm:$0xff] %v5280
    %s5326 = scalar_lea.vmem [#allocation1], 32
    %5327 = vst [vmem:[%s5326] ss:$4 sm:$0xff] %v5281
    %s5328 = scalar_lea.vmem [#allocation1], 33
    %5329 = vst [vmem:[%s5328] ss:$4 sm:$0xff] %v5282
    %s5330 = scalar_lea.vmem [#allocation1], 34
    %5331 = vst [vmem:[%s5330] ss:$4 sm:$0xff] %v5283
    %s5332 = scalar_lea.vmem [#allocation1], 35
    %5333 = vst [vmem:[%s5332] ss:$4 sm:$0xff] %v5284
    %v5334 = vld.sshfl [vmem:[#allocation1] sm:$0xff pattern:$0x73625140]
    %v5335 = vld.sshfl [vmem:[#allocation1 + $0x20] sm:$0xff pattern:$0x73625140]
    %5336 = vst [vmem:[#allocation1] ss:$4 sm:$0xff] %v5285
    %5337 = vst [vmem:[%s5320] ss:$4 sm:$0xff] %v5286
    %5338 = vst [vmem:[%s5322] ss:$4 sm:$0xff] %v5287
    %5339 = vst [vmem:[%s5324] ss:$4 sm:$0xff] %v5288
    %5340 = vst [vmem:[%s5326] ss:$4 sm:$0xff] %v5289
    %5341 = vst [vmem:[%s5328] ss:$4 sm:$0xff] %v5290
    %v5342 = vld.sshfl [vmem:[#allocation1] sm:$0xff pattern:$0x73625140]
    %v5343 = vld.sshfl [vmem:[#allocation1 + $0x20] sm:$0xff pattern:$0x73625140]
    %5344 = vst [vmem:[#allocation1] ss:$4 sm:$0xff] %v5300
    %s5345 = scalar_lea.vmem [#allocation1], 1
    %5346 = vst [vmem:[%s5345] ss:$4 sm:$0xff] %v5302
    %s5347 = scalar_lea.vmem [#allocation1], 2
    %5348 = vst [vmem:[%s5347] ss:$4 sm:$0xff] %v5303
    %s5349 = scalar_lea.vmem [#allocation1], 3
    %5350 = vst [vmem:[%s5349] ss:$4 sm:$0xff] %v5304
    %s5351 = scalar_lea.vmem [#allocation1], 32
    %5352 = vst [vmem:[%s5351] ss:$4 sm:$0xff] %v5300
    %s5353 = scalar_lea.vmem [#allocation1], 33
    %5354 = vst [vmem:[%s5353] ss:$4 sm:$0xff] %v5302
    %s5355 = scalar_lea.vmem [#allocation1], 34
    %5356 = vst [vmem:[%s5355] ss:$4 sm:$0xff] %v5303
    %s5357 = scalar_lea.vmem [#allocation1], 35
    %5358 = vst [vmem:[%s5357] ss:$4 sm:$0xff] %v5300
    %v5359 = vld.sshfl [vmem:[#allocation1] sm:$0xff pattern:$0x73625140]
    %v5360 = vld.sshfl [vmem:[#allocation1 + $0x20] sm:$0xff pattern:$0x73625140]
    %5361 = vst [vmem:[#allocation1] ss:$4 sm:$0xff] %v5302
    %5362 = vst [vmem:[%s5345] ss:$4 sm:$0xff] %v5303
    %5363 = vst [vmem:[%s5347] ss:$4 sm:$0xff] %v5304
    %5364 = vst [vmem:[%s5349] ss:$4 sm:$0xff] %v5300
    %5365 = vst [vmem:[%s5351] ss:$4 sm:$0xff] %v5302
    %5366 = vst [vmem:[%s5353] ss:$4 sm:$0xff] %v5303
    %v5367 = vld.sshfl [vmem:[#allocation1] sm:$0xff pattern:$0x73625140]
    %v5368 = vld.sshfl [vmem:[#allocation1 + $0x20] sm:$0xff pattern:$0x73625140]
    %v5373 = vsel %vm2747, %v5334, 0
    %v5375 = vsel %vm2747, %v5335, 0
    %v5377 = vsel %vm2747, %v5342, 0
    %v5379 = vsel %vm2747, %v5343, 0
    %5381 = vmatpush.msra.mxu0 0.0
    %5382 = vmatpush.msra.mxu0 0.0
    %5383 = vmatpush.msra.mxu0 0.0
    %5384 = vmatpush.msra.mxu0 0.0
    %5385 = vmatpush.msra.mxu0 0.0
    %5386 = vmatpush.msra.mxu0 0.0
    %5387 = vmatpush.msra.mxu0 0.0
    %5388 = vmatpush.msra.mxu0 0.0
    %5389 = vmatpush.msra.mxu0 %v5298
    %5390 = vmatpush.msra.mxu0 %v5297
    %5391 = vmatpush.msra.mxu0 %v5296
    %5392 = vmatpush.msra.mxu0 %v5295
    %5393 = vmatpush.msra.mxu0 %v5294
    %5394 = vmatpush.msra.mxu0 %v5293
    %5395 = vmatpush.msra.mxu0 %v5292
    %5396 = vmatpush.msra.mxu0 %v5291
    %5397 = vmatmul.f32.gmra.mxu0 %v5373
    %v5398 = vpop.f32.mrf.mxu0
    %v5399 = vadd.f32 %v5359, %v5398
    %5400 = vmatmul.f32.gmra.mxu0 %v5375
    %v5401 = vpop.f32.mrf.mxu0
    %v5402 = vadd.f32 %v5360, %v5401
    %5403 = vmatmul.f32.gmra.mxu0 %v5377
    %v5404 = vpop.f32.mrf.mxu0
    %v5405 = vadd.f32 %v5367, %v5404
    %5406 = vmatmul.f32.gmra.mxu0 %v5379
    %v5407 = vpop.f32.mrf.mxu0
    %v5408 = vadd.f32 %v5368, %v5407
    %5409 = vdwg.mxu0
    %v5414 = vrot.slane %v5399, 2
    %v5415 = vrot.slane %v5399, 4
    %v5416 = vrot.slane %v5399, 6
    %v5417 = vrot.slane %v5402, 2
    %v5418 = vrot.slane %v5402, 4
    %v5419 = vrot.slane %v5402, 6
    %v5420 = vrot.slane %v5405, 2
    %v5421 = vrot.slane %v5405, 4
    %v5422 = vrot.slane %v5405, 6
    %v5423 = vrot.slane %v5408, 2
    %v5434 = vadd.f32 %v5399, %v4720
    %v5435 = vadd.f32 %v5414, %v4721
    %v5436 = vadd.f32 %v5415, %v4722
    %v5437 = vadd.f32 %v5416, %v4723
    %v5438 = vadd.f32 %v5402, %v4724
    %v5439 = vadd.f32 %v5417, %v4725
    %v5440 = vadd.f32 %v5418, %v4726
    %v5441 = vadd.f32 %v5419, %v4727
    %v5442 = vadd.f32 %v5405, %v4728
    %v5443 = vadd.f32 %v5420, %v4729
    %v5444 = vadd.f32 %v5421, %v4730
    %v5445 = vadd.f32 %v5422, %v4731
    %v5446 = vadd.f32 %v5408, %v4732
    %v5447 = vadd.f32 %v5423, %v4733
    %s5448 = scalar_lea.vmem %s4, 16
    %v5449 = vld [vmem:[%s5448] sm:$0x1]
    %v5450 = vld [vmem:[%s5448 + $0x1] sm:$0x1]
    %5465 = vst [vmem:[#allocation1] ss:$4 sm:$0xff] %v5434
    %s5466 = scalar_lea.vmem [#allocation1], 1
    %5467 = vst [vmem:[%s5466] ss:$4 sm:$0xff] %v5435
    %s5468 = scalar_lea.vmem [#allocation1], 2
    %5469 = vst [vmem:[%s5468] ss:$4 sm:$0xff] %v5436
    %s5470 = scalar_lea.vmem [#allocation1], 3
    %5471 = vst [vmem:[%s5470] ss:$4 sm:$0xff] %v5437
    %s5472 = scalar_lea.vmem [#allocation1], 32
    %5473 = vst [vmem:[%s5472] ss:$4 sm:$0xff] %v5438
    %s5474 = scalar_lea.vmem [#allocation1], 33
    %5475 = vst [vmem:[%s5474] ss:$4 sm:$0xff] %v5439
    %s5476 = scalar_lea.vmem [#allocation1], 34
    %5477 = vst [vmem:[%s5476] ss:$4 sm:$0xff] %v5440
    %v5478 = vld.sshfl [vmem:[#allocation1] sm:$0xff pattern:$0x73625140]
    %v5479 = vld.sshfl [vmem:[#allocation1 + $0x20] sm:$0xff pattern:$0x73625140]
    %5480 = vst [vmem:[#allocation1] ss:$4 sm:$0xff] %v5441
    %5481 = vst [vmem:[%s5466] ss:$4 sm:$0xff] %v5442
    %5482 = vst [vmem:[%s5468] ss:$4 sm:$0xff] %v5443
    %5483 = vst [vmem:[%s5470] ss:$4 sm:$0xff] %v5444
    %5484 = vst [vmem:[%s5472] ss:$4 sm:$0xff] %v5445
    %5485 = vst [vmem:[%s5474] ss:$4 sm:$0xff] %v5446
    %5486 = vst [vmem:[%s5476] ss:$4 sm:$0xff] %v5447
    %v5487 = vld.sshfl [vmem:[#allocation1] sm:$0xff pattern:$0x73625140]
    %v5488 = vld.sshfl [vmem:[#allocation1 + $0x20] sm:$0xff pattern:$0x73625140]
    %v5493 = vsel %vm203, %v5478, 0.0
    %5494 = vadd.xlane.f32.xlu0 %v5493
    %v5495 = vpop.xlane.xlu0 %5494
    %v5496 = vsel %vm207, %v5479, 0.0
    %5497 = vadd.xlane.f32.xlu0 %v5496
    %v5498 = vpop.xlane.xlu0 %5497
    %v5499 = vsel %vm203, %v5487, 0.0
    %5500 = vadd.xlane.f32.xlu0 %v5499
    %v5501 = vpop.xlane.xlu0 %5500
    %v5502 = vsel %vm207, %v5488, 0.0
    %5503 = vadd.xlane.f32.xlu0 %v5502
    %v5504 = vpop.xlane.xlu0 %5503
    %v5505 = vmul.f32 %v5495, %v223
    %v5506 = vmul.f32 %v5498, %v223
    %v5507 = vmul.f32 %v5501, %v223
    %v5508 = vmul.f32 %v5504, %v223
    %v5509 = vmul.f32 %v5434, %v5434
    %v5510 = vmul.f32 %v5435, %v5435
    %v5511 = vmul.f32 %v5436, %v5436
    %v5512 = vmul.f32 %v5437, %v5437
    %v5513 = vmul.f32 %v5438, %v5438
    %v5514 = vmul.f32 %v5439, %v5439
    %v5515 = vmul.f32 %v5440, %v5440
    %v5516 = vmul.f32 %v5441, %v5441
    %v5517 = vmul.f32 %v5442, %v5442
    %v5518 = vmul.f32 %v5443, %v5443
    %v5519 = vmul.f32 %v5444, %v5444
    %v5520 = vmul.f32 %v5445, %v5445
    %v5521 = vmul.f32 %v5446, %v5446
    %v5522 = vmul.f32 %v5447, %v5447
    %5537 = vst [vmem:[#allocation1] ss:$4 sm:$0xff] %v5509
    %s5538 = scalar_lea.vmem [#allocation1], 1
    %5539 = vst [vmem:[%s5538] ss:$4 sm:$0xff] %v5510
    %s5540 = scalar_lea.vmem [#allocation1], 2
    %5541 = vst [vmem:[%s5540] ss:$4 sm:$0xff] %v5511
    %s5542 = scalar_lea.vmem [#allocation1], 3
    %5543 = vst [vmem:[%s5542] ss:$4 sm:$0xff] %v5512
    %s5544 = scalar_lea.vmem [#allocation1], 32
    %5545 = vst [vmem:[%s5544] ss:$4 sm:$0xff] %v5513
    %s5546 = scalar_lea.vmem [#allocation1], 33
    %5547 = vst [vmem:[%s5546] ss:$4 sm:$0xff] %v5514
    %s5548 = scalar_lea.vmem [#allocation1], 34
    %5549 = vst [vmem:[%s5548] ss:$4 sm:$0xff] %v5515
    %v5550 = vld.sshfl [vmem:[#allocation1] sm:$0xff pattern:$0x73625140]
    %v5551 = vld.sshfl [vmem:[#allocation1 + $0x20] sm:$0xff pattern:$0x73625140]
    %5552 = vst [vmem:[#allocation1] ss:$4 sm:$0xff] %v5516
    %5553 = vst [vmem:[%s5538] ss:$4 sm:$0xff] %v5517
    %5554 = vst [vmem:[%s5540] ss:$4 sm:$0xff] %v5518
    %5555 = vst [vmem:[%s5542] ss:$4 sm:$0xff] %v5519
    %5556 = vst [vmem:[%s5544] ss:$4 sm:$0xff] %v5520
    %5557 = vst [vmem:[%s5546] ss:$4 sm:$0xff] %v5521
    %5558 = vst [vmem:[%s5548] ss:$4 sm:$0xff] %v5522
    %v5559 = vld.sshfl [vmem:[#allocation1] sm:$0xff pattern:$0x73625140]
    %v5560 = vld.sshfl [vmem:[#allocation1 + $0x20] sm:$0xff pattern:$0x73625140]
    %v5565 = vsel %vm203, %v5550, 0.0
    %5566 = vadd.xlane.f32.xlu0 %v5565
    %v5567 = vpop.xlane.xlu0 %5566
    %v5568 = vsel %vm207, %v5551, 0.0
    %5569 = vadd.xlane.f32.xlu0 %v5568
    %v5570 = vpop.xlane.xlu0 %5569
    %v5571 = vsel %vm203, %v5559, 0.0
    %5572 = vadd.xlane.f32.xlu0 %v5571
    %v5573 = vpop.xlane.xlu0 %5572
    %v5574 = vsel %vm207, %v5560, 0.0
    %5575 = vadd.xlane.f32.xlu0 %v5574
    %v5576 = vpop.xlane.xlu0 %5575
    %v5577 = vmul.f32 %v5567, %v223
    %v5578 = vmul.f32 %v5570, %v223
    %v5579 = vmul.f32 %v5573, %v223
    %v5580 = vmul.f32 %v5576, %v223
    %v5586 = vunpack.c.l.s4 269488144
    %v5587 = vunpack.c.0.s8 %v5586
    %v5588 = vperm.slane %v5505, %v5587
    %v5590 = vunpack.c.l.s4 842150450
    %v5591 = vunpack.c.0.s8 %v5590
    %v5592 = vperm.slane %v5505, %v5591
    %v5594 = vunpack.c.l.s4 1414812756
    %v5595 = vunpack.c.0.s8 %v5594
    %v5596 = vperm.slane %v5505, %v5595
    %v5598 = vunpack.c.l.s4 1987475062
    %v5599 = vunpack.c.0.s8 %v5598
    %v5600 = vperm.slane %v5505, %v5599
    %v5602 = vunpack.c.l.s4 269488144
    %v5603 = vunpack.c.0.s8 %v5602
    %v5604 = vperm.slane %v5506, %v5603
    %v5606 = vunpack.c.l.s4 842150450
    %v5607 = vunpack.c.0.s8 %v5606
    %v5608 = vperm.slane %v5506, %v5607
    %v5610 = vunpack.c.l.s4 1414812756
    %v5611 = vunpack.c.0.s8 %v5610
    %v5612 = vperm.slane %v5506, %v5611
    %v5614 = vunpack.c.l.s4 269488144
    %v5615 = vunpack.c.0.s8 %v5614
    %v5616 = vperm.slane %v5507, %v5615
    %v5618 = vunpack.c.l.s4 842150450
    %v5619 = vunpack.c.0.s8 %v5618
    %v5620 = vperm.slane %v5507, %v5619
    %v5622 = vunpack.c.l.s4 1414812756
    %v5623 = vunpack.c.0.s8 %v5622
    %v5624 = vperm.slane %v5507, %v5623
    %v5626 = vunpack.c.l.s4 1987475062
    %v5627 = vunpack.c.0.s8 %v5626
    %v5628 = vperm.slane %v5507, %v5627
    %v5630 = vunpack.c.l.s4 269488144
    %v5631 = vunpack.c.0.s8 %v5630
    %v5632 = vperm.slane %v5508, %v5631
    %v5634 = vunpack.c.l.s4 842150450
    %v5635 = vunpack.c.0.s8 %v5634
    %v5636 = vperm.slane %v5508, %v5635
    %v5638 = vunpack.c.l.s4 1414812756
    %v5639 = vunpack.c.0.s8 %v5638
    %v5640 = vperm.slane %v5508, %v5639
    %v5655 = vsub.f32 %v5434, %v5588
    %v5656 = vsub.f32 %v5435, %v5592
    %v5657 = vsub.f32 %v5436, %v5596
    %v5658 = vsub.f32 %v5437, %v5600
    %v5659 = vsub.f32 %v5438, %v5604
    %v5660 = vsub.f32 %v5439, %v5608
    %v5661 = vsub.f32 %v5440, %v5612
    %v5662 = vsub.f32 %v5441, %v5616
    %v5663 = vsub.f32 %v5442, %v5620
    %v5664 = vsub.f32 %v5443, %v5624
    %v5665 = vsub.f32 %v5444, %v5628
    %v5666 = vsub.f32 %v5445, %v5632
    %v5667 = vsub.f32 %v5446, %v5636
    %v5668 = vsub.f32 %v5447, %v5640
    %v5669 = vmul.f32 %v5505, %v5505
    %v5670 = vmul.f32 %v5506, %v5506
    %v5671 = vmul.f32 %v5507, %v5507
    %v5672 = vmul.f32 %v5508, %v5508
    %v5673 = vsub.f32 %v5577, %v5669
    %v5674 = vsub.f32 %v5578, %v5670
    %v5675 = vsub.f32 %v5579, %v5671
    %v5676 = vsub.f32 %v5580, %v5672
    %v5677 = vadd.f32 %v5673, 1e-05
    %v5678 = vadd.f32 %v5674, 1e-05
    %v5679 = vadd.f32 %v5675, 1e-05
    %v5680 = vadd.f32 %v5676, 1e-05
    %v5681 = vrsqrt.pop %v5677
    %v5682 = vmul.f32 %v5681, %v5677
    %v5683 = vmul.f32 %v5682, %v5681
    %v5684 = vmul.f32 0.5, %v5683
    %v5685 = vsub.f32 1.5, %v5684
    %v5686 = vmul.f32 %v5681, %v5685
    %vm5687 = vweird.f32 %v5677
    %vm5688 = vweird.f32 %v5681
    %vm5689 = vmor %vm5687, %vm5688
    %v5690 = vsel %vm5689, %v5681, %v5686
    %v5691 = vrsqrt.pop %v5678
    %v5692 = vmul.f32 %v5691, %v5678
    %v5693 = vmul.f32 %v5692, %v5691
    %v5694 = vmul.f32 0.5, %v5693
    %v5695 = vsub.f32 1.5, %v5694
    %v5696 = vmul.f32 %v5691, %v5695
    %vm5697 = vweird.f32 %v5678
    %vm5698 = vweird.f32 %v5691
    %vm5699 = vmor %vm5697, %vm5698
    %v5700 = vsel %vm5699, %v5691, %v5696
    %v5701 = vrsqrt.pop %v5679
    %v5702 = vmul.f32 %v5701, %v5679
    %v5703 = vmul.f32 %v5702, %v5701
    %v5704 = vmul.f32 0.5, %v5703
    %v5705 = vsub.f32 1.5, %v5704
    %v5706 = vmul.f32 %v5701, %v5705
    %vm5707 = vweird.f32 %v5679
    %vm5708 = vweird.f32 %v5701
    %vm5709 = vmor %vm5707, %vm5708
    %v5710 = vsel %vm5709, %v5701, %v5706
    %v5711 = vrsqrt.pop %v5680
    %v5712 = vmul.f32 %v5711, %v5680
    %v5713 = vmul.f32 %v5712, %v5711
    %v5714 = vmul.f32 0.5, %v5713
    %v5715 = vsub.f32 1.5, %v5714
    %v5716 = vmul.f32 %v5711, %v5715
    %vm5717 = vweird.f32 %v5680
    %vm5718 = vweird.f32 %v5711
    %vm5719 = vmor %vm5717, %vm5718
    %v5720 = vsel %vm5719, %v5711, %v5716
    %v5726 = vunpack.c.l.s4 269488144
    %v5727 = vunpack.c.0.s8 %v5726
    %v5728 = vperm.slane %v5690, %v5727
    %v5730 = vunpack.c.l.s4 842150450
    %v5731 = vunpack.c.0.s8 %v5730
    %v5732 = vperm.slane %v5690, %v5731
    %v5734 = vunpack.c.l.s4 1414812756
    %v5735 = vunpack.c.0.s8 %v5734
    %v5736 = vperm.slane %v5690, %v5735
    %v5738 = vunpack.c.l.s4 1987475062
    %v5739 = vunpack.c.0.s8 %v5738
    %v5740 = vperm.slane %v5690, %v5739
    %v5742 = vunpack.c.l.s4 269488144
    %v5743 = vunpack.c.0.s8 %v5742
    %v5744 = vperm.slane %v5700, %v5743
    %v5746 = vunpack.c.l.s4 842150450
    %v5747 = vunpack.c.0.s8 %v5746
    %v5748 = vperm.slane %v5700, %v5747
    %v5750 = vunpack.c.l.s4 1414812756
    %v5751 = vunpack.c.0.s8 %v5750
    %v5752 = vperm.slane %v5700, %v5751
    %v5754 = vunpack.c.l.s4 269488144
    %v5755 = vunpack.c.0.s8 %v5754
    %v5756 = vperm.slane %v5710, %v5755
    %v5758 = vunpack.c.l.s4 842150450
    %v5759 = vunpack.c.0.s8 %v5758
    %v5760 = vperm.slane %v5710, %v5759
    %v5762 = vunpack.c.l.s4 1414812756
    %v5763 = vunpack.c.0.s8 %v5762
    %v5764 = vperm.slane %v5710, %v5763
    %v5766 = vunpack.c.l.s4 1987475062
    %v5767 = vunpack.c.0.s8 %v5766
    %v5768 = vperm.slane %v5710, %v5767
    %v5770 = vunpack.c.l.s4 269488144
    %v5771 = vunpack.c.0.s8 %v5770
    %v5772 = vperm.slane %v5720, %v5771
    %v5774 = vunpack.c.l.s4 842150450
    %v5775 = vunpack.c.0.s8 %v5774
    %v5776 = vperm.slane %v5720, %v5775
    %v5778 = vunpack.c.l.s4 1414812756
    %v5779 = vunpack.c.0.s8 %v5778
    %v5780 = vperm.slane %v5720, %v5779
    %v5795 = vmul.f32 %v5655, %v5728
    %v5796 = vmul.f32 %v5656, %v5732
    %v5797 = vmul.f32 %v5657, %v5736
    %v5798 = vmul.f32 %v5658, %v5740
    %v5799 = vmul.f32 %v5659, %v5744
    %v5800 = vmul.f32 %v5660, %v5748
    %v5801 = vmul.f32 %v5661, %v5752
    %v5802 = vmul.f32 %v5662, %v5756
    %v5803 = vmul.f32 %v5663, %v5760
    %v5804 = vmul.f32 %v5664, %v5764
    %v5805 = vmul.f32 %v5665, %v5768
    %v5806 = vmul.f32 %v5666, %v5772
    %v5807 = vmul.f32 %v5667, %v5776
    %v5808 = vmul.f32 %v5668, %v5780
    %v5809 = vperm.slane %v5449, 0
    %v5811 = vrot.slane %v5809, 2
    %v5812 = vrot.slane %v5809, 4
    %v5813 = vrot.slane %v5809, 6
    %v5817 = vmul.f32 %v5795, %v5809
    %v5818 = vmul.f32 %v5796, %v5811
    %v5819 = vmul.f32 %v5797, %v5812
    %v5820 = vmul.f32 %v5798, %v5813
    %v5821 = vmul.f32 %v5799, %v5809
    %v5822 = vmul.f32 %v5800, %v5811
    %v5823 = vmul.f32 %v5801, %v5812
    %v5824 = vmul.f32 %v5802, %v5809
    %v5825 = vmul.f32 %v5803, %v5811
    %v5826 = vmul.f32 %v5804, %v5812
    %v5827 = vmul.f32 %v5805, %v5813
    %v5828 = vmul.f32 %v5806, %v5809
    %v5829 = vmul.f32 %v5807, %v5811
    %v5830 = vmul.f32 %v5808, %v5812
    %v5831 = vperm.slane %v5450, 0
    %v5833 = vrot.slane %v5831, 2
    %v5834 = vrot.slane %v5831, 4
    %v5835 = vrot.slane %v5831, 6
    %v5839 = vadd.f32 %v5817, %v5831
    %v5840 = vadd.f32 %v5818, %v5833
    %v5841 = vadd.f32 %v5819, %v5834
    %v5842 = vadd.f32 %v5820, %v5835
    %v5843 = vadd.f32 %v5821, %v5831
    %v5844 = vadd.f32 %v5822, %v5833
    %v5845 = vadd.f32 %v5823, %v5834
    %v5846 = vadd.f32 %v5824, %v5831
    %v5847 = vadd.f32 %v5825, %v5833
    %v5848 = vadd.f32 %v5826, %v5834
    %v5849 = vadd.f32 %v5827, %v5835
    %v5850 = vadd.f32 %v5828, %v5831
    %v5851 = vadd.f32 %v5829, %v5833
    %v5852 = vadd.f32 %v5830, %v5834
    %s5853 = scalar_lea.vmem [#allocation2], 320
    %v5854 = vld [vmem:[%s5853] sm:$0xff]
    %v5855 = vld [vmem:[%s5853 + $0x8] sm:$0xff]
    %v5856 = vld [vmem:[%s5853 + $0x10] sm:$0xff]
    %v5857 = vld [vmem:[%s5853 + $0x18] sm:$0xff]
    %5872 = vst [vmem:[#allocation1] ss:$4 sm:$0xff] %v5839
    %s5873 = scalar_lea.vmem [#allocation1], 1
    %5874 = vst [vmem:[%s5873] ss:$4 sm:$0xff] %v5840
    %s5875 = scalar_lea.vmem [#allocation1], 2
    %5876 = vst [vmem:[%s5875] ss:$4 sm:$0xff] %v5841
    %s5877 = scalar_lea.vmem [#allocation1], 3
    %5878 = vst [vmem:[%s5877] ss:$4 sm:$0xff] %v5842
    %s5879 = scalar_lea.vmem [#allocation1], 32
    %5880 = vst [vmem:[%s5879] ss:$4 sm:$0xff] %v5843
    %s5881 = scalar_lea.vmem [#allocation1], 33
    %5882 = vst [vmem:[%s5881] ss:$4 sm:$0xff] %v5844
    %s5883 = scalar_lea.vmem [#allocation1], 34
    %5884 = vst [vmem:[%s5883] ss:$4 sm:$0xff] %v5845
    %s5885 = scalar_lea.vmem [#allocation1], 35
    %5886 = vst [vmem:[%s5885] ss:$4 sm:$0xff] %v5846
    %v5887 = vld.sshfl [vmem:[#allocation1] sm:$0xff pattern:$0x73625140]
    %v5888 = vld.sshfl [vmem:[#allocation1 + $0x20] sm:$0xff pattern:$0x73625140]
    %5889 = vst [vmem:[#allocation1] ss:$4 sm:$0xff] %v5847
    %5890 = vst [vmem:[%s5873] ss:$4 sm:$0xff] %v5848
    %5891 = vst [vmem:[%s5875] ss:$4 sm:$0xff] %v5849
    %5892 = vst [vmem:[%s5877] ss:$4 sm:$0xff] %v5850
    %5893 = vst [vmem:[%s5879] ss:$4 sm:$0xff] %v5851
    %5894 = vst [vmem:[%s5881] ss:$4 sm:$0xff] %v5852
    %v5895 = vld.sshfl [vmem:[#allocation1] sm:$0xff pattern:$0x73625140]
    %v5896 = vld.sshfl [vmem:[#allocation1 + $0x20] sm:$0xff pattern:$0x73625140]
    %v5897 = vsel %vm203, %v5887, 0
    %v5899 = vsel %vm203, %v5888, 0
    %v5901 = vsel %vm203, %v5895, 0
    %v5903 = vsel %vm203, %v5896, 0
    %5905 = vmatpush.msra.mxu0 0.0
    %5906 = vmatpush.msra.mxu0 0.0
    %5907 = vmatpush.msra.mxu0 0.0
    %5908 = vmatpush.msra.mxu0 0.0
    %5909 = vmatpush.msra.mxu0 0.0
    %5910 = vmatpush.msra.mxu0 0.0
    %5911 = vmatpush.msra.mxu0 0.0
    %5912 = vmatpush.msra.mxu0 0.0
    %5913 = vmatpush.msra.mxu0 0.0
    %5914 = vmatpush.msra.mxu0 0.0
    %5915 = vmatpush.msra.mxu0 0.0
    %5916 = vmatpush.msra.mxu0 0.0
    %5917 = vmatpush.msra.mxu0 %v5857
    %5918 = vmatpush.msra.mxu0 %v5856
    %5919 = vmatpush.msra.mxu0 %v5855
    %5920 = vmatpush.msra.mxu0 %v5854
    %5921 = vmatmul.f32.gmra.mxu0 %v5897
    %v5922 = vpop.f32.mrf.mxu0
    %v5923 = vadd.f32 0.0, %v5922
    %5924 = vmatmul.f32.gmra.mxu0 %v5899
    %v5925 = vpop.f32.mrf.mxu0
    %v5926 = vadd.f32 0.0, %v5925
    %5927 = vmatmul.f32.gmra.mxu0 %v5901
    %v5928 = vpop.f32.mrf.mxu0
    %v5929 = vadd.f32 0.0, %v5928
    %5930 = vmatmul.f32.gmra.mxu0 %v5903
    %v5931 = vpop.f32.mrf.mxu0
    %v5932 = vadd.f32 0.0, %v5931
    %5933 = vdwg.mxu0
    %v5938 = vrot.slane %v5923, 2
    %v5939 = vrot.slane %v5923, 4
    %v5940 = vrot.slane %v5923, 6
    %v5941 = vrot.slane %v5926, 2
    %v5942 = vrot.slane %v5926, 4
    %v5943 = vrot.slane %v5926, 6
    %v5944 = vrot.slane %v5929, 2
    %v5945 = vrot.slane %v5929, 4
    %v5946 = vrot.slane %v5929, 6
    %v5947 = vrot.slane %v5932, 2
    %v5958 = vmul.f32 %v5923, %v157
    %v5959 = vmul.f32 %v5938, %v677
    %v5960 = vmul.f32 %v5939, %v678
    %v5961 = vmul.f32 %v5940, %v679
    %v5962 = vmul.f32 %v5926, %v157
    %v5963 = vmul.f32 %v5941, %v677
    %v5964 = vmul.f32 %v5942, %v678
    %v5965 = vmul.f32 %v5943, %v157
    %v5966 = vmul.f32 %v5929, %v677
    %v5967 = vmul.f32 %v5944, %v678
    %v5968 = vmul.f32 %v5945, %v679
    %v5969 = vmul.f32 %v5946, %v157
    %v5970 = vmul.f32 %v5932, %v677
    %v5971 = vmul.f32 %v5947, %v678
    %5979 = vst [vmem:[#allocation1] ss:$4 sm:$0xff] %v5958
    %s5980 = scalar_lea.vmem [#allocation1], 1
    %5981 = vst [vmem:[%s5980] ss:$4 sm:$0xff] %v5959
    %s5982 = scalar_lea.vmem [#allocation1], 2
    %5983 = vst [vmem:[%s5982] ss:$4 sm:$0xff] %v5960
    %s5984 = scalar_lea.vmem [#allocation1], 3
    %5985 = vst [vmem:[%s5984] ss:$4 sm:$0xff] %v5961
    %s5986 = scalar_lea.vmem [#allocation1], 32
    %5987 = vst [vmem:[%s5986] ss:$4 sm:$0xff] %v5962
    %s5988 = scalar_lea.vmem [#allocation1], 33
    %5989 = vst [vmem:[%s5988] ss:$4 sm:$0xff] %v5963
    %s5990 = scalar_lea.vmem [#allocation1], 34
    %5991 = vst [vmem:[%s5990] ss:$4 sm:$0xff] %v5964
    %v5992 = vld.sshfl [vmem:[#allocation1] sm:$0xff pattern:$0x73625140]
    %v5993 = vld.sshfl [vmem:[#allocation1 + $0x20] sm:$0xff pattern:$0x73625140]
    %5994 = vst [vmem:[#allocation1] ss:$4 sm:$0xff] %v5923
    %s5995 = scalar_lea.vmem [#allocation1], 1
    %5996 = vst [vmem:[%s5995] ss:$4 sm:$0xff] %v5938
    %s5997 = scalar_lea.vmem [#allocation1], 2
    %5998 = vst [vmem:[%s5997] ss:$4 sm:$0xff] %v5939
    %s5999 = scalar_lea.vmem [#allocation1], 3
    %6000 = vst [vmem:[%s5999] ss:$4 sm:$0xff] %v5940
    %s6001 = scalar_lea.vmem [#allocation1], 32
    %6002 = vst [vmem:[%s6001] ss:$4 sm:$0xff] %v5926
    %s6003 = scalar_lea.vmem [#allocation1], 33
    %6004 = vst [vmem:[%s6003] ss:$4 sm:$0xff] %v5941
    %s6005 = scalar_lea.vmem [#allocation1], 34
    %6006 = vst [vmem:[%s6005] ss:$4 sm:$0xff] %v5942
    %v6007 = vld.sshfl [vmem:[#allocation1] sm:$0xff pattern:$0x73625140]
    %v6008 = vld.sshfl [vmem:[#allocation1 + $0x20] sm:$0xff pattern:$0x73625140]
    %6009 = vrot.lane.b32.xlu0 %v6007, 96
    %v6010 = vpop.permute.xlu0 %6009
    %6011 = vrot.lane.b32.xlu0 %v6008, 96
    %v6012 = vpop.permute.xlu0 %6011
    %v6013 = vsel %vm203, %v5992, 0
    %v6015 = vsel %vm203, %v5993, 0
    %v6017 = vsel %vm203, %v6010, 0
    %v6019 = vsel %vm203, %v6012, 0
    %6021 = vmatpush.xpose.msra.mxu0 0.0
    %6022 = vmatpush.xpose.msra.mxu0 0.0
    %6023 = vmatpush.xpose.msra.mxu0 0.0
    %6024 = vmatpush.xpose.msra.mxu0 0.0
    %6025 = vmatpush.xpose.msra.mxu0 0.0
    %6026 = vmatpush.xpose.msra.mxu0 0.0
    %6027 = vmatpush.xpose.msra.mxu0 0.0
    %6028 = vmatpush.xpose.msra.mxu0 0.0
    %6029 = vmatpush.xpose.msra.mxu0 0.0
    %6030 = vmatpush.xpose.msra.mxu0 0.0
    %6031 = vmatpush.xpose.msra.mxu0 0.0
    %6032 = vmatpush.xpose.msra.mxu0 0.0
    %6033 = vmatpush.xpose.msra.mxu0 0.0
    %6034 = vmatpush.xpose.msra.mxu0 0.0
    %6035 = vmatpush.xpose.msra.mxu0 %v6019
    %6036 = vmatpush.xpose.msra.mxu0 %v6017
    %6037 = vmatmul.f32.gmra.mxu0 %v6013
    %v6038 = vpop.f32.mrf.mxu0
    %v6039 = vadd.f32 0.0, %v6038
    %6040 = vmatmul.f32.gmra.mxu0 %v6015
    %v6041 = vpop.f32.mrf.mxu0
    %v6042 = vadd.f32 0.0, %v6041
    %6043 = vdwg.mxu0
    %6051 = vst [vmem:[#allocation1] ss:$4 sm:$0xff] %v5965
    %s6052 = scalar_lea.vmem [#allocation1], 1
    %6053 = vst [vmem:[%s6052] ss:$4 sm:$0xff] %v5966
    %s6054 = scalar_lea.vmem [#allocation1], 2
    %6055 = vst [vmem:[%s6054] ss:$4 sm:$0xff] %v5967
    %s6056 = scalar_lea.vmem [#allocation1], 3
    %6057 = vst [vmem:[%s6056] ss:$4 sm:$0xff] %v5968
    %s6058 = scalar_lea.vmem [#allocation1], 32
    %6059 = vst [vmem:[%s6058] ss:$4 sm:$0xff] %v5969
    %s6060 = scalar_lea.vmem [#allocation1], 33
    %6061 = vst [vmem:[%s6060] ss:$4 sm:$0xff] %v5970
    %s6062 = scalar_lea.vmem [#allocation1], 34
    %6063 = vst [vmem:[%s6062] ss:$4 sm:$0xff] %v5971
    %v6064 = vld.sshfl [vmem:[#allocation1] sm:$0xff pattern:$0x73625140]
    %v6065 = vld.sshfl [vmem:[#allocation1 + $0x20] sm:$0xff pattern:$0x73625140]
    %6066 = vst [vmem:[#allocation1] ss:$4 sm:$0xff] %v5943
    %s6067 = scalar_lea.vmem [#allocation1], 1
    %6068 = vst [vmem:[%s6067] ss:$4 sm:$0xff] %v5929
    %s6069 = scalar_lea.vmem [#allocation1], 2
    %6070 = vst [vmem:[%s6069] ss:$4 sm:$0xff] %v5944
    %s6071 = scalar_lea.vmem [#allocation1], 3
    %6072 = vst [vmem:[%s6071] ss:$4 sm:$0xff] %v5945
    %s6073 = scalar_lea.vmem [#allocation1], 32
    %6074 = vst [vmem:[%s6073] ss:$4 sm:$0xff] %v5946
    %s6075 = scalar_lea.vmem [#allocation1], 33
    %6076 = vst [vmem:[%s6075] ss:$4 sm:$0xff] %v5932
    %s6077 = scalar_lea.vmem [#allocation1], 34
    %6078 = vst [vmem:[%s6077] ss:$4 sm:$0xff] %v5947
    %v6079 = vld.sshfl [vmem:[#allocation1] sm:$0xff pattern:$0x73625140]
    %v6080 = vld.sshfl [vmem:[#allocation1 + $0x20] sm:$0xff pattern:$0x73625140]
    %6081 = vrot.lane.b32.xlu0 %v6079, 96
    %v6082 = vpop.permute.xlu0 %6081
    %6083 = vrot.lane.b32.xlu0 %v6080, 96
    %v6084 = vpop.permute.xlu0 %6083
    %v6085 = vsel %vm203, %v6064, 0
    %v6087 = vsel %vm203, %v6065, 0
    %v6089 = vsel %vm203, %v6082, 0
    %v6091 = vsel %vm203, %v6084, 0
    %6093 = vmatpush.xpose.msra.mxu0 0.0
    %6094 = vmatpush.xpose.msra.mxu0 0.0
    %6095 = vmatpush.xpose.msra.mxu0 0.0
    %6096 = vmatpush.xpose.msra.mxu0 0.0
    %6097 = vmatpush.xpose.msra.mxu0 0.0
    %6098 = vmatpush.xpose.msra.mxu0 0.0
    %6099 = vmatpush.xpose.msra.mxu0 0.0
    %6100 = vmatpush.xpose.msra.mxu0 0.0
    %6101 = vmatpush.xpose.msra.mxu0 0.0
    %6102 = vmatpush.xpose.msra.mxu0 0.0
    %6103 = vmatpush.xpose.msra.mxu0 0.0
    %6104 = vmatpush.xpose.msra.mxu0 0.0
    %6105 = vmatpush.xpose.msra.mxu0 0.0
    %6106 = vmatpush.xpose.msra.mxu0 0.0
    %6107 = vmatpush.xpose.msra.mxu0 %v6091
    %6108 = vmatpush.xpose.msra.mxu0 %v6089
    %6109 = vmatmul.f32.gmra.mxu0 %v6085
    %v6110 = vpop.f32.mrf.mxu0
    %v6111 = vadd.f32 0.0, %v6110
    %6112 = vmatmul.f32.gmra.mxu0 %v6087
    %v6113 = vpop.f32.mrf.mxu0
    %v6114 = vadd.f32 0.0, %v6113
    %6115 = vdwg.mxu0
    %v6116 = vsel %vm841, %v6039, -inf
    %6117 = vmax.xlane.f32.xlu0 %v6116
    %v6118 = vpop.xlane.xlu0 %6117
    %v6119 = vsel %vm845, %v6042, -inf
    %6120 = vmax.xlane.f32.xlu0 %v6119
    %v6121 = vpop.xlane.xlu0 %6120
    %v6122 = vsel %vm841, %v6111, -inf
    %6123 = vmax.xlane.f32.xlu0 %v6122
    %v6124 = vpop.xlane.xlu0 %6123
    %v6125 = vsel %vm845, %v6114, -inf
    %6126 = vmax.xlane.f32.xlu0 %v6125
    %v6127 = vpop.xlane.xlu0 %6126
    %v6128 = vsub.f32 %v6039, %v6118
    %v6129 = vsub.f32 %v6042, %v6121
    %v6130 = vsub.f32 %v6111, %v6124
    %v6131 = vsub.f32 %v6114, %v6127
    %v6132 = vmul.f32 %v6128, 1.442695
    %v6133 = vpow.pop %v6132
    %v6134 = vmul.f32 %v6129, 1.442695
    %v6135 = vpow.pop %v6134
    %v6136 = vmul.f32 %v6130, 1.442695
    %v6137 = vpow.pop %v6136
    %v6138 = vmul.f32 %v6131, 1.442695
    %v6139 = vpow.pop %v6138
    %v6140 = vsel %vm841, %v6133, 0.0
    %6141 = vadd.xlane.f32.xlu0 %v6140
    %v6142 = vpop.xlane.xlu0 %6141
    %v6143 = vsel %vm845, %v6135, 0.0
    %6144 = vadd.xlane.f32.xlu0 %v6143
    %v6145 = vpop.xlane.xlu0 %6144
    %v6146 = vsel %vm841, %v6137, 0.0
    %6147 = vadd.xlane.f32.xlu0 %v6146
    %v6148 = vpop.xlane.xlu0 %6147
    %v6149 = vsel %vm845, %v6139, 0.0
    %6150 = vadd.xlane.f32.xlu0 %v6149
    %v6151 = vpop.xlane.xlu0 %6150
    %v6152 = vrcp.pop %v6142
    %v6153 = vrcp.pop %v6145
    %v6154 = vrcp.pop %v6148
    %v6155 = vrcp.pop %v6151
    %v6156 = vmul.f32 %v6133, %v6152
    %v6157 = vmul.f32 %v6135, %v6153
    %v6158 = vmul.f32 %v6137, %v6154
    %v6159 = vmul.f32 %v6139, %v6155
    %6160 = vst [vmem:[#allocation1] ss:$4 sm:$0xff] %v5923
    %s6161 = scalar_lea.vmem [#allocation1], 1
    %6162 = vst [vmem:[%s6161] ss:$4 sm:$0xff] %v5938
    %s6163 = scalar_lea.vmem [#allocation1], 2
    %6164 = vst [vmem:[%s6163] ss:$4 sm:$0xff] %v5939
    %s6165 = scalar_lea.vmem [#allocation1], 3
    %6166 = vst [vmem:[%s6165] ss:$4 sm:$0xff] %v5940
    %s6167 = scalar_lea.vmem [#allocation1], 32
    %6168 = vst [vmem:[%s6167] ss:$4 sm:$0xff] %v5926
    %s6169 = scalar_lea.vmem [#allocation1], 33
    %6170 = vst [vmem:[%s6169] ss:$4 sm:$0xff] %v5941
    %s6171 = scalar_lea.vmem [#allocation1], 34
    %6172 = vst [vmem:[%s6171] ss:$4 sm:$0xff] %v5942
    %v6173 = vld.sshfl [vmem:[#allocation1] sm:$0xff pattern:$0x73625140]
    %v6174 = vld.sshfl [vmem:[#allocation1 + $0x20] sm:$0xff pattern:$0x73625140]
    %6175 = vrot.lane.b32.xlu0 %v6173, 64
    %v6176 = vpop.permute.xlu0 %6175
    %6177 = vrot.lane.b32.xlu0 %v6174, 64
    %v6178 = vpop.permute.xlu0 %6177
    %v6181 = vsel %vm841, %v6156, 0
    %v6184 = vsel %vm841, %v6157, 0
    %v6186 = vsel %vm913, %v6178, 0
    %6188 = vmatpush.msra.mxu0 0.0
    %6189 = vmatpush.msra.mxu0 0.0
    %6190 = vmatpush.msra.mxu0 0.0
    %6191 = vmatpush.msra.mxu0 0.0
    %6192 = vmatpush.msra.mxu0 0.0
    %6193 = vmatpush.msra.mxu0 0.0
    %6194 = vmatpush.msra.mxu0 0.0
    %6195 = vmatpush.msra.mxu0 0.0
    %6196 = vmatpush.msra.mxu0 0.0
    %6197 = vmatpush.msra.mxu0 0.0
    %6198 = vmatpush.msra.mxu0 0.0
    %6199 = vmatpush.msra.mxu0 0.0
    %6200 = vmatpush.msra.mxu0 0.0
    %6201 = vmatpush.msra.mxu0 0.0
    %6202 = vmatpush.msra.mxu0 %v6186
    %6203 = vmatpush.msra.mxu0 %v6176
    %6204 = vmatmul.f32.gmra.mxu0 %v6181
    %v6205 = vpop.f32.mrf.mxu0
    %v6206 = vadd.f32 0.0, %v6205
    %6207 = vmatmul.f32.gmra.mxu0 %v6184
    %v6208 = vpop.f32.mrf.mxu0
    %v6209 = vadd.f32 0.0, %v6208
    %6210 = vdwg.mxu0
    %6211 = vst [vmem:[#allocation1] ss:$4 sm:$0xff] %v5943
    %s6212 = scalar_lea.vmem [#allocation1], 1
    %6213 = vst [vmem:[%s6212] ss:$4 sm:$0xff] %v5929
    %s6214 = scalar_lea.vmem [#allocation1], 2
    %6215 = vst [vmem:[%s6214] ss:$4 sm:$0xff] %v5944
    %s6216 = scalar_lea.vmem [#allocation1], 3
    %6217 = vst [vmem:[%s6216] ss:$4 sm:$0xff] %v5945
    %s6218 = scalar_lea.vmem [#allocation1], 32
    %6219 = vst [vmem:[%s6218] ss:$4 sm:$0xff] %v5946
    %s6220 = scalar_lea.vmem [#allocation1], 33
    %6221 = vst [vmem:[%s6220] ss:$4 sm:$0xff] %v5932
    %s6222 = scalar_lea.vmem [#allocation1], 34
    %6223 = vst [vmem:[%s6222] ss:$4 sm:$0xff] %v5947
    %v6224 = vld.sshfl [vmem:[#allocation1] sm:$0xff pattern:$0x73625140]
    %v6225 = vld.sshfl [vmem:[#allocation1 + $0x20] sm:$0xff pattern:$0x73625140]
    %6226 = vrot.lane.b32.xlu0 %v6224, 64
    %v6227 = vpop.permute.xlu0 %6226
    %6228 = vrot.lane.b32.xlu0 %v6225, 64
    %v6229 = vpop.permute.xlu0 %6228
    %v6232 = vsel %vm841, %v6158, 0
    %v6235 = vsel %vm841, %v6159, 0
    %v6237 = vsel %vm913, %v6229, 0
    %6239 = vmatpush.msra.mxu0 0.0
    %6240 = vmatpush.msra.mxu0 0.0
    %6241 = vmatpush.msra.mxu0 0.0
    %6242 = vmatpush.msra.mxu0 0.0
    %6243 = vmatpush.msra.mxu0 0.0
    %6244 = vmatpush.msra.mxu0 0.0
    %6245 = vmatpush.msra.mxu0 0.0
    %6246 = vmatpush.msra.mxu0 0.0
    %6247 = vmatpush.msra.mxu0 0.0
    %6248 = vmatpush.msra.mxu0 0.0
    %6249 = vmatpush.msra.mxu0 0.0
    %6250 = vmatpush.msra.mxu0 0.0
    %6251 = vmatpush.msra.mxu0 0.0
    %6252 = vmatpush.msra.mxu0 0.0
    %6253 = vmatpush.msra.mxu0 %v6237
    %6254 = vmatpush.msra.mxu0 %v6227
    %6255 = vmatmul.f32.gmra.mxu0 %v6232
    %v6256 = vpop.f32.mrf.mxu0
    %v6257 = vadd.f32 0.0, %v6256
    %6258 = vmatmul.f32.gmra.mxu0 %v6235
    %v6259 = vpop.f32.mrf.mxu0
    %v6260 = vadd.f32 0.0, %v6259
    %6261 = vdwg.mxu0
    %v6262 = vmul.f32 %v6206, %v157
    %v6263 = vmul.f32 %v6209, %v157
    %v6264 = vmul.f32 %v6257, %v157
    %v6265 = vmul.f32 %v6260, %v157
    %v6266 = vadd.f32 %v6262, 0.0
    %v6267 = vadd.f32 %v6263, 0.0
    %v6268 = vadd.f32 %v6264, 0.0
    %v6269 = vadd.f32 %v6265, 0.0
    %v6270 = vmul.f32 %v5923, %v162
    %v6271 = vmul.f32 %v5938, %v999
    %v6272 = vmul.f32 %v5939, %v1000
    %v6273 = vmul.f32 %v5940, %v1001
    %v6274 = vmul.f32 %v5926, %v162
    %v6275 = vmul.f32 %v5941, %v999
    %v6276 = vmul.f32 %v5942, %v1000
    %v6277 = vmul.f32 %v5943, %v162
    %v6278 = vmul.f32 %v5929, %v999
    %v6279 = vmul.f32 %v5944, %v1000
    %v6280 = vmul.f32 %v5945, %v1001
    %v6281 = vmul.f32 %v5946, %v162
    %v6282 = vmul.f32 %v5932, %v999
    %v6283 = vmul.f32 %v5947, %v1000
    %6291 = vst [vmem:[#allocation1] ss:$4 sm:$0xff] %v6270
    %s6292 = scalar_lea.vmem [#allocation1], 1
    %6293 = vst [vmem:[%s6292] ss:$4 sm:$0xff] %v6271
    %s6294 = scalar_lea.vmem [#allocation1], 2
    %6295 = vst [vmem:[%s6294] ss:$4 sm:$0xff] %v6272
    %s6296 = scalar_lea.vmem [#allocation1], 3
    %6297 = vst [vmem:[%s6296] ss:$4 sm:$0xff] %v6273
    %s6298 = scalar_lea.vmem [#allocation1], 32
    %6299 = vst [vmem:[%s6298] ss:$4 sm:$0xff] %v6274
    %s6300 = scalar_lea.vmem [#allocation1], 33
    %6301 = vst [vmem:[%s6300] ss:$4 sm:$0xff] %v6275
    %s6302 = scalar_lea.vmem [#allocation1], 34
    %6303 = vst [vmem:[%s6302] ss:$4 sm:$0xff] %v6276
    %v6304 = vld.sshfl [vmem:[#allocation1] sm:$0xff pattern:$0x73625140]
    %v6305 = vld.sshfl [vmem:[#allocation1 + $0x20] sm:$0xff pattern:$0x73625140]
    %6306 = vst [vmem:[#allocation1] ss:$4 sm:$0xff] %v5923
    %s6307 = scalar_lea.vmem [#allocation1], 1
    %6308 = vst [vmem:[%s6307] ss:$4 sm:$0xff] %v5938
    %s6309 = scalar_lea.vmem [#allocation1], 2
    %6310 = vst [vmem:[%s6309] ss:$4 sm:$0xff] %v5939
    %s6311 = scalar_lea.vmem [#allocation1], 3
    %6312 = vst [vmem:[%s6311] ss:$4 sm:$0xff] %v5940
    %s6313 = scalar_lea.vmem [#allocation1], 32
    %6314 = vst [vmem:[%s6313] ss:$4 sm:$0xff] %v5926
    %s6315 = scalar_lea.vmem [#allocation1], 33
    %6316 = vst [vmem:[%s6315] ss:$4 sm:$0xff] %v5941
    %s6317 = scalar_lea.vmem [#allocation1], 34
    %6318 = vst [vmem:[%s6317] ss:$4 sm:$0xff] %v5942
    %v6319 = vld.sshfl [vmem:[#allocation1] sm:$0xff pattern:$0x73625140]
    %v6320 = vld.sshfl [vmem:[#allocation1 + $0x20] sm:$0xff pattern:$0x73625140]
    %6321 = vrot.lane.b32.xlu0 %v6319, 96
    %v6322 = vpop.permute.xlu0 %6321
    %6323 = vrot.lane.b32.xlu0 %v6320, 96
    %v6324 = vpop.permute.xlu0 %6323
    %v6325 = vsel %vm203, %v6304, 0
    %v6327 = vsel %vm203, %v6305, 0
    %v6329 = vsel %vm203, %v6322, 0
    %v6331 = vsel %vm203, %v6324, 0
    %6333 = vmatpush.xpose.msra.mxu0 0.0
    %6334 = vmatpush.xpose.msra.mxu0 0.0
    %6335 = vmatpush.xpose.msra.mxu0 0.0
    %6336 = vmatpush.xpose.msra.mxu0 0.0
    %6337 = vmatpush.xpose.msra.mxu0 0.0
    %6338 = vmatpush.xpose.msra.mxu0 0.0
    %6339 = vmatpush.xpose.msra.mxu0 0.0
    %6340 = vmatpush.xpose.msra.mxu0 0.0
    %6341 = vmatpush.xpose.msra.mxu0 0.0
    %6342 = vmatpush.xpose.msra.mxu0 0.0
    %6343 = vmatpush.xpose.msra.mxu0 0.0
    %6344 = vmatpush.xpose.msra.mxu0 0.0
    %6345 = vmatpush.xpose.msra.mxu0 0.0
    %6346 = vmatpush.xpose.msra.mxu0 0.0
    %6347 = vmatpush.xpose.msra.mxu0 %v6331
    %6348 = vmatpush.xpose.msra.mxu0 %v6329
    %6349 = vmatmul.f32.gmra.mxu0 %v6325
    %v6350 = vpop.f32.mrf.mxu0
    %v6351 = vadd.f32 0.0, %v6350
    %6352 = vmatmul.f32.gmra.mxu0 %v6327
    %v6353 = vpop.f32.mrf.mxu0
    %v6354 = vadd.f32 0.0, %v6353
    %6355 = vdwg.mxu0
    %6363 = vst [vmem:[#allocation1] ss:$4 sm:$0xff] %v6277
    %s6364 = scalar_lea.vmem [#allocation1], 1
    %6365 = vst [vmem:[%s6364] ss:$4 sm:$0xff] %v6278
    %s6366 = scalar_lea.vmem [#allocation1], 2
    %6367 = vst [vmem:[%s6366] ss:$4 sm:$0xff] %v6279
    %s6368 = scalar_lea.vmem [#allocation1], 3
    %6369 = vst [vmem:[%s6368] ss:$4 sm:$0xff] %v6280
    %s6370 = scalar_lea.vmem [#allocation1], 32
    %6371 = vst [vmem:[%s6370] ss:$4 sm:$0xff] %v6281
    %s6372 = scalar_lea.vmem [#allocation1], 33
    %6373 = vst [vmem:[%s6372] ss:$4 sm:$0xff] %v6282
    %s6374 = scalar_lea.vmem [#allocation1], 34
    %6375 = vst [vmem:[%s6374] ss:$4 sm:$0xff] %v6283
    %v6376 = vld.sshfl [vmem:[#allocation1] sm:$0xff pattern:$0x73625140]
    %v6377 = vld.sshfl [vmem:[#allocation1 + $0x20] sm:$0xff pattern:$0x73625140]
    %6378 = vst [vmem:[#allocation1] ss:$4 sm:$0xff] %v5943
    %s6379 = scalar_lea.vmem [#allocation1], 1
    %6380 = vst [vmem:[%s6379] ss:$4 sm:$0xff] %v5929
    %s6381 = scalar_lea.vmem [#allocation1], 2
    %6382 = vst [vmem:[%s6381] ss:$4 sm:$0xff] %v5944
    %s6383 = scalar_lea.vmem [#allocation1], 3
    %6384 = vst [vmem:[%s6383] ss:$4 sm:$0xff] %v5945
    %s6385 = scalar_lea.vmem [#allocation1], 32
    %6386 = vst [vmem:[%s6385] ss:$4 sm:$0xff] %v5946
    %s6387 = scalar_lea.vmem [#allocation1], 33
    %6388 = vst [vmem:[%s6387] ss:$4 sm:$0xff] %v5932
    %s6389 = scalar_lea.vmem [#allocation1], 34
    %6390 = vst [vmem:[%s6389] ss:$4 sm:$0xff] %v5947
    %v6391 = vld.sshfl [vmem:[#allocation1] sm:$0xff pattern:$0x73625140]
    %v6392 = vld.sshfl [vmem:[#allocation1 + $0x20] sm:$0xff pattern:$0x73625140]
    %6393 = vrot.lane.b32.xlu0 %v6391, 96
    %v6394 = vpop.permute.xlu0 %6393
    %6395 = vrot.lane.b32.xlu0 %v6392, 96
    %v6396 = vpop.permute.xlu0 %6395
    %v6397 = vsel %vm203, %v6376, 0
    %v6399 = vsel %vm203, %v6377, 0
    %v6401 = vsel %vm203, %v6394, 0
    %v6403 = vsel %vm203, %v6396, 0
    %6405 = vmatpush.xpose.msra.mxu0 0.0
    %6406 = vmatpush.xpose.msra.mxu0 0.0
    %6407 = vmatpush.xpose.msra.mxu0 0.0
    %6408 = vmatpush.xpose.msra.mxu0 0.0
    %6409 = vmatpush.xpose.msra.mxu0 0.0
    %6410 = vmatpush.xpose.msra.mxu0 0.0
    %6411 = vmatpush.xpose.msra.mxu0 0.0
    %6412 = vmatpush.xpose.msra.mxu0 0.0
    %6413 = vmatpush.xpose.msra.mxu0 0.0
    %6414 = vmatpush.xpose.msra.mxu0 0.0
    %6415 = vmatpush.xpose.msra.mxu0 0.0
    %6416 = vmatpush.xpose.msra.mxu0 0.0
    %6417 = vmatpush.xpose.msra.mxu0 0.0
    %6418 = vmatpush.xpose.msra.mxu0 0.0
    %6419 = vmatpush.xpose.msra.mxu0 %v6403
    %6420 = vmatpush.xpose.msra.mxu0 %v6401
    %6421 = vmatmul.f32.gmra.mxu0 %v6397
    %v6422 = vpop.f32.mrf.mxu0
    %v6423 = vadd.f32 0.0, %v6422
    %6424 = vmatmul.f32.gmra.mxu0 %v6399
    %v6425 = vpop.f32.mrf.mxu0
    %v6426 = vadd.f32 0.0, %v6425
    %6427 = vdwg.mxu0
    %v6428 = vsel %vm841, %v6351, -inf
    %6429 = vmax.xlane.f32.xlu0 %v6428
    %v6430 = vpop.xlane.xlu0 %6429
    %v6431 = vsel %vm845, %v6354, -inf
    %6432 = vmax.xlane.f32.xlu0 %v6431
    %v6433 = vpop.xlane.xlu0 %6432
    %v6434 = vsel %vm841, %v6423, -inf
    %6435 = vmax.xlane.f32.xlu0 %v6434
    %v6436 = vpop.xlane.xlu0 %6435
    %v6437 = vsel %vm845, %v6426, -inf
    %6438 = vmax.xlane.f32.xlu0 %v6437
    %v6439 = vpop.xlane.xlu0 %6438
    %v6440 = vsub.f32 %v6351, %v6430
    %v6441 = vsub.f32 %v6354, %v6433
    %v6442 = vsub.f32 %v6423, %v6436
    %v6443 = vsub.f32 %v6426, %v6439
    %v6444 = vmul.f32 %v6440, 1.442695
    %v6445 = vpow.pop %v6444
    %v6446 = vmul.f32 %v6441, 1.442695
    %v6447 = vpow.pop %v6446
    %v6448 = vmul.f32 %v6442, 1.442695
    %v6449 = vpow.pop %v6448
    %v6450 = vmul.f32 %v6443, 1.442695
    %v6451 = vpow.pop %v6450
    %v6452 = vsel %vm841, %v6445, 0.0
    %6453 = vadd.xlane.f32.xlu0 %v6452
    %v6454 = vpop.xlane.xlu0 %6453
    %v6455 = vsel %vm845, %v6447, 0.0
    %6456 = vadd.xlane.f32.xlu0 %v6455
    %v6457 = vpop.xlane.xlu0 %6456
    %v6458 = vsel %vm841, %v6449, 0.0
    %6459 = vadd.xlane.f32.xlu0 %v6458
    %v6460 = vpop.xlane.xlu0 %6459
    %v6461 = vsel %vm845, %v6451, 0.0
    %6462 = vadd.xlane.f32.xlu0 %v6461
    %v6463 = vpop.xlane.xlu0 %6462
    %v6464 = vrcp.pop %v6454
    %v6465 = vrcp.pop %v6457
    %v6466 = vrcp.pop %v6460
    %v6467 = vrcp.pop %v6463
    %v6468 = vmul.f32 %v6445, %v6464
    %v6469 = vmul.f32 %v6447, %v6465
    %v6470 = vmul.f32 %v6449, %v6466
    %v6471 = vmul.f32 %v6451, %v6467
    %6472 = vst [vmem:[#allocation1] ss:$4 sm:$0xff] %v5923
    %s6473 = scalar_lea.vmem [#allocation1], 1
    %6474 = vst [vmem:[%s6473] ss:$4 sm:$0xff] %v5938
    %s6475 = scalar_lea.vmem [#allocation1], 2
    %6476 = vst [vmem:[%s6475] ss:$4 sm:$0xff] %v5939
    %s6477 = scalar_lea.vmem [#allocation1], 3
    %6478 = vst [vmem:[%s6477] ss:$4 sm:$0xff] %v5940
    %s6479 = scalar_lea.vmem [#allocation1], 32
    %6480 = vst [vmem:[%s6479] ss:$4 sm:$0xff] %v5926
    %s6481 = scalar_lea.vmem [#allocation1], 33
    %6482 = vst [vmem:[%s6481] ss:$4 sm:$0xff] %v5941
    %s6483 = scalar_lea.vmem [#allocation1], 34
    %6484 = vst [vmem:[%s6483] ss:$4 sm:$0xff] %v5942
    %v6485 = vld.sshfl [vmem:[#allocation1] sm:$0xff pattern:$0x73625140]
    %v6486 = vld.sshfl [vmem:[#allocation1 + $0x20] sm:$0xff pattern:$0x73625140]
    %6487 = vrot.lane.b32.xlu0 %v6485, 64
    %v6488 = vpop.permute.xlu0 %6487
    %6489 = vrot.lane.b32.xlu0 %v6486, 64
    %v6490 = vpop.permute.xlu0 %6489
    %v6493 = vsel %vm841, %v6468, 0
    %v6496 = vsel %vm841, %v6469, 0
    %v6498 = vsel %vm913, %v6490, 0
    %6500 = vmatpush.msra.mxu0 0.0
    %6501 = vmatpush.msra.mxu0 0.0
    %6502 = vmatpush.msra.mxu0 0.0
    %6503 = vmatpush.msra.mxu0 0.0
    %6504 = vmatpush.msra.mxu0 0.0
    %6505 = vmatpush.msra.mxu0 0.0
    %6506 = vmatpush.msra.mxu0 0.0
    %6507 = vmatpush.msra.mxu0 0.0
    %6508 = vmatpush.msra.mxu0 0.0
    %6509 = vmatpush.msra.mxu0 0.0
    %6510 = vmatpush.msra.mxu0 0.0
    %6511 = vmatpush.msra.mxu0 0.0
    %6512 = vmatpush.msra.mxu0 0.0
    %6513 = vmatpush.msra.mxu0 0.0
    %6514 = vmatpush.msra.mxu0 %v6498
    %6515 = vmatpush.msra.mxu0 %v6488
    %6516 = vmatmul.f32.gmra.mxu0 %v6493
    %v6517 = vpop.f32.mrf.mxu0
    %v6518 = vadd.f32 0.0, %v6517
    %6519 = vmatmul.f32.gmra.mxu0 %v6496
    %v6520 = vpop.f32.mrf.mxu0
    %v6521 = vadd.f32 0.0, %v6520
    %6522 = vdwg.mxu0
    %6523 = vst [vmem:[#allocation1] ss:$4 sm:$0xff] %v5943
    %s6524 = scalar_lea.vmem [#allocation1], 1
    %6525 = vst [vmem:[%s6524] ss:$4 sm:$0xff] %v5929
    %s6526 = scalar_lea.vmem [#allocation1], 2
    %6527 = vst [vmem:[%s6526] ss:$4 sm:$0xff] %v5944
    %s6528 = scalar_lea.vmem [#allocation1], 3
    %6529 = vst [vmem:[%s6528] ss:$4 sm:$0xff] %v5945
    %s6530 = scalar_lea.vmem [#allocation1], 32
    %6531 = vst [vmem:[%s6530] ss:$4 sm:$0xff] %v5946
    %s6532 = scalar_lea.vmem [#allocation1], 33
    %6533 = vst [vmem:[%s6532] ss:$4 sm:$0xff] %v5932
    %s6534 = scalar_lea.vmem [#allocation1], 34
    %6535 = vst [vmem:[%s6534] ss:$4 sm:$0xff] %v5947
    %v6536 = vld.sshfl [vmem:[#allocation1] sm:$0xff pattern:$0x73625140]
    %v6537 = vld.sshfl [vmem:[#allocation1 + $0x20] sm:$0xff pattern:$0x73625140]
    %6538 = vrot.lane.b32.xlu0 %v6536, 64
    %v6539 = vpop.permute.xlu0 %6538
    %6540 = vrot.lane.b32.xlu0 %v6537, 64
    %v6541 = vpop.permute.xlu0 %6540
    %v6544 = vsel %vm841, %v6470, 0
    %v6547 = vsel %vm841, %v6471, 0
    %v6549 = vsel %vm913, %v6541, 0
    %6551 = vmatpush.msra.mxu0 0.0
    %6552 = vmatpush.msra.mxu0 0.0
    %6553 = vmatpush.msra.mxu0 0.0
    %6554 = vmatpush.msra.mxu0 0.0
    %6555 = vmatpush.msra.mxu0 0.0
    %6556 = vmatpush.msra.mxu0 0.0
    %6557 = vmatpush.msra.mxu0 0.0
    %6558 = vmatpush.msra.mxu0 0.0
    %6559 = vmatpush.msra.mxu0 0.0
    %6560 = vmatpush.msra.mxu0 0.0
    %6561 = vmatpush.msra.mxu0 0.0
    %6562 = vmatpush.msra.mxu0 0.0
    %6563 = vmatpush.msra.mxu0 0.0
    %6564 = vmatpush.msra.mxu0 0.0
    %6565 = vmatpush.msra.mxu0 %v6549
    %6566 = vmatpush.msra.mxu0 %v6539
    %6567 = vmatmul.f32.gmra.mxu0 %v6544
    %v6568 = vpop.f32.mrf.mxu0
    %v6569 = vadd.f32 0.0, %v6568
    %6570 = vmatmul.f32.gmra.mxu0 %v6547
    %v6571 = vpop.f32.mrf.mxu0
    %v6572 = vadd.f32 0.0, %v6571
    %6573 = vdwg.mxu0
    %v6574 = vmul.f32 %v6518, %v162
    %v6575 = vmul.f32 %v6521, %v162
    %v6576 = vmul.f32 %v6569, %v162
    %v6577 = vmul.f32 %v6572, %v162
    %v6578 = vadd.f32 %v6266, %v6574
    %v6579 = vadd.f32 %v6267, %v6575
    %v6580 = vadd.f32 %v6268, %v6576
    %v6581 = vadd.f32 %v6269, %v6577
    %v6582 = vmul.f32 %v5923, %v167
    %v6583 = vmul.f32 %v5938, %v1318
    %v6584 = vmul.f32 %v5939, %v1319
    %v6585 = vmul.f32 %v5940, %v1320
    %v6586 = vmul.f32 %v5926, %v167
    %v6587 = vmul.f32 %v5941, %v1318
    %v6588 = vmul.f32 %v5942, %v1319
    %v6589 = vmul.f32 %v5943, %v167
    %v6590 = vmul.f32 %v5929, %v1318
    %v6591 = vmul.f32 %v5944, %v1319
    %v6592 = vmul.f32 %v5945, %v1320
    %v6593 = vmul.f32 %v5946, %v167
    %v6594 = vmul.f32 %v5932, %v1318
    %v6595 = vmul.f32 %v5947, %v1319
    %6603 = vst [vmem:[#allocation1] ss:$4 sm:$0xff] %v6582
    %s6604 = scalar_lea.vmem [#allocation1], 1
    %6605 = vst [vmem:[%s6604] ss:$4 sm:$0xff] %v6583
    %s6606 = scalar_lea.vmem [#allocation1], 2
    %6607 = vst [vmem:[%s6606] ss:$4 sm:$0xff] %v6584
    %s6608 = scalar_lea.vmem [#allocation1], 3
    %6609 = vst [vmem:[%s6608] ss:$4 sm:$0xff] %v6585
    %s6610 = scalar_lea.vmem [#allocation1], 32
    %6611 = vst [vmem:[%s6610] ss:$4 sm:$0xff] %v6586
    %s6612 = scalar_lea.vmem [#allocation1], 33
    %6613 = vst [vmem:[%s6612] ss:$4 sm:$0xff] %v6587
    %s6614 = scalar_lea.vmem [#allocation1], 34
    %6615 = vst [vmem:[%s6614] ss:$4 sm:$0xff] %v6588
    %v6616 = vld.sshfl [vmem:[#allocation1] sm:$0xff pattern:$0x73625140]
    %v6617 = vld.sshfl [vmem:[#allocation1 + $0x20] sm:$0xff pattern:$0x73625140]
    %6618 = vst [vmem:[#allocation1] ss:$4 sm:$0xff] %v5923
    %s6619 = scalar_lea.vmem [#allocation1], 1
    %6620 = vst [vmem:[%s6619] ss:$4 sm:$0xff] %v5938
    %s6621 = scalar_lea.vmem [#allocation1], 2
    %6622 = vst [vmem:[%s6621] ss:$4 sm:$0xff] %v5939
    %s6623 = scalar_lea.vmem [#allocation1], 3
    %6624 = vst [vmem:[%s6623] ss:$4 sm:$0xff] %v5940
    %s6625 = scalar_lea.vmem [#allocation1], 32
    %6626 = vst [vmem:[%s6625] ss:$4 sm:$0xff] %v5926
    %s6627 = scalar_lea.vmem [#allocation1], 33
    %6628 = vst [vmem:[%s6627] ss:$4 sm:$0xff] %v5941
    %s6629 = scalar_lea.vmem [#allocation1], 34
    %6630 = vst [vmem:[%s6629] ss:$4 sm:$0xff] %v5942
    %v6631 = vld.sshfl [vmem:[#allocation1] sm:$0xff pattern:$0x73625140]
    %v6632 = vld.sshfl [vmem:[#allocation1 + $0x20] sm:$0xff pattern:$0x73625140]
    %6633 = vrot.lane.b32.xlu0 %v6631, 96
    %v6634 = vpop.permute.xlu0 %6633
    %6635 = vrot.lane.b32.xlu0 %v6632, 96
    %v6636 = vpop.permute.xlu0 %6635
    %v6637 = vsel %vm203, %v6616, 0
    %v6639 = vsel %vm203, %v6617, 0
    %v6641 = vsel %vm203, %v6634, 0
    %v6643 = vsel %vm203, %v6636, 0
    %6645 = vmatpush.xpose.msra.mxu0 0.0
    %6646 = vmatpush.xpose.msra.mxu0 0.0
    %6647 = vmatpush.xpose.msra.mxu0 0.0
    %6648 = vmatpush.xpose.msra.mxu0 0.0
    %6649 = vmatpush.xpose.msra.mxu0 0.0
    %6650 = vmatpush.xpose.msra.mxu0 0.0
    %6651 = vmatpush.xpose.msra.mxu0 0.0
    %6652 = vmatpush.xpose.msra.mxu0 0.0
    %6653 = vmatpush.xpose.msra.mxu0 0.0
    %6654 = vmatpush.xpose.msra.mxu0 0.0
    %6655 = vmatpush.xpose.msra.mxu0 0.0
    %6656 = vmatpush.xpose.msra.mxu0 0.0
    %6657 = vmatpush.xpose.msra.mxu0 0.0
    %6658 = vmatpush.xpose.msra.mxu0 0.0
    %6659 = vmatpush.xpose.msra.mxu0 %v6643
    %6660 = vmatpush.xpose.msra.mxu0 %v6641
    %6661 = vmatmul.f32.gmra.mxu0 %v6637
    %v6662 = vpop.f32.mrf.mxu0
    %v6663 = vadd.f32 0.0, %v6662
    %6664 = vmatmul.f32.gmra.mxu0 %v6639
    %v6665 = vpop.f32.mrf.mxu0
    %v6666 = vadd.f32 0.0, %v6665
    %6667 = vdwg.mxu0
    %6675 = vst [vmem:[#allocation1] ss:$4 sm:$0xff] %v6589
    %s6676 = scalar_lea.vmem [#allocation1], 1
    %6677 = vst [vmem:[%s6676] ss:$4 sm:$0xff] %v6590
    %s6678 = scalar_lea.vmem [#allocation1], 2
    %6679 = vst [vmem:[%s6678] ss:$4 sm:$0xff] %v6591
    %s6680 = scalar_lea.vmem [#allocation1], 3
    %6681 = vst [vmem:[%s6680] ss:$4 sm:$0xff] %v6592
    %s6682 = scalar_lea.vmem [#allocation1], 32
    %6683 = vst [vmem:[%s6682] ss:$4 sm:$0xff] %v6593
    %s6684 = scalar_lea.vmem [#allocation1], 33
    %6685 = vst [vmem:[%s6684] ss:$4 sm:$0xff] %v6594
    %s6686 = scalar_lea.vmem [#allocation1], 34
    %6687 = vst [vmem:[%s6686] ss:$4 sm:$0xff] %v6595
    %v6688 = vld.sshfl [vmem:[#allocation1] sm:$0xff pattern:$0x73625140]
    %v6689 = vld.sshfl [vmem:[#allocation1 + $0x20] sm:$0xff pattern:$0x73625140]
    %6690 = vst [vmem:[#allocation1] ss:$4 sm:$0xff] %v5943
    %s6691 = scalar_lea.vmem [#allocation1], 1
    %6692 = vst [vmem:[%s6691] ss:$4 sm:$0xff] %v5929
    %s6693 = scalar_lea.vmem [#allocation1], 2
    %6694 = vst [vmem:[%s6693] ss:$4 sm:$0xff] %v5944
    %s6695 = scalar_lea.vmem [#allocation1], 3
    %6696 = vst [vmem:[%s6695] ss:$4 sm:$0xff] %v5945
    %s6697 = scalar_lea.vmem [#allocation1], 32
    %6698 = vst [vmem:[%s6697] ss:$4 sm:$0xff] %v5946
    %s6699 = scalar_lea.vmem [#allocation1], 33
    %6700 = vst [vmem:[%s6699] ss:$4 sm:$0xff] %v5932
    %s6701 = scalar_lea.vmem [#allocation1], 34
    %6702 = vst [vmem:[%s6701] ss:$4 sm:$0xff] %v5947
    %v6703 = vld.sshfl [vmem:[#allocation1] sm:$0xff pattern:$0x73625140]
    %v6704 = vld.sshfl [vmem:[#allocation1 + $0x20] sm:$0xff pattern:$0x73625140]
    %6705 = vrot.lane.b32.xlu0 %v6703, 96
    %v6706 = vpop.permute.xlu0 %6705
    %6707 = vrot.lane.b32.xlu0 %v6704, 96
    %v6708 = vpop.permute.xlu0 %6707
    %v6709 = vsel %vm203, %v6688, 0
    %v6711 = vsel %vm203, %v6689, 0
    %v6713 = vsel %vm203, %v6706, 0
    %v6715 = vsel %vm203, %v6708, 0
    %6717 = vmatpush.xpose.msra.mxu0 0.0
    %6718 = vmatpush.xpose.msra.mxu0 0.0
    %6719 = vmatpush.xpose.msra.mxu0 0.0
    %6720 = vmatpush.xpose.msra.mxu0 0.0
    %6721 = vmatpush.xpose.msra.mxu0 0.0
    %6722 = vmatpush.xpose.msra.mxu0 0.0
    %6723 = vmatpush.xpose.msra.mxu0 0.0
    %6724 = vmatpush.xpose.msra.mxu0 0.0
    %6725 = vmatpush.xpose.msra.mxu0 0.0
    %6726 = vmatpush.xpose.msra.mxu0 0.0
    %6727 = vmatpush.xpose.msra.mxu0 0.0
    %6728 = vmatpush.xpose.msra.mxu0 0.0
    %6729 = vmatpush.xpose.msra.mxu0 0.0
    %6730 = vmatpush.xpose.msra.mxu0 0.0
    %6731 = vmatpush.xpose.msra.mxu0 %v6715
    %6732 = vmatpush.xpose.msra.mxu0 %v6713
    %6733 = vmatmul.f32.gmra.mxu0 %v6709
    %v6734 = vpop.f32.mrf.mxu0
    %v6735 = vadd.f32 0.0, %v6734
    %6736 = vmatmul.f32.gmra.mxu0 %v6711
    %v6737 = vpop.f32.mrf.mxu0
    %v6738 = vadd.f32 0.0, %v6737
    %6739 = vdwg.mxu0
    %v6740 = vsel %vm841, %v6663, -inf
    %6741 = vmax.xlane.f32.xlu0 %v6740
    %v6742 = vpop.xlane.xlu0 %6741
    %v6743 = vsel %vm845, %v6666, -inf
    %6744 = vmax.xlane.f32.xlu0 %v6743
    %v6745 = vpop.xlane.xlu0 %6744
    %v6746 = vsel %vm841, %v6735, -inf
    %6747 = vmax.xlane.f32.xlu0 %v6746
    %v6748 = vpop.xlane.xlu0 %6747
    %v6749 = vsel %vm845, %v6738, -inf
    %6750 = vmax.xlane.f32.xlu0 %v6749
    %v6751 = vpop.xlane.xlu0 %6750
    %v6752 = vsub.f32 %v6663, %v6742
    %v6753 = vsub.f32 %v6666, %v6745
    %v6754 = vsub.f32 %v6735, %v6748
    %v6755 = vsub.f32 %v6738, %v6751
    %v6756 = vmul.f32 %v6752, 1.442695
    %v6757 = vpow.pop %v6756
    %v6758 = vmul.f32 %v6753, 1.442695
    %v6759 = vpow.pop %v6758
    %v6760 = vmul.f32 %v6754, 1.442695
    %v6761 = vpow.pop %v6760
    %v6762 = vmul.f32 %v6755, 1.442695
    %v6763 = vpow.pop %v6762
    %v6764 = vsel %vm841, %v6757, 0.0
    %6765 = vadd.xlane.f32.xlu0 %v6764
    %v6766 = vpop.xlane.xlu0 %6765
    %v6767 = vsel %vm845, %v6759, 0.0
    %6768 = vadd.xlane.f32.xlu0 %v6767
    %v6769 = vpop.xlane.xlu0 %6768
    %v6770 = vsel %vm841, %v6761, 0.0
    %6771 = vadd.xlane.f32.xlu0 %v6770
    %v6772 = vpop.xlane.xlu0 %6771
    %v6773 = vsel %vm845, %v6763, 0.0
    %6774 = vadd.xlane.f32.xlu0 %v6773
    %v6775 = vpop.xlane.xlu0 %6774
    %v6776 = vrcp.pop %v6766
    %v6777 = vrcp.pop %v6769
    %v6778 = vrcp.pop %v6772
    %v6779 = vrcp.pop %v6775
    %v6780 = vmul.f32 %v6757, %v6776
    %v6781 = vmul.f32 %v6759, %v6777
    %v6782 = vmul.f32 %v6761, %v6778
    %v6783 = vmul.f32 %v6763, %v6779
    %6784 = vst [vmem:[#allocation1] ss:$4 sm:$0xff] %v5923
    %s6785 = scalar_lea.vmem [#allocation1], 1
    %6786 = vst [vmem:[%s6785] ss:$4 sm:$0xff] %v5938
    %s6787 = scalar_lea.vmem [#allocation1], 2
    %6788 = vst [vmem:[%s6787] ss:$4 sm:$0xff] %v5939
    %s6789 = scalar_lea.vmem [#allocation1], 3
    %6790 = vst [vmem:[%s6789] ss:$4 sm:$0xff] %v5940
    %s6791 = scalar_lea.vmem [#allocation1], 32
    %6792 = vst [vmem:[%s6791] ss:$4 sm:$0xff] %v5926
    %s6793 = scalar_lea.vmem [#allocation1], 33
    %6794 = vst [vmem:[%s6793] ss:$4 sm:$0xff] %v5941
    %s6795 = scalar_lea.vmem [#allocation1], 34
    %6796 = vst [vmem:[%s6795] ss:$4 sm:$0xff] %v5942
    %v6797 = vld.sshfl [vmem:[#allocation1] sm:$0xff pattern:$0x73625140]
    %v6798 = vld.sshfl [vmem:[#allocation1 + $0x20] sm:$0xff pattern:$0x73625140]
    %6799 = vrot.lane.b32.xlu0 %v6797, 64
    %v6800 = vpop.permute.xlu0 %6799
    %6801 = vrot.lane.b32.xlu0 %v6798, 64
    %v6802 = vpop.permute.xlu0 %6801
    %v6805 = vsel %vm841, %v6780, 0
    %v6808 = vsel %vm841, %v6781, 0
    %v6810 = vsel %vm913, %v6802, 0
    %6812 = vmatpush.msra.mxu0 0.0
    %6813 = vmatpush.msra.mxu0 0.0
    %6814 = vmatpush.msra.mxu0 0.0
    %6815 = vmatpush.msra.mxu0 0.0
    %6816 = vmatpush.msra.mxu0 0.0
    %6817 = vmatpush.msra.mxu0 0.0
    %6818 = vmatpush.msra.mxu0 0.0
    %6819 = vmatpush.msra.mxu0 0.0
    %6820 = vmatpush.msra.mxu0 0.0
    %6821 = vmatpush.msra.mxu0 0.0
    %6822 = vmatpush.msra.mxu0 0.0
    %6823 = vmatpush.msra.mxu0 0.0
    %6824 = vmatpush.msra.mxu0 0.0
    %6825 = vmatpush.msra.mxu0 0.0
    %6826 = vmatpush.msra.mxu0 %v6810
    %6827 = vmatpush.msra.mxu0 %v6800
    %6828 = vmatmul.f32.gmra.mxu0 %v6805
    %v6829 = vpop.f32.mrf.mxu0
    %v6830 = vadd.f32 0.0, %v6829
    %6831 = vmatmul.f32.gmra.mxu0 %v6808
    %v6832 = vpop.f32.mrf.mxu0
    %v6833 = vadd.f32 0.0, %v6832
    %6834 = vdwg.mxu0
    %6835 = vst [vmem:[#allocation1] ss:$4 sm:$0xff] %v5943
    %s6836 = scalar_lea.vmem [#allocation1], 1
    %6837 = vst [vmem:[%s6836] ss:$4 sm:$0xff] %v5929
    %s6838 = scalar_lea.vmem [#allocation1], 2
    %6839 = vst [vmem:[%s6838] ss:$4 sm:$0xff] %v5944
    %s6840 = scalar_lea.vmem [#allocation1], 3
    %6841 = vst [vmem:[%s6840] ss:$4 sm:$0xff] %v5945
    %s6842 = scalar_lea.vmem [#allocation1], 32
    %6843 = vst [vmem:[%s6842] ss:$4 sm:$0xff] %v5946
    %s6844 = scalar_lea.vmem [#allocation1], 33
    %6845 = vst [vmem:[%s6844] ss:$4 sm:$0xff] %v5932
    %s6846 = scalar_lea.vmem [#allocation1], 34
    %6847 = vst [vmem:[%s6846] ss:$4 sm:$0xff] %v5947
    %v6848 = vld.sshfl [vmem:[#allocation1] sm:$0xff pattern:$0x73625140]
    %v6849 = vld.sshfl [vmem:[#allocation1 + $0x20] sm:$0xff pattern:$0x73625140]
    %6850 = vrot.lane.b32.xlu0 %v6848, 64
    %v6851 = vpop.permute.xlu0 %6850
    %6852 = vrot.lane.b32.xlu0 %v6849, 64
    %v6853 = vpop.permute.xlu0 %6852
    %v6856 = vsel %vm841, %v6782, 0
    %v6859 = vsel %vm841, %v6783, 0
    %v6861 = vsel %vm913, %v6853, 0
    %6863 = vmatpush.msra.mxu0 0.0
    %6864 = vmatpush.msra.mxu0 0.0
    %6865 = vmatpush.msra.mxu0 0.0
    %6866 = vmatpush.msra.mxu0 0.0
    %6867 = vmatpush.msra.mxu0 0.0
    %6868 = vmatpush.msra.mxu0 0.0
    %6869 = vmatpush.msra.mxu0 0.0
    %6870 = vmatpush.msra.mxu0 0.0
    %6871 = vmatpush.msra.mxu0 0.0
    %6872 = vmatpush.msra.mxu0 0.0
    %6873 = vmatpush.msra.mxu0 0.0
    %6874 = vmatpush.msra.mxu0 0.0
    %6875 = vmatpush.msra.mxu0 0.0
    %6876 = vmatpush.msra.mxu0 0.0
    %6877 = vmatpush.msra.mxu0 %v6861
    %6878 = vmatpush.msra.mxu0 %v6851
    %6879 = vmatmul.f32.gmra.mxu0 %v6856
    %v6880 = vpop.f32.mrf.mxu0
    %v6881 = vadd.f32 0.0, %v6880
    %6882 = vmatmul.f32.gmra.mxu0 %v6859
    %v6883 = vpop.f32.mrf.mxu0
    %v6884 = vadd.f32 0.0, %v6883
    %6885 = vdwg.mxu0
    %v6886 = vmul.f32 %v6830, %v167
    %v6887 = vmul.f32 %v6833, %v167
    %v6888 = vmul.f32 %v6881, %v167
    %v6889 = vmul.f32 %v6884, %v167
    %v6890 = vadd.f32 %v6578, %v6886
    %v6891 = vadd.f32 %v6579, %v6887
    %v6892 = vadd.f32 %v6580, %v6888
    %v6893 = vadd.f32 %v6581, %v6889
    %v6894 = vmul.f32 %v5923, %v172
    %v6895 = vmul.f32 %v5938, %v1637
    %v6896 = vmul.f32 %v5939, %v1638
    %v6897 = vmul.f32 %v5940, %v1639
    %v6898 = vmul.f32 %v5926, %v172
    %v6899 = vmul.f32 %v5941, %v1637
    %v6900 = vmul.f32 %v5942, %v1638
    %v6901 = vmul.f32 %v5943, %v172
    %v6902 = vmul.f32 %v5929, %v1637
    %v6903 = vmul.f32 %v5944, %v1638
    %v6904 = vmul.f32 %v5945, %v1639
    %v6905 = vmul.f32 %v5946, %v172
    %v6906 = vmul.f32 %v5932, %v1637
    %v6907 = vmul.f32 %v5947, %v1638
    %6915 = vst [vmem:[#allocation1] ss:$4 sm:$0xff] %v6894
    %s6916 = scalar_lea.vmem [#allocation1], 1
    %6917 = vst [vmem:[%s6916] ss:$4 sm:$0xff] %v6895
    %s6918 = scalar_lea.vmem [#allocation1], 2
    %6919 = vst [vmem:[%s6918] ss:$4 sm:$0xff] %v6896
    %s6920 = scalar_lea.vmem [#allocation1], 3
    %6921 = vst [vmem:[%s6920] ss:$4 sm:$0xff] %v6897
    %s6922 = scalar_lea.vmem [#allocation1], 32
    %6923 = vst [vmem:[%s6922] ss:$4 sm:$0xff] %v6898
    %s6924 = scalar_lea.vmem [#allocation1], 33
    %6925 = vst [vmem:[%s6924] ss:$4 sm:$0xff] %v6899
    %s6926 = scalar_lea.vmem [#allocation1], 34
    %6927 = vst [vmem:[%s6926] ss:$4 sm:$0xff] %v6900
    %v6928 = vld.sshfl [vmem:[#allocation1] sm:$0xff pattern:$0x73625140]
    %v6929 = vld.sshfl [vmem:[#allocation1 + $0x20] sm:$0xff pattern:$0x73625140]
    %6930 = vst [vmem:[#allocation1] ss:$4 sm:$0xff] %v5923
    %s6931 = scalar_lea.vmem [#allocation1], 1
    %6932 = vst [vmem:[%s6931] ss:$4 sm:$0xff] %v5938
    %s6933 = scalar_lea.vmem [#allocation1], 2
    %6934 = vst [vmem:[%s6933] ss:$4 sm:$0xff] %v5939
    %s6935 = scalar_lea.vmem [#allocation1], 3
    %6936 = vst [vmem:[%s6935] ss:$4 sm:$0xff] %v5940
    %s6937 = scalar_lea.vmem [#allocation1], 32
    %6938 = vst [vmem:[%s6937] ss:$4 sm:$0xff] %v5926
    %s6939 = scalar_lea.vmem [#allocation1], 33
    %6940 = vst [vmem:[%s6939] ss:$4 sm:$0xff] %v5941
    %s6941 = scalar_lea.vmem [#allocation1], 34
    %6942 = vst [vmem:[%s6941] ss:$4 sm:$0xff] %v5942
    %v6943 = vld.sshfl [vmem:[#allocation1] sm:$0xff pattern:$0x73625140]
    %v6944 = vld.sshfl [vmem:[#allocation1 + $0x20] sm:$0xff pattern:$0x73625140]
    %6945 = vrot.lane.b32.xlu0 %v6943, 96
    %v6946 = vpop.permute.xlu0 %6945
    %6947 = vrot.lane.b32.xlu0 %v6944, 96
    %v6948 = vpop.permute.xlu0 %6947
    %v6949 = vsel %vm203, %v6928, 0
    %v6951 = vsel %vm203, %v6929, 0
    %v6953 = vsel %vm203, %v6946, 0
    %v6955 = vsel %vm203, %v6948, 0
    %6957 = vmatpush.xpose.msra.mxu0 0.0
    %6958 = vmatpush.xpose.msra.mxu0 0.0
    %6959 = vmatpush.xpose.msra.mxu0 0.0
    %6960 = vmatpush.xpose.msra.mxu0 0.0
    %6961 = vmatpush.xpose.msra.mxu0 0.0
    %6962 = vmatpush.xpose.msra.mxu0 0.0
    %6963 = vmatpush.xpose.msra.mxu0 0.0
    %6964 = vmatpush.xpose.msra.mxu0 0.0
    %6965 = vmatpush.xpose.msra.mxu0 0.0
    %6966 = vmatpush.xpose.msra.mxu0 0.0
    %6967 = vmatpush.xpose.msra.mxu0 0.0
    %6968 = vmatpush.xpose.msra.mxu0 0.0
    %6969 = vmatpush.xpose.msra.mxu0 0.0
    %6970 = vmatpush.xpose.msra.mxu0 0.0
    %6971 = vmatpush.xpose.msra.mxu0 %v6955
    %6972 = vmatpush.xpose.msra.mxu0 %v6953
    %6973 = vmatmul.f32.gmra.mxu0 %v6949
    %v6974 = vpop.f32.mrf.mxu0
    %v6975 = vadd.f32 0.0, %v6974
    %6976 = vmatmul.f32.gmra.mxu0 %v6951
    %v6977 = vpop.f32.mrf.mxu0
    %v6978 = vadd.f32 0.0, %v6977
    %6979 = vdwg.mxu0
    %6987 = vst [vmem:[#allocation1] ss:$4 sm:$0xff] %v6901
    %s6988 = scalar_lea.vmem [#allocation1], 1
    %6989 = vst [vmem:[%s6988] ss:$4 sm:$0xff] %v6902
    %s6990 = scalar_lea.vmem [#allocation1], 2
    %6991 = vst [vmem:[%s6990] ss:$4 sm:$0xff] %v6903
    %s6992 = scalar_lea.vmem [#allocation1], 3
    %6993 = vst [vmem:[%s6992] ss:$4 sm:$0xff] %v6904
    %s6994 = scalar_lea.vmem [#allocation1], 32
    %6995 = vst [vmem:[%s6994] ss:$4 sm:$0xff] %v6905
    %s6996 = scalar_lea.vmem [#allocation1], 33
    %6997 = vst [vmem:[%s6996] ss:$4 sm:$0xff] %v6906
    %s6998 = scalar_lea.vmem [#allocation1], 34
    %6999 = vst [vmem:[%s6998] ss:$4 sm:$0xff] %v6907
    %v7000 = vld.sshfl [vmem:[#allocation1] sm:$0xff pattern:$0x73625140]
    %v7001 = vld.sshfl [vmem:[#allocation1 + $0x20] sm:$0xff pattern:$0x73625140]
    %7002 = vst [vmem:[#allocation1] ss:$4 sm:$0xff] %v5943
    %s7003 = scalar_lea.vmem [#allocation1], 1
    %7004 = vst [vmem:[%s7003] ss:$4 sm:$0xff] %v5929
    %s7005 = scalar_lea.vmem [#allocation1], 2
    %7006 = vst [vmem:[%s7005] ss:$4 sm:$0xff] %v5944
    %s7007 = scalar_lea.vmem [#allocation1], 3
    %7008 = vst [vmem:[%s7007] ss:$4 sm:$0xff] %v5945
    %s7009 = scalar_lea.vmem [#allocation1], 32
    %7010 = vst [vmem:[%s7009] ss:$4 sm:$0xff] %v5946
    %s7011 = scalar_lea.vmem [#allocation1], 33
    %7012 = vst [vmem:[%s7011] ss:$4 sm:$0xff] %v5932
    %s7013 = scalar_lea.vmem [#allocation1], 34
    %7014 = vst [vmem:[%s7013] ss:$4 sm:$0xff] %v5947
    %v7015 = vld.sshfl [vmem:[#allocation1] sm:$0xff pattern:$0x73625140]
    %v7016 = vld.sshfl [vmem:[#allocation1 + $0x20] sm:$0xff pattern:$0x73625140]
    %7017 = vrot.lane.b32.xlu0 %v7015, 96
    %v7018 = vpop.permute.xlu0 %7017
    %7019 = vrot.lane.b32.xlu0 %v7016, 96
    %v7020 = vpop.permute.xlu0 %7019
    %v7021 = vsel %vm203, %v7000, 0
    %v7023 = vsel %vm203, %v7001, 0
    %v7025 = vsel %vm203, %v7018, 0
    %v7027 = vsel %vm203, %v7020, 0
    %7029 = vmatpush.xpose.msra.mxu0 0.0
    %7030 = vmatpush.xpose.msra.mxu0 0.0
    %7031 = vmatpush.xpose.msra.mxu0 0.0
    %7032 = vmatpush.xpose.msra.mxu0 0.0
    %7033 = vmatpush.xpose.msra.mxu0 0.0
    %7034 = vmatpush.xpose.msra.mxu0 0.0
    %7035 = vmatpush.xpose.msra.mxu0 0.0
    %7036 = vmatpush.xpose.msra.mxu0 0.0
    %7037 = vmatpush.xpose.msra.mxu0 0.0
    %7038 = vmatpush.xpose.msra.mxu0 0.0
    %7039 = vmatpush.xpose.msra.mxu0 0.0
    %7040 = vmatpush.xpose.msra.mxu0 0.0
    %7041 = vmatpush.xpose.msra.mxu0 0.0
    %7042 = vmatpush.xpose.msra.mxu0 0.0
    %7043 = vmatpush.xpose.msra.mxu0 %v7027
    %7044 = vmatpush.xpose.msra.mxu0 %v7025
    %7045 = vmatmul.f32.gmra.mxu0 %v7021
    %v7046 = vpop.f32.mrf.mxu0
    %v7047 = vadd.f32 0.0, %v7046
    %7048 = vmatmul.f32.gmra.mxu0 %v7023
    %v7049 = vpop.f32.mrf.mxu0
    %v7050 = vadd.f32 0.0, %v7049
    %7051 = vdwg.mxu0
    %v7052 = vsel %vm841, %v6975, -inf
    %7053 = vmax.xlane.f32.xlu0 %v7052
    %v7054 = vpop.xlane.xlu0 %7053
    %v7055 = vsel %vm845, %v6978, -inf
    %7056 = vmax.xlane.f32.xlu0 %v7055
    %v7057 = vpop.xlane.xlu0 %7056
    %v7058 = vsel %vm841, %v7047, -inf
    %7059 = vmax.xlane.f32.xlu0 %v7058
    %v7060 = vpop.xlane.xlu0 %7059
    %v7061 = vsel %vm845, %v7050, -inf
    %7062 = vmax.xlane.f32.xlu0 %v7061
    %v7063 = vpop.xlane.xlu0 %7062
    %v7064 = vsub.f32 %v6975, %v7054
    %v7065 = vsub.f32 %v6978, %v7057
    %v7066 = vsub.f32 %v7047, %v7060
    %v7067 = vsub.f32 %v7050, %v7063
    %v7068 = vmul.f32 %v7064, 1.442695
    %v7069 = vpow.pop %v7068
    %v7070 = vmul.f32 %v7065, 1.442695
    %v7071 = vpow.pop %v7070
    %v7072 = vmul.f32 %v7066, 1.442695
    %v7073 = vpow.pop %v7072
    %v7074 = vmul.f32 %v7067, 1.442695
    %v7075 = vpow.pop %v7074
    %v7076 = vsel %vm841, %v7069, 0.0
    %7077 = vadd.xlane.f32.xlu0 %v7076
    %v7078 = vpop.xlane.xlu0 %7077
    %v7079 = vsel %vm845, %v7071, 0.0
    %7080 = vadd.xlane.f32.xlu0 %v7079
    %v7081 = vpop.xlane.xlu0 %7080
    %v7082 = vsel %vm841, %v7073, 0.0
    %7083 = vadd.xlane.f32.xlu0 %v7082
    %v7084 = vpop.xlane.xlu0 %7083
    %v7085 = vsel %vm845, %v7075, 0.0
    %7086 = vadd.xlane.f32.xlu0 %v7085
    %v7087 = vpop.xlane.xlu0 %7086
    %v7088 = vrcp.pop %v7078
    %v7089 = vrcp.pop %v7081
    %v7090 = vrcp.pop %v7084
    %v7091 = vrcp.pop %v7087
    %v7092 = vmul.f32 %v7069, %v7088
    %v7093 = vmul.f32 %v7071, %v7089
    %v7094 = vmul.f32 %v7073, %v7090
    %v7095 = vmul.f32 %v7075, %v7091
    %7096 = vst [vmem:[#allocation1] ss:$4 sm:$0xff] %v5923
    %s7097 = scalar_lea.vmem [#allocation1], 1
    %7098 = vst [vmem:[%s7097] ss:$4 sm:$0xff] %v5938
    %s7099 = scalar_lea.vmem [#allocation1], 2
    %7100 = vst [vmem:[%s7099] ss:$4 sm:$0xff] %v5939
    %s7101 = scalar_lea.vmem [#allocation1], 3
    %7102 = vst [vmem:[%s7101] ss:$4 sm:$0xff] %v5940
    %s7103 = scalar_lea.vmem [#allocation1], 32
    %7104 = vst [vmem:[%s7103] ss:$4 sm:$0xff] %v5926
    %s7105 = scalar_lea.vmem [#allocation1], 33
    %7106 = vst [vmem:[%s7105] ss:$4 sm:$0xff] %v5941
    %s7107 = scalar_lea.vmem [#allocation1], 34
    %7108 = vst [vmem:[%s7107] ss:$4 sm:$0xff] %v5942
    %v7109 = vld.sshfl [vmem:[#allocation1] sm:$0xff pattern:$0x73625140]
    %v7110 = vld.sshfl [vmem:[#allocation1 + $0x20] sm:$0xff pattern:$0x73625140]
    %7111 = vrot.lane.b32.xlu0 %v7109, 64
    %v7112 = vpop.permute.xlu0 %7111
    %7113 = vrot.lane.b32.xlu0 %v7110, 64
    %v7114 = vpop.permute.xlu0 %7113
    %v7117 = vsel %vm841, %v7092, 0
    %v7120 = vsel %vm841, %v7093, 0
    %v7122 = vsel %vm913, %v7114, 0
    %7124 = vmatpush.msra.mxu0 0.0
    %7125 = vmatpush.msra.mxu0 0.0
    %7126 = vmatpush.msra.mxu0 0.0
    %7127 = vmatpush.msra.mxu0 0.0
    %7128 = vmatpush.msra.mxu0 0.0
    %7129 = vmatpush.msra.mxu0 0.0
    %7130 = vmatpush.msra.mxu0 0.0
    %7131 = vmatpush.msra.mxu0 0.0
    %7132 = vmatpush.msra.mxu0 0.0
    %7133 = vmatpush.msra.mxu0 0.0
    %7134 = vmatpush.msra.mxu0 0.0
    %7135 = vmatpush.msra.mxu0 0.0
    %7136 = vmatpush.msra.mxu0 0.0
    %7137 = vmatpush.msra.mxu0 0.0
    %7138 = vmatpush.msra.mxu0 %v7122
    %7139 = vmatpush.msra.mxu0 %v7112
    %7140 = vmatmul.f32.gmra.mxu0 %v7117
    %v7141 = vpop.f32.mrf.mxu0
    %v7142 = vadd.f32 0.0, %v7141
    %7143 = vmatmul.f32.gmra.mxu0 %v7120
    %v7144 = vpop.f32.mrf.mxu0
    %v7145 = vadd.f32 0.0, %v7144
    %7146 = vdwg.mxu0
    %7147 = vst [vmem:[#allocation1] ss:$4 sm:$0xff] %v5943
    %s7148 = scalar_lea.vmem [#allocation1], 1
    %7149 = vst [vmem:[%s7148] ss:$4 sm:$0xff] %v5929
    %s7150 = scalar_lea.vmem [#allocation1], 2
    %7151 = vst [vmem:[%s7150] ss:$4 sm:$0xff] %v5944
    %s7152 = scalar_lea.vmem [#allocation1], 3
    %7153 = vst [vmem:[%s7152] ss:$4 sm:$0xff] %v5945
    %s7154 = scalar_lea.vmem [#allocation1], 32
    %7155 = vst [vmem:[%s7154] ss:$4 sm:$0xff] %v5946
    %s7156 = scalar_lea.vmem [#allocation1], 33
    %7157 = vst [vmem:[%s7156] ss:$4 sm:$0xff] %v5932
    %s7158 = scalar_lea.vmem [#allocation1], 34
    %7159 = vst [vmem:[%s7158] ss:$4 sm:$0xff] %v5947
    %v7160 = vld.sshfl [vmem:[#allocation1] sm:$0xff pattern:$0x73625140]
    %v7161 = vld.sshfl [vmem:[#allocation1 + $0x20] sm:$0xff pattern:$0x73625140]
    %7162 = vrot.lane.b32.xlu0 %v7160, 64
    %v7163 = vpop.permute.xlu0 %7162
    %7164 = vrot.lane.b32.xlu0 %v7161, 64
    %v7165 = vpop.permute.xlu0 %7164
    %v7168 = vsel %vm841, %v7094, 0
    %v7171 = vsel %vm841, %v7095, 0
    %v7173 = vsel %vm913, %v7165, 0
    %7175 = vmatpush.msra.mxu0 0.0
    %7176 = vmatpush.msra.mxu0 0.0
    %7177 = vmatpush.msra.mxu0 0.0
    %7178 = vmatpush.msra.mxu0 0.0
    %7179 = vmatpush.msra.mxu0 0.0
    %7180 = vmatpush.msra.mxu0 0.0
    %7181 = vmatpush.msra.mxu0 0.0
    %7182 = vmatpush.msra.mxu0 0.0
    %7183 = vmatpush.msra.mxu0 0.0
    %7184 = vmatpush.msra.mxu0 0.0
    %7185 = vmatpush.msra.mxu0 0.0
    %7186 = vmatpush.msra.mxu0 0.0
    %7187 = vmatpush.msra.mxu0 0.0
    %7188 = vmatpush.msra.mxu0 0.0
    %7189 = vmatpush.msra.mxu0 %v7173
    %7190 = vmatpush.msra.mxu0 %v7163
    %7191 = vmatmul.f32.gmra.mxu0 %v7168
    %v7192 = vpop.f32.mrf.mxu0
    %v7193 = vadd.f32 0.0, %v7192
    %7194 = vmatmul.f32.gmra.mxu0 %v7171
    %v7195 = vpop.f32.mrf.mxu0
    %v7196 = vadd.f32 0.0, %v7195
    %7197 = vdwg.mxu0
    %v7198 = vmul.f32 %v7142, %v172
    %v7199 = vmul.f32 %v7145, %v172
    %v7200 = vmul.f32 %v7193, %v172
    %v7201 = vmul.f32 %v7196, %v172
    %v7202 = vadd.f32 %v6890, %v7198
    %v7203 = vadd.f32 %v6891, %v7199
    %v7204 = vadd.f32 %v6892, %v7200
    %v7205 = vadd.f32 %v6893, %v7201
    %v7206 = vld [vmem:[%s5853 + $0x20] sm:$0xff]
    %v7207 = vld [vmem:[%s5853 + $0x28] sm:$0xff]
    %v7208 = vld [vmem:[%s5853 + $0x30] sm:$0xff]
    %v7209 = vld [vmem:[%s5853 + $0x38] sm:$0xff]
    %v7210 = vld [vmem:[%s5448 + $0x4] sm:$0x1]
    %v7211 = vperm.slane %v7210, 0
    %v7216 = vrot.slane %v7202, 2
    %v7217 = vrot.slane %v7202, 4
    %v7218 = vrot.slane %v7202, 6
    %v7219 = vrot.slane %v7203, 2
    %v7220 = vrot.slane %v7203, 4
    %v7221 = vrot.slane %v7204, 2
    %v7222 = vrot.slane %v7204, 4
    %v7223 = vrot.slane %v7204, 6
    %v7224 = vrot.slane %v7205, 2
    %v7225 = vrot.slane %v7205, 4
    %v7227 = vrot.slane %v7211, 2
    %v7228 = vrot.slane %v7211, 4
    %v7229 = vrot.slane %v7211, 6
    %7230 = vst [vmem:[#allocation1] ss:$4 sm:$0xff] %v7202
    %s7231 = scalar_lea.vmem [#allocation1], 1
    %7232 = vst [vmem:[%s7231] ss:$4 sm:$0xff] %v7216
    %s7233 = scalar_lea.vmem [#allocation1], 2
    %7234 = vst [vmem:[%s7233] ss:$4 sm:$0xff] %v7217
    %s7235 = scalar_lea.vmem [#allocation1], 3
    %7236 = vst [vmem:[%s7235] ss:$4 sm:$0xff] %v7218
    %s7237 = scalar_lea.vmem [#allocation1], 32
    %7238 = vst [vmem:[%s7237] ss:$4 sm:$0xff] %v7203
    %s7239 = scalar_lea.vmem [#allocation1], 33
    %7240 = vst [vmem:[%s7239] ss:$4 sm:$0xff] %v7219
    %s7241 = scalar_lea.vmem [#allocation1], 34
    %7242 = vst [vmem:[%s7241] ss:$4 sm:$0xff] %v7220
    %s7243 = scalar_lea.vmem [#allocation1], 35
    %7244 = vst [vmem:[%s7243] ss:$4 sm:$0xff] %v7204
    %v7245 = vld.sshfl [vmem:[#allocation1] sm:$0xff pattern:$0x73625140]
    %v7246 = vld.sshfl [vmem:[#allocation1 + $0x20] sm:$0xff pattern:$0x73625140]
    %7247 = vst [vmem:[#allocation1] ss:$4 sm:$0xff] %v7221
    %7248 = vst [vmem:[%s7231] ss:$4 sm:$0xff] %v7222
    %7249 = vst [vmem:[%s7233] ss:$4 sm:$0xff] %v7223
    %7250 = vst [vmem:[%s7235] ss:$4 sm:$0xff] %v7205
    %7251 = vst [vmem:[%s7237] ss:$4 sm:$0xff] %v7224
    %7252 = vst [vmem:[%s7239] ss:$4 sm:$0xff] %v7225
    %v7253 = vld.sshfl [vmem:[#allocation1] sm:$0xff pattern:$0x73625140]
    %v7254 = vld.sshfl [vmem:[#allocation1 + $0x20] sm:$0xff pattern:$0x73625140]
    %7255 = vst [vmem:[#allocation1] ss:$4 sm:$0xff] %v7211
    %s7256 = scalar_lea.vmem [#allocation1], 1
    %7257 = vst [vmem:[%s7256] ss:$4 sm:$0xff] %v7227
    %s7258 = scalar_lea.vmem [#allocation1], 2
    %7259 = vst [vmem:[%s7258] ss:$4 sm:$0xff] %v7228
    %s7260 = scalar_lea.vmem [#allocation1], 3
    %7261 = vst [vmem:[%s7260] ss:$4 sm:$0xff] %v7229
    %s7262 = scalar_lea.vmem [#allocation1], 32
    %7263 = vst [vmem:[%s7262] ss:$4 sm:$0xff] %v7211
    %s7264 = scalar_lea.vmem [#allocation1], 33
    %7265 = vst [vmem:[%s7264] ss:$4 sm:$0xff] %v7227
    %s7266 = scalar_lea.vmem [#allocation1], 34
    %7267 = vst [vmem:[%s7266] ss:$4 sm:$0xff] %v7228
    %s7268 = scalar_lea.vmem [#allocation1], 35
    %7269 = vst [vmem:[%s7268] ss:$4 sm:$0xff] %v7211
    %v7270 = vld.sshfl [vmem:[#allocation1] sm:$0xff pattern:$0x73625140]
    %v7271 = vld.sshfl [vmem:[#allocation1 + $0x20] sm:$0xff pattern:$0x73625140]
    %7272 = vst [vmem:[#allocation1] ss:$4 sm:$0xff] %v7227
    %7273 = vst [vmem:[%s7256] ss:$4 sm:$0xff] %v7228
    %7274 = vst [vmem:[%s7258] ss:$4 sm:$0xff] %v7229
    %7275 = vst [vmem:[%s7260] ss:$4 sm:$0xff] %v7211
    %7276 = vst [vmem:[%s7262] ss:$4 sm:$0xff] %v7227
    %7277 = vst [vmem:[%s7264] ss:$4 sm:$0xff] %v7228
    %v7278 = vld.sshfl [vmem:[#allocation1] sm:$0xff pattern:$0x73625140]
    %v7279 = vld.sshfl [vmem:[#allocation1 + $0x20] sm:$0xff pattern:$0x73625140]
    %v7284 = vsel %vm203, %v7245, 0
    %v7286 = vsel %vm203, %v7246, 0
    %v7288 = vsel %vm203, %v7253, 0
    %v7290 = vsel %vm203, %v7254, 0
    %7292 = vmatpush.msra.mxu0 0.0
    %7293 = vmatpush.msra.mxu0 0.0
    %7294 = vmatpush.msra.mxu0 0.0
    %7295 = vmatpush.msra.mxu0 0.0
    %7296 = vmatpush.msra.mxu0 0.0
    %7297 = vmatpush.msra.mxu0 0.0
    %7298 = vmatpush.msra.mxu0 0.0
    %7299 = vmatpush.msra.mxu0 0.0
    %7300 = vmatpush.msra.mxu0 0.0
    %7301 = vmatpush.msra.mxu0 0.0
    %7302 = vmatpush.msra.mxu0 0.0
    %7303 = vmatpush.msra.mxu0 0.0
    %7304 = vmatpush.msra.mxu0 %v7209
    %7305 = vmatpush.msra.mxu0 %v7208
    %7306 = vmatpush.msra.mxu0 %v7207
    %7307 = vmatpush.msra.mxu0 %v7206
    %7308 = vmatmul.f32.gmra.mxu0 %v7284
    %v7309 = vpop.f32.mrf.mxu0
    %v7310 = vadd.f32 %v7270, %v7309
    %7311 = vmatmul.f32.gmra.mxu0 %v7286
    %v7312 = vpop.f32.mrf.mxu0
    %v7313 = vadd.f32 %v7271, %v7312
    %7314 = vmatmul.f32.gmra.mxu0 %v7288
    %v7315 = vpop.f32.mrf.mxu0
    %v7316 = vadd.f32 %v7278, %v7315
    %7317 = vmatmul.f32.gmra.mxu0 %v7290
    %v7318 = vpop.f32.mrf.mxu0
    %v7319 = vadd.f32 %v7279, %v7318
    %7320 = vdwg.mxu0
    %v7325 = vrot.slane %v7310, 2
    %v7326 = vrot.slane %v7310, 4
    %v7327 = vrot.slane %v7310, 6
    %v7328 = vrot.slane %v7313, 2
    %v7329 = vrot.slane %v7313, 4
    %v7330 = vrot.slane %v7313, 6
    %v7331 = vrot.slane %v7316, 2
    %v7332 = vrot.slane %v7316, 4
    %v7333 = vrot.slane %v7316, 6
    %v7334 = vrot.slane %v7319, 2
    %v7345 = vadd.f32 %v7310, %v5434
    %v7346 = vadd.f32 %v7325, %v5435
    %v7347 = vadd.f32 %v7326, %v5436
    %v7348 = vadd.f32 %v7327, %v5437
    %v7349 = vadd.f32 %v7313, %v5438
    %v7350 = vadd.f32 %v7328, %v5439
    %v7351 = vadd.f32 %v7329, %v5440
    %v7352 = vadd.f32 %v7330, %v5441
    %v7353 = vadd.f32 %v7316, %v5442
    %v7354 = vadd.f32 %v7331, %v5443
    %v7355 = vadd.f32 %v7332, %v5444
    %v7356 = vadd.f32 %v7333, %v5445
    %v7357 = vadd.f32 %v7319, %v5446
    %v7358 = vadd.f32 %v7334, %v5447
    %v7359 = vld [vmem:[%s5448 + $0x2] sm:$0x1]
    %v7360 = vld [vmem:[%s5448 + $0x3] sm:$0x1]
    %7375 = vst [vmem:[#allocation1] ss:$4 sm:$0xff] %v7345
    %s7376 = scalar_lea.vmem [#allocation1], 1
    %7377 = vst [vmem:[%s7376] ss:$4 sm:$0xff] %v7346
    %s7378 = scalar_lea.vmem [#allocation1], 2
    %7379 = vst [vmem:[%s7378] ss:$4 sm:$0xff] %v7347
    %s7380 = scalar_lea.vmem [#allocation1], 3
    %7381 = vst [vmem:[%s7380] ss:$4 sm:$0xff] %v7348
    %s7382 = scalar_lea.vmem [#allocation1], 32
    %7383 = vst [vmem:[%s7382] ss:$4 sm:$0xff] %v7349
    %s7384 = scalar_lea.vmem [#allocation1], 33
    %7385 = vst [vmem:[%s7384] ss:$4 sm:$0xff] %v7350
    %s7386 = scalar_lea.vmem [#allocation1], 34
    %7387 = vst [vmem:[%s7386] ss:$4 sm:$0xff] %v7351
    %v7388 = vld.sshfl [vmem:[#allocation1] sm:$0xff pattern:$0x73625140]
    %v7389 = vld.sshfl [vmem:[#allocation1 + $0x20] sm:$0xff pattern:$0x73625140]
    %7390 = vst [vmem:[#allocation1] ss:$4 sm:$0xff] %v7352
    %7391 = vst [vmem:[%s7376] ss:$4 sm:$0xff] %v7353
    %7392 = vst [vmem:[%s7378] ss:$4 sm:$0xff] %v7354
    %7393 = vst [vmem:[%s7380] ss:$4 sm:$0xff] %v7355
    %7394 = vst [vmem:[%s7382] ss:$4 sm:$0xff] %v7356
    %7395 = vst [vmem:[%s7384] ss:$4 sm:$0xff] %v7357
    %7396 = vst [vmem:[%s7386] ss:$4 sm:$0xff] %v7358
    %v7397 = vld.sshfl [vmem:[#allocation1] sm:$0xff pattern:$0x73625140]
    %v7398 = vld.sshfl [vmem:[#allocation1 + $0x20] sm:$0xff pattern:$0x73625140]
    %v7403 = vsel %vm203, %v7388, 0.0
    %7404 = vadd.xlane.f32.xlu0 %v7403
    %v7405 = vpop.xlane.xlu0 %7404
    %v7406 = vsel %vm207, %v7389, 0.0
    %7407 = vadd.xlane.f32.xlu0 %v7406
    %v7408 = vpop.xlane.xlu0 %7407
    %v7409 = vsel %vm203, %v7397, 0.0
    %7410 = vadd.xlane.f32.xlu0 %v7409
    %v7411 = vpop.xlane.xlu0 %7410
    %v7412 = vsel %vm207, %v7398, 0.0
    %7413 = vadd.xlane.f32.xlu0 %v7412
    %v7414 = vpop.xlane.xlu0 %7413
    %v7415 = vmul.f32 %v7405, %v223
    %v7416 = vmul.f32 %v7408, %v223
    %v7417 = vmul.f32 %v7411, %v223
    %v7418 = vmul.f32 %v7414, %v223
    %v7419 = vmul.f32 %v7345, %v7345
    %v7420 = vmul.f32 %v7346, %v7346
    %v7421 = vmul.f32 %v7347, %v7347
    %v7422 = vmul.f32 %v7348, %v7348
    %v7423 = vmul.f32 %v7349, %v7349
    %v7424 = vmul.f32 %v7350, %v7350
    %v7425 = vmul.f32 %v7351, %v7351
    %v7426 = vmul.f32 %v7352, %v7352
    %v7427 = vmul.f32 %v7353, %v7353
    %v7428 = vmul.f32 %v7354, %v7354
    %v7429 = vmul.f32 %v7355, %v7355
    %v7430 = vmul.f32 %v7356, %v7356
    %v7431 = vmul.f32 %v7357, %v7357
    %v7432 = vmul.f32 %v7358, %v7358
    %7447 = vst [vmem:[#allocation1] ss:$4 sm:$0xff] %v7419
    %s7448 = scalar_lea.vmem [#allocation1], 1
    %7449 = vst [vmem:[%s7448] ss:$4 sm:$0xff] %v7420
    %s7450 = scalar_lea.vmem [#allocation1], 2
    %7451 = vst [vmem:[%s7450] ss:$4 sm:$0xff] %v7421
    %s7452 = scalar_lea.vmem [#allocation1], 3
    %7453 = vst [vmem:[%s7452] ss:$4 sm:$0xff] %v7422
    %s7454 = scalar_lea.vmem [#allocation1], 32
    %7455 = vst [vmem:[%s7454] ss:$4 sm:$0xff] %v7423
    %s7456 = scalar_lea.vmem [#allocation1], 33
    %7457 = vst [vmem:[%s7456] ss:$4 sm:$0xff] %v7424
    %s7458 = scalar_lea.vmem [#allocation1], 34
    %7459 = vst [vmem:[%s7458] ss:$4 sm:$0xff] %v7425
    %v7460 = vld.sshfl [vmem:[#allocation1] sm:$0xff pattern:$0x73625140]
    %v7461 = vld.sshfl [vmem:[#allocation1 + $0x20] sm:$0xff pattern:$0x73625140]
    %7462 = vst [vmem:[#allocation1] ss:$4 sm:$0xff] %v7426
    %7463 = vst [vmem:[%s7448] ss:$4 sm:$0xff] %v7427
    %7464 = vst [vmem:[%s7450] ss:$4 sm:$0xff] %v7428
    %7465 = vst [vmem:[%s7452] ss:$4 sm:$0xff] %v7429
    %7466 = vst [vmem:[%s7454] ss:$4 sm:$0xff] %v7430
    %7467 = vst [vmem:[%s7456] ss:$4 sm:$0xff] %v7431
    %7468 = vst [vmem:[%s7458] ss:$4 sm:$0xff] %v7432
    %v7469 = vld.sshfl [vmem:[#allocation1] sm:$0xff pattern:$0x73625140]
    %v7470 = vld.sshfl [vmem:[#allocation1 + $0x20] sm:$0xff pattern:$0x73625140]
    %v7475 = vsel %vm203, %v7460, 0.0
    %7476 = vadd.xlane.f32.xlu0 %v7475
    %v7477 = vpop.xlane.xlu0 %7476
    %v7478 = vsel %vm207, %v7461, 0.0
    %7479 = vadd.xlane.f32.xlu0 %v7478
    %v7480 = vpop.xlane.xlu0 %7479
    %v7481 = vsel %vm203, %v7469, 0.0
    %7482 = vadd.xlane.f32.xlu0 %v7481
    %v7483 = vpop.xlane.xlu0 %7482
    %v7484 = vsel %vm207, %v7470, 0.0
    %7485 = vadd.xlane.f32.xlu0 %v7484
    %v7486 = vpop.xlane.xlu0 %7485
    %v7487 = vmul.f32 %v7477, %v223
    %v7488 = vmul.f32 %v7480, %v223
    %v7489 = vmul.f32 %v7483, %v223
    %v7490 = vmul.f32 %v7486, %v223
    %v7496 = vunpack.c.l.s4 269488144
    %v7497 = vunpack.c.0.s8 %v7496
    %v7498 = vperm.slane %v7415, %v7497
    %v7500 = vunpack.c.l.s4 842150450
    %v7501 = vunpack.c.0.s8 %v7500
    %v7502 = vperm.slane %v7415, %v7501
    %v7504 = vunpack.c.l.s4 1414812756
    %v7505 = vunpack.c.0.s8 %v7504
    %v7506 = vperm.slane %v7415, %v7505
    %v7508 = vunpack.c.l.s4 1987475062
    %v7509 = vunpack.c.0.s8 %v7508
    %v7510 = vperm.slane %v7415, %v7509
    %v7512 = vunpack.c.l.s4 269488144
    %v7513 = vunpack.c.0.s8 %v7512
    %v7514 = vperm.slane %v7416, %v7513
    %v7516 = vunpack.c.l.s4 842150450
    %v7517 = vunpack.c.0.s8 %v7516
    %v7518 = vperm.slane %v7416, %v7517
    %v7520 = vunpack.c.l.s4 1414812756
    %v7521 = vunpack.c.0.s8 %v7520
    %v7522 = vperm.slane %v7416, %v7521
    %v7524 = vunpack.c.l.s4 269488144
    %v7525 = vunpack.c.0.s8 %v7524
    %v7526 = vperm.slane %v7417, %v7525
    %v7528 = vunpack.c.l.s4 842150450
    %v7529 = vunpack.c.0.s8 %v7528
    %v7530 = vperm.slane %v7417, %v7529
    %v7532 = vunpack.c.l.s4 1414812756
    %v7533 = vunpack.c.0.s8 %v7532
    %v7534 = vperm.slane %v7417, %v7533
    %v7536 = vunpack.c.l.s4 1987475062
    %v7537 = vunpack.c.0.s8 %v7536
    %v7538 = vperm.slane %v7417, %v7537
    %v7540 = vunpack.c.l.s4 269488144
    %v7541 = vunpack.c.0.s8 %v7540
    %v7542 = vperm.slane %v7418, %v7541
    %v7544 = vunpack.c.l.s4 842150450
    %v7545 = vunpack.c.0.s8 %v7544
    %v7546 = vperm.slane %v7418, %v7545
    %v7548 = vunpack.c.l.s4 1414812756
    %v7549 = vunpack.c.0.s8 %v7548
    %v7550 = vperm.slane %v7418, %v7549
    %v7565 = vsub.f32 %v7345, %v7498
    %v7566 = vsub.f32 %v7346, %v7502
    %v7567 = vsub.f32 %v7347, %v7506
    %v7568 = vsub.f32 %v7348, %v7510
    %v7569 = vsub.f32 %v7349, %v7514
    %v7570 = vsub.f32 %v7350, %v7518
    %v7571 = vsub.f32 %v7351, %v7522
    %v7572 = vsub.f32 %v7352, %v7526
    %v7573 = vsub.f32 %v7353, %v7530
    %v7574 = vsub.f32 %v7354, %v7534
    %v7575 = vsub.f32 %v7355, %v7538
    %v7576 = vsub.f32 %v7356, %v7542
    %v7577 = vsub.f32 %v7357, %v7546
    %v7578 = vsub.f32 %v7358, %v7550
    %v7579 = vmul.f32 %v7415, %v7415
    %v7580 = vmul.f32 %v7416, %v7416
    %v7581 = vmul.f32 %v7417, %v7417
    %v7582 = vmul.f32 %v7418, %v7418
    %v7583 = vsub.f32 %v7487, %v7579
    %v7584 = vsub.f32 %v7488, %v7580
    %v7585 = vsub.f32 %v7489, %v7581
    %v7586 = vsub.f32 %v7490, %v7582
    %v7587 = vadd.f32 %v7583, 1e-05
    %v7588 = vadd.f32 %v7584, 1e-05
    %v7589 = vadd.f32 %v7585, 1e-05
    %v7590 = vadd.f32 %v7586, 1e-05
    %v7591 = vrsqrt.pop %v7587
    %v7592 = vmul.f32 %v7591, %v7587
    %v7593 = vmul.f32 %v7592, %v7591
    %v7594 = vmul.f32 0.5, %v7593
    %v7595 = vsub.f32 1.5, %v7594
    %v7596 = vmul.f32 %v7591, %v7595
    %vm7597 = vweird.f32 %v7587
    %vm7598 = vweird.f32 %v7591
    %vm7599 = vmor %vm7597, %vm7598
    %v7600 = vsel %vm7599, %v7591, %v7596
    %v7601 = vrsqrt.pop %v7588
    %v7602 = vmul.f32 %v7601, %v7588
    %v7603 = vmul.f32 %v7602, %v7601
    %v7604 = vmul.f32 0.5, %v7603
    %v7605 = vsub.f32 1.5, %v7604
    %v7606 = vmul.f32 %v7601, %v7605
    %vm7607 = vweird.f32 %v7588
    %vm7608 = vweird.f32 %v7601
    %vm7609 = vmor %vm7607, %vm7608
    %v7610 = vsel %vm7609, %v7601, %v7606
    %v7611 = vrsqrt.pop %v7589
    %v7612 = vmul.f32 %v7611, %v7589
    %v7613 = vmul.f32 %v7612, %v7611
    %v7614 = vmul.f32 0.5, %v7613
    %v7615 = vsub.f32 1.5, %v7614
    %v7616 = vmul.f32 %v7611, %v7615
    %vm7617 = vweird.f32 %v7589
    %vm7618 = vweird.f32 %v7611
    %vm7619 = vmor %vm7617, %vm7618
    %v7620 = vsel %vm7619, %v7611, %v7616
    %v7621 = vrsqrt.pop %v7590
    %v7622 = vmul.f32 %v7621, %v7590
    %v7623 = vmul.f32 %v7622, %v7621
    %v7624 = vmul.f32 0.5, %v7623
    %v7625 = vsub.f32 1.5, %v7624
    %v7626 = vmul.f32 %v7621, %v7625
    %vm7627 = vweird.f32 %v7590
    %vm7628 = vweird.f32 %v7621
    %vm7629 = vmor %vm7627, %vm7628
    %v7630 = vsel %vm7629, %v7621, %v7626
    %v7636 = vunpack.c.l.s4 269488144
    %v7637 = vunpack.c.0.s8 %v7636
    %v7638 = vperm.slane %v7600, %v7637
    %v7640 = vunpack.c.l.s4 842150450
    %v7641 = vunpack.c.0.s8 %v7640
    %v7642 = vperm.slane %v7600, %v7641
    %v7644 = vunpack.c.l.s4 1414812756
    %v7645 = vunpack.c.0.s8 %v7644
    %v7646 = vperm.slane %v7600, %v7645
    %v7648 = vunpack.c.l.s4 1987475062
    %v7649 = vunpack.c.0.s8 %v7648
    %v7650 = vperm.slane %v7600, %v7649
    %v7652 = vunpack.c.l.s4 269488144
    %v7653 = vunpack.c.0.s8 %v7652
    %v7654 = vperm.slane %v7610, %v7653
    %v7656 = vunpack.c.l.s4 842150450
    %v7657 = vunpack.c.0.s8 %v7656
    %v7658 = vperm.slane %v7610, %v7657
    %v7660 = vunpack.c.l.s4 1414812756
    %v7661 = vunpack.c.0.s8 %v7660
    %v7662 = vperm.slane %v7610, %v7661
    %v7664 = vunpack.c.l.s4 269488144
    %v7665 = vunpack.c.0.s8 %v7664
    %v7666 = vperm.slane %v7620, %v7665
    %v7668 = vunpack.c.l.s4 842150450
    %v7669 = vunpack.c.0.s8 %v7668
    %v7670 = vperm.slane %v7620, %v7669
    %v7672 = vunpack.c.l.s4 1414812756
    %v7673 = vunpack.c.0.s8 %v7672
    %v7674 = vperm.slane %v7620, %v7673
    %v7676 = vunpack.c.l.s4 1987475062
    %v7677 = vunpack.c.0.s8 %v7676
    %v7678 = vperm.slane %v7620, %v7677
    %v7680 = vunpack.c.l.s4 269488144
    %v7681 = vunpack.c.0.s8 %v7680
    %v7682 = vperm.slane %v7630, %v7681
    %v7684 = vunpack.c.l.s4 842150450
    %v7685 = vunpack.c.0.s8 %v7684
    %v7686 = vperm.slane %v7630, %v7685
    %v7688 = vunpack.c.l.s4 1414812756
    %v7689 = vunpack.c.0.s8 %v7688
    %v7690 = vperm.slane %v7630, %v7689
    %v7705 = vmul.f32 %v7565, %v7638
    %v7706 = vmul.f32 %v7566, %v7642
    %v7707 = vmul.f32 %v7567, %v7646
    %v7708 = vmul.f32 %v7568, %v7650
    %v7709 = vmul.f32 %v7569, %v7654
    %v7710 = vmul.f32 %v7570, %v7658
    %v7711 = vmul.f32 %v7571, %v7662
    %v7712 = vmul.f32 %v7572, %v7666
    %v7713 = vmul.f32 %v7573, %v7670
    %v7714 = vmul.f32 %v7574, %v7674
    %v7715 = vmul.f32 %v7575, %v7678
    %v7716 = vmul.f32 %v7576, %v7682
    %v7717 = vmul.f32 %v7577, %v7686
    %v7718 = vmul.f32 %v7578, %v7690
    %v7719 = vperm.slane %v7359, 0
    %v7721 = vrot.slane %v7719, 2
    %v7722 = vrot.slane %v7719, 4
    %v7723 = vrot.slane %v7719, 6
    %v7727 = vmul.f32 %v7705, %v7719
    %v7728 = vmul.f32 %v7706, %v7721
    %v7729 = vmul.f32 %v7707, %v7722
    %v7730 = vmul.f32 %v7708, %v7723
    %v7731 = vmul.f32 %v7709, %v7719
    %v7732 = vmul.f32 %v7710, %v7721
    %v7733 = vmul.f32 %v7711, %v7722
    %v7734 = vmul.f32 %v7712, %v7719
    %v7735 = vmul.f32 %v7713, %v7721
    %v7736 = vmul.f32 %v7714, %v7722
    %v7737 = vmul.f32 %v7715, %v7723
    %v7738 = vmul.f32 %v7716, %v7719
    %v7739 = vmul.f32 %v7717, %v7721
    %v7740 = vmul.f32 %v7718, %v7722
    %v7741 = vperm.slane %v7360, 0
    %v7743 = vrot.slane %v7741, 2
    %v7744 = vrot.slane %v7741, 4
    %v7745 = vrot.slane %v7741, 6
    %v7749 = vadd.f32 %v7727, %v7741
    %v7750 = vadd.f32 %v7728, %v7743
    %v7751 = vadd.f32 %v7729, %v7744
    %v7752 = vadd.f32 %v7730, %v7745
    %v7753 = vadd.f32 %v7731, %v7741
    %v7754 = vadd.f32 %v7732, %v7743
    %v7755 = vadd.f32 %v7733, %v7744
    %v7756 = vadd.f32 %v7734, %v7741
    %v7757 = vadd.f32 %v7735, %v7743
    %v7758 = vadd.f32 %v7736, %v7744
    %v7759 = vadd.f32 %v7737, %v7745
    %v7760 = vadd.f32 %v7738, %v7741
    %v7761 = vadd.f32 %v7739, %v7743
    %v7762 = vadd.f32 %v7740, %v7744
    %v7763 = vld [vmem:[%s5853 + $0x40] sm:$0xff]
    %v7764 = vld [vmem:[%s5853 + $0x48] sm:$0xff]
    %v7765 = vld [vmem:[%s5853 + $0x50] sm:$0xff]
    %v7766 = vld [vmem:[%s5853 + $0x58] sm:$0xff]
    %v7767 = vld [vmem:[%s5448 + $0x6] sm:$0x1]
    %v7768 = vperm.slane %v7767, 0
    %v7770 = vrot.slane %v7768, 2
    %v7771 = vrot.slane %v7768, 4
    %v7772 = vrot.slane %v7768, 6
    %7787 = vst [vmem:[#allocation1] ss:$4 sm:$0xff] %v7749
    %s7788 = scalar_lea.vmem [#allocation1], 1
    %7789 = vst [vmem:[%s7788] ss:$4 sm:$0xff] %v7750
    %s7790 = scalar_lea.vmem [#allocation1], 2
    %7791 = vst [vmem:[%s7790] ss:$4 sm:$0xff] %v7751
    %s7792 = scalar_lea.vmem [#allocation1], 3
    %7793 = vst [vmem:[%s7792] ss:$4 sm:$0xff] %v7752
    %s7794 = scalar_lea.vmem [#allocation1], 32
    %7795 = vst [vmem:[%s7794] ss:$4 sm:$0xff] %v7753
    %s7796 = scalar_lea.vmem [#allocation1], 33
    %7797 = vst [vmem:[%s7796] ss:$4 sm:$0xff] %v7754
    %s7798 = scalar_lea.vmem [#allocation1], 34
    %7799 = vst [vmem:[%s7798] ss:$4 sm:$0xff] %v7755
    %s7800 = scalar_lea.vmem [#allocation1], 35
    %7801 = vst [vmem:[%s7800] ss:$4 sm:$0xff] %v7756
    %v7802 = vld.sshfl [vmem:[#allocation1] sm:$0xff pattern:$0x73625140]
    %v7803 = vld.sshfl [vmem:[#allocation1 + $0x20] sm:$0xff pattern:$0x73625140]
    %7804 = vst [vmem:[#allocation1] ss:$4 sm:$0xff] %v7757
    %7805 = vst [vmem:[%s7788] ss:$4 sm:$0xff] %v7758
    %7806 = vst [vmem:[%s7790] ss:$4 sm:$0xff] %v7759
    %7807 = vst [vmem:[%s7792] ss:$4 sm:$0xff] %v7760
    %7808 = vst [vmem:[%s7794] ss:$4 sm:$0xff] %v7761
    %7809 = vst [vmem:[%s7796] ss:$4 sm:$0xff] %v7762
    %v7810 = vld.sshfl [vmem:[#allocation1] sm:$0xff pattern:$0x73625140]
    %v7811 = vld.sshfl [vmem:[#allocation1 + $0x20] sm:$0xff pattern:$0x73625140]
    %7812 = vst [vmem:[#allocation1] ss:$4 sm:$0xff] %v7768
    %s7813 = scalar_lea.vmem [#allocation1], 1
    %7814 = vst [vmem:[%s7813] ss:$4 sm:$0xff] %v7770
    %s7815 = scalar_lea.vmem [#allocation1], 2
    %7816 = vst [vmem:[%s7815] ss:$4 sm:$0xff] %v7771
    %s7817 = scalar_lea.vmem [#allocation1], 3
    %7818 = vst [vmem:[%s7817] ss:$4 sm:$0xff] %v7772
    %s7819 = scalar_lea.vmem [#allocation1], 32
    %7820 = vst [vmem:[%s7819] ss:$4 sm:$0xff] %v7768
    %s7821 = scalar_lea.vmem [#allocation1], 33
    %7822 = vst [vmem:[%s7821] ss:$4 sm:$0xff] %v7770
    %s7823 = scalar_lea.vmem [#allocation1], 34
    %7824 = vst [vmem:[%s7823] ss:$4 sm:$0xff] %v7771
    %s7825 = scalar_lea.vmem [#allocation1], 35
    %7826 = vst [vmem:[%s7825] ss:$4 sm:$0xff] %v7768
    %v7827 = vld.sshfl [vmem:[#allocation1] sm:$0xff pattern:$0x73625140]
    %v7828 = vld.sshfl [vmem:[#allocation1 + $0x20] sm:$0xff pattern:$0x73625140]
    %7829 = vst [vmem:[#allocation1] ss:$4 sm:$0xff] %v7770
    %7830 = vst [vmem:[%s7813] ss:$4 sm:$0xff] %v7771
    %7831 = vst [vmem:[%s7815] ss:$4 sm:$0xff] %v7772
    %7832 = vst [vmem:[%s7817] ss:$4 sm:$0xff] %v7768
    %7833 = vst [vmem:[%s7819] ss:$4 sm:$0xff] %v7770
    %7834 = vst [vmem:[%s7821] ss:$4 sm:$0xff] %v7771
    %v7835 = vld.sshfl [vmem:[#allocation1] sm:$0xff pattern:$0x73625140]
    %v7836 = vld.sshfl [vmem:[#allocation1 + $0x20] sm:$0xff pattern:$0x73625140]
    %v7841 = vsel %vm203, %v7802, 0
    %v7843 = vsel %vm203, %v7803, 0
    %v7845 = vsel %vm203, %v7810, 0
    %v7847 = vsel %vm203, %v7811, 0
    %7849 = vmatpush.msra.mxu0 0.0
    %7850 = vmatpush.msra.mxu0 0.0
    %7851 = vmatpush.msra.mxu0 0.0
    %7852 = vmatpush.msra.mxu0 0.0
    %7853 = vmatpush.msra.mxu0 0.0
    %7854 = vmatpush.msra.mxu0 0.0
    %7855 = vmatpush.msra.mxu0 0.0
    %7856 = vmatpush.msra.mxu0 0.0
    %7857 = vmatpush.msra.mxu0 0.0
    %7858 = vmatpush.msra.mxu0 0.0
    %7859 = vmatpush.msra.mxu0 0.0
    %7860 = vmatpush.msra.mxu0 0.0
    %7861 = vmatpush.msra.mxu0 %v7766
    %7862 = vmatpush.msra.mxu0 %v7765
    %7863 = vmatpush.msra.mxu0 %v7764
    %7864 = vmatpush.msra.mxu0 %v7763
    %7865 = vmatmul.f32.gmra.mxu0 %v7841
    %v7866 = vpop.f32.mrf.mxu0
    %v7867 = vadd.f32 %v7827, %v7866
    %7868 = vmatmul.f32.gmra.mxu0 %v7843
    %v7869 = vpop.f32.mrf.mxu0
    %v7870 = vadd.f32 %v7828, %v7869
    %7871 = vmatmul.f32.gmra.mxu0 %v7845
    %v7872 = vpop.f32.mrf.mxu0
    %v7873 = vadd.f32 %v7835, %v7872
    %7874 = vmatmul.f32.gmra.mxu0 %v7847
    %v7875 = vpop.f32.mrf.mxu0
    %v7876 = vadd.f32 %v7836, %v7875
    %7877 = vdwg.mxu0
    %v7882 = vrot.slane %v7867, 2
    %v7883 = vrot.slane %v7867, 4
    %v7884 = vrot.slane %v7867, 6
    %v7885 = vrot.slane %v7870, 2
    %v7886 = vrot.slane %v7870, 4
    %v7887 = vrot.slane %v7870, 6
    %v7888 = vrot.slane %v7873, 2
    %v7889 = vrot.slane %v7873, 4
    %v7890 = vrot.slane %v7873, 6
    %v7891 = vrot.slane %v7876, 2
    %v7902 = vmax.f32 %v7867, 0.0
    %v7903 = vmax.f32 %v7882, 0.0
    %v7904 = vmax.f32 %v7883, 0.0
    %v7905 = vmax.f32 %v7884, 0.0
    %v7906 = vmax.f32 %v7870, 0.0
    %v7907 = vmax.f32 %v7885, 0.0
    %v7908 = vmax.f32 %v7886, 0.0
    %v7909 = vmax.f32 %v7887, 0.0
    %v7910 = vmax.f32 %v7873, 0.0
    %v7911 = vmax.f32 %v7888, 0.0
    %v7912 = vmax.f32 %v7889, 0.0
    %v7913 = vmax.f32 %v7890, 0.0
    %v7914 = vmax.f32 %v7876, 0.0
    %v7915 = vmax.f32 %v7891, 0.0
    %v7916 = vld [vmem:[%s5853 + $0x60] sm:$0xff]
    %v7917 = vld [vmem:[%s5853 + $0x68] sm:$0xff]
    %v7918 = vld [vmem:[%s5853 + $0x70] sm:$0xff]
    %v7919 = vld [vmem:[%s5853 + $0x78] sm:$0xff]
    %v7920 = vld [vmem:[%s5853 + $0x80] sm:$0xff]
    %v7921 = vld [vmem:[%s5853 + $0x88] sm:$0xff]
    %v7922 = vld [vmem:[%s5853 + $0x90] sm:$0xff]
    %v7923 = vld [vmem:[%s5853 + $0x98] sm:$0xff]
    %v7924 = vld [vmem:[%s5448 + $0x5] sm:$0x1]
    %v7925 = vperm.slane %v7924, 0
    %v7927 = vrot.slane %v7925, 2
    %v7928 = vrot.slane %v7925, 4
    %v7929 = vrot.slane %v7925, 6
    %7944 = vst [vmem:[#allocation1] ss:$4 sm:$0xff] %v7902
    %s7945 = scalar_lea.vmem [#allocation1], 1
    %7946 = vst [vmem:[%s7945] ss:$4 sm:$0xff] %v7903
    %s7947 = scalar_lea.vmem [#allocation1], 2
    %7948 = vst [vmem:[%s7947] ss:$4 sm:$0xff] %v7904
    %s7949 = scalar_lea.vmem [#allocation1], 3
    %7950 = vst [vmem:[%s7949] ss:$4 sm:$0xff] %v7905
    %s7951 = scalar_lea.vmem [#allocation1], 32
    %7952 = vst [vmem:[%s7951] ss:$4 sm:$0xff] %v7906
    %s7953 = scalar_lea.vmem [#allocation1], 33
    %7954 = vst [vmem:[%s7953] ss:$4 sm:$0xff] %v7907
    %s7955 = scalar_lea.vmem [#allocation1], 34
    %7956 = vst [vmem:[%s7955] ss:$4 sm:$0xff] %v7908
    %s7957 = scalar_lea.vmem [#allocation1], 35
    %7958 = vst [vmem:[%s7957] ss:$4 sm:$0xff] %v7909
    %v7959 = vld.sshfl [vmem:[#allocation1] sm:$0xff pattern:$0x73625140]
    %v7960 = vld.sshfl [vmem:[#allocation1 + $0x20] sm:$0xff pattern:$0x73625140]
    %7961 = vst [vmem:[#allocation1] ss:$4 sm:$0xff] %v7910
    %7962 = vst [vmem:[%s7945] ss:$4 sm:$0xff] %v7911
    %7963 = vst [vmem:[%s7947] ss:$4 sm:$0xff] %v7912
    %7964 = vst [vmem:[%s7949] ss:$4 sm:$0xff] %v7913
    %7965 = vst [vmem:[%s7951] ss:$4 sm:$0xff] %v7914
    %7966 = vst [vmem:[%s7953] ss:$4 sm:$0xff] %v7915
    %v7967 = vld.sshfl [vmem:[#allocation1] sm:$0xff pattern:$0x73625140]
    %v7968 = vld.sshfl [vmem:[#allocation1 + $0x20] sm:$0xff pattern:$0x73625140]
    %7969 = vst [vmem:[#allocation1] ss:$4 sm:$0xff] %v7925
    %s7970 = scalar_lea.vmem [#allocation1], 1
    %7971 = vst [vmem:[%s7970] ss:$4 sm:$0xff] %v7927
    %s7972 = scalar_lea.vmem [#allocation1], 2
    %7973 = vst [vmem:[%s7972] ss:$4 sm:$0xff] %v7928
    %s7974 = scalar_lea.vmem [#allocation1], 3
    %7975 = vst [vmem:[%s7974] ss:$4 sm:$0xff] %v7929
    %s7976 = scalar_lea.vmem [#allocation1], 32
    %7977 = vst [vmem:[%s7976] ss:$4 sm:$0xff] %v7925
    %s7978 = scalar_lea.vmem [#allocation1], 33
    %7979 = vst [vmem:[%s7978] ss:$4 sm:$0xff] %v7927
    %s7980 = scalar_lea.vmem [#allocation1], 34
    %7981 = vst [vmem:[%s7980] ss:$4 sm:$0xff] %v7928
    %s7982 = scalar_lea.vmem [#allocation1], 35
    %7983 = vst [vmem:[%s7982] ss:$4 sm:$0xff] %v7925
    %v7984 = vld.sshfl [vmem:[#allocation1] sm:$0xff pattern:$0x73625140]
    %v7985 = vld.sshfl [vmem:[#allocation1 + $0x20] sm:$0xff pattern:$0x73625140]
    %7986 = vst [vmem:[#allocation1] ss:$4 sm:$0xff] %v7927
    %7987 = vst [vmem:[%s7970] ss:$4 sm:$0xff] %v7928
    %7988 = vst [vmem:[%s7972] ss:$4 sm:$0xff] %v7929
    %7989 = vst [vmem:[%s7974] ss:$4 sm:$0xff] %v7925
    %7990 = vst [vmem:[%s7976] ss:$4 sm:$0xff] %v7927
    %7991 = vst [vmem:[%s7978] ss:$4 sm:$0xff] %v7928
    %v7992 = vld.sshfl [vmem:[#allocation1] sm:$0xff pattern:$0x73625140]
    %v7993 = vld.sshfl [vmem:[#allocation1 + $0x20] sm:$0xff pattern:$0x73625140]
    %v7998 = vsel %vm2747, %v7959, 0
    %v8000 = vsel %vm2747, %v7960, 0
    %v8002 = vsel %vm2747, %v7967, 0
    %v8004 = vsel %vm2747, %v7968, 0
    %8006 = vmatpush.msra.mxu0 0.0
    %8007 = vmatpush.msra.mxu0 0.0
    %8008 = vmatpush.msra.mxu0 0.0
    %8009 = vmatpush.msra.mxu0 0.0
    %8010 = vmatpush.msra.mxu0 0.0
    %8011 = vmatpush.msra.mxu0 0.0
    %8012 = vmatpush.msra.mxu0 0.0
    %8013 = vmatpush.msra.mxu0 0.0
    %8014 = vmatpush.msra.mxu0 %v7923
    %8015 = vmatpush.msra.mxu0 %v7922
    %8016 = vmatpush.msra.mxu0 %v7921
    %8017 = vmatpush.msra.mxu0 %v7920
    %8018 = vmatpush.msra.mxu0 %v7919
    %8019 = vmatpush.msra.mxu0 %v7918
    %8020 = vmatpush.msra.mxu0 %v7917
    %8021 = vmatpush.msra.mxu0 %v7916
    %8022 = vmatmul.f32.gmra.mxu0 %v7998
    %v8023 = vpop.f32.mrf.mxu0
    %v8024 = vadd.f32 %v7984, %v8023
    %8025 = vmatmul.f32.gmra.mxu0 %v8000
    %v8026 = vpop.f32.mrf.mxu0
    %v8027 = vadd.f32 %v7985, %v8026
    %8028 = vmatmul.f32.gmra.mxu0 %v8002
    %v8029 = vpop.f32.mrf.mxu0
    %v8030 = vadd.f32 %v7992, %v8029
    %8031 = vmatmul.f32.gmra.mxu0 %v8004
    %v8032 = vpop.f32.mrf.mxu0
    %v8033 = vadd.f32 %v7993, %v8032
    %8034 = vdwg.mxu0
    %v8039 = vrot.slane %v8024, 2
    %v8040 = vrot.slane %v8024, 4
    %v8041 = vrot.slane %v8024, 6
    %v8042 = vrot.slane %v8027, 2
    %v8043 = vrot.slane %v8027, 4
    %v8044 = vrot.slane %v8027, 6
    %v8045 = vrot.slane %v8030, 2
    %v8046 = vrot.slane %v8030, 4
    %v8047 = vrot.slane %v8030, 6
    %v8048 = vrot.slane %v8033, 2
    %v8059 = vadd.f32 %v8024, %v7345
    %v8060 = vadd.f32 %v8039, %v7346
    %v8061 = vadd.f32 %v8040, %v7347
    %v8062 = vadd.f32 %v8041, %v7348
    %v8063 = vadd.f32 %v8027, %v7349
    %v8064 = vadd.f32 %v8042, %v7350
    %v8065 = vadd.f32 %v8043, %v7351
    %v8066 = vadd.f32 %v8044, %v7352
    %v8067 = vadd.f32 %v8030, %v7353
    %v8068 = vadd.f32 %v8045, %v7354
    %v8069 = vadd.f32 %v8046, %v7355
    %v8070 = vadd.f32 %v8047, %v7356
    %v8071 = vadd.f32 %v8033, %v7357
    %v8072 = vadd.f32 %v8048, %v7358
    %s8073 = scalar_lea.vmem %s4, 24
    %v8074 = vld [vmem:[%s8073] sm:$0x1]
    %v8075 = vld [vmem:[%s8073 + $0x1] sm:$0x1]
    %8090 = vst [vmem:[#allocation1] ss:$4 sm:$0xff] %v8059
    %s8091 = scalar_lea.vmem [#allocation1], 1
    %8092 = vst [vmem:[%s8091] ss:$4 sm:$0xff] %v8060
    %s8093 = scalar_lea.vmem [#allocation1], 2
    %8094 = vst [vmem:[%s8093] ss:$4 sm:$0xff] %v8061
    %s8095 = scalar_lea.vmem [#allocation1], 3
    %8096 = vst [vmem:[%s8095] ss:$4 sm:$0xff] %v8062
    %s8097 = scalar_lea.vmem [#allocation1], 32
    %8098 = vst [vmem:[%s8097] ss:$4 sm:$0xff] %v8063
    %s8099 = scalar_lea.vmem [#allocation1], 33
    %8100 = vst [vmem:[%s8099] ss:$4 sm:$0xff] %v8064
    %s8101 = scalar_lea.vmem [#allocation1], 34
    %8102 = vst [vmem:[%s8101] ss:$4 sm:$0xff] %v8065
    %v8103 = vld.sshfl [vmem:[#allocation1] sm:$0xff pattern:$0x73625140]
    %v8104 = vld.sshfl [vmem:[#allocation1 + $0x20] sm:$0xff pattern:$0x73625140]
    %8105 = vst [vmem:[#allocation1] ss:$4 sm:$0xff] %v8066
    %8106 = vst [vmem:[%s8091] ss:$4 sm:$0xff] %v8067
    %8107 = vst [vmem:[%s8093] ss:$4 sm:$0xff] %v8068
    %8108 = vst [vmem:[%s8095] ss:$4 sm:$0xff] %v8069
    %8109 = vst [vmem:[%s8097] ss:$4 sm:$0xff] %v8070
    %8110 = vst [vmem:[%s8099] ss:$4 sm:$0xff] %v8071
    %8111 = vst [vmem:[%s8101] ss:$4 sm:$0xff] %v8072
    %v8112 = vld.sshfl [vmem:[#allocation1] sm:$0xff pattern:$0x73625140]
    %v8113 = vld.sshfl [vmem:[#allocation1 + $0x20] sm:$0xff pattern:$0x73625140]
    %v8118 = vsel %vm203, %v8103, 0.0
    %8119 = vadd.xlane.f32.xlu0 %v8118
    %v8120 = vpop.xlane.xlu0 %8119
    %v8121 = vsel %vm207, %v8104, 0.0
    %8122 = vadd.xlane.f32.xlu0 %v8121
    %v8123 = vpop.xlane.xlu0 %8122
    %v8124 = vsel %vm203, %v8112, 0.0
    %8125 = vadd.xlane.f32.xlu0 %v8124
    %v8126 = vpop.xlane.xlu0 %8125
    %v8127 = vsel %vm207, %v8113, 0.0
    %8128 = vadd.xlane.f32.xlu0 %v8127
    %v8129 = vpop.xlane.xlu0 %8128
    %v8130 = vmul.f32 %v8120, %v223
    %v8131 = vmul.f32 %v8123, %v223
    %v8132 = vmul.f32 %v8126, %v223
    %v8133 = vmul.f32 %v8129, %v223
    %v8134 = vmul.f32 %v8059, %v8059
    %v8135 = vmul.f32 %v8060, %v8060
    %v8136 = vmul.f32 %v8061, %v8061
    %v8137 = vmul.f32 %v8062, %v8062
    %v8138 = vmul.f32 %v8063, %v8063
    %v8139 = vmul.f32 %v8064, %v8064
    %v8140 = vmul.f32 %v8065, %v8065
    %v8141 = vmul.f32 %v8066, %v8066
    %v8142 = vmul.f32 %v8067, %v8067
    %v8143 = vmul.f32 %v8068, %v8068
    %v8144 = vmul.f32 %v8069, %v8069
    %v8145 = vmul.f32 %v8070, %v8070
    %v8146 = vmul.f32 %v8071, %v8071
    %v8147 = vmul.f32 %v8072, %v8072
    %8162 = vst [vmem:[#allocation1] ss:$4 sm:$0xff] %v8134
    %s8163 = scalar_lea.vmem [#allocation1], 1
    %8164 = vst [vmem:[%s8163] ss:$4 sm:$0xff] %v8135
    %s8165 = scalar_lea.vmem [#allocation1], 2
    %8166 = vst [vmem:[%s8165] ss:$4 sm:$0xff] %v8136
    %s8167 = scalar_lea.vmem [#allocation1], 3
    %8168 = vst [vmem:[%s8167] ss:$4 sm:$0xff] %v8137
    %s8169 = scalar_lea.vmem [#allocation1], 32
    %8170 = vst [vmem:[%s8169] ss:$4 sm:$0xff] %v8138
    %s8171 = scalar_lea.vmem [#allocation1], 33
    %8172 = vst [vmem:[%s8171] ss:$4 sm:$0xff] %v8139
    %s8173 = scalar_lea.vmem [#allocation1], 34
    %8174 = vst [vmem:[%s8173] ss:$4 sm:$0xff] %v8140
    %v8175 = vld.sshfl [vmem:[#allocation1] sm:$0xff pattern:$0x73625140]
    %v8176 = vld.sshfl [vmem:[#allocation1 + $0x20] sm:$0xff pattern:$0x73625140]
    %8177 = vst [vmem:[#allocation1] ss:$4 sm:$0xff] %v8141
    %8178 = vst [vmem:[%s8163] ss:$4 sm:$0xff] %v8142
    %8179 = vst [vmem:[%s8165] ss:$4 sm:$0xff] %v8143
    %8180 = vst [vmem:[%s8167] ss:$4 sm:$0xff] %v8144
    %8181 = vst [vmem:[%s8169] ss:$4 sm:$0xff] %v8145
    %8182 = vst [vmem:[%s8171] ss:$4 sm:$0xff] %v8146
    %8183 = vst [vmem:[%s8173] ss:$4 sm:$0xff] %v8147
    %v8184 = vld.sshfl [vmem:[#allocation1] sm:$0xff pattern:$0x73625140]
    %v8185 = vld.sshfl [vmem:[#allocation1 + $0x20] sm:$0xff pattern:$0x73625140]
    %v8190 = vsel %vm203, %v8175, 0.0
    %8191 = vadd.xlane.f32.xlu0 %v8190
    %v8192 = vpop.xlane.xlu0 %8191
    %v8193 = vsel %vm207, %v8176, 0.0
    %8194 = vadd.xlane.f32.xlu0 %v8193
    %v8195 = vpop.xlane.xlu0 %8194
    %v8196 = vsel %vm203, %v8184, 0.0
    %8197 = vadd.xlane.f32.xlu0 %v8196
    %v8198 = vpop.xlane.xlu0 %8197
    %v8199 = vsel %vm207, %v8185, 0.0
    %8200 = vadd.xlane.f32.xlu0 %v8199
    %v8201 = vpop.xlane.xlu0 %8200
    %v8202 = vmul.f32 %v8192, %v223
    %v8203 = vmul.f32 %v8195, %v223
    %v8204 = vmul.f32 %v8198, %v223
    %v8205 = vmul.f32 %v8201, %v223
    %v8211 = vunpack.c.l.s4 269488144
    %v8212 = vunpack.c.0.s8 %v8211
    %v8213 = vperm.slane %v8130, %v8212
    %v8215 = vunpack.c.l.s4 842150450
    %v8216 = vunpack.c.0.s8 %v8215
    %v8217 = vperm.slane %v8130, %v8216
    %v8219 = vunpack.c.l.s4 1414812756
    %v8220 = vunpack.c.0.s8 %v8219
    %v8221 = vperm.slane %v8130, %v8220
    %v8223 = vunpack.c.l.s4 1987475062
    %v8224 = vunpack.c.0.s8 %v8223
    %v8225 = vperm.slane %v8130, %v8224
    %v8227 = vunpack.c.l.s4 269488144
    %v8228 = vunpack.c.0.s8 %v8227
    %v8229 = vperm.slane %v8131, %v8228
    %v8231 = vunpack.c.l.s4 842150450
    %v8232 = vunpack.c.0.s8 %v8231
    %v8233 = vperm.slane %v8131, %v8232
    %v8235 = vunpack.c.l.s4 1414812756
    %v8236 = vunpack.c.0.s8 %v8235
    %v8237 = vperm.slane %v8131, %v8236
    %v8239 = vunpack.c.l.s4 269488144
    %v8240 = vunpack.c.0.s8 %v8239
    %v8241 = vperm.slane %v8132, %v8240
    %v8243 = vunpack.c.l.s4 842150450
    %v8244 = vunpack.c.0.s8 %v8243
    %v8245 = vperm.slane %v8132, %v8244
    %v8247 = vunpack.c.l.s4 1414812756
    %v8248 = vunpack.c.0.s8 %v8247
    %v8249 = vperm.slane %v8132, %v8248
    %v8251 = vunpack.c.l.s4 1987475062
    %v8252 = vunpack.c.0.s8 %v8251
    %v8253 = vperm.slane %v8132, %v8252
    %v8255 = vunpack.c.l.s4 269488144
    %v8256 = vunpack.c.0.s8 %v8255
    %v8257 = vperm.slane %v8133, %v8256
    %v8259 = vunpack.c.l.s4 842150450
    %v8260 = vunpack.c.0.s8 %v8259
    %v8261 = vperm.slane %v8133, %v8260
    %v8263 = vunpack.c.l.s4 1414812756
    %v8264 = vunpack.c.0.s8 %v8263
    %v8265 = vperm.slane %v8133, %v8264
    %v8280 = vsub.f32 %v8059, %v8213
    %v8281 = vsub.f32 %v8060, %v8217
    %v8282 = vsub.f32 %v8061, %v8221
    %v8283 = vsub.f32 %v8062, %v8225
    %v8284 = vsub.f32 %v8063, %v8229
    %v8285 = vsub.f32 %v8064, %v8233
    %v8286 = vsub.f32 %v8065, %v8237
    %v8287 = vsub.f32 %v8066, %v8241
    %v8288 = vsub.f32 %v8067, %v8245
    %v8289 = vsub.f32 %v8068, %v8249
    %v8290 = vsub.f32 %v8069, %v8253
    %v8291 = vsub.f32 %v8070, %v8257
    %v8292 = vsub.f32 %v8071, %v8261
    %v8293 = vsub.f32 %v8072, %v8265
    %v8294 = vmul.f32 %v8130, %v8130
    %v8295 = vmul.f32 %v8131, %v8131
    %v8296 = vmul.f32 %v8132, %v8132
    %v8297 = vmul.f32 %v8133, %v8133
    %v8298 = vsub.f32 %v8202, %v8294
    %v8299 = vsub.f32 %v8203, %v8295
    %v8300 = vsub.f32 %v8204, %v8296
    %v8301 = vsub.f32 %v8205, %v8297
    %v8302 = vadd.f32 %v8298, 1e-05
    %v8303 = vadd.f32 %v8299, 1e-05
    %v8304 = vadd.f32 %v8300, 1e-05
    %v8305 = vadd.f32 %v8301, 1e-05
    %v8306 = vrsqrt.pop %v8302
    %v8307 = vmul.f32 %v8306, %v8302
    %v8308 = vmul.f32 %v8307, %v8306
    %v8309 = vmul.f32 0.5, %v8308
    %v8310 = vsub.f32 1.5, %v8309
    %v8311 = vmul.f32 %v8306, %v8310
    %vm8312 = vweird.f32 %v8302
    %vm8313 = vweird.f32 %v8306
    %vm8314 = vmor %vm8312, %vm8313
    %v8315 = vsel %vm8314, %v8306, %v8311
    %v8316 = vrsqrt.pop %v8303
    %v8317 = vmul.f32 %v8316, %v8303
    %v8318 = vmul.f32 %v8317, %v8316
    %v8319 = vmul.f32 0.5, %v8318
    %v8320 = vsub.f32 1.5, %v8319
    %v8321 = vmul.f32 %v8316, %v8320
    %vm8322 = vweird.f32 %v8303
    %vm8323 = vweird.f32 %v8316
    %vm8324 = vmor %vm8322, %vm8323
    %v8325 = vsel %vm8324, %v8316, %v8321
    %v8326 = vrsqrt.pop %v8304
    %v8327 = vmul.f32 %v8326, %v8304
    %v8328 = vmul.f32 %v8327, %v8326
    %v8329 = vmul.f32 0.5, %v8328
    %v8330 = vsub.f32 1.5, %v8329
    %v8331 = vmul.f32 %v8326, %v8330
    %vm8332 = vweird.f32 %v8304
    %vm8333 = vweird.f32 %v8326
    %vm8334 = vmor %vm8332, %vm8333
    %v8335 = vsel %vm8334, %v8326, %v8331
    %v8336 = vrsqrt.pop %v8305
    %v8337 = vmul.f32 %v8336, %v8305
    %v8338 = vmul.f32 %v8337, %v8336
    %v8339 = vmul.f32 0.5, %v8338
    %v8340 = vsub.f32 1.5, %v8339
    %v8341 = vmul.f32 %v8336, %v8340
    %vm8342 = vweird.f32 %v8305
    %vm8343 = vweird.f32 %v8336
    %vm8344 = vmor %vm8342, %vm8343
    %v8345 = vsel %vm8344, %v8336, %v8341
    %v8351 = vunpack.c.l.s4 269488144
    %v8352 = vunpack.c.0.s8 %v8351
    %v8353 = vperm.slane %v8315, %v8352
    %v8355 = vunpack.c.l.s4 842150450
    %v8356 = vunpack.c.0.s8 %v8355
    %v8357 = vperm.slane %v8315, %v8356
    %v8359 = vunpack.c.l.s4 1414812756
    %v8360 = vunpack.c.0.s8 %v8359
    %v8361 = vperm.slane %v8315, %v8360
    %v8363 = vunpack.c.l.s4 1987475062
    %v8364 = vunpack.c.0.s8 %v8363
    %v8365 = vperm.slane %v8315, %v8364
    %v8367 = vunpack.c.l.s4 269488144
    %v8368 = vunpack.c.0.s8 %v8367
    %v8369 = vperm.slane %v8325, %v8368
    %v8371 = vunpack.c.l.s4 842150450
    %v8372 = vunpack.c.0.s8 %v8371
    %v8373 = vperm.slane %v8325, %v8372
    %v8375 = vunpack.c.l.s4 1414812756
    %v8376 = vunpack.c.0.s8 %v8375
    %v8377 = vperm.slane %v8325, %v8376
    %v8379 = vunpack.c.l.s4 269488144
    %v8380 = vunpack.c.0.s8 %v8379
    %v8381 = vperm.slane %v8335, %v8380
    %v8383 = vunpack.c.l.s4 842150450
    %v8384 = vunpack.c.0.s8 %v8383
    %v8385 = vperm.slane %v8335, %v8384
    %v8387 = vunpack.c.l.s4 1414812756
    %v8388 = vunpack.c.0.s8 %v8387
    %v8389 = vperm.slane %v8335, %v8388
    %v8391 = vunpack.c.l.s4 1987475062
    %v8392 = vunpack.c.0.s8 %v8391
    %v8393 = vperm.slane %v8335, %v8392
    %v8395 = vunpack.c.l.s4 269488144
    %v8396 = vunpack.c.0.s8 %v8395
    %v8397 = vperm.slane %v8345, %v8396
    %v8399 = vunpack.c.l.s4 842150450
    %v8400 = vunpack.c.0.s8 %v8399
    %v8401 = vperm.slane %v8345, %v8400
    %v8403 = vunpack.c.l.s4 1414812756
    %v8404 = vunpack.c.0.s8 %v8403
    %v8405 = vperm.slane %v8345, %v8404
    %v8420 = vmul.f32 %v8280, %v8353
    %v8421 = vmul.f32 %v8281, %v8357
    %v8422 = vmul.f32 %v8282, %v8361
    %v8423 = vmul.f32 %v8283, %v8365
    %v8424 = vmul.f32 %v8284, %v8369
    %v8425 = vmul.f32 %v8285, %v8373
    %v8426 = vmul.f32 %v8286, %v8377
    %v8427 = vmul.f32 %v8287, %v8381
    %v8428 = vmul.f32 %v8288, %v8385
    %v8429 = vmul.f32 %v8289, %v8389
    %v8430 = vmul.f32 %v8290, %v8393
    %v8431 = vmul.f32 %v8291, %v8397
    %v8432 = vmul.f32 %v8292, %v8401
    %v8433 = vmul.f32 %v8293, %v8405
    %v8434 = vperm.slane %v8074, 0
    %v8436 = vrot.slane %v8434, 2
    %v8437 = vrot.slane %v8434, 4
    %v8438 = vrot.slane %v8434, 6
    %v8442 = vmul.f32 %v8420, %v8434
    %v8443 = vmul.f32 %v8421, %v8436
    %v8444 = vmul.f32 %v8422, %v8437
    %v8445 = vmul.f32 %v8423, %v8438
    %v8446 = vmul.f32 %v8424, %v8434
    %v8447 = vmul.f32 %v8425, %v8436
    %v8448 = vmul.f32 %v8426, %v8437
    %v8449 = vmul.f32 %v8427, %v8434
    %v8450 = vmul.f32 %v8428, %v8436
    %v8451 = vmul.f32 %v8429, %v8437
    %v8452 = vmul.f32 %v8430, %v8438
    %v8453 = vmul.f32 %v8431, %v8434
    %v8454 = vmul.f32 %v8432, %v8436
    %v8455 = vmul.f32 %v8433, %v8437
    %v8456 = vperm.slane %v8075, 0
    %v8458 = vrot.slane %v8456, 2
    %v8459 = vrot.slane %v8456, 4
    %v8460 = vrot.slane %v8456, 6
    %v8464 = vadd.f32 %v8442, %v8456
    %v8465 = vadd.f32 %v8443, %v8458
    %v8466 = vadd.f32 %v8444, %v8459
    %v8467 = vadd.f32 %v8445, %v8460
    %v8468 = vadd.f32 %v8446, %v8456
    %v8469 = vadd.f32 %v8447, %v8458
    %v8470 = vadd.f32 %v8448, %v8459
    %v8471 = vadd.f32 %v8449, %v8456
    %v8472 = vadd.f32 %v8450, %v8458
    %v8473 = vadd.f32 %v8451, %v8459
    %v8474 = vadd.f32 %v8452, %v8460
    %v8475 = vadd.f32 %v8453, %v8456
    %v8476 = vadd.f32 %v8454, %v8458
    %v8477 = vadd.f32 %v8455, %v8459
    %s8478 = scalar_lea.vmem [#allocation2], 480
    %v8479 = vld [vmem:[%s8478] sm:$0xff]
    %v8480 = vld [vmem:[%s8478 + $0x8] sm:$0xff]
    %v8481 = vld [vmem:[%s8478 + $0x10] sm:$0xff]
    %v8482 = vld [vmem:[%s8478 + $0x18] sm:$0xff]
    %8497 = vst [vmem:[#allocation1] ss:$4 sm:$0xff] %v8464
    %s8498 = scalar_lea.vmem [#allocation1], 1
    %8499 = vst [vmem:[%s8498] ss:$4 sm:$0xff] %v8465
    %s8500 = scalar_lea.vmem [#allocation1], 2
    %8501 = vst [vmem:[%s8500] ss:$4 sm:$0xff] %v8466
    %s8502 = scalar_lea.vmem [#allocation1], 3
    %8503 = vst [vmem:[%s8502] ss:$4 sm:$0xff] %v8467
    %s8504 = scalar_lea.vmem [#allocation1], 32
    %8505 = vst [vmem:[%s8504] ss:$4 sm:$0xff] %v8468
    %s8506 = scalar_lea.vmem [#allocation1], 33
    %8507 = vst [vmem:[%s8506] ss:$4 sm:$0xff] %v8469
    %s8508 = scalar_lea.vmem [#allocation1], 34
    %8509 = vst [vmem:[%s8508] ss:$4 sm:$0xff] %v8470
    %s8510 = scalar_lea.vmem [#allocation1], 35
    %8511 = vst [vmem:[%s8510] ss:$4 sm:$0xff] %v8471
    %v8512 = vld.sshfl [vmem:[#allocation1] sm:$0xff pattern:$0x73625140]
    %v8513 = vld.sshfl [vmem:[#allocation1 + $0x20] sm:$0xff pattern:$0x73625140]
    %8514 = vst [vmem:[#allocation1] ss:$4 sm:$0xff] %v8472
    %8515 = vst [vmem:[%s8498] ss:$4 sm:$0xff] %v8473
    %8516 = vst [vmem:[%s8500] ss:$4 sm:$0xff] %v8474
    %8517 = vst [vmem:[%s8502] ss:$4 sm:$0xff] %v8475
    %8518 = vst [vmem:[%s8504] ss:$4 sm:$0xff] %v8476
    %8519 = vst [vmem:[%s8506] ss:$4 sm:$0xff] %v8477
    %v8520 = vld.sshfl [vmem:[#allocation1] sm:$0xff pattern:$0x73625140]
    %v8521 = vld.sshfl [vmem:[#allocation1 + $0x20] sm:$0xff pattern:$0x73625140]
    %v8522 = vsel %vm203, %v8512, 0
    %v8524 = vsel %vm203, %v8513, 0
    %v8526 = vsel %vm203, %v8520, 0
    %v8528 = vsel %vm203, %v8521, 0
    %8530 = vmatpush.msra.mxu0 0.0
    %8531 = vmatpush.msra.mxu0 0.0
    %8532 = vmatpush.msra.mxu0 0.0
    %8533 = vmatpush.msra.mxu0 0.0
    %8534 = vmatpush.msra.mxu0 0.0
    %8535 = vmatpush.msra.mxu0 0.0
    %8536 = vmatpush.msra.mxu0 0.0
    %8537 = vmatpush.msra.mxu0 0.0
    %8538 = vmatpush.msra.mxu0 0.0
    %8539 = vmatpush.msra.mxu0 0.0
    %8540 = vmatpush.msra.mxu0 0.0
    %8541 = vmatpush.msra.mxu0 0.0
    %8542 = vmatpush.msra.mxu0 %v8482
    %8543 = vmatpush.msra.mxu0 %v8481
    %8544 = vmatpush.msra.mxu0 %v8480
    %8545 = vmatpush.msra.mxu0 %v8479
    %8546 = vmatmul.f32.gmra.mxu0 %v8522
    %v8547 = vpop.f32.mrf.mxu0
    %v8548 = vadd.f32 0.0, %v8547
    %8549 = vmatmul.f32.gmra.mxu0 %v8524
    %v8550 = vpop.f32.mrf.mxu0
    %v8551 = vadd.f32 0.0, %v8550
    %8552 = vmatmul.f32.gmra.mxu0 %v8526
    %v8553 = vpop.f32.mrf.mxu0
    %v8554 = vadd.f32 0.0, %v8553
    %8555 = vmatmul.f32.gmra.mxu0 %v8528
    %v8556 = vpop.f32.mrf.mxu0
    %v8557 = vadd.f32 0.0, %v8556
    %8558 = vdwg.mxu0
    %v8563 = vrot.slane %v8548, 2
    %v8564 = vrot.slane %v8548, 4
    %v8565 = vrot.slane %v8548, 6
    %v8566 = vrot.slane %v8551, 2
    %v8567 = vrot.slane %v8551, 4
    %v8568 = vrot.slane %v8551, 6
    %v8569 = vrot.slane %v8554, 2
    %v8570 = vrot.slane %v8554, 4
    %v8571 = vrot.slane %v8554, 6
    %v8572 = vrot.slane %v8557, 2
    %v8583 = vmul.f32 %v8548, %v157
    %v8584 = vmul.f32 %v8563, %v677
    %v8585 = vmul.f32 %v8564, %v678
    %v8586 = vmul.f32 %v8565, %v679
    %v8587 = vmul.f32 %v8551, %v157
    %v8588 = vmul.f32 %v8566, %v677
    %v8589 = vmul.f32 %v8567, %v678
    %v8590 = vmul.f32 %v8568, %v157
    %v8591 = vmul.f32 %v8554, %v677
    %v8592 = vmul.f32 %v8569, %v678
    %v8593 = vmul.f32 %v8570, %v679
    %v8594 = vmul.f32 %v8571, %v157
    %v8595 = vmul.f32 %v8557, %v677
    %v8596 = vmul.f32 %v8572, %v678
    %8604 = vst [vmem:[#allocation1] ss:$4 sm:$0xff] %v8583
    %s8605 = scalar_lea.vmem [#allocation1], 1
    %8606 = vst [vmem:[%s8605] ss:$4 sm:$0xff] %v8584
    %s8607 = scalar_lea.vmem [#allocation1], 2
    %8608 = vst [vmem:[%s8607] ss:$4 sm:$0xff] %v8585
    %s8609 = scalar_lea.vmem [#allocation1], 3
    %8610 = vst [vmem:[%s8609] ss:$4 sm:$0xff] %v8586
    %s8611 = scalar_lea.vmem [#allocation1], 32
    %8612 = vst [vmem:[%s8611] ss:$4 sm:$0xff] %v8587
    %s8613 = scalar_lea.vmem [#allocation1], 33
    %8614 = vst [vmem:[%s8613] ss:$4 sm:$0xff] %v8588
    %s8615 = scalar_lea.vmem [#allocation1], 34
    %8616 = vst [vmem:[%s8615] ss:$4 sm:$0xff] %v8589
    %v8617 = vld.sshfl [vmem:[#allocation1] sm:$0xff pattern:$0x73625140]
    %v8618 = vld.sshfl [vmem:[#allocation1 + $0x20] sm:$0xff pattern:$0x73625140]
    %8619 = vst [vmem:[#allocation1] ss:$4 sm:$0xff] %v8548
    %s8620 = scalar_lea.vmem [#allocation1], 1
    %8621 = vst [vmem:[%s8620] ss:$4 sm:$0xff] %v8563
    %s8622 = scalar_lea.vmem [#allocation1], 2
    %8623 = vst [vmem:[%s8622] ss:$4 sm:$0xff] %v8564
    %s8624 = scalar_lea.vmem [#allocation1], 3
    %8625 = vst [vmem:[%s8624] ss:$4 sm:$0xff] %v8565
    %s8626 = scalar_lea.vmem [#allocation1], 32
    %8627 = vst [vmem:[%s8626] ss:$4 sm:$0xff] %v8551
    %s8628 = scalar_lea.vmem [#allocation1], 33
    %8629 = vst [vmem:[%s8628] ss:$4 sm:$0xff] %v8566
    %s8630 = scalar_lea.vmem [#allocation1], 34
    %8631 = vst [vmem:[%s8630] ss:$4 sm:$0xff] %v8567
    %v8632 = vld.sshfl [vmem:[#allocation1] sm:$0xff pattern:$0x73625140]
    %v8633 = vld.sshfl [vmem:[#allocation1 + $0x20] sm:$0xff pattern:$0x73625140]
    %8634 = vrot.lane.b32.xlu0 %v8632, 96
    %v8635 = vpop.permute.xlu0 %8634
    %8636 = vrot.lane.b32.xlu0 %v8633, 96
    %v8637 = vpop.permute.xlu0 %8636
    %v8638 = vsel %vm203, %v8617, 0
    %v8640 = vsel %vm203, %v8618, 0
    %v8642 = vsel %vm203, %v8635, 0
    %v8644 = vsel %vm203, %v8637, 0
    %8646 = vmatpush.xpose.msra.mxu0 0.0
    %8647 = vmatpush.xpose.msra.mxu0 0.0
    %8648 = vmatpush.xpose.msra.mxu0 0.0
    %8649 = vmatpush.xpose.msra.mxu0 0.0
    %8650 = vmatpush.xpose.msra.mxu0 0.0
    %8651 = vmatpush.xpose.msra.mxu0 0.0
    %8652 = vmatpush.xpose.msra.mxu0 0.0
    %8653 = vmatpush.xpose.msra.mxu0 0.0
    %8654 = vmatpush.xpose.msra.mxu0 0.0
    %8655 = vmatpush.xpose.msra.mxu0 0.0
    %8656 = vmatpush.xpose.msra.mxu0 0.0
    %8657 = vmatpush.xpose.msra.mxu0 0.0
    %8658 = vmatpush.xpose.msra.mxu0 0.0
    %8659 = vmatpush.xpose.msra.mxu0 0.0
    %8660 = vmatpush.xpose.msra.mxu0 %v8644
    %8661 = vmatpush.xpose.msra.mxu0 %v8642
    %8662 = vmatmul.f32.gmra.mxu0 %v8638
    %v8663 = vpop.f32.mrf.mxu0
    %v8664 = vadd.f32 0.0, %v8663
    %8665 = vmatmul.f32.gmra.mxu0 %v8640
    %v8666 = vpop.f32.mrf.mxu0
    %v8667 = vadd.f32 0.0, %v8666
    %8668 = vdwg.mxu0
    %8676 = vst [vmem:[#allocation1] ss:$4 sm:$0xff] %v8590
    %s8677 = scalar_lea.vmem [#allocation1], 1
    %8678 = vst [vmem:[%s8677] ss:$4 sm:$0xff] %v8591
    %s8679 = scalar_lea.vmem [#allocation1], 2
    %8680 = vst [vmem:[%s8679] ss:$4 sm:$0xff] %v8592
    %s8681 = scalar_lea.vmem [#allocation1], 3
    %8682 = vst [vmem:[%s8681] ss:$4 sm:$0xff] %v8593
    %s8683 = scalar_lea.vmem [#allocation1], 32
    %8684 = vst [vmem:[%s8683] ss:$4 sm:$0xff] %v8594
    %s8685 = scalar_lea.vmem [#allocation1], 33
    %8686 = vst [vmem:[%s8685] ss:$4 sm:$0xff] %v8595
    %s8687 = scalar_lea.vmem [#allocation1], 34
    %8688 = vst [vmem:[%s8687] ss:$4 sm:$0xff] %v8596
    %v8689 = vld.sshfl [vmem:[#allocation1] sm:$0xff pattern:$0x73625140]
    %v8690 = vld.sshfl [vmem:[#allocation1 + $0x20] sm:$0xff pattern:$0x73625140]
    %8691 = vst [vmem:[#allocation1] ss:$4 sm:$0xff] %v8568
    %s8692 = scalar_lea.vmem [#allocation1], 1
    %8693 = vst [vmem:[%s8692] ss:$4 sm:$0xff] %v8554
    %s8694 = scalar_lea.vmem [#allocation1], 2
    %8695 = vst [vmem:[%s8694] ss:$4 sm:$0xff] %v8569
    %s8696 = scalar_lea.vmem [#allocation1], 3
    %8697 = vst [vmem:[%s8696] ss:$4 sm:$0xff] %v8570
    %s8698 = scalar_lea.vmem [#allocation1], 32
    %8699 = vst [vmem:[%s8698] ss:$4 sm:$0xff] %v8571
    %s8700 = scalar_lea.vmem [#allocation1], 33
    %8701 = vst [vmem:[%s8700] ss:$4 sm:$0xff] %v8557
    %s8702 = scalar_lea.vmem [#allocation1], 34
    %8703 = vst [vmem:[%s8702] ss:$4 sm:$0xff] %v8572
    %v8704 = vld.sshfl [vmem:[#allocation1] sm:$0xff pattern:$0x73625140]
    %v8705 = vld.sshfl [vmem:[#allocation1 + $0x20] sm:$0xff pattern:$0x73625140]
    %8706 = vrot.lane.b32.xlu0 %v8704, 96
    %v8707 = vpop.permute.xlu0 %8706
    %8708 = vrot.lane.b32.xlu0 %v8705, 96
    %v8709 = vpop.permute.xlu0 %8708
    %v8710 = vsel %vm203, %v8689, 0
    %v8712 = vsel %vm203, %v8690, 0
    %v8714 = vsel %vm203, %v8707, 0
    %v8716 = vsel %vm203, %v8709, 0
    %8718 = vmatpush.xpose.msra.mxu0 0.0
    %8719 = vmatpush.xpose.msra.mxu0 0.0
    %8720 = vmatpush.xpose.msra.mxu0 0.0
    %8721 = vmatpush.xpose.msra.mxu0 0.0
    %8722 = vmatpush.xpose.msra.mxu0 0.0
    %8723 = vmatpush.xpose.msra.mxu0 0.0
    %8724 = vmatpush.xpose.msra.mxu0 0.0
    %8725 = vmatpush.xpose.msra.mxu0 0.0
    %8726 = vmatpush.xpose.msra.mxu0 0.0
    %8727 = vmatpush.xpose.msra.mxu0 0.0
    %8728 = vmatpush.xpose.msra.mxu0 0.0
    %8729 = vmatpush.xpose.msra.mxu0 0.0
    %8730 = vmatpush.xpose.msra.mxu0 0.0
    %8731 = vmatpush.xpose.msra.mxu0 0.0
    %8732 = vmatpush.xpose.msra.mxu0 %v8716
    %8733 = vmatpush.xpose.msra.mxu0 %v8714
    %8734 = vmatmul.f32.gmra.mxu0 %v8710
    %v8735 = vpop.f32.mrf.mxu0
    %v8736 = vadd.f32 0.0, %v8735
    %8737 = vmatmul.f32.gmra.mxu0 %v8712
    %v8738 = vpop.f32.mrf.mxu0
    %v8739 = vadd.f32 0.0, %v8738
    %8740 = vdwg.mxu0
    %v8741 = vsel %vm841, %v8664, -inf
    %8742 = vmax.xlane.f32.xlu0 %v8741
    %v8743 = vpop.xlane.xlu0 %8742
    %v8744 = vsel %vm845, %v8667, -inf
    %8745 = vmax.xlane.f32.xlu0 %v8744
    %v8746 = vpop.xlane.xlu0 %8745
    %v8747 = vsel %vm841, %v8736, -inf
    %8748 = vmax.xlane.f32.xlu0 %v8747
    %v8749 = vpop.xlane.xlu0 %8748
    %v8750 = vsel %vm845, %v8739, -inf
    %8751 = vmax.xlane.f32.xlu0 %v8750
    %v8752 = vpop.xlane.xlu0 %8751
    %v8753 = vsub.f32 %v8664, %v8743
    %v8754 = vsub.f32 %v8667, %v8746
    %v8755 = vsub.f32 %v8736, %v8749
    %v8756 = vsub.f32 %v8739, %v8752
    %v8757 = vmul.f32 %v8753, 1.442695
    %v8758 = vpow.pop %v8757
    %v8759 = vmul.f32 %v8754, 1.442695
    %v8760 = vpow.pop %v8759
    %v8761 = vmul.f32 %v8755, 1.442695
    %v8762 = vpow.pop %v8761
    %v8763 = vmul.f32 %v8756, 1.442695
    %v8764 = vpow.pop %v8763
    %v8765 = vsel %vm841, %v8758, 0.0
    %8766 = vadd.xlane.f32.xlu0 %v8765
    %v8767 = vpop.xlane.xlu0 %8766
    %v8768 = vsel %vm845, %v8760, 0.0
    %8769 = vadd.xlane.f32.xlu0 %v8768
    %v8770 = vpop.xlane.xlu0 %8769
    %v8771 = vsel %vm841, %v8762, 0.0
    %8772 = vadd.xlane.f32.xlu0 %v8771
    %v8773 = vpop.xlane.xlu0 %8772
    %v8774 = vsel %vm845, %v8764, 0.0
    %8775 = vadd.xlane.f32.xlu0 %v8774
    %v8776 = vpop.xlane.xlu0 %8775
    %v8777 = vrcp.pop %v8767
    %v8778 = vrcp.pop %v8770
    %v8779 = vrcp.pop %v8773
    %v8780 = vrcp.pop %v8776
    %v8781 = vmul.f32 %v8758, %v8777
    %v8782 = vmul.f32 %v8760, %v8778
    %v8783 = vmul.f32 %v8762, %v8779
    %v8784 = vmul.f32 %v8764, %v8780
    %8785 = vst [vmem:[#allocation1] ss:$4 sm:$0xff] %v8548
    %s8786 = scalar_lea.vmem [#allocation1], 1
    %8787 = vst [vmem:[%s8786] ss:$4 sm:$0xff] %v8563
    %s8788 = scalar_lea.vmem [#allocation1], 2
    %8789 = vst [vmem:[%s8788] ss:$4 sm:$0xff] %v8564
    %s8790 = scalar_lea.vmem [#allocation1], 3
    %8791 = vst [vmem:[%s8790] ss:$4 sm:$0xff] %v8565
    %s8792 = scalar_lea.vmem [#allocation1], 32
    %8793 = vst [vmem:[%s8792] ss:$4 sm:$0xff] %v8551
    %s8794 = scalar_lea.vmem [#allocation1], 33
    %8795 = vst [vmem:[%s8794] ss:$4 sm:$0xff] %v8566
    %s8796 = scalar_lea.vmem [#allocation1], 34
    %8797 = vst [vmem:[%s8796] ss:$4 sm:$0xff] %v8567
    %v8798 = vld.sshfl [vmem:[#allocation1] sm:$0xff pattern:$0x73625140]
    %v8799 = vld.sshfl [vmem:[#allocation1 + $0x20] sm:$0xff pattern:$0x73625140]
    %8800 = vrot.lane.b32.xlu0 %v8798, 64
    %v8801 = vpop.permute.xlu0 %8800
    %8802 = vrot.lane.b32.xlu0 %v8799, 64
    %v8803 = vpop.permute.xlu0 %8802
    %v8806 = vsel %vm841, %v8781, 0
    %v8809 = vsel %vm841, %v8782, 0
    %v8811 = vsel %vm913, %v8803, 0
    %8813 = vmatpush.msra.mxu0 0.0
    %8814 = vmatpush.msra.mxu0 0.0
    %8815 = vmatpush.msra.mxu0 0.0
    %8816 = vmatpush.msra.mxu0 0.0
    %8817 = vmatpush.msra.mxu0 0.0
    %8818 = vmatpush.msra.mxu0 0.0
    %8819 = vmatpush.msra.mxu0 0.0
    %8820 = vmatpush.msra.mxu0 0.0
    %8821 = vmatpush.msra.mxu0 0.0
    %8822 = vmatpush.msra.mxu0 0.0
    %8823 = vmatpush.msra.mxu0 0.0
    %8824 = vmatpush.msra.mxu0 0.0
    %8825 = vmatpush.msra.mxu0 0.0
    %8826 = vmatpush.msra.mxu0 0.0
    %8827 = vmatpush.msra.mxu0 %v8811
    %8828 = vmatpush.msra.mxu0 %v8801
    %8829 = vmatmul.f32.gmra.mxu0 %v8806
    %v8830 = vpop.f32.mrf.mxu0
    %v8831 = vadd.f32 0.0, %v8830
    %8832 = vmatmul.f32.gmra.mxu0 %v8809
    %v8833 = vpop.f32.mrf.mxu0
    %v8834 = vadd.f32 0.0, %v8833
    %8835 = vdwg.mxu0
    %8836 = vst [vmem:[#allocation1] ss:$4 sm:$0xff] %v8568
    %s8837 = scalar_lea.vmem [#allocation1], 1
    %8838 = vst [vmem:[%s8837] ss:$4 sm:$0xff] %v8554
    %s8839 = scalar_lea.vmem [#allocation1], 2
    %8840 = vst [vmem:[%s8839] ss:$4 sm:$0xff] %v8569
    %s8841 = scalar_lea.vmem [#allocation1], 3
    %8842 = vst [vmem:[%s8841] ss:$4 sm:$0xff] %v8570
    %s8843 = scalar_lea.vmem [#allocation1], 32
    %8844 = vst [vmem:[%s8843] ss:$4 sm:$0xff] %v8571
    %s8845 = scalar_lea.vmem [#allocation1], 33
    %8846 = vst [vmem:[%s8845] ss:$4 sm:$0xff] %v8557
    %s8847 = scalar_lea.vmem [#allocation1], 34
    %8848 = vst [vmem:[%s8847] ss:$4 sm:$0xff] %v8572
    %v8849 = vld.sshfl [vmem:[#allocation1] sm:$0xff pattern:$0x73625140]
    %v8850 = vld.sshfl [vmem:[#allocation1 + $0x20] sm:$0xff pattern:$0x73625140]
    %8851 = vrot.lane.b32.xlu0 %v8849, 64
    %v8852 = vpop.permute.xlu0 %8851
    %8853 = vrot.lane.b32.xlu0 %v8850, 64
    %v8854 = vpop.permute.xlu0 %8853
    %v8857 = vsel %vm841, %v8783, 0
    %v8860 = vsel %vm841, %v8784, 0
    %v8862 = vsel %vm913, %v8854, 0
    %8864 = vmatpush.msra.mxu0 0.0
    %8865 = vmatpush.msra.mxu0 0.0
    %8866 = vmatpush.msra.mxu0 0.0
    %8867 = vmatpush.msra.mxu0 0.0
    %8868 = vmatpush.msra.mxu0 0.0
    %8869 = vmatpush.msra.mxu0 0.0
    %8870 = vmatpush.msra.mxu0 0.0
    %8871 = vmatpush.msra.mxu0 0.0
    %8872 = vmatpush.msra.mxu0 0.0
    %8873 = vmatpush.msra.mxu0 0.0
    %8874 = vmatpush.msra.mxu0 0.0
    %8875 = vmatpush.msra.mxu0 0.0
    %8876 = vmatpush.msra.mxu0 0.0
    %8877 = vmatpush.msra.mxu0 0.0
    %8878 = vmatpush.msra.mxu0 %v8862
    %8879 = vmatpush.msra.mxu0 %v8852
    %8880 = vmatmul.f32.gmra.mxu0 %v8857
    %v8881 = vpop.f32.mrf.mxu0
    %v8882 = vadd.f32 0.0, %v8881
    %8883 = vmatmul.f32.gmra.mxu0 %v8860
    %v8884 = vpop.f32.mrf.mxu0
    %v8885 = vadd.f32 0.0, %v8884
    %8886 = vdwg.mxu0
    %v8887 = vmul.f32 %v8831, %v157
    %v8888 = vmul.f32 %v8834, %v157
    %v8889 = vmul.f32 %v8882, %v157
    %v8890 = vmul.f32 %v8885, %v157
    %v8891 = vadd.f32 %v8887, 0.0
    %v8892 = vadd.f32 %v8888, 0.0
    %v8893 = vadd.f32 %v8889, 0.0
    %v8894 = vadd.f32 %v8890, 0.0
    %v8895 = vmul.f32 %v8548, %v162
    %v8896 = vmul.f32 %v8563, %v999
    %v8897 = vmul.f32 %v8564, %v1000
    %v8898 = vmul.f32 %v8565, %v1001
    %v8899 = vmul.f32 %v8551, %v162
    %v8900 = vmul.f32 %v8566, %v999
    %v8901 = vmul.f32 %v8567, %v1000
    %v8902 = vmul.f32 %v8568, %v162
    %v8903 = vmul.f32 %v8554, %v999
    %v8904 = vmul.f32 %v8569, %v1000
    %v8905 = vmul.f32 %v8570, %v1001
    %v8906 = vmul.f32 %v8571, %v162
    %v8907 = vmul.f32 %v8557, %v999
    %v8908 = vmul.f32 %v8572, %v1000
    %8916 = vst [vmem:[#allocation1] ss:$4 sm:$0xff] %v8895
    %s8917 = scalar_lea.vmem [#allocation1], 1
    %8918 = vst [vmem:[%s8917] ss:$4 sm:$0xff] %v8896
    %s8919 = scalar_lea.vmem [#allocation1], 2
    %8920 = vst [vmem:[%s8919] ss:$4 sm:$0xff] %v8897
    %s8921 = scalar_lea.vmem [#allocation1], 3
    %8922 = vst [vmem:[%s8921] ss:$4 sm:$0xff] %v8898
    %s8923 = scalar_lea.vmem [#allocation1], 32
    %8924 = vst [vmem:[%s8923] ss:$4 sm:$0xff] %v8899
    %s8925 = scalar_lea.vmem [#allocation1], 33
    %8926 = vst [vmem:[%s8925] ss:$4 sm:$0xff] %v8900
    %s8927 = scalar_lea.vmem [#allocation1], 34
    %8928 = vst [vmem:[%s8927] ss:$4 sm:$0xff] %v8901
    %v8929 = vld.sshfl [vmem:[#allocation1] sm:$0xff pattern:$0x73625140]
    %v8930 = vld.sshfl [vmem:[#allocation1 + $0x20] sm:$0xff pattern:$0x73625140]
    %8931 = vst [vmem:[#allocation1] ss:$4 sm:$0xff] %v8548
    %s8932 = scalar_lea.vmem [#allocation1], 1
    %8933 = vst [vmem:[%s8932] ss:$4 sm:$0xff] %v8563
    %s8934 = scalar_lea.vmem [#allocation1], 2
    %8935 = vst [vmem:[%s8934] ss:$4 sm:$0xff] %v8564
    %s8936 = scalar_lea.vmem [#allocation1], 3
    %8937 = vst [vmem:[%s8936] ss:$4 sm:$0xff] %v8565
    %s8938 = scalar_lea.vmem [#allocation1], 32
    %8939 = vst [vmem:[%s8938] ss:$4 sm:$0xff] %v8551
    %s8940 = scalar_lea.vmem [#allocation1], 33
    %8941 = vst [vmem:[%s8940] ss:$4 sm:$0xff] %v8566
    %s8942 = scalar_lea.vmem [#allocation1], 34
    %8943 = vst [vmem:[%s8942] ss:$4 sm:$0xff] %v8567
    %v8944 = vld.sshfl [vmem:[#allocation1] sm:$0xff pattern:$0x73625140]
    %v8945 = vld.sshfl [vmem:[#allocation1 + $0x20] sm:$0xff pattern:$0x73625140]
    %8946 = vrot.lane.b32.xlu0 %v8944, 96
    %v8947 = vpop.permute.xlu0 %8946
    %8948 = vrot.lane.b32.xlu0 %v8945, 96
    %v8949 = vpop.permute.xlu0 %8948
    %v8950 = vsel %vm203, %v8929, 0
    %v8952 = vsel %vm203, %v8930, 0
    %v8954 = vsel %vm203, %v8947, 0
    %v8956 = vsel %vm203, %v8949, 0
    %8958 = vmatpush.xpose.msra.mxu0 0.0
    %8959 = vmatpush.xpose.msra.mxu0 0.0
    %8960 = vmatpush.xpose.msra.mxu0 0.0
    %8961 = vmatpush.xpose.msra.mxu0 0.0
    %8962 = vmatpush.xpose.msra.mxu0 0.0
    %8963 = vmatpush.xpose.msra.mxu0 0.0
    %8964 = vmatpush.xpose.msra.mxu0 0.0
    %8965 = vmatpush.xpose.msra.mxu0 0.0
    %8966 = vmatpush.xpose.msra.mxu0 0.0
    %8967 = vmatpush.xpose.msra.mxu0 0.0
    %8968 = vmatpush.xpose.msra.mxu0 0.0
    %8969 = vmatpush.xpose.msra.mxu0 0.0
    %8970 = vmatpush.xpose.msra.mxu0 0.0
    %8971 = vmatpush.xpose.msra.mxu0 0.0
    %8972 = vmatpush.xpose.msra.mxu0 %v8956
    %8973 = vmatpush.xpose.msra.mxu0 %v8954
    %8974 = vmatmul.f32.gmra.mxu0 %v8950
    %v8975 = vpop.f32.mrf.mxu0
    %v8976 = vadd.f32 0.0, %v8975
    %8977 = vmatmul.f32.gmra.mxu0 %v8952
    %v8978 = vpop.f32.mrf.mxu0
    %v8979 = vadd.f32 0.0, %v8978
    %8980 = vdwg.mxu0
    %8988 = vst [vmem:[#allocation1] ss:$4 sm:$0xff] %v8902
    %s8989 = scalar_lea.vmem [#allocation1], 1
    %8990 = vst [vmem:[%s8989] ss:$4 sm:$0xff] %v8903
    %s8991 = scalar_lea.vmem [#allocation1], 2
    %8992 = vst [vmem:[%s8991] ss:$4 sm:$0xff] %v8904
    %s8993 = scalar_lea.vmem [#allocation1], 3
    %8994 = vst [vmem:[%s8993] ss:$4 sm:$0xff] %v8905
    %s8995 = scalar_lea.vmem [#allocation1], 32
    %8996 = vst [vmem:[%s8995] ss:$4 sm:$0xff] %v8906
    %s8997 = scalar_lea.vmem [#allocation1], 33
    %8998 = vst [vmem:[%s8997] ss:$4 sm:$0xff] %v8907
    %s8999 = scalar_lea.vmem [#allocation1], 34
    %9000 = vst [vmem:[%s8999] ss:$4 sm:$0xff] %v8908
    %v9001 = vld.sshfl [vmem:[#allocation1] sm:$0xff pattern:$0x73625140]
    %v9002 = vld.sshfl [vmem:[#allocation1 + $0x20] sm:$0xff pattern:$0x73625140]
    %9003 = vst [vmem:[#allocation1] ss:$4 sm:$0xff] %v8568
    %s9004 = scalar_lea.vmem [#allocation1], 1
    %9005 = vst [vmem:[%s9004] ss:$4 sm:$0xff] %v8554
    %s9006 = scalar_lea.vmem [#allocation1], 2
    %9007 = vst [vmem:[%s9006] ss:$4 sm:$0xff] %v8569
    %s9008 = scalar_lea.vmem [#allocation1], 3
    %9009 = vst [vmem:[%s9008] ss:$4 sm:$0xff] %v8570
    %s9010 = scalar_lea.vmem [#allocation1], 32
    %9011 = vst [vmem:[%s9010] ss:$4 sm:$0xff] %v8571
    %s9012 = scalar_lea.vmem [#allocation1], 33
    %9013 = vst [vmem:[%s9012] ss:$4 sm:$0xff] %v8557
    %s9014 = scalar_lea.vmem [#allocation1], 34
    %9015 = vst [vmem:[%s9014] ss:$4 sm:$0xff] %v8572
    %v9016 = vld.sshfl [vmem:[#allocation1] sm:$0xff pattern:$0x73625140]
    %v9017 = vld.sshfl [vmem:[#allocation1 + $0x20] sm:$0xff pattern:$0x73625140]
    %9018 = vrot.lane.b32.xlu0 %v9016, 96
    %v9019 = vpop.permute.xlu0 %9018
    %9020 = vrot.lane.b32.xlu0 %v9017, 96
    %v9021 = vpop.permute.xlu0 %9020
    %v9022 = vsel %vm203, %v9001, 0
    %v9024 = vsel %vm203, %v9002, 0
    %v9026 = vsel %vm203, %v9019, 0
    %v9028 = vsel %vm203, %v9021, 0
    %9030 = vmatpush.xpose.msra.mxu0 0.0
    %9031 = vmatpush.xpose.msra.mxu0 0.0
    %9032 = vmatpush.xpose.msra.mxu0 0.0
    %9033 = vmatpush.xpose.msra.mxu0 0.0
    %9034 = vmatpush.xpose.msra.mxu0 0.0
    %9035 = vmatpush.xpose.msra.mxu0 0.0
    %9036 = vmatpush.xpose.msra.mxu0 0.0
    %9037 = vmatpush.xpose.msra.mxu0 0.0
    %9038 = vmatpush.xpose.msra.mxu0 0.0
    %9039 = vmatpush.xpose.msra.mxu0 0.0
    %9040 = vmatpush.xpose.msra.mxu0 0.0
    %9041 = vmatpush.xpose.msra.mxu0 0.0
    %9042 = vmatpush.xpose.msra.mxu0 0.0
    %9043 = vmatpush.xpose.msra.mxu0 0.0
    %9044 = vmatpush.xpose.msra.mxu0 %v9028
    %9045 = vmatpush.xpose.msra.mxu0 %v9026
    %9046 = vmatmul.f32.gmra.mxu0 %v9022
    %v9047 = vpop.f32.mrf.mxu0
    %v9048 = vadd.f32 0.0, %v9047
    %9049 = vmatmul.f32.gmra.mxu0 %v9024
    %v9050 = vpop.f32.mrf.mxu0
    %v9051 = vadd.f32 0.0, %v9050
    %9052 = vdwg.mxu0
    %v9053 = vsel %vm841, %v8976, -inf
    %9054 = vmax.xlane.f32.xlu0 %v9053
    %v9055 = vpop.xlane.xlu0 %9054
    %v9056 = vsel %vm845, %v8979, -inf
    %9057 = vmax.xlane.f32.xlu0 %v9056
    %v9058 = vpop.xlane.xlu0 %9057
    %v9059 = vsel %vm841, %v9048, -inf
    %9060 = vmax.xlane.f32.xlu0 %v9059
    %v9061 = vpop.xlane.xlu0 %9060
    %v9062 = vsel %vm845, %v9051, -inf
    %9063 = vmax.xlane.f32.xlu0 %v9062
    %v9064 = vpop.xlane.xlu0 %9063
    %v9065 = vsub.f32 %v8976, %v9055
    %v9066 = vsub.f32 %v8979, %v9058
    %v9067 = vsub.f32 %v9048, %v9061
    %v9068 = vsub.f32 %v9051, %v9064
    %v9069 = vmul.f32 %v9065, 1.442695
    %v9070 = vpow.pop %v9069
    %v9071 = vmul.f32 %v9066, 1.442695
    %v9072 = vpow.pop %v9071
    %v9073 = vmul.f32 %v9067, 1.442695
    %v9074 = vpow.pop %v9073
    %v9075 = vmul.f32 %v9068, 1.442695
    %v9076 = vpow.pop %v9075
    %v9077 = vsel %vm841, %v9070, 0.0
    %9078 = vadd.xlane.f32.xlu0 %v9077
    %v9079 = vpop.xlane.xlu0 %9078
    %v9080 = vsel %vm845, %v9072, 0.0
    %9081 = vadd.xlane.f32.xlu0 %v9080
    %v9082 = vpop.xlane.xlu0 %9081
    %v9083 = vsel %vm841, %v9074, 0.0
    %9084 = vadd.xlane.f32.xlu0 %v9083
    %v9085 = vpop.xlane.xlu0 %9084
    %v9086 = vsel %vm845, %v9076, 0.0
    %9087 = vadd.xlane.f32.xlu0 %v9086
    %v9088 = vpop.xlane.xlu0 %9087
    %v9089 = vrcp.pop %v9079
    %v9090 = vrcp.pop %v9082
    %v9091 = vrcp.pop %v9085
    %v9092 = vrcp.pop %v9088
    %v9093 = vmul.f32 %v9070, %v9089
    %v9094 = vmul.f32 %v9072, %v9090
    %v9095 = vmul.f32 %v9074, %v9091
    %v9096 = vmul.f32 %v9076, %v9092
    %9097 = vst [vmem:[#allocation1] ss:$4 sm:$0xff] %v8548
    %s9098 = scalar_lea.vmem [#allocation1], 1
    %9099 = vst [vmem:[%s9098] ss:$4 sm:$0xff] %v8563
    %s9100 = scalar_lea.vmem [#allocation1], 2
    %9101 = vst [vmem:[%s9100] ss:$4 sm:$0xff] %v8564
    %s9102 = scalar_lea.vmem [#allocation1], 3
    %9103 = vst [vmem:[%s9102] ss:$4 sm:$0xff] %v8565
    %s9104 = scalar_lea.vmem [#allocation1], 32
    %9105 = vst [vmem:[%s9104] ss:$4 sm:$0xff] %v8551
    %s9106 = scalar_lea.vmem [#allocation1], 33
    %9107 = vst [vmem:[%s9106] ss:$4 sm:$0xff] %v8566
    %s9108 = scalar_lea.vmem [#allocation1], 34
    %9109 = vst [vmem:[%s9108] ss:$4 sm:$0xff] %v8567
    %v9110 = vld.sshfl [vmem:[#allocation1] sm:$0xff pattern:$0x73625140]
    %v9111 = vld.sshfl [vmem:[#allocation1 + $0x20] sm:$0xff pattern:$0x73625140]
    %9112 = vrot.lane.b32.xlu0 %v9110, 64
    %v9113 = vpop.permute.xlu0 %9112
    %9114 = vrot.lane.b32.xlu0 %v9111, 64
    %v9115 = vpop.permute.xlu0 %9114
    %v9118 = vsel %vm841, %v9093, 0
    %v9121 = vsel %vm841, %v9094, 0
    %v9123 = vsel %vm913, %v9115, 0
    %9125 = vmatpush.msra.mxu0 0.0
    %9126 = vmatpush.msra.mxu0 0.0
    %9127 = vmatpush.msra.mxu0 0.0
    %9128 = vmatpush.msra.mxu0 0.0
    %9129 = vmatpush.msra.mxu0 0.0
    %9130 = vmatpush.msra.mxu0 0.0
    %9131 = vmatpush.msra.mxu0 0.0
    %9132 = vmatpush.msra.mxu0 0.0
    %9133 = vmatpush.msra.mxu0 0.0
    %9134 = vmatpush.msra.mxu0 0.0
    %9135 = vmatpush.msra.mxu0 0.0
    %9136 = vmatpush.msra.mxu0 0.0
    %9137 = vmatpush.msra.mxu0 0.0
    %9138 = vmatpush.msra.mxu0 0.0
    %9139 = vmatpush.msra.mxu0 %v9123
    %9140 = vmatpush.msra.mxu0 %v9113
    %9141 = vmatmul.f32.gmra.mxu0 %v9118
    %v9142 = vpop.f32.mrf.mxu0
    %v9143 = vadd.f32 0.0, %v9142
    %9144 = vmatmul.f32.gmra.mxu0 %v9121
    %v9145 = vpop.f32.mrf.mxu0
    %v9146 = vadd.f32 0.0, %v9145
    %9147 = vdwg.mxu0
    %9148 = vst [vmem:[#allocation1] ss:$4 sm:$0xff] %v8568
    %s9149 = scalar_lea.vmem [#allocation1], 1
    %9150 = vst [vmem:[%s9149] ss:$4 sm:$0xff] %v8554
    %s9151 = scalar_lea.vmem [#allocation1], 2
    %9152 = vst [vmem:[%s9151] ss:$4 sm:$0xff] %v8569
    %s9153 = scalar_lea.vmem [#allocation1], 3
    %9154 = vst [vmem:[%s9153] ss:$4 sm:$0xff] %v8570
    %s9155 = scalar_lea.vmem [#allocation1], 32
    %9156 = vst [vmem:[%s9155] ss:$4 sm:$0xff] %v8571
    %s9157 = scalar_lea.vmem [#allocation1], 33
    %9158 = vst [vmem:[%s9157] ss:$4 sm:$0xff] %v8557
    %s9159 = scalar_lea.vmem [#allocation1], 34
    %9160 = vst [vmem:[%s9159] ss:$4 sm:$0xff] %v8572
    %v9161 = vld.sshfl [vmem:[#allocation1] sm:$0xff pattern:$0x73625140]
    %v9162 = vld.sshfl [vmem:[#allocation1 + $0x20] sm:$0xff pattern:$0x73625140]
    %9163 = vrot.lane.b32.xlu0 %v9161, 64
    %v9164 = vpop.permute.xlu0 %9163
    %9165 = vrot.lane.b32.xlu0 %v9162, 64
    %v9166 = vpop.permute.xlu0 %9165
    %v9169 = vsel %vm841, %v9095, 0
    %v9172 = vsel %vm841, %v9096, 0
    %v9174 = vsel %vm913, %v9166, 0
    %9176 = vmatpush.msra.mxu0 0.0
    %9177 = vmatpush.msra.mxu0 0.0
    %9178 = vmatpush.msra.mxu0 0.0
    %9179 = vmatpush.msra.mxu0 0.0
    %9180 = vmatpush.msra.mxu0 0.0
    %9181 = vmatpush.msra.mxu0 0.0
    %9182 = vmatpush.msra.mxu0 0.0
    %9183 = vmatpush.msra.mxu0 0.0
    %9184 = vmatpush.msra.mxu0 0.0
    %9185 = vmatpush.msra.mxu0 0.0
    %9186 = vmatpush.msra.mxu0 0.0
    %9187 = vmatpush.msra.mxu0 0.0
    %9188 = vmatpush.msra.mxu0 0.0
    %9189 = vmatpush.msra.mxu0 0.0
    %9190 = vmatpush.msra.mxu0 %v9174
    %9191 = vmatpush.msra.mxu0 %v9164
    %9192 = vmatmul.f32.gmra.mxu0 %v9169
    %v9193 = vpop.f32.mrf.mxu0
    %v9194 = vadd.f32 0.0, %v9193
    %9195 = vmatmul.f32.gmra.mxu0 %v9172
    %v9196 = vpop.f32.mrf.mxu0
    %v9197 = vadd.f32 0.0, %v9196
    %9198 = vdwg.mxu0
    %v9199 = vmul.f32 %v9143, %v162
    %v9200 = vmul.f32 %v9146, %v162
    %v9201 = vmul.f32 %v9194, %v162
    %v9202 = vmul.f32 %v9197, %v162
    %v9203 = vadd.f32 %v8891, %v9199
    %v9204 = vadd.f32 %v8892, %v9200
    %v9205 = vadd.f32 %v8893, %v9201
    %v9206 = vadd.f32 %v8894, %v9202
    %v9207 = vmul.f32 %v8548, %v167
    %v9208 = vmul.f32 %v8563, %v1318
    %v9209 = vmul.f32 %v8564, %v1319
    %v9210 = vmul.f32 %v8565, %v1320
    %v9211 = vmul.f32 %v8551, %v167
    %v9212 = vmul.f32 %v8566, %v1318
    %v9213 = vmul.f32 %v8567, %v1319
    %v9214 = vmul.f32 %v8568, %v167
    %v9215 = vmul.f32 %v8554, %v1318
    %v9216 = vmul.f32 %v8569, %v1319
    %v9217 = vmul.f32 %v8570, %v1320
    %v9218 = vmul.f32 %v8571, %v167
    %v9219 = vmul.f32 %v8557, %v1318
    %v9220 = vmul.f32 %v8572, %v1319
    %9228 = vst [vmem:[#allocation1] ss:$4 sm:$0xff] %v9207
    %s9229 = scalar_lea.vmem [#allocation1], 1
    %9230 = vst [vmem:[%s9229] ss:$4 sm:$0xff] %v9208
    %s9231 = scalar_lea.vmem [#allocation1], 2
    %9232 = vst [vmem:[%s9231] ss:$4 sm:$0xff] %v9209
    %s9233 = scalar_lea.vmem [#allocation1], 3
    %9234 = vst [vmem:[%s9233] ss:$4 sm:$0xff] %v9210
    %s9235 = scalar_lea.vmem [#allocation1], 32
    %9236 = vst [vmem:[%s9235] ss:$4 sm:$0xff] %v9211
    %s9237 = scalar_lea.vmem [#allocation1], 33
    %9238 = vst [vmem:[%s9237] ss:$4 sm:$0xff] %v9212
    %s9239 = scalar_lea.vmem [#allocation1], 34
    %9240 = vst [vmem:[%s9239] ss:$4 sm:$0xff] %v9213
    %v9241 = vld.sshfl [vmem:[#allocation1] sm:$0xff pattern:$0x73625140]
    %v9242 = vld.sshfl [vmem:[#allocation1 + $0x20] sm:$0xff pattern:$0x73625140]
    %9243 = vst [vmem:[#allocation1] ss:$4 sm:$0xff] %v8548
    %s9244 = scalar_lea.vmem [#allocation1], 1
    %9245 = vst [vmem:[%s9244] ss:$4 sm:$0xff] %v8563
    %s9246 = scalar_lea.vmem [#allocation1], 2
    %9247 = vst [vmem:[%s9246] ss:$4 sm:$0xff] %v8564
    %s9248 = scalar_lea.vmem [#allocation1], 3
    %9249 = vst [vmem:[%s9248] ss:$4 sm:$0xff] %v8565
    %s9250 = scalar_lea.vmem [#allocation1], 32
    %9251 = vst [vmem:[%s9250] ss:$4 sm:$0xff] %v8551
    %s9252 = scalar_lea.vmem [#allocation1], 33
    %9253 = vst [vmem:[%s9252] ss:$4 sm:$0xff] %v8566
    %s9254 = scalar_lea.vmem [#allocation1], 34
    %9255 = vst [vmem:[%s9254] ss:$4 sm:$0xff] %v8567
    %v9256 = vld.sshfl [vmem:[#allocation1] sm:$0xff pattern:$0x73625140]
    %v9257 = vld.sshfl [vmem:[#allocation1 + $0x20] sm:$0xff pattern:$0x73625140]
    %9258 = vrot.lane.b32.xlu0 %v9256, 96
    %v9259 = vpop.permute.xlu0 %9258
    %9260 = vrot.lane.b32.xlu0 %v9257, 96
    %v9261 = vpop.permute.xlu0 %9260
    %v9262 = vsel %vm203, %v9241, 0
    %v9264 = vsel %vm203, %v9242, 0
    %v9266 = vsel %vm203, %v9259, 0
    %v9268 = vsel %vm203, %v9261, 0
    %9270 = vmatpush.xpose.msra.mxu0 0.0
    %9271 = vmatpush.xpose.msra.mxu0 0.0
    %9272 = vmatpush.xpose.msra.mxu0 0.0
    %9273 = vmatpush.xpose.msra.mxu0 0.0
    %9274 = vmatpush.xpose.msra.mxu0 0.0
    %9275 = vmatpush.xpose.msra.mxu0 0.0
    %9276 = vmatpush.xpose.msra.mxu0 0.0
    %9277 = vmatpush.xpose.msra.mxu0 0.0
    %9278 = vmatpush.xpose.msra.mxu0 0.0
    %9279 = vmatpush.xpose.msra.mxu0 0.0
    %9280 = vmatpush.xpose.msra.mxu0 0.0
    %9281 = vmatpush.xpose.msra.mxu0 0.0
    %9282 = vmatpush.xpose.msra.mxu0 0.0
    %9283 = vmatpush.xpose.msra.mxu0 0.0
    %9284 = vmatpush.xpose.msra.mxu0 %v9268
    %9285 = vmatpush.xpose.msra.mxu0 %v9266
    %9286 = vmatmul.f32.gmra.mxu0 %v9262
    %v9287 = vpop.f32.mrf.mxu0
    %v9288 = vadd.f32 0.0, %v9287
    %9289 = vmatmul.f32.gmra.mxu0 %v9264
    %v9290 = vpop.f32.mrf.mxu0
    %v9291 = vadd.f32 0.0, %v9290
    %9292 = vdwg.mxu0
    %9300 = vst [vmem:[#allocation1] ss:$4 sm:$0xff] %v9214
    %s9301 = scalar_lea.vmem [#allocation1], 1
    %9302 = vst [vmem:[%s9301] ss:$4 sm:$0xff] %v9215
    %s9303 = scalar_lea.vmem [#allocation1], 2
    %9304 = vst [vmem:[%s9303] ss:$4 sm:$0xff] %v9216
    %s9305 = scalar_lea.vmem [#allocation1], 3
    %9306 = vst [vmem:[%s9305] ss:$4 sm:$0xff] %v9217
    %s9307 = scalar_lea.vmem [#allocation1], 32
    %9308 = vst [vmem:[%s9307] ss:$4 sm:$0xff] %v9218
    %s9309 = scalar_lea.vmem [#allocation1], 33
    %9310 = vst [vmem:[%s9309] ss:$4 sm:$0xff] %v9219
    %s9311 = scalar_lea.vmem [#allocation1], 34
    %9312 = vst [vmem:[%s9311] ss:$4 sm:$0xff] %v9220
    %v9313 = vld.sshfl [vmem:[#allocation1] sm:$0xff pattern:$0x73625140]
    %v9314 = vld.sshfl [vmem:[#allocation1 + $0x20] sm:$0xff pattern:$0x73625140]
    %9315 = vst [vmem:[#allocation1] ss:$4 sm:$0xff] %v8568
    %s9316 = scalar_lea.vmem [#allocation1], 1
    %9317 = vst [vmem:[%s9316] ss:$4 sm:$0xff] %v8554
    %s9318 = scalar_lea.vmem [#allocation1], 2
    %9319 = vst [vmem:[%s9318] ss:$4 sm:$0xff] %v8569
    %s9320 = scalar_lea.vmem [#allocation1], 3
    %9321 = vst [vmem:[%s9320] ss:$4 sm:$0xff] %v8570
    %s9322 = scalar_lea.vmem [#allocation1], 32
    %9323 = vst [vmem:[%s9322] ss:$4 sm:$0xff] %v8571
    %s9324 = scalar_lea.vmem [#allocation1], 33
    %9325 = vst [vmem:[%s9324] ss:$4 sm:$0xff] %v8557
    %s9326 = scalar_lea.vmem [#allocation1], 34
    %9327 = vst [vmem:[%s9326] ss:$4 sm:$0xff] %v8572
    %v9328 = vld.sshfl [vmem:[#allocation1] sm:$0xff pattern:$0x73625140]
    %v9329 = vld.sshfl [vmem:[#allocation1 + $0x20] sm:$0xff pattern:$0x73625140]
    %9330 = vrot.lane.b32.xlu0 %v9328, 96
    %v9331 = vpop.permute.xlu0 %9330
    %9332 = vrot.lane.b32.xlu0 %v9329, 96
    %v9333 = vpop.permute.xlu0 %9332
    %v9334 = vsel %vm203, %v9313, 0
    %v9336 = vsel %vm203, %v9314, 0
    %v9338 = vsel %vm203, %v9331, 0
    %v9340 = vsel %vm203, %v9333, 0
    %9342 = vmatpush.xpose.msra.mxu0 0.0
    %9343 = vmatpush.xpose.msra.mxu0 0.0
    %9344 = vmatpush.xpose.msra.mxu0 0.0
    %9345 = vmatpush.xpose.msra.mxu0 0.0
    %9346 = vmatpush.xpose.msra.mxu0 0.0
    %9347 = vmatpush.xpose.msra.mxu0 0.0
    %9348 = vmatpush.xpose.msra.mxu0 0.0
    %9349 = vmatpush.xpose.msra.mxu0 0.0
    %9350 = vmatpush.xpose.msra.mxu0 0.0
    %9351 = vmatpush.xpose.msra.mxu0 0.0
    %9352 = vmatpush.xpose.msra.mxu0 0.0
    %9353 = vmatpush.xpose.msra.mxu0 0.0
    %9354 = vmatpush.xpose.msra.mxu0 0.0
    %9355 = vmatpush.xpose.msra.mxu0 0.0
    %9356 = vmatpush.xpose.msra.mxu0 %v9340
    %9357 = vmatpush.xpose.msra.mxu0 %v9338
    %9358 = vmatmul.f32.gmra.mxu0 %v9334
    %v9359 = vpop.f32.mrf.mxu0
    %v9360 = vadd.f32 0.0, %v9359
    %9361 = vmatmul.f32.gmra.mxu0 %v9336
    %v9362 = vpop.f32.mrf.mxu0
    %v9363 = vadd.f32 0.0, %v9362
    %9364 = vdwg.mxu0
    %v9365 = vsel %vm841, %v9288, -inf
    %9366 = vmax.xlane.f32.xlu0 %v9365
    %v9367 = vpop.xlane.xlu0 %9366
    %v9368 = vsel %vm845, %v9291, -inf
    %9369 = vmax.xlane.f32.xlu0 %v9368
    %v9370 = vpop.xlane.xlu0 %9369
    %v9371 = vsel %vm841, %v9360, -inf
    %9372 = vmax.xlane.f32.xlu0 %v9371
    %v9373 = vpop.xlane.xlu0 %9372
    %v9374 = vsel %vm845, %v9363, -inf
    %9375 = vmax.xlane.f32.xlu0 %v9374
    %v9376 = vpop.xlane.xlu0 %9375
    %v9377 = vsub.f32 %v9288, %v9367
    %v9378 = vsub.f32 %v9291, %v9370
    %v9379 = vsub.f32 %v9360, %v9373
    %v9380 = vsub.f32 %v9363, %v9376
    %v9381 = vmul.f32 %v9377, 1.442695
    %v9382 = vpow.pop %v9381
    %v9383 = vmul.f32 %v9378, 1.442695
    %v9384 = vpow.pop %v9383
    %v9385 = vmul.f32 %v9379, 1.442695
    %v9386 = vpow.pop %v9385
    %v9387 = vmul.f32 %v9380, 1.442695
    %v9388 = vpow.pop %v9387
    %v9389 = vsel %vm841, %v9382, 0.0
    %9390 = vadd.xlane.f32.xlu0 %v9389
    %v9391 = vpop.xlane.xlu0 %9390
    %v9392 = vsel %vm845, %v9384, 0.0
    %9393 = vadd.xlane.f32.xlu0 %v9392
    %v9394 = vpop.xlane.xlu0 %9393
    %v9395 = vsel %vm841, %v9386, 0.0
    %9396 = vadd.xlane.f32.xlu0 %v9395
    %v9397 = vpop.xlane.xlu0 %9396
    %v9398 = vsel %vm845, %v9388, 0.0
    %9399 = vadd.xlane.f32.xlu0 %v9398
    %v9400 = vpop.xlane.xlu0 %9399
    %v9401 = vrcp.pop %v9391
    %v9402 = vrcp.pop %v9394
    %v9403 = vrcp.pop %v9397
    %v9404 = vrcp.pop %v9400
    %v9405 = vmul.f32 %v9382, %v9401
    %v9406 = vmul.f32 %v9384, %v9402
    %v9407 = vmul.f32 %v9386, %v9403
    %v9408 = vmul.f32 %v9388, %v9404
    %9409 = vst [vmem:[#allocation1] ss:$4 sm:$0xff] %v8548
    %s9410 = scalar_lea.vmem [#allocation1], 1
    %9411 = vst [vmem:[%s9410] ss:$4 sm:$0xff] %v8563
    %s9412 = scalar_lea.vmem [#allocation1], 2
    %9413 = vst [vmem:[%s9412] ss:$4 sm:$0xff] %v8564
    %s9414 = scalar_lea.vmem [#allocation1], 3
    %9415 = vst [vmem:[%s9414] ss:$4 sm:$0xff] %v8565
    %s9416 = scalar_lea.vmem [#allocation1], 32
    %9417 = vst [vmem:[%s9416] ss:$4 sm:$0xff] %v8551
    %s9418 = scalar_lea.vmem [#allocation1], 33
    %9419 = vst [vmem:[%s9418] ss:$4 sm:$0xff] %v8566
    %s9420 = scalar_lea.vmem [#allocation1], 34
    %9421 = vst [vmem:[%s9420] ss:$4 sm:$0xff] %v8567
    %v9422 = vld.sshfl [vmem:[#allocation1] sm:$0xff pattern:$0x73625140]
    %v9423 = vld.sshfl [vmem:[#allocation1 + $0x20] sm:$0xff pattern:$0x73625140]
    %9424 = vrot.lane.b32.xlu0 %v9422, 64
    %v9425 = vpop.permute.xlu0 %9424
    %9426 = vrot.lane.b32.xlu0 %v9423, 64
    %v9427 = vpop.permute.xlu0 %9426
    %v9430 = vsel %vm841, %v9405, 0
    %v9433 = vsel %vm841, %v9406, 0
    %v9435 = vsel %vm913, %v9427, 0
    %9437 = vmatpush.msra.mxu0 0.0
    %9438 = vmatpush.msra.mxu0 0.0
    %9439 = vmatpush.msra.mxu0 0.0
    %9440 = vmatpush.msra.mxu0 0.0
    %9441 = vmatpush.msra.mxu0 0.0
    %9442 = vmatpush.msra.mxu0 0.0
    %9443 = vmatpush.msra.mxu0 0.0
    %9444 = vmatpush.msra.mxu0 0.0
    %9445 = vmatpush.msra.mxu0 0.0
    %9446 = vmatpush.msra.mxu0 0.0
    %9447 = vmatpush.msra.mxu0 0.0
    %9448 = vmatpush.msra.mxu0 0.0
    %9449 = vmatpush.msra.mxu0 0.0
    %9450 = vmatpush.msra.mxu0 0.0
    %9451 = vmatpush.msra.mxu0 %v9435
    %9452 = vmatpush.msra.mxu0 %v9425
    %9453 = vmatmul.f32.gmra.mxu0 %v9430
    %v9454 = vpop.f32.mrf.mxu0
    %v9455 = vadd.f32 0.0, %v9454
    %9456 = vmatmul.f32.gmra.mxu0 %v9433
    %v9457 = vpop.f32.mrf.mxu0
    %v9458 = vadd.f32 0.0, %v9457
    %9459 = vdwg.mxu0
    %9460 = vst [vmem:[#allocation1] ss:$4 sm:$0xff] %v8568
    %s9461 = scalar_lea.vmem [#allocation1], 1
    %9462 = vst [vmem:[%s9461] ss:$4 sm:$0xff] %v8554
    %s9463 = scalar_lea.vmem [#allocation1], 2
    %9464 = vst [vmem:[%s9463] ss:$4 sm:$0xff] %v8569
    %s9465 = scalar_lea.vmem [#allocation1], 3
    %9466 = vst [vmem:[%s9465] ss:$4 sm:$0xff] %v8570
    %s9467 = scalar_lea.vmem [#allocation1], 32
    %9468 = vst [vmem:[%s9467] ss:$4 sm:$0xff] %v8571
    %s9469 = scalar_lea.vmem [#allocation1], 33
    %9470 = vst [vmem:[%s9469] ss:$4 sm:$0xff] %v8557
    %s9471 = scalar_lea.vmem [#allocation1], 34
    %9472 = vst [vmem:[%s9471] ss:$4 sm:$0xff] %v8572
    %v9473 = vld.sshfl [vmem:[#allocation1] sm:$0xff pattern:$0x73625140]
    %v9474 = vld.sshfl [vmem:[#allocation1 + $0x20] sm:$0xff pattern:$0x73625140]
    %9475 = vrot.lane.b32.xlu0 %v9473, 64
    %v9476 = vpop.permute.xlu0 %9475
    %9477 = vrot.lane.b32.xlu0 %v9474, 64
    %v9478 = vpop.permute.xlu0 %9477
    %v9481 = vsel %vm841, %v9407, 0
    %v9484 = vsel %vm841, %v9408, 0
    %v9486 = vsel %vm913, %v9478, 0
    %9488 = vmatpush.msra.mxu0 0.0
    %9489 = vmatpush.msra.mxu0 0.0
    %9490 = vmatpush.msra.mxu0 0.0
    %9491 = vmatpush.msra.mxu0 0.0
    %9492 = vmatpush.msra.mxu0 0.0
    %9493 = vmatpush.msra.mxu0 0.0
    %9494 = vmatpush.msra.mxu0 0.0
    %9495 = vmatpush.msra.mxu0 0.0
    %9496 = vmatpush.msra.mxu0 0.0
    %9497 = vmatpush.msra.mxu0 0.0
    %9498 = vmatpush.msra.mxu0 0.0
    %9499 = vmatpush.msra.mxu0 0.0
    %9500 = vmatpush.msra.mxu0 0.0
    %9501 = vmatpush.msra.mxu0 0.0
    %9502 = vmatpush.msra.mxu0 %v9486
    %9503 = vmatpush.msra.mxu0 %v9476
    %9504 = vmatmul.f32.gmra.mxu0 %v9481
    %v9505 = vpop.f32.mrf.mxu0
    %v9506 = vadd.f32 0.0, %v9505
    %9507 = vmatmul.f32.gmra.mxu0 %v9484
    %v9508 = vpop.f32.mrf.mxu0
    %v9509 = vadd.f32 0.0, %v9508
    %9510 = vdwg.mxu0
    %v9511 = vmul.f32 %v9455, %v167
    %v9512 = vmul.f32 %v9458, %v167
    %v9513 = vmul.f32 %v9506, %v167
    %v9514 = vmul.f32 %v9509, %v167
    %v9515 = vadd.f32 %v9203, %v9511
    %v9516 = vadd.f32 %v9204, %v9512
    %v9517 = vadd.f32 %v9205, %v9513
    %v9518 = vadd.f32 %v9206, %v9514
    %v9519 = vmul.f32 %v8548, %v172
    %v9520 = vmul.f32 %v8563, %v1637
    %v9521 = vmul.f32 %v8564, %v1638
    %v9522 = vmul.f32 %v8565, %v1639
    %v9523 = vmul.f32 %v8551, %v172
    %v9524 = vmul.f32 %v8566, %v1637
    %v9525 = vmul.f32 %v8567, %v1638
    %v9526 = vmul.f32 %v8568, %v172
    %v9527 = vmul.f32 %v8554, %v1637
    %v9528 = vmul.f32 %v8569, %v1638
    %v9529 = vmul.f32 %v8570, %v1639
    %v9530 = vmul.f32 %v8571, %v172
    %v9531 = vmul.f32 %v8557, %v1637
    %v9532 = vmul.f32 %v8572, %v1638
    %9540 = vst [vmem:[#allocation1] ss:$4 sm:$0xff] %v9519
    %s9541 = scalar_lea.vmem [#allocation1], 1
    %9542 = vst [vmem:[%s9541] ss:$4 sm:$0xff] %v9520
    %s9543 = scalar_lea.vmem [#allocation1], 2
    %9544 = vst [vmem:[%s9543] ss:$4 sm:$0xff] %v9521
    %s9545 = scalar_lea.vmem [#allocation1], 3
    %9546 = vst [vmem:[%s9545] ss:$4 sm:$0xff] %v9522
    %s9547 = scalar_lea.vmem [#allocation1], 32
    %9548 = vst [vmem:[%s9547] ss:$4 sm:$0xff] %v9523
    %s9549 = scalar_lea.vmem [#allocation1], 33
    %9550 = vst [vmem:[%s9549] ss:$4 sm:$0xff] %v9524
    %s9551 = scalar_lea.vmem [#allocation1], 34
    %9552 = vst [vmem:[%s9551] ss:$4 sm:$0xff] %v9525
    %v9553 = vld.sshfl [vmem:[#allocation1] sm:$0xff pattern:$0x73625140]
    %v9554 = vld.sshfl [vmem:[#allocation1 + $0x20] sm:$0xff pattern:$0x73625140]
    %9555 = vst [vmem:[#allocation1] ss:$4 sm:$0xff] %v8548
    %s9556 = scalar_lea.vmem [#allocation1], 1
    %9557 = vst [vmem:[%s9556] ss:$4 sm:$0xff] %v8563
    %s9558 = scalar_lea.vmem [#allocation1], 2
    %9559 = vst [vmem:[%s9558] ss:$4 sm:$0xff] %v8564
    %s9560 = scalar_lea.vmem [#allocation1], 3
    %9561 = vst [vmem:[%s9560] ss:$4 sm:$0xff] %v8565
    %s9562 = scalar_lea.vmem [#allocation1], 32
    %9563 = vst [vmem:[%s9562] ss:$4 sm:$0xff] %v8551
    %s9564 = scalar_lea.vmem [#allocation1], 33
    %9565 = vst [vmem:[%s9564] ss:$4 sm:$0xff] %v8566
    %s9566 = scalar_lea.vmem [#allocation1], 34
    %9567 = vst [vmem:[%s9566] ss:$4 sm:$0xff] %v8567
    %v9568 = vld.sshfl [vmem:[#allocation1] sm:$0xff pattern:$0x73625140]
    %v9569 = vld.sshfl [vmem:[#allocation1 + $0x20] sm:$0xff pattern:$0x73625140]
    %9570 = vrot.lane.b32.xlu0 %v9568, 96
    %v9571 = vpop.permute.xlu0 %9570
    %9572 = vrot.lane.b32.xlu0 %v9569, 96
    %v9573 = vpop.permute.xlu0 %9572
    %v9574 = vsel %vm203, %v9553, 0
    %v9576 = vsel %vm203, %v9554, 0
    %v9578 = vsel %vm203, %v9571, 0
    %v9580 = vsel %vm203, %v9573, 0
    %9582 = vmatpush.xpose.msra.mxu0 0.0
    %9583 = vmatpush.xpose.msra.mxu0 0.0
    %9584 = vmatpush.xpose.msra.mxu0 0.0
    %9585 = vmatpush.xpose.msra.mxu0 0.0
    %9586 = vmatpush.xpose.msra.mxu0 0.0
    %9587 = vmatpush.xpose.msra.mxu0 0.0
    %9588 = vmatpush.xpose.msra.mxu0 0.0
    %9589 = vmatpush.xpose.msra.mxu0 0.0
    %9590 = vmatpush.xpose.msra.mxu0 0.0
    %9591 = vmatpush.xpose.msra.mxu0 0.0
    %9592 = vmatpush.xpose.msra.mxu0 0.0
    %9593 = vmatpush.xpose.msra.mxu0 0.0
    %9594 = vmatpush.xpose.msra.mxu0 0.0
    %9595 = vmatpush.xpose.msra.mxu0 0.0
    %9596 = vmatpush.xpose.msra.mxu0 %v9580
    %9597 = vmatpush.xpose.msra.mxu0 %v9578
    %9598 = vmatmul.f32.gmra.mxu0 %v9574
    %v9599 = vpop.f32.mrf.mxu0
    %v9600 = vadd.f32 0.0, %v9599
    %9601 = vmatmul.f32.gmra.mxu0 %v9576
    %v9602 = vpop.f32.mrf.mxu0
    %v9603 = vadd.f32 0.0, %v9602
    %9604 = vdwg.mxu0
    %9612 = vst [vmem:[#allocation1] ss:$4 sm:$0xff] %v9526
    %s9613 = scalar_lea.vmem [#allocation1], 1
    %9614 = vst [vmem:[%s9613] ss:$4 sm:$0xff] %v9527
    %s9615 = scalar_lea.vmem [#allocation1], 2
    %9616 = vst [vmem:[%s9615] ss:$4 sm:$0xff] %v9528
    %s9617 = scalar_lea.vmem [#allocation1], 3
    %9618 = vst [vmem:[%s9617] ss:$4 sm:$0xff] %v9529
    %s9619 = scalar_lea.vmem [#allocation1], 32
    %9620 = vst [vmem:[%s9619] ss:$4 sm:$0xff] %v9530
    %s9621 = scalar_lea.vmem [#allocation1], 33
    %9622 = vst [vmem:[%s9621] ss:$4 sm:$0xff] %v9531
    %s9623 = scalar_lea.vmem [#allocation1], 34
    %9624 = vst [vmem:[%s9623] ss:$4 sm:$0xff] %v9532
    %v9625 = vld.sshfl [vmem:[#allocation1] sm:$0xff pattern:$0x73625140]
    %v9626 = vld.sshfl [vmem:[#allocation1 + $0x20] sm:$0xff pattern:$0x73625140]
    %9627 = vst [vmem:[#allocation1] ss:$4 sm:$0xff] %v8568
    %s9628 = scalar_lea.vmem [#allocation1], 1
    %9629 = vst [vmem:[%s9628] ss:$4 sm:$0xff] %v8554
    %s9630 = scalar_lea.vmem [#allocation1], 2
    %9631 = vst [vmem:[%s9630] ss:$4 sm:$0xff] %v8569
    %s9632 = scalar_lea.vmem [#allocation1], 3
    %9633 = vst [vmem:[%s9632] ss:$4 sm:$0xff] %v8570
    %s9634 = scalar_lea.vmem [#allocation1], 32
    %9635 = vst [vmem:[%s9634] ss:$4 sm:$0xff] %v8571
    %s9636 = scalar_lea.vmem [#allocation1], 33
    %9637 = vst [vmem:[%s9636] ss:$4 sm:$0xff] %v8557
    %s9638 = scalar_lea.vmem [#allocation1], 34
    %9639 = vst [vmem:[%s9638] ss:$4 sm:$0xff] %v8572
    %v9640 = vld.sshfl [vmem:[#allocation1] sm:$0xff pattern:$0x73625140]
    %v9641 = vld.sshfl [vmem:[#allocation1 + $0x20] sm:$0xff pattern:$0x73625140]
    %9642 = vrot.lane.b32.xlu0 %v9640, 96
    %v9643 = vpop.permute.xlu0 %9642
    %9644 = vrot.lane.b32.xlu0 %v9641, 96
    %v9645 = vpop.permute.xlu0 %9644
    %v9646 = vsel %vm203, %v9625, 0
    %v9648 = vsel %vm203, %v9626, 0
    %v9650 = vsel %vm203, %v9643, 0
    %v9652 = vsel %vm203, %v9645, 0
    %9654 = vmatpush.xpose.msra.mxu0 0.0
    %9655 = vmatpush.xpose.msra.mxu0 0.0
    %9656 = vmatpush.xpose.msra.mxu0 0.0
    %9657 = vmatpush.xpose.msra.mxu0 0.0
    %9658 = vmatpush.xpose.msra.mxu0 0.0
    %9659 = vmatpush.xpose.msra.mxu0 0.0
    %9660 = vmatpush.xpose.msra.mxu0 0.0
    %9661 = vmatpush.xpose.msra.mxu0 0.0
    %9662 = vmatpush.xpose.msra.mxu0 0.0
    %9663 = vmatpush.xpose.msra.mxu0 0.0
    %9664 = vmatpush.xpose.msra.mxu0 0.0
    %9665 = vmatpush.xpose.msra.mxu0 0.0
    %9666 = vmatpush.xpose.msra.mxu0 0.0
    %9667 = vmatpush.xpose.msra.mxu0 0.0
    %9668 = vmatpush.xpose.msra.mxu0 %v9652
    %9669 = vmatpush.xpose.msra.mxu0 %v9650
    %9670 = vmatmul.f32.gmra.mxu0 %v9646
    %v9671 = vpop.f32.mrf.mxu0
    %v9672 = vadd.f32 0.0, %v9671
    %9673 = vmatmul.f32.gmra.mxu0 %v9648
    %v9674 = vpop.f32.mrf.mxu0
    %v9675 = vadd.f32 0.0, %v9674
    %9676 = vdwg.mxu0
    %v9677 = vsel %vm841, %v9600, -inf
    %9678 = vmax.xlane.f32.xlu0 %v9677
    %v9679 = vpop.xlane.xlu0 %9678
    %v9680 = vsel %vm845, %v9603, -inf
    %9681 = vmax.xlane.f32.xlu0 %v9680
    %v9682 = vpop.xlane.xlu0 %9681
    %v9683 = vsel %vm841, %v9672, -inf
    %9684 = vmax.xlane.f32.xlu0 %v9683
    %v9685 = vpop.xlane.xlu0 %9684
    %v9686 = vsel %vm845, %v9675, -inf
    %9687 = vmax.xlane.f32.xlu0 %v9686
    %v9688 = vpop.xlane.xlu0 %9687
    %v9689 = vsub.f32 %v9600, %v9679
    %v9690 = vsub.f32 %v9603, %v9682
    %v9691 = vsub.f32 %v9672, %v9685
    %v9692 = vsub.f32 %v9675, %v9688
    %v9693 = vmul.f32 %v9689, 1.442695
    %v9694 = vpow.pop %v9693
    %v9695 = vmul.f32 %v9690, 1.442695
    %v9696 = vpow.pop %v9695
    %v9697 = vmul.f32 %v9691, 1.442695
    %v9698 = vpow.pop %v9697
    %v9699 = vmul.f32 %v9692, 1.442695
    %v9700 = vpow.pop %v9699
    %v9701 = vsel %vm841, %v9694, 0.0
    %9702 = vadd.xlane.f32.xlu0 %v9701
    %v9703 = vpop.xlane.xlu0 %9702
    %v9704 = vsel %vm845, %v9696, 0.0
    %9705 = vadd.xlane.f32.xlu0 %v9704
    %v9706 = vpop.xlane.xlu0 %9705
    %v9707 = vsel %vm841, %v9698, 0.0
    %9708 = vadd.xlane.f32.xlu0 %v9707
    %v9709 = vpop.xlane.xlu0 %9708
    %v9710 = vsel %vm845, %v9700, 0.0
    %9711 = vadd.xlane.f32.xlu0 %v9710
    %v9712 = vpop.xlane.xlu0 %9711
    %v9713 = vrcp.pop %v9703
    %v9714 = vrcp.pop %v9706
    %v9715 = vrcp.pop %v9709
    %v9716 = vrcp.pop %v9712
    %v9717 = vmul.f32 %v9694, %v9713
    %v9718 = vmul.f32 %v9696, %v9714
    %v9719 = vmul.f32 %v9698, %v9715
    %v9720 = vmul.f32 %v9700, %v9716
    %9721 = vst [vmem:[#allocation1] ss:$4 sm:$0xff] %v8548
    %s9722 = scalar_lea.vmem [#allocation1], 1
    %9723 = vst [vmem:[%s9722] ss:$4 sm:$0xff] %v8563
    %s9724 = scalar_lea.vmem [#allocation1], 2
    %9725 = vst [vmem:[%s9724] ss:$4 sm:$0xff] %v8564
    %s9726 = scalar_lea.vmem [#allocation1], 3
    %9727 = vst [vmem:[%s9726] ss:$4 sm:$0xff] %v8565
    %s9728 = scalar_lea.vmem [#allocation1], 32
    %9729 = vst [vmem:[%s9728] ss:$4 sm:$0xff] %v8551
    %s9730 = scalar_lea.vmem [#allocation1], 33
    %9731 = vst [vmem:[%s9730] ss:$4 sm:$0xff] %v8566
    %s9732 = scalar_lea.vmem [#allocation1], 34
    %9733 = vst [vmem:[%s9732] ss:$4 sm:$0xff] %v8567
    %v9734 = vld.sshfl [vmem:[#allocation1] sm:$0xff pattern:$0x73625140]
    %v9735 = vld.sshfl [vmem:[#allocation1 + $0x20] sm:$0xff pattern:$0x73625140]
    %9736 = vrot.lane.b32.xlu0 %v9734, 64
    %v9737 = vpop.permute.xlu0 %9736
    %9738 = vrot.lane.b32.xlu0 %v9735, 64
    %v9739 = vpop.permute.xlu0 %9738
    %v9742 = vsel %vm841, %v9717, 0
    %v9745 = vsel %vm841, %v9718, 0
    %v9747 = vsel %vm913, %v9739, 0
    %9749 = vmatpush.msra.mxu0 0.0
    %9750 = vmatpush.msra.mxu0 0.0
    %9751 = vmatpush.msra.mxu0 0.0
    %9752 = vmatpush.msra.mxu0 0.0
    %9753 = vmatpush.msra.mxu0 0.0
    %9754 = vmatpush.msra.mxu0 0.0
    %9755 = vmatpush.msra.mxu0 0.0
    %9756 = vmatpush.msra.mxu0 0.0
    %9757 = vmatpush.msra.mxu0 0.0
    %9758 = vmatpush.msra.mxu0 0.0
    %9759 = vmatpush.msra.mxu0 0.0
    %9760 = vmatpush.msra.mxu0 0.0
    %9761 = vmatpush.msra.mxu0 0.0
    %9762 = vmatpush.msra.mxu0 0.0
    %9763 = vmatpush.msra.mxu0 %v9747
    %9764 = vmatpush.msra.mxu0 %v9737
    %9765 = vmatmul.f32.gmra.mxu0 %v9742
    %v9766 = vpop.f32.mrf.mxu0
    %v9767 = vadd.f32 0.0, %v9766
    %9768 = vmatmul.f32.gmra.mxu0 %v9745
    %v9769 = vpop.f32.mrf.mxu0
    %v9770 = vadd.f32 0.0, %v9769
    %9771 = vdwg.mxu0
    %9772 = vst [vmem:[#allocation1] ss:$4 sm:$0xff] %v8568
    %s9773 = scalar_lea.vmem [#allocation1], 1
    %9774 = vst [vmem:[%s9773] ss:$4 sm:$0xff] %v8554
    %s9775 = scalar_lea.vmem [#allocation1], 2
    %9776 = vst [vmem:[%s9775] ss:$4 sm:$0xff] %v8569
    %s9777 = scalar_lea.vmem [#allocation1], 3
    %9778 = vst [vmem:[%s9777] ss:$4 sm:$0xff] %v8570
    %s9779 = scalar_lea.vmem [#allocation1], 32
    %9780 = vst [vmem:[%s9779] ss:$4 sm:$0xff] %v8571
    %s9781 = scalar_lea.vmem [#allocation1], 33
    %9782 = vst [vmem:[%s9781] ss:$4 sm:$0xff] %v8557
    %s9783 = scalar_lea.vmem [#allocation1], 34
    %9784 = vst [vmem:[%s9783] ss:$4 sm:$0xff] %v8572
    %v9785 = vld.sshfl [vmem:[#allocation1] sm:$0xff pattern:$0x73625140]
    %v9786 = vld.sshfl [vmem:[#allocation1 + $0x20] sm:$0xff pattern:$0x73625140]
    %9787 = vrot.lane.b32.xlu0 %v9785, 64
    %v9788 = vpop.permute.xlu0 %9787
    %9789 = vrot.lane.b32.xlu0 %v9786, 64
    %v9790 = vpop.permute.xlu0 %9789
    %v9793 = vsel %vm841, %v9719, 0
    %v9796 = vsel %vm841, %v9720, 0
    %v9798 = vsel %vm913, %v9790, 0
    %9800 = vmatpush.msra.mxu0 0.0
    %9801 = vmatpush.msra.mxu0 0.0
    %9802 = vmatpush.msra.mxu0 0.0
    %9803 = vmatpush.msra.mxu0 0.0
    %9804 = vmatpush.msra.mxu0 0.0
    %9805 = vmatpush.msra.mxu0 0.0
    %9806 = vmatpush.msra.mxu0 0.0
    %9807 = vmatpush.msra.mxu0 0.0
    %9808 = vmatpush.msra.mxu0 0.0
    %9809 = vmatpush.msra.mxu0 0.0
    %9810 = vmatpush.msra.mxu0 0.0
    %9811 = vmatpush.msra.mxu0 0.0
    %9812 = vmatpush.msra.mxu0 0.0
    %9813 = vmatpush.msra.mxu0 0.0
    %9814 = vmatpush.msra.mxu0 %v9798
    %9815 = vmatpush.msra.mxu0 %v9788
    %9816 = vmatmul.f32.gmra.mxu0 %v9793
    %v9817 = vpop.f32.mrf.mxu0
    %v9818 = vadd.f32 0.0, %v9817
    %9819 = vmatmul.f32.gmra.mxu0 %v9796
    %v9820 = vpop.f32.mrf.mxu0
    %v9821 = vadd.f32 0.0, %v9820
    %9822 = vdwg.mxu0
    %v9823 = vmul.f32 %v9767, %v172
    %v9824 = vmul.f32 %v9770, %v172
    %v9825 = vmul.f32 %v9818, %v172
    %v9826 = vmul.f32 %v9821, %v172
    %v9827 = vadd.f32 %v9515, %v9823
    %v9828 = vadd.f32 %v9516, %v9824
    %v9829 = vadd.f32 %v9517, %v9825
    %v9830 = vadd.f32 %v9518, %v9826
    %v9831 = vld [vmem:[%s8478 + $0x20] sm:$0xff]
    %v9832 = vld [vmem:[%s8478 + $0x28] sm:$0xff]
    %v9833 = vld [vmem:[%s8478 + $0x30] sm:$0xff]
    %v9834 = vld [vmem:[%s8478 + $0x38] sm:$0xff]
    %v9835 = vld [vmem:[%s8073 + $0x4] sm:$0x1]
    %v9836 = vperm.slane %v9835, 0
    %v9841 = vrot.slane %v9827, 2
    %v9842 = vrot.slane %v9827, 4
    %v9843 = vrot.slane %v9827, 6
    %v9844 = vrot.slane %v9828, 2
    %v9845 = vrot.slane %v9828, 4
    %v9846 = vrot.slane %v9829, 2
    %v9847 = vrot.slane %v9829, 4
    %v9848 = vrot.slane %v9829, 6
    %v9849 = vrot.slane %v9830, 2
    %v9850 = vrot.slane %v9830, 4
    %v9852 = vrot.slane %v9836, 2
    %v9853 = vrot.slane %v9836, 4
    %v9854 = vrot.slane %v9836, 6
    %9855 = vst [vmem:[#allocation1] ss:$4 sm:$0xff] %v9827
    %s9856 = scalar_lea.vmem [#allocation1], 1
    %9857 = vst [vmem:[%s9856] ss:$4 sm:$0xff] %v9841
    %s9858 = scalar_lea.vmem [#allocation1], 2
    %9859 = vst [vmem:[%s9858] ss:$4 sm:$0xff] %v9842
    %s9860 = scalar_lea.vmem [#allocation1], 3
    %9861 = vst [vmem:[%s9860] ss:$4 sm:$0xff] %v9843
    %s9862 = scalar_lea.vmem [#allocation1], 32
    %9863 = vst [vmem:[%s9862] ss:$4 sm:$0xff] %v9828
    %s9864 = scalar_lea.vmem [#allocation1], 33
    %9865 = vst [vmem:[%s9864] ss:$4 sm:$0xff] %v9844
    %s9866 = scalar_lea.vmem [#allocation1], 34
    %9867 = vst [vmem:[%s9866] ss:$4 sm:$0xff] %v9845
    %s9868 = scalar_lea.vmem [#allocation1], 35
    %9869 = vst [vmem:[%s9868] ss:$4 sm:$0xff] %v9829
    %v9870 = vld.sshfl [vmem:[#allocation1] sm:$0xff pattern:$0x73625140]
    %v9871 = vld.sshfl [vmem:[#allocation1 + $0x20] sm:$0xff pattern:$0x73625140]
    %9872 = vst [vmem:[#allocation1] ss:$4 sm:$0xff] %v9846
    %9873 = vst [vmem:[%s9856] ss:$4 sm:$0xff] %v9847
    %9874 = vst [vmem:[%s9858] ss:$4 sm:$0xff] %v9848
    %9875 = vst [vmem:[%s9860] ss:$4 sm:$0xff] %v9830
    %9876 = vst [vmem:[%s9862] ss:$4 sm:$0xff] %v9849
    %9877 = vst [vmem:[%s9864] ss:$4 sm:$0xff] %v9850
    %v9878 = vld.sshfl [vmem:[#allocation1] sm:$0xff pattern:$0x73625140]
    %v9879 = vld.sshfl [vmem:[#allocation1 + $0x20] sm:$0xff pattern:$0x73625140]
    %9880 = vst [vmem:[#allocation1] ss:$4 sm:$0xff] %v9836
    %s9881 = scalar_lea.vmem [#allocation1], 1
    %9882 = vst [vmem:[%s9881] ss:$4 sm:$0xff] %v9852
    %s9883 = scalar_lea.vmem [#allocation1], 2
    %9884 = vst [vmem:[%s9883] ss:$4 sm:$0xff] %v9853
    %s9885 = scalar_lea.vmem [#allocation1], 3
    %9886 = vst [vmem:[%s9885] ss:$4 sm:$0xff] %v9854
    %s9887 = scalar_lea.vmem [#allocation1], 32
    %9888 = vst [vmem:[%s9887] ss:$4 sm:$0xff] %v9836
    %s9889 = scalar_lea.vmem [#allocation1], 33
    %9890 = vst [vmem:[%s9889] ss:$4 sm:$0xff] %v9852
    %s9891 = scalar_lea.vmem [#allocation1], 34
    %9892 = vst [vmem:[%s9891] ss:$4 sm:$0xff] %v9853
    %s9893 = scalar_lea.vmem [#allocation1], 35
    %9894 = vst [vmem:[%s9893] ss:$4 sm:$0xff] %v9836
    %v9895 = vld.sshfl [vmem:[#allocation1] sm:$0xff pattern:$0x73625140]
    %v9896 = vld.sshfl [vmem:[#allocation1 + $0x20] sm:$0xff pattern:$0x73625140]
    %9897 = vst [vmem:[#allocation1] ss:$4 sm:$0xff] %v9852
    %9898 = vst [vmem:[%s9881] ss:$4 sm:$0xff] %v9853
    %9899 = vst [vmem:[%s9883] ss:$4 sm:$0xff] %v9854
    %9900 = vst [vmem:[%s9885] ss:$4 sm:$0xff] %v9836
    %9901 = vst [vmem:[%s9887] ss:$4 sm:$0xff] %v9852
    %9902 = vst [vmem:[%s9889] ss:$4 sm:$0xff] %v9853
    %v9903 = vld.sshfl [vmem:[#allocation1] sm:$0xff pattern:$0x73625140]
    %v9904 = vld.sshfl [vmem:[#allocation1 + $0x20] sm:$0xff pattern:$0x73625140]
    %v9909 = vsel %vm203, %v9870, 0
    %v9911 = vsel %vm203, %v9871, 0
    %v9913 = vsel %vm203, %v9878, 0
    %v9915 = vsel %vm203, %v9879, 0
    %9917 = vmatpush.msra.mxu0 0.0
    %9918 = vmatpush.msra.mxu0 0.0
    %9919 = vmatpush.msra.mxu0 0.0
    %9920 = vmatpush.msra.mxu0 0.0
    %9921 = vmatpush.msra.mxu0 0.0
    %9922 = vmatpush.msra.mxu0 0.0
    %9923 = vmatpush.msra.mxu0 0.0
    %9924 = vmatpush.msra.mxu0 0.0
    %9925 = vmatpush.msra.mxu0 0.0
    %9926 = vmatpush.msra.mxu0 0.0
    %9927 = vmatpush.msra.mxu0 0.0
    %9928 = vmatpush.msra.mxu0 0.0
    %9929 = vmatpush.msra.mxu0 %v9834
    %9930 = vmatpush.msra.mxu0 %v9833
    %9931 = vmatpush.msra.mxu0 %v9832
    %9932 = vmatpush.msra.mxu0 %v9831
    %9933 = vmatmul.f32.gmra.mxu0 %v9909
    %v9934 = vpop.f32.mrf.mxu0
    %v9935 = vadd.f32 %v9895, %v9934
    %9936 = vmatmul.f32.gmra.mxu0 %v9911
    %v9937 = vpop.f32.mrf.mxu0
    %v9938 = vadd.f32 %v9896, %v9937
    %9939 = vmatmul.f32.gmra.mxu0 %v9913
    %v9940 = vpop.f32.mrf.mxu0
    %v9941 = vadd.f32 %v9903, %v9940
    %9942 = vmatmul.f32.gmra.mxu0 %v9915
    %v9943 = vpop.f32.mrf.mxu0
    %v9944 = vadd.f32 %v9904, %v9943
    %9945 = vdwg.mxu0
    %v9950 = vrot.slane %v9935, 2
    %v9951 = vrot.slane %v9935, 4
    %v9952 = vrot.slane %v9935, 6
    %v9953 = vrot.slane %v9938, 2
    %v9954 = vrot.slane %v9938, 4
    %v9955 = vrot.slane %v9938, 6
    %v9956 = vrot.slane %v9941, 2
    %v9957 = vrot.slane %v9941, 4
    %v9958 = vrot.slane %v9941, 6
    %v9959 = vrot.slane %v9944, 2
    %v9970 = vadd.f32 %v9935, %v8059
    %v9971 = vadd.f32 %v9950, %v8060
    %v9972 = vadd.f32 %v9951, %v8061
    %v9973 = vadd.f32 %v9952, %v8062
    %v9974 = vadd.f32 %v9938, %v8063
    %v9975 = vadd.f32 %v9953, %v8064
    %v9976 = vadd.f32 %v9954, %v8065
    %v9977 = vadd.f32 %v9955, %v8066
    %v9978 = vadd.f32 %v9941, %v8067
    %v9979 = vadd.f32 %v9956, %v8068
    %v9980 = vadd.f32 %v9957, %v8069
    %v9981 = vadd.f32 %v9958, %v8070
    %v9982 = vadd.f32 %v9944, %v8071
    %v9983 = vadd.f32 %v9959, %v8072
    %v9984 = vld [vmem:[%s8073 + $0x2] sm:$0x1]
    %v9985 = vld [vmem:[%s8073 + $0x3] sm:$0x1]
    %10000 = vst [vmem:[#allocation1] ss:$4 sm:$0xff] %v9970
    %s10001 = scalar_lea.vmem [#allocation1], 1
    %10002 = vst [vmem:[%s10001] ss:$4 sm:$0xff] %v9971
    %s10003 = scalar_lea.vmem [#allocation1], 2
    %10004 = vst [vmem:[%s10003] ss:$4 sm:$0xff] %v9972
    %s10005 = scalar_lea.vmem [#allocation1], 3
    %10006 = vst [vmem:[%s10005] ss:$4 sm:$0xff] %v9973
    %s10007 = scalar_lea.vmem [#allocation1], 32
    %10008 = vst [vmem:[%s10007] ss:$4 sm:$0xff] %v9974
    %s10009 = scalar_lea.vmem [#allocation1], 33
    %10010 = vst [vmem:[%s10009] ss:$4 sm:$0xff] %v9975
    %s10011 = scalar_lea.vmem [#allocation1], 34
    %10012 = vst [vmem:[%s10011] ss:$4 sm:$0xff] %v9976
    %v10013 = vld.sshfl [vmem:[#allocation1] sm:$0xff pattern:$0x73625140]
    %v10014 = vld.sshfl [vmem:[#allocation1 + $0x20] sm:$0xff pattern:$0x73625140]
    %10015 = vst [vmem:[#allocation1] ss:$4 sm:$0xff] %v9977
    %10016 = vst [vmem:[%s10001] ss:$4 sm:$0xff] %v9978
    %10017 = vst [vmem:[%s10003] ss:$4 sm:$0xff] %v9979
    %10018 = vst [vmem:[%s10005] ss:$4 sm:$0xff] %v9980
    %10019 = vst [vmem:[%s10007] ss:$4 sm:$0xff] %v9981
    %10020 = vst [vmem:[%s10009] ss:$4 sm:$0xff] %v9982
    %10021 = vst [vmem:[%s10011] ss:$4 sm:$0xff] %v9983
    %v10022 = vld.sshfl [vmem:[#allocation1] sm:$0xff pattern:$0x73625140]
    %v10023 = vld.sshfl [vmem:[#allocation1 + $0x20] sm:$0xff pattern:$0x73625140]
    %v10028 = vsel %vm203, %v10013, 0.0
    %10029 = vadd.xlane.f32.xlu0 %v10028
    %v10030 = vpop.xlane.xlu0 %10029
    %v10031 = vsel %vm207, %v10014, 0.0
    %10032 = vadd.xlane.f32.xlu0 %v10031
    %v10033 = vpop.xlane.xlu0 %10032
    %v10034 = vsel %vm203, %v10022, 0.0
    %10035 = vadd.xlane.f32.xlu0 %v10034
    %v10036 = vpop.xlane.xlu0 %10035
    %v10037 = vsel %vm207, %v10023, 0.0
    %10038 = vadd.xlane.f32.xlu0 %v10037
    %v10039 = vpop.xlane.xlu0 %10038
    %v10040 = vmul.f32 %v10030, %v223
    %v10041 = vmul.f32 %v10033, %v223
    %v10042 = vmul.f32 %v10036, %v223
    %v10043 = vmul.f32 %v10039, %v223
    %v10044 = vmul.f32 %v9970, %v9970
    %v10045 = vmul.f32 %v9971, %v9971
    %v10046 = vmul.f32 %v9972, %v9972
    %v10047 = vmul.f32 %v9973, %v9973
    %v10048 = vmul.f32 %v9974, %v9974
    %v10049 = vmul.f32 %v9975, %v9975
    %v10050 = vmul.f32 %v9976, %v9976
    %v10051 = vmul.f32 %v9977, %v9977
    %v10052 = vmul.f32 %v9978, %v9978
    %v10053 = vmul.f32 %v9979, %v9979
    %v10054 = vmul.f32 %v9980, %v9980
    %v10055 = vmul.f32 %v9981, %v9981
    %v10056 = vmul.f32 %v9982, %v9982
    %v10057 = vmul.f32 %v9983, %v9983
    %10072 = vst [vmem:[#allocation1] ss:$4 sm:$0xff] %v10044
    %s10073 = scalar_lea.vmem [#allocation1], 1
    %10074 = vst [vmem:[%s10073] ss:$4 sm:$0xff] %v10045
    %s10075 = scalar_lea.vmem [#allocation1], 2
    %10076 = vst [vmem:[%s10075] ss:$4 sm:$0xff] %v10046
    %s10077 = scalar_lea.vmem [#allocation1], 3
    %10078 = vst [vmem:[%s10077] ss:$4 sm:$0xff] %v10047
    %s10079 = scalar_lea.vmem [#allocation1], 32
    %10080 = vst [vmem:[%s10079] ss:$4 sm:$0xff] %v10048
    %s10081 = scalar_lea.vmem [#allocation1], 33
    %10082 = vst [vmem:[%s10081] ss:$4 sm:$0xff] %v10049
    %s10083 = scalar_lea.vmem [#allocation1], 34
    %10084 = vst [vmem:[%s10083] ss:$4 sm:$0xff] %v10050
    %v10085 = vld.sshfl [vmem:[#allocation1] sm:$0xff pattern:$0x73625140]
    %v10086 = vld.sshfl [vmem:[#allocation1 + $0x20] sm:$0xff pattern:$0x73625140]
    %10087 = vst [vmem:[#allocation1] ss:$4 sm:$0xff] %v10051
    %10088 = vst [vmem:[%s10073] ss:$4 sm:$0xff] %v10052
    %10089 = vst [vmem:[%s10075] ss:$4 sm:$0xff] %v10053
    %10090 = vst [vmem:[%s10077] ss:$4 sm:$0xff] %v10054
    %10091 = vst [vmem:[%s10079] ss:$4 sm:$0xff] %v10055
    %10092 = vst [vmem:[%s10081] ss:$4 sm:$0xff] %v10056
    %10093 = vst [vmem:[%s10083] ss:$4 sm:$0xff] %v10057
    %v10094 = vld.sshfl [vmem:[#allocation1] sm:$0xff pattern:$0x73625140]
    %v10095 = vld.sshfl [vmem:[#allocation1 + $0x20] sm:$0xff pattern:$0x73625140]
    %v10100 = vsel %vm203, %v10085, 0.0
    %10101 = vadd.xlane.f32.xlu0 %v10100
    %v10102 = vpop.xlane.xlu0 %10101
    %v10103 = vsel %vm207, %v10086, 0.0
    %10104 = vadd.xlane.f32.xlu0 %v10103
    %v10105 = vpop.xlane.xlu0 %10104
    %v10106 = vsel %vm203, %v10094, 0.0
    %10107 = vadd.xlane.f32.xlu0 %v10106
    %v10108 = vpop.xlane.xlu0 %10107
    %v10109 = vsel %vm207, %v10095, 0.0
    %10110 = vadd.xlane.f32.xlu0 %v10109
    %v10111 = vpop.xlane.xlu0 %10110
    %v10112 = vmul.f32 %v10102, %v223
    %v10113 = vmul.f32 %v10105, %v223
    %v10114 = vmul.f32 %v10108, %v223
    %v10115 = vmul.f32 %v10111, %v223
    %v10121 = vunpack.c.l.s4 269488144
    %v10122 = vunpack.c.0.s8 %v10121
    %v10123 = vperm.slane %v10040, %v10122
    %v10125 = vunpack.c.l.s4 842150450
    %v10126 = vunpack.c.0.s8 %v10125
    %v10127 = vperm.slane %v10040, %v10126
    %v10129 = vunpack.c.l.s4 1414812756
    %v10130 = vunpack.c.0.s8 %v10129
    %v10131 = vperm.slane %v10040, %v10130
    %v10133 = vunpack.c.l.s4 1987475062
    %v10134 = vunpack.c.0.s8 %v10133
    %v10135 = vperm.slane %v10040, %v10134
    %v10137 = vunpack.c.l.s4 269488144
    %v10138 = vunpack.c.0.s8 %v10137
    %v10139 = vperm.slane %v10041, %v10138
    %v10141 = vunpack.c.l.s4 842150450
    %v10142 = vunpack.c.0.s8 %v10141
    %v10143 = vperm.slane %v10041, %v10142
    %v10145 = vunpack.c.l.s4 1414812756
    %v10146 = vunpack.c.0.s8 %v10145
    %v10147 = vperm.slane %v10041, %v10146
    %v10149 = vunpack.c.l.s4 269488144
    %v10150 = vunpack.c.0.s8 %v10149
    %v10151 = vperm.slane %v10042, %v10150
    %v10153 = vunpack.c.l.s4 842150450
    %v10154 = vunpack.c.0.s8 %v10153
    %v10155 = vperm.slane %v10042, %v10154
    %v10157 = vunpack.c.l.s4 1414812756
    %v10158 = vunpack.c.0.s8 %v10157
    %v10159 = vperm.slane %v10042, %v10158
    %v10161 = vunpack.c.l.s4 1987475062
    %v10162 = vunpack.c.0.s8 %v10161
    %v10163 = vperm.slane %v10042, %v10162
    %v10165 = vunpack.c.l.s4 269488144
    %v10166 = vunpack.c.0.s8 %v10165
    %v10167 = vperm.slane %v10043, %v10166
    %v10169 = vunpack.c.l.s4 842150450
    %v10170 = vunpack.c.0.s8 %v10169
    %v10171 = vperm.slane %v10043, %v10170
    %v10173 = vunpack.c.l.s4 1414812756
    %v10174 = vunpack.c.0.s8 %v10173
    %v10175 = vperm.slane %v10043, %v10174
    %v10190 = vsub.f32 %v9970, %v10123
    %v10191 = vsub.f32 %v9971, %v10127
    %v10192 = vsub.f32 %v9972, %v10131
    %v10193 = vsub.f32 %v9973, %v10135
    %v10194 = vsub.f32 %v9974, %v10139
    %v10195 = vsub.f32 %v9975, %v10143
    %v10196 = vsub.f32 %v9976, %v10147
    %v10197 = vsub.f32 %v9977, %v10151
    %v10198 = vsub.f32 %v9978, %v10155
    %v10199 = vsub.f32 %v9979, %v10159
    %v10200 = vsub.f32 %v9980, %v10163
    %v10201 = vsub.f32 %v9981, %v10167
    %v10202 = vsub.f32 %v9982, %v10171
    %v10203 = vsub.f32 %v9983, %v10175
    %v10204 = vmul.f32 %v10040, %v10040
    %v10205 = vmul.f32 %v10041, %v10041
    %v10206 = vmul.f32 %v10042, %v10042
    %v10207 = vmul.f32 %v10043, %v10043
    %v10208 = vsub.f32 %v10112, %v10204
    %v10209 = vsub.f32 %v10113, %v10205
    %v10210 = vsub.f32 %v10114, %v10206
    %v10211 = vsub.f32 %v10115, %v10207
    %v10212 = vadd.f32 %v10208, 1e-05
    %v10213 = vadd.f32 %v10209, 1e-05
    %v10214 = vadd.f32 %v10210, 1e-05
    %v10215 = vadd.f32 %v10211, 1e-05
    %v10216 = vrsqrt.pop %v10212
    %v10217 = vmul.f32 %v10216, %v10212
    %v10218 = vmul.f32 %v10217, %v10216
    %v10219 = vmul.f32 0.5, %v10218
    %v10220 = vsub.f32 1.5, %v10219
    %v10221 = vmul.f32 %v10216, %v10220
    %vm10222 = vweird.f32 %v10212
    %vm10223 = vweird.f32 %v10216
    %vm10224 = vmor %vm10222, %vm10223
    %v10225 = vsel %vm10224, %v10216, %v10221
    %v10226 = vrsqrt.pop %v10213
    %v10227 = vmul.f32 %v10226, %v10213
    %v10228 = vmul.f32 %v10227, %v10226
    %v10229 = vmul.f32 0.5, %v10228
    %v10230 = vsub.f32 1.5, %v10229
    %v10231 = vmul.f32 %v10226, %v10230
    %vm10232 = vweird.f32 %v10213
    %vm10233 = vweird.f32 %v10226
    %vm10234 = vmor %vm10232, %vm10233
    %v10235 = vsel %vm10234, %v10226, %v10231
    %v10236 = vrsqrt.pop %v10214
    %v10237 = vmul.f32 %v10236, %v10214
    %v10238 = vmul.f32 %v10237, %v10236
    %v10239 = vmul.f32 0.5, %v10238
    %v10240 = vsub.f32 1.5, %v10239
    %v10241 = vmul.f32 %v10236, %v10240
    %vm10242 = vweird.f32 %v10214
    %vm10243 = vweird.f32 %v10236
    %vm10244 = vmor %vm10242, %vm10243
    %v10245 = vsel %vm10244, %v10236, %v10241
    %v10246 = vrsqrt.pop %v10215
    %v10247 = vmul.f32 %v10246, %v10215
    %v10248 = vmul.f32 %v10247, %v10246
    %v10249 = vmul.f32 0.5, %v10248
    %v10250 = vsub.f32 1.5, %v10249
    %v10251 = vmul.f32 %v10246, %v10250
    %vm10252 = vweird.f32 %v10215
    %vm10253 = vweird.f32 %v10246
    %vm10254 = vmor %vm10252, %vm10253
    %v10255 = vsel %vm10254, %v10246, %v10251
    %v10261 = vunpack.c.l.s4 269488144
    %v10262 = vunpack.c.0.s8 %v10261
    %v10263 = vperm.slane %v10225, %v10262
    %v10265 = vunpack.c.l.s4 842150450
    %v10266 = vunpack.c.0.s8 %v10265
    %v10267 = vperm.slane %v10225, %v10266
    %v10269 = vunpack.c.l.s4 1414812756
    %v10270 = vunpack.c.0.s8 %v10269
    %v10271 = vperm.slane %v10225, %v10270
    %v10273 = vunpack.c.l.s4 1987475062
    %v10274 = vunpack.c.0.s8 %v10273
    %v10275 = vperm.slane %v10225, %v10274
    %v10277 = vunpack.c.l.s4 269488144
    %v10278 = vunpack.c.0.s8 %v10277
    %v10279 = vperm.slane %v10235, %v10278
    %v10281 = vunpack.c.l.s4 842150450
    %v10282 = vunpack.c.0.s8 %v10281
    %v10283 = vperm.slane %v10235, %v10282
    %v10285 = vunpack.c.l.s4 1414812756
    %v10286 = vunpack.c.0.s8 %v10285
    %v10287 = vperm.slane %v10235, %v10286
    %v10289 = vunpack.c.l.s4 269488144
    %v10290 = vunpack.c.0.s8 %v10289
    %v10291 = vperm.slane %v10245, %v10290
    %v10293 = vunpack.c.l.s4 842150450
    %v10294 = vunpack.c.0.s8 %v10293
    %v10295 = vperm.slane %v10245, %v10294
    %v10297 = vunpack.c.l.s4 1414812756
    %v10298 = vunpack.c.0.s8 %v10297
    %v10299 = vperm.slane %v10245, %v10298
    %v10301 = vunpack.c.l.s4 1987475062
    %v10302 = vunpack.c.0.s8 %v10301
    %v10303 = vperm.slane %v10245, %v10302
    %v10305 = vunpack.c.l.s4 269488144
    %v10306 = vunpack.c.0.s8 %v10305
    %v10307 = vperm.slane %v10255, %v10306
    %v10309 = vunpack.c.l.s4 842150450
    %v10310 = vunpack.c.0.s8 %v10309
    %v10311 = vperm.slane %v10255, %v10310
    %v10313 = vunpack.c.l.s4 1414812756
    %v10314 = vunpack.c.0.s8 %v10313
    %v10315 = vperm.slane %v10255, %v10314
    %v10330 = vmul.f32 %v10190, %v10263
    %v10331 = vmul.f32 %v10191, %v10267
    %v10332 = vmul.f32 %v10192, %v10271
    %v10333 = vmul.f32 %v10193, %v10275
    %v10334 = vmul.f32 %v10194, %v10279
    %v10335 = vmul.f32 %v10195, %v10283
    %v10336 = vmul.f32 %v10196, %v10287
    %v10337 = vmul.f32 %v10197, %v10291
    %v10338 = vmul.f32 %v10198, %v10295
    %v10339 = vmul.f32 %v10199, %v10299
    %v10340 = vmul.f32 %v10200, %v10303
    %v10341 = vmul.f32 %v10201, %v10307
    %v10342 = vmul.f32 %v10202, %v10311
    %v10343 = vmul.f32 %v10203, %v10315
    %v10344 = vperm.slane %v9984, 0
    %v10346 = vrot.slane %v10344, 2
    %v10347 = vrot.slane %v10344, 4
    %v10348 = vrot.slane %v10344, 6
    %v10352 = vmul.f32 %v10330, %v10344
    %v10353 = vmul.f32 %v10331, %v10346
    %v10354 = vmul.f32 %v10332, %v10347
    %v10355 = vmul.f32 %v10333, %v10348
    %v10356 = vmul.f32 %v10334, %v10344
    %v10357 = vmul.f32 %v10335, %v10346
    %v10358 = vmul.f32 %v10336, %v10347
    %v10359 = vmul.f32 %v10337, %v10344
    %v10360 = vmul.f32 %v10338, %v10346
    %v10361 = vmul.f32 %v10339, %v10347
    %v10362 = vmul.f32 %v10340, %v10348
    %v10363 = vmul.f32 %v10341, %v10344
    %v10364 = vmul.f32 %v10342, %v10346
    %v10365 = vmul.f32 %v10343, %v10347
    %v10366 = vperm.slane %v9985, 0
    %v10368 = vrot.slane %v10366, 2
    %v10369 = vrot.slane %v10366, 4
    %v10370 = vrot.slane %v10366, 6
    %v10374 = vadd.f32 %v10352, %v10366
    %v10375 = vadd.f32 %v10353, %v10368
    %v10376 = vadd.f32 %v10354, %v10369
    %v10377 = vadd.f32 %v10355, %v10370
    %v10378 = vadd.f32 %v10356, %v10366
    %v10379 = vadd.f32 %v10357, %v10368
    %v10380 = vadd.f32 %v10358, %v10369
    %v10381 = vadd.f32 %v10359, %v10366
    %v10382 = vadd.f32 %v10360, %v10368
    %v10383 = vadd.f32 %v10361, %v10369
    %v10384 = vadd.f32 %v10362, %v10370
    %v10385 = vadd.f32 %v10363, %v10366
    %v10386 = vadd.f32 %v10364, %v10368
    %v10387 = vadd.f32 %v10365, %v10369
    %v10388 = vld [vmem:[%s8478 + $0x40] sm:$0xff]
    %v10389 = vld [vmem:[%s8478 + $0x48] sm:$0xff]
    %v10390 = vld [vmem:[%s8478 + $0x50] sm:$0xff]
    %v10391 = vld [vmem:[%s8478 + $0x58] sm:$0xff]
    %v10392 = vld [vmem:[%s8073 + $0x6] sm:$0x1]
    %v10393 = vperm.slane %v10392, 0
    %v10395 = vrot.slane %v10393, 2
    %v10396 = vrot.slane %v10393, 4
    %v10397 = vrot.slane %v10393, 6
    %10412 = vst [vmem:[#allocation1] ss:$4 sm:$0xff] %v10374
    %s10413 = scalar_lea.vmem [#allocation1], 1
    %10414 = vst [vmem:[%s10413] ss:$4 sm:$0xff] %v10375
    %s10415 = scalar_lea.vmem [#allocation1], 2
    %10416 = vst [vmem:[%s10415] ss:$4 sm:$0xff] %v10376
    %s10417 = scalar_lea.vmem [#allocation1], 3
    %10418 = vst [vmem:[%s10417] ss:$4 sm:$0xff] %v10377
    %s10419 = scalar_lea.vmem [#allocation1], 32
    %10420 = vst [vmem:[%s10419] ss:$4 sm:$0xff] %v10378
    %s10421 = scalar_lea.vmem [#allocation1], 33
    %10422 = vst [vmem:[%s10421] ss:$4 sm:$0xff] %v10379
    %s10423 = scalar_lea.vmem [#allocation1], 34
    %10424 = vst [vmem:[%s10423] ss:$4 sm:$0xff] %v10380
    %s10425 = scalar_lea.vmem [#allocation1], 35
    %10426 = vst [vmem:[%s10425] ss:$4 sm:$0xff] %v10381
    %v10427 = vld.sshfl [vmem:[#allocation1] sm:$0xff pattern:$0x73625140]
    %v10428 = vld.sshfl [vmem:[#allocation1 + $0x20] sm:$0xff pattern:$0x73625140]
    %10429 = vst [vmem:[#allocation1] ss:$4 sm:$0xff] %v10382
    %10430 = vst [vmem:[%s10413] ss:$4 sm:$0xff] %v10383
    %10431 = vst [vmem:[%s10415] ss:$4 sm:$0xff] %v10384
    %10432 = vst [vmem:[%s10417] ss:$4 sm:$0xff] %v10385
    %10433 = vst [vmem:[%s10419] ss:$4 sm:$0xff] %v10386
    %10434 = vst [vmem:[%s10421] ss:$4 sm:$0xff] %v10387
    %v10435 = vld.sshfl [vmem:[#allocation1] sm:$0xff pattern:$0x73625140]
    %v10436 = vld.sshfl [vmem:[#allocation1 + $0x20] sm:$0xff pattern:$0x73625140]
    %10437 = vst [vmem:[#allocation1] ss:$4 sm:$0xff] %v10393
    %s10438 = scalar_lea.vmem [#allocation1], 1
    %10439 = vst [vmem:[%s10438] ss:$4 sm:$0xff] %v10395
    %s10440 = scalar_lea.vmem [#allocation1], 2
    %10441 = vst [vmem:[%s10440] ss:$4 sm:$0xff] %v10396
    %s10442 = scalar_lea.vmem [#allocation1], 3
    %10443 = vst [vmem:[%s10442] ss:$4 sm:$0xff] %v10397
    %s10444 = scalar_lea.vmem [#allocation1], 32
    %10445 = vst [vmem:[%s10444] ss:$4 sm:$0xff] %v10393
    %s10446 = scalar_lea.vmem [#allocation1], 33
    %10447 = vst [vmem:[%s10446] ss:$4 sm:$0xff] %v10395
    %s10448 = scalar_lea.vmem [#allocation1], 34
    %10449 = vst [vmem:[%s10448] ss:$4 sm:$0xff] %v10396
    %s10450 = scalar_lea.vmem [#allocation1], 35
    %10451 = vst [vmem:[%s10450] ss:$4 sm:$0xff] %v10393
    %v10452 = vld.sshfl [vmem:[#allocation1] sm:$0xff pattern:$0x73625140]
    %v10453 = vld.sshfl [vmem:[#allocation1 + $0x20] sm:$0xff pattern:$0x73625140]
    %10454 = vst [vmem:[#allocation1] ss:$4 sm:$0xff] %v10395
    %10455 = vst [vmem:[%s10438] ss:$4 sm:$0xff] %v10396
    %10456 = vst [vmem:[%s10440] ss:$4 sm:$0xff] %v10397
    %10457 = vst [vmem:[%s10442] ss:$4 sm:$0xff] %v10393
    %10458 = vst [vmem:[%s10444] ss:$4 sm:$0xff] %v10395
    %10459 = vst [vmem:[%s10446] ss:$4 sm:$0xff] %v10396
    %v10460 = vld.sshfl [vmem:[#allocation1] sm:$0xff pattern:$0x73625140]
    %v10461 = vld.sshfl [vmem:[#allocation1 + $0x20] sm:$0xff pattern:$0x73625140]
    %v10466 = vsel %vm203, %v10427, 0
    %v10468 = vsel %vm203, %v10428, 0
    %v10470 = vsel %vm203, %v10435, 0
    %v10472 = vsel %vm203, %v10436, 0
    %10474 = vmatpush.msra.mxu0 0.0
    %10475 = vmatpush.msra.mxu0 0.0
    %10476 = vmatpush.msra.mxu0 0.0
    %10477 = vmatpush.msra.mxu0 0.0
    %10478 = vmatpush.msra.mxu0 0.0
    %10479 = vmatpush.msra.mxu0 0.0
    %10480 = vmatpush.msra.mxu0 0.0
    %10481 = vmatpush.msra.mxu0 0.0
    %10482 = vmatpush.msra.mxu0 0.0
    %10483 = vmatpush.msra.mxu0 0.0
    %10484 = vmatpush.msra.mxu0 0.0
    %10485 = vmatpush.msra.mxu0 0.0
    %10486 = vmatpush.msra.mxu0 %v10391
    %10487 = vmatpush.msra.mxu0 %v10390
    %10488 = vmatpush.msra.mxu0 %v10389
    %10489 = vmatpush.msra.mxu0 %v10388
    %10490 = vmatmul.f32.gmra.mxu0 %v10466
    %v10491 = vpop.f32.mrf.mxu0
    %v10492 = vadd.f32 %v10452, %v10491
    %10493 = vmatmul.f32.gmra.mxu0 %v10468
    %v10494 = vpop.f32.mrf.mxu0
    %v10495 = vadd.f32 %v10453, %v10494
    %10496 = vmatmul.f32.gmra.mxu0 %v10470
    %v10497 = vpop.f32.mrf.mxu0
    %v10498 = vadd.f32 %v10460, %v10497
    %10499 = vmatmul.f32.gmra.mxu0 %v10472
    %v10500 = vpop.f32.mrf.mxu0
    %v10501 = vadd.f32 %v10461, %v10500
    %10502 = vdwg.mxu0
    %v10507 = vrot.slane %v10492, 2
    %v10508 = vrot.slane %v10492, 4
    %v10509 = vrot.slane %v10492, 6
    %v10510 = vrot.slane %v10495, 2
    %v10511 = vrot.slane %v10495, 4
    %v10512 = vrot.slane %v10495, 6
    %v10513 = vrot.slane %v10498, 2
    %v10514 = vrot.slane %v10498, 4
    %v10515 = vrot.slane %v10498, 6
    %v10516 = vrot.slane %v10501, 2
    %v10527 = vmax.f32 %v10492, 0.0
    %v10528 = vmax.f32 %v10507, 0.0
    %v10529 = vmax.f32 %v10508, 0.0
    %v10530 = vmax.f32 %v10509, 0.0
    %v10531 = vmax.f32 %v10495, 0.0
    %v10532 = vmax.f32 %v10510, 0.0
    %v10533 = vmax.f32 %v10511, 0.0
    %v10534 = vmax.f32 %v10512, 0.0
    %v10535 = vmax.f32 %v10498, 0.0
    %v10536 = vmax.f32 %v10513, 0.0
    %v10537 = vmax.f32 %v10514, 0.0
    %v10538 = vmax.f32 %v10515, 0.0
    %v10539 = vmax.f32 %v10501, 0.0
    %v10540 = vmax.f32 %v10516, 0.0
    %v10541 = vld [vmem:[%s8478 + $0x60] sm:$0xff]
    %v10542 = vld [vmem:[%s8478 + $0x68] sm:$0xff]
    %v10543 = vld [vmem:[%s8478 + $0x70] sm:$0xff]
    %v10544 = vld [vmem:[%s8478 + $0x78] sm:$0xff]
    %v10545 = vld [vmem:[%s8478 + $0x80] sm:$0xff]
    %v10546 = vld [vmem:[%s8478 + $0x88] sm:$0xff]
    %v10547 = vld [vmem:[%s8478 + $0x90] sm:$0xff]
    %v10548 = vld [vmem:[%s8478 + $0x98] sm:$0xff]
    %v10549 = vld [vmem:[%s8073 + $0x5] sm:$0x1]
    %v10550 = vperm.slane %v10549, 0
    %v10552 = vrot.slane %v10550, 2
    %v10553 = vrot.slane %v10550, 4
    %v10554 = vrot.slane %v10550, 6
    %10569 = vst [vmem:[#allocation1] ss:$4 sm:$0xff] %v10527
    %s10570 = scalar_lea.vmem [#allocation1], 1
    %10571 = vst [vmem:[%s10570] ss:$4 sm:$0xff] %v10528
    %s10572 = scalar_lea.vmem [#allocation1], 2
    %10573 = vst [vmem:[%s10572] ss:$4 sm:$0xff] %v10529
    %s10574 = scalar_lea.vmem [#allocation1], 3
    %10575 = vst [vmem:[%s10574] ss:$4 sm:$0xff] %v10530
    %s10576 = scalar_lea.vmem [#allocation1], 32
    %10577 = vst [vmem:[%s10576] ss:$4 sm:$0xff] %v10531
    %s10578 = scalar_lea.vmem [#allocation1], 33
    %10579 = vst [vmem:[%s10578] ss:$4 sm:$0xff] %v10532
    %s10580 = scalar_lea.vmem [#allocation1], 34
    %10581 = vst [vmem:[%s10580] ss:$4 sm:$0xff] %v10533
    %s10582 = scalar_lea.vmem [#allocation1], 35
    %10583 = vst [vmem:[%s10582] ss:$4 sm:$0xff] %v10534
    %v10584 = vld.sshfl [vmem:[#allocation1] sm:$0xff pattern:$0x73625140]
    %v10585 = vld.sshfl [vmem:[#allocation1 + $0x20] sm:$0xff pattern:$0x73625140]
    %10586 = vst [vmem:[#allocation1] ss:$4 sm:$0xff] %v10535
    %10587 = vst [vmem:[%s10570] ss:$4 sm:$0xff] %v10536
    %10588 = vst [vmem:[%s10572] ss:$4 sm:$0xff] %v10537
    %10589 = vst [vmem:[%s10574] ss:$4 sm:$0xff] %v10538
    %10590 = vst [vmem:[%s10576] ss:$4 sm:$0xff] %v10539
    %10591 = vst [vmem:[%s10578] ss:$4 sm:$0xff] %v10540
    %v10592 = vld.sshfl [vmem:[#allocation1] sm:$0xff pattern:$0x73625140]
    %v10593 = vld.sshfl [vmem:[#allocation1 + $0x20] sm:$0xff pattern:$0x73625140]
    %10594 = vst [vmem:[#allocation1] ss:$4 sm:$0xff] %v10550
    %s10595 = scalar_lea.vmem [#allocation1], 1
    %10596 = vst [vmem:[%s10595] ss:$4 sm:$0xff] %v10552
    %s10597 = scalar_lea.vmem [#allocation1], 2
    %10598 = vst [vmem:[%s10597] ss:$4 sm:$0xff] %v10553
    %s10599 = scalar_lea.vmem [#allocation1], 3
    %10600 = vst [vmem:[%s10599] ss:$4 sm:$0xff] %v10554
    %s10601 = scalar_lea.vmem [#allocation1], 32
    %10602 = vst [vmem:[%s10601] ss:$4 sm:$0xff] %v10550
    %s10603 = scalar_lea.vmem [#allocation1], 33
    %10604 = vst [vmem:[%s10603] ss:$4 sm:$0xff] %v10552
    %s10605 = scalar_lea.vmem [#allocation1], 34
    %10606 = vst [vmem:[%s10605] ss:$4 sm:$0xff] %v10553
    %s10607 = scalar_lea.vmem [#allocation1], 35
    %10608 = vst [vmem:[%s10607] ss:$4 sm:$0xff] %v10550
    %v10609 = vld.sshfl [vmem:[#allocation1] sm:$0xff pattern:$0x73625140]
    %v10610 = vld.sshfl [vmem:[#allocation1 + $0x20] sm:$0xff pattern:$0x73625140]
    %10611 = vst [vmem:[#allocation1] ss:$4 sm:$0xff] %v10552
    %10612 = vst [vmem:[%s10595] ss:$4 sm:$0xff] %v10553
    %10613 = vst [vmem:[%s10597] ss:$4 sm:$0xff] %v10554
    %10614 = vst [vmem:[%s10599] ss:$4 sm:$0xff] %v10550
    %10615 = vst [vmem:[%s10601] ss:$4 sm:$0xff] %v10552
    %10616 = vst [vmem:[%s10603] ss:$4 sm:$0xff] %v10553
    %v10619 = vsel %vm2747, %v10584, 0
    %v10621 = vsel %vm2747, %v10585, 0
    %v10623 = vsel %vm2747, %v10592, 0
    %v10625 = vsel %vm2747, %v10593, 0
    %10627 = vmatpush.msra.mxu0 0.0
    %10628 = vmatpush.msra.mxu0 0.0
    %10629 = vmatpush.msra.mxu0 0.0
    %10630 = vmatpush.msra.mxu0 0.0
    %10631 = vmatpush.msra.mxu0 0.0
    %10632 = vmatpush.msra.mxu0 0.0
    %10633 = vmatpush.msra.mxu0 0.0
    %10634 = vmatpush.msra.mxu0 0.0
    %10635 = vmatpush.msra.mxu0 %v10548
    %10636 = vmatpush.msra.mxu0 %v10547
    %10637 = vmatpush.msra.mxu0 %v10546
    %10638 = vmatpush.msra.mxu0 %v10545
    %10639 = vmatpush.msra.mxu0 %v10544
    %10640 = vmatpush.msra.mxu0 %v10543
    %10641 = vmatpush.msra.mxu0 %v10542
    %10642 = vmatpush.msra.mxu0 %v10541
    %10643 = vmatmul.f32.gmra.mxu0 %v10619
    %v10644 = vpop.f32.mrf.mxu0
    %v10645 = vadd.f32 %v10609, %v10644
    %10646 = vmatmul.f32.gmra.mxu0 %v10621
    %v10647 = vpop.f32.mrf.mxu0
    %v10648 = vadd.f32 %v10610, %v10647
    %10649 = vmatmul.f32.gmra.mxu0 %v10623
    %v10650 = vpop.f32.mrf.mxu0
    %10651 = vmatmul.f32.gmra.mxu0 %v10625
    %v10652 = vpop.f32.mrf.mxu0
    %10653 = vdwg.mxu0
    %v10655 = vrot.slane %v10648, 6
    %v10657 = vadd.f32 %v10645, %v9970
    %v10658 = vadd.f32 %v10655, %v9977
    %v10659 = vld [vmem:[%s5] sm:$0xff]
    %v10660 = vld [vmem:[%s5 + $0x8] sm:$0xff]
    %v10661 = vld [vmem:[%s5 + $0x10] sm:$0xff]
    %v10662 = vld [vmem:[%s5 + $0x18] sm:$0xff]
    %s10663 = scalar_lea.vmem %s4, 32
    %v10664 = vld [vmem:[%s10663] sm:$0x1]
    %v10665 = vperm.slane %v10664, 0
    %v10668 = vperm.slane %v10657, 0
    %v10669 = vperm.slane %v10658, 0
    %vm10670 = vcmask 1041409
    %v10671 = vsel %vm10670, %v10669, %v10668
    %v10672 = vsel %vm203, %v10671, 0
    %10674 = vmatpush.msra.mxu0 0.0
    %10675 = vmatpush.msra.mxu0 0.0
    %10676 = vmatpush.msra.mxu0 0.0
    %10677 = vmatpush.msra.mxu0 0.0
    %10678 = vmatpush.msra.mxu0 0.0
    %10679 = vmatpush.msra.mxu0 0.0
    %10680 = vmatpush.msra.mxu0 0.0
    %10681 = vmatpush.msra.mxu0 0.0
    %10682 = vmatpush.msra.mxu0 0.0
    %10683 = vmatpush.msra.mxu0 0.0
    %10684 = vmatpush.msra.mxu0 0.0
    %10685 = vmatpush.msra.mxu0 0.0
    %10686 = vmatpush.msra.mxu0 %v10662
    %10687 = vmatpush.msra.mxu0 %v10661
    %10688 = vmatpush.msra.mxu0 %v10660
    %10689 = vmatpush.msra.mxu0 %v10659
    %10690 = vmatmul.f32.gmra.mxu0 %v10672
    %v10691 = vpop.f32.mrf.mxu0
    %v10692 = vadd.f32 %v10665, %v10691
    %10693 = vdwg.mxu0
    %v10694 = vmax.f32 %v10692, 0.0
    %v10695 = vld [vmem:[%s1] sm:$0x3f]
    %vm10696 = vcmask 392192
    %v10698 = vsel %vm10696, %v10695, 0
    %v10701 = vsel %vm10696, %v10692, 0
    %10703 = vmatpush.xpose.msra.mxu0 0.0
    %10704 = vmatpush.xpose.msra.mxu0 0.0
    %10705 = vmatpush.xpose.msra.mxu0 0.0
    %10706 = vmatpush.xpose.msra.mxu0 0.0
    %10707 = vmatpush.xpose.msra.mxu0 0.0
    %10708 = vmatpush.xpose.msra.mxu0 0.0
    %10709 = vmatpush.xpose.msra.mxu0 0.0
    %10710 = vmatpush.xpose.msra.mxu0 0.0
    %10711 = vmatpush.xpose.msra.mxu0 0.0
    %10712 = vmatpush.xpose.msra.mxu0 0.0
    %10713 = vmatpush.xpose.msra.mxu0 0.0
    %10714 = vmatpush.xpose.msra.mxu0 0.0
    %10715 = vmatpush.xpose.msra.mxu0 0.0
    %10716 = vmatpush.xpose.msra.mxu0 0.0
    %10717 = vmatpush.xpose.msra.mxu0 0.0
    %10718 = vmatpush.xpose.msra.mxu0 %v10701
    %10719 = vmatmul.f32.gmra.mxu0 %v10698
    %v10720 = vpop.f32.mrf.mxu0
    %v10721 = vadd.f32 0.0, %v10720
    %10722 = vdwg.mxu0
    %vm10723 = vcmask 13312
    %v10724 = vsel %vm10723, %v10721, -inf
    %10725 = vmax.xlane.f32.xlu0 %v10724
    %v10726 = vpop.xlane.xlu0 %10725
    %v10727 = vsub.f32 %v10721, %v10726
    %v10728 = vmul.f32 %v10727, 1.442695
    %v10729 = vpow.pop %v10728
    %v10730 = vsel %vm10723, %v10729, 0.0
    %10731 = vadd.xlane.f32.xlu0 %v10730
    %v10732 = vpop.xlane.xlu0 %10731
    %v10733 = vlog2.pop %v10732
    %v10734 = vmul.f32 %v10733, 0.6931472
    %v10735 = vadd.f32 %v10734, %v10726
    %v10736 = vlaneseq
    %v10737 = vshrl.u32 %v10736, 7
    %vm10738 = vcmp.eq.s32.totalorder %v10737, %v152
    %v10739 = vadd.s32 %v152, 2
    %vm10740 = vcmp.eq.s32.totalorder %v10737, %v10739
    %vm10741 = vmor %vm10738, %vm10740
    %v10742 = vadd.s32 %v152, 4
    %vm10743 = vcmp.eq.s32.totalorder %v10737, %v10742
    %vm10744 = vmor %vm10741, %vm10743
    %v10745 = vsub.f32 %v10721, %v10735
    %v10746 = vsel %vm10744, %v10745, 0.0
    %v10747 = vsel %vm10723, %v10746, 0.0
    %10748 = vadd.xlane.f32.xlu0 %v10747
    %v10749 = vpop.xlane.xlu0 %10748
    %v10750 = vrot.slane %v10749, 4
    %v10751 = vadd.f32 %v10749, %v10750
    %v10752 = vrot.slane %v10751, 2
    %v10753 = vadd.f32 %v10751, %v10752
    %v10754 = vrot.slane %v10753, 1
    %v10755 = vadd.f32 %v10753, %v10754
    %s10756 = vtos %v10755
    %s10757 = smul.f32 %s10756, -0.16666667
    %s10758 = scalar_lea.vmem %s4, 40
    %v10759 = vld [vmem:[%s10758] sm:$0xff]
    %v10760 = vld [vmem:[%s10663 + $0x1] sm:$0x1]
    %v10761 = vperm.slane %v10760, 0
    %10763 = vrot.lane.b32.xlu0 %v10694, 80
    %v10764 = vpop.permute.xlu0 %10763
    %vm10765 = vcmask 64512
    %v10766 = vsel %vm10765, %v10764, 0
    %10768 = vmatpush.msra.mxu0 0.0
    %10769 = vmatpush.msra.mxu0 0.0
    %10770 = vmatpush.msra.mxu0 0.0
    %10771 = vmatpush.msra.mxu0 0.0
    %10772 = vmatpush.msra.mxu0 0.0
    %10773 = vmatpush.msra.mxu0 0.0
    %10774 = vmatpush.msra.mxu0 0.0
    %10775 = vmatpush.msra.mxu0 0.0
    %10776 = vmatpush.msra.mxu0 0.0
    %10777 = vmatpush.msra.mxu0 0.0
    %10778 = vmatpush.msra.mxu0 0.0
    %10779 = vmatpush.msra.mxu0 0.0
    %10780 = vmatpush.msra.mxu0 0.0
    %10781 = vmatpush.msra.mxu0 0.0
    %10782 = vmatpush.msra.mxu0 0.0
    %10783 = vmatpush.msra.mxu0 %v10759
    %10784 = vmatmul.f32.gmra.mxu0 %v10766
    %v10785 = vpop.f32.mrf.mxu0
    %v10786 = vadd.f32 %v10761, %v10785
    %10787 = vdwg.mxu0
    %vm10788 = vcmp.eq.s32.totalorder %v10737, 0
    %vm10789 = vcmp.eq.s32.totalorder %v152, 127
    %vm10790 = vmand %vm10788, %vm10789
    %v10791 = vstv %s10757
    %v10792 = vsel %vm10790, %v10791, %v10786
    %10793 = vst [vmem:[%s6] sm:$0x3] %v10792
    // Predicated region
    $region30: #{tc_forward.1} parent=1 // pred_check
      _
    $region31: #{tc_forward.1} parent=1 // pred_check_branch
      %10795 = sbr.rel (0) target = $region33
    $region32: #{tc_forward.1} parent=1 // pred_region
      _
    $region33: #{tc_forward.1} parent=1 // pred_fallthru
      _
    // Predicated region
    $region34: #{tc_forward.1} parent=1 // pred_check
      _
    $region35: #{tc_forward.1} parent=1 // pred_check_branch
      %10797 = sbr.rel (0) target = $region37
    $region36: #{tc_forward.1} parent=1 // pred_region
      _
    $region37: #{tc_forward.1} parent=1 // pred_fallthru
      _
    %10798 = vsyncpa [#allocation3], 1

</llo_original>
